<compile_context>
chip_gen: v7x
topology: tpu7x:2x2x1
jax: 0.10.0
libtpu: 0.0.40
codegen_flags: <defaults>
</compile_context>

<pallas_src>
import math
import functools

import jax
import jax.numpy as jnp
from jax.experimental import pallas as pl
from jax.experimental.pallas import tpu as pltpu

# ---- model hyper-parameters (small, consistent with the module) ----
BATCH = 2
SEQ = 8
INPUT_DIM = 32                       # == embed_dim of the self-attention
NUM_HEADS = 4
HEAD_DIM = INPUT_DIM // NUM_HEADS
DIM_FF = 64
NUM_LAYERS = 2
LN_EPS = 1e-5                        # torch.nn.LayerNorm default

_SOS_ORDER = ("g1", "a1", "b1", "g2", "a2", "b2")          # gamma1..beta2 packing order
_PARAM_ORDER = ("cond_w1", "cond_b1", "cond_w2", "cond_b2",
                "ln1_g", "ln1_b", "ln2_g", "ln2_b",
                "w_q", "w_k", "w_v", "b_q", "b_k", "b_v", "w_o", "b_o",
                "mlp_w1", "mlp_b1", "mlp_w2", "mlp_b2")


# ---------------------------------------------------------------------------
# In-kernel math helpers (exp/mul/add/rsqrt/reciprocal -> guaranteed lowering)
# ---------------------------------------------------------------------------
def _recip(y):
    # EUP approximate reciprocal + one Newton-Raphson step (~1e-7 rel error).
    r = pl.reciprocal(y, approx=True)
    return r * (2.0 - y * r)


def _erf(x):
    # Abramowitz & Stegun 7.1.26, |abs err| <= 1.5e-7. Avoids relying on a
    # lax.erf lowering rule inside the kernel; the division uses the EUP.
    p = 0.3275911
    a1, a2, a3, a4, a5 = (0.254829592, -0.284496736, 1.421413741,
                          -1.453152027, 1.061405429)
    sgn = jnp.where(x < 0.0, -1.0, 1.0)
    z = x * sgn
    t = _recip(1.0 + p * z)
    poly = ((((a5 * t + a4) * t + a3) * t + a2) * t + a1) * t
    return sgn * (1.0 - poly * jnp.exp(-z * z))


def _gelu(x):
    # Exact (erf-based) GELU, matching torch.nn.GELU() default.
    return 0.5 * x * (1.0 + _erf(x * 0.7071067811865476))


def _layer_norm(x, g, b):
    mean = jnp.mean(x, axis=-1, keepdims=True)
    cen = x - mean
    var = jnp.mean(cen * cen, axis=-1, keepdims=True)
    return cen * jax.lax.rsqrt(var + LN_EPS) * g + b


# ---------------------------------------------------------------------------
# The fused encoder kernel
# ---------------------------------------------------------------------------
def _encoder_kernel(x_ref, xc_ref, bias_ref,
                    cond_w1_ref, cond_b1_ref, cond_w2_ref, cond_b2_ref,
                    ln1_g_ref, ln1_b_ref, ln2_g_ref, ln2_b_ref,
                    w_q_ref, w_k_ref, w_v_ref, b_q_ref, b_k_ref, b_v_ref,
                    w_o_ref, b_o_ref,
                    mlp_w1_ref, mlp_b1_ref, mlp_w2_ref, mlp_b2_ref,
                    o_ref,
                    *, num_layers, num_heads, head_dim, batch, seq):
    d_model = num_heads * head_dim
    rows = batch * seq
    scale = 1.0 / math.sqrt(head_dim)

    x = x_ref[...]                 # (B*S, D) activations
    xc = xc_ref[...]               # (B, D)   conditioning (NOT pre-repeated)
    attn_bias = bias_ref[...]      # (B*S, B*S): 0 within a batch element, -1e30 across

    def rows_of(m):
        # (B, D) -> (B*S, D): broadcast over seq (sublane broadcast + row merge).
        return jnp.broadcast_to(m[:, None, :], (batch, seq, d_model)).reshape(rows, d_model)

    for l in range(num_layers):                    # small & static -> unrolled
        # ---- six ScaleOrShift conditioning MLPs on B rows only ----------------
        # layer1 of all six modules fused into one matmul (columns concatenated);
        # layer2 is a per-module (D, D) stack (no block-diagonal dead FLOPs).
        ch = jnp.dot(xc, cond_w1_ref[l], preferred_element_type=jnp.float32)
        ch = _gelu(ch + cond_b1_ref[l])            # (B, 6D); dropout(p=0) == identity
        mods = []
        for i in range(6):
            hblk = ch[:, i * d_model:(i + 1) * d_model]                 # (B, D)
            m = jnp.dot(hblk, cond_w2_ref[l * 6 + i],
                        preferred_element_type=jnp.float32) + cond_b2_ref[l * 6 + i]
            mods.append(rows_of(m))                # broadcast over sequence in-kernel
        gamma1, alpha1, beta1, gamma2, alpha2, beta2 = mods

        # ---- self-attention branch --------------------------------------------
        pre_attn = _layer_norm(x, ln1_g_ref[l], ln1_b_ref[l]) * gamma1 + beta1
        acc = jnp.zeros((rows, d_model), jnp.float32)
        for h in range(num_heads):                 # heads unrolled; per-head weights
            hi = l * num_heads + h                 # were sliced host-side (free), so
            q = jnp.dot(pre_attn, w_q_ref[hi],     # no in-kernel lane slices/concats.
                        preferred_element_type=jnp.float32) + b_q_ref[hi]   # (BS, hd)
            k = jnp.dot(pre_attn, w_k_ref[hi],
                        preferred_element_type=jnp.float32) + b_k_ref[hi]
            v = jnp.dot(pre_attn, w_v_ref[hi],
                        preferred_element_type=jnp.float32) + b_v_ref[hi]
            # (BS, BS) logits; additive block mask keeps batches separate, so the
            # softmax below is exactly the per-batch softmax of the reference.
            logits = jnp.dot(q, k.T, preferred_element_type=jnp.float32) * scale
            logits = logits + attn_bias
            logits = logits - jnp.max(logits, axis=-1, keepdims=True)
            p = jnp.exp(logits)                    # masked entries underflow to 0.0
            s = jnp.sum(p, axis=-1, keepdims=True)
            attn = p * _recip(s)                   # softmax(-1), EUP reciprocal + NR
            vals = jnp.dot(attn, v, preferred_element_type=jnp.float32)     # (BS, hd)
            acc = acc + jnp.dot(vals, w_o_ref[hi],
                                preferred_element_type=jnp.float32)
        attn_out = acc + b_o_ref[l]
        x = x + attn_out * alpha1

        # ---- MLP branch ---------------------------------------------------------
        pre_lin = _layer_norm(x, ln2_g_ref[l], ln2_b_ref[l]) * gamma2 + beta2
        mid = jnp.dot(pre_lin, mlp_w1_ref[l],
                      preferred_element_type=jnp.float32) + mlp_b1_ref[l]
        mid = _gelu(mid)
        lin = jnp.dot(mid, mlp_w2_ref[l],
                      preferred_element_type=jnp.float32) + mlp_b2_ref[l]
        x = x + lin * alpha2

    o_ref[...] = x.astype(o_ref.dtype)


def transformer_encoder(x, x_cond, packed):
    """x: (B, S, D); x_cond: (B, D); packed: dict of layer-stacked params."""
    B, S, D = x.shape
    L = packed["mlp_w1"].shape[0]

    # Collapse (B, S) to one row axis; single invocation (grid=()), all operands are
    # full VMEM-resident blocks (< 1 MB total).
    # Scaling note (v7x): when B*S / NUM_LAYERS grow, switch to a "parallel" row grid
    # axis + an "arbitrary" layer axis with BlockSpec-streamed per-layer weights.
    x2 = x.reshape(B * S, D)
    row_b = jnp.arange(B * S, dtype=jnp.int32) // S
    attn_bias = jnp.where(row_b[:, None] == row_b[None, :], 0.0, -1e30)
    attn_bias = attn_bias.astype(jnp.float32)      # (B*S, B*S) batch-separation mask

    kernel = functools.partial(
        _encoder_kernel, num_layers=L, num_heads=NUM_HEADS,
        head_dim=D // NUM_HEADS, batch=B, seq=S)

    vmem = pl.BlockSpec(memory_space=pltpu.MemorySpace.VMEM)
    args = (x2, x_cond, attn_bias) + tuple(packed[k] for k in _PARAM_ORDER)
    out = pl.pallas_call(
        kernel,
        out_shape=jax.ShapeDtypeStruct((B * S, D), x.dtype),
        in_specs=[vmem] * len(args),
        out_specs=vmem,
    )(*args)
    return out.reshape(B, S, D)


# ---------------------------------------------------------------------------
# Pure-JAX reference mirroring the PyTorch module exactly (torch weight layout)
# ---------------------------------------------------------------------------
def _layer_norm_ref(x, w, b):
    mean = jnp.mean(x, axis=-1, keepdims=True)
    var = jnp.mean((x - mean) ** 2, axis=-1, keepdims=True)
    return (x - mean) / jnp.sqrt(var + LN_EPS) * w + b


def _scale_or_shift_ref(xc, params):
    w1, b1, w2, b2 = params
    h = xc @ w1.T + b1
    h = jax.nn.gelu(h, approximate=False)
    return h @ w2.T + b2


def _mha_ref(x, qkv_w, qkv_b, o_w, o_b):
    B, S, D = x.shape
    hd = D // NUM_HEADS
    qkv = x @ qkv_w.T + qkv_b
    qkv = qkv.reshape(B, S, NUM_HEADS, 3 * hd).transpose(0, 2, 1, 3)
    q, k, v = jnp.split(qkv, 3, axis=-1)
    logits = jnp.einsum("bhqd,bhkd->bhqk", q, k) / math.sqrt(hd)
    attn = jax.nn.softmax(logits, axis=-1)
    vals = jnp.einsum("bhqk,bhkd->bhqd", attn, v)
    vals = vals.transpose(0, 2, 1, 3).reshape(B, S, D)
    return vals @ o_w.T + o_b


def _encoder_block_ref(x, x_cond, p):
    g1 = _scale_or_shift_ref(x_cond, p["g1"])[:, None, :]
    a1 = _scale_or_shift_ref(x_cond, p["a1"])[:, None, :]
    b1 = _scale_or_shift_ref(x_cond, p["b1"])[:, None, :]
    g2 = _scale_or_shift_ref(x_cond, p["g2"])[:, None, :]
    a2 = _scale_or_shift_ref(x_cond, p["a2"])[:, None, :]
    b2 = _scale_or_shift_ref(x_cond, p["b2"])[:, None, :]
    pre_attn = _layer_norm_ref(x, p["ln1_w"], p["ln1_b"]) * g1 + b1
    attn_out = _mha_ref(pre_attn, p["qkv_w"], p["qkv_b"], p["o_w"], p["o_b"])
    x = x + attn_out * a1
    pre_lin = _layer_norm_ref(x, p["ln2_w"], p["ln2_b"]) * g2 + b2
    lin = pre_lin @ p["mlp_w1"].T + p["mlp_b1"]
    lin = jax.nn.gelu(lin, approximate=False)
    lin = lin @ p["mlp_w2"].T + p["mlp_b2"]
    return x + lin * a2


def _reference(x, x_cond, layer_params):
    for p in layer_params:
        x = _encoder_block_ref(x, x_cond, p)
    return x


# ---------------------------------------------------------------------------
# Deterministic parameter construction (torch layout) + packing for the kernel
# ---------------------------------------------------------------------------
def _default_linear(key, in_f, out_f):
    # torch.nn.Linear default init: U(-1/sqrt(fan_in), 1/sqrt(fan_in)).
    kw, kb = jax.random.split(key)
    bound = 1.0 / math.sqrt(in_f)
    w = jax.random.uniform(kw, (out_f, in_f), jnp.float32, -bound, bound)
    b = jax.random.uniform(kb, (out_f,), jnp.float32, -bound, bound)
    return w, b


def _xavier_linear(key, in_f, out_f):
    # MultiheadAttention._reset_parameters: xavier_uniform weight, zero bias.
    bound = math.sqrt(6.0 / (in_f + out_f))
    w = jax.random.uniform(key, (out_f, in_f), jnp.float32, -bound, bound)
    return w, jnp.zeros((out_f,), jnp.float32)


def _encoder_block_params(key, dim, dim_ff):
    keys = jax.random.split(key, 14)
    p = {}
    for i, name in enumerate(_SOS_ORDER):
        k1, k2 = jax.random.split(keys[i])
        p[name] = _default_linear(k1, dim, dim) + _default_linear(k2, dim, dim)
    p["qkv_w"], p["qkv_b"] = _xavier_linear(keys[6], dim, 3 * dim)
    p["o_w"], p["o_b"] = _xavier_linear(keys[7], dim, dim)
    p["mlp_w1"], p["mlp_b1"] = _default_linear(keys[8], dim, dim_ff)
    p["mlp_w2"], p["mlp_b2"] = _default_linear(keys[9], dim_ff, dim)
    # torch inits LayerNorm affine to ones/zeros; randomized here only so the
    # kernel-vs-reference check actually exercises the affine path.
    p["ln1_w"] = jax.random.uniform(keys[10], (dim,), jnp.float32, 0.5, 1.5)
    p["ln1_b"] = jax.random.uniform(keys[11], (dim,), jnp.float32, -0.5, 0.5)
    p["ln2_w"] = jax.random.uniform(keys[12], (dim,), jnp.float32, 0.5, 1.5)
    p["ln2_b"] = jax.random.uniform(keys[13], (dim,), jnp.float32, -0.5, 0.5)
    return p


def _pack_layer(p):
    """Host-side repacking: all per-head / per-module slicing happens here (free)."""
    hd, H = HEAD_DIM, NUM_HEADS
    # qkv_proj packs the output as, per head h: [q(hd) | k(hd) | v(hd)] (torch layout:
    # weight rows are output features).  Slice per head and transpose to (in, out).
    wq, wk, wv, bq, bk, bv = [], [], [], [], [], []
    for h in range(H):
        base = h * 3 * hd
        wq.append(p["qkv_w"][base:base + hd, :].T)
        wk.append(p["qkv_w"][base + hd:base + 2 * hd, :].T)
        wv.append(p["qkv_w"][base + 2 * hd:base + 3 * hd, :].T)
        bq.append(p["qkv_b"][base:base + hd].reshape(1, hd))
        bk.append(p["qkv_b"][base + hd:base + 2 * hd].reshape(1, hd))
        bv.append(p["qkv_b"][base + 2 * hd:base + 3 * hd].reshape(1, hd))
    # o_proj consumes head-major concatenated values: per-head (hd, D) blocks.
    wo = [p["o_w"][:, h * hd:(h + 1) * hd].T for h in range(H)]
    return {
        # six ScaleOrShift modules: layer1 column-concatenated, layer2 per-module stack
        "cond_w1": jnp.concatenate([p[n][0].T for n in _SOS_ORDER], axis=1),
        "cond_b1": jnp.concatenate([p[n][1] for n in _SOS_ORDER]).reshape(1, -1),
        "cond_w2": jnp.stack([p[n][2].T for n in _SOS_ORDER], axis=0),        # (6, D, D)
        "cond_b2": jnp.stack([p[n][3].reshape(1, -1) for n in _SOS_ORDER]),   # (6, 1, D)
        "ln1_g": p["ln1_w"].reshape(1, -1),
        "ln1_b": p["ln1_b"].reshape(1, -1),
        "ln2_g": p["ln2_w"].reshape(1, -1),
        "ln2_b": p["ln2_b"].reshape(1, -1),
        "w_q": jnp.stack(wq), "w_k": jnp.stack(wk), "w_v": jnp.stack(wv),     # (H, D, hd)
        "b_q": jnp.stack(bq), "b_k": jnp.stack(bk), "b_v": jnp.stack(bv),     # (H, 1, hd)
        "w_o": jnp.stack(wo),                                                 # (H, hd, D)
        "b_o": p["o_b"].reshape(1, -1),
        # linear weights stored transposed to (in, out) for in-kernel `x @ W`
        "mlp_w1": p["mlp_w1"].T,
        "mlp_b1": p["mlp_b1"].reshape(1, -1),
        "mlp_w2": p["mlp_w2"].T,
        "mlp_b2": p["mlp_b2"].reshape(1, -1),
    }


def pack_params(layer_params):
    per_layer = [_pack_layer(p) for p in layer_params]
    stacked = {k: jnp.stack([d[k] for d in per_layer], axis=0)
               for k in per_layer[0]}
    # Flatten (L, H, ...) -> (L*H, ...) and (L, 6, ...) -> (L*6, ...) so the kernel
    # indexes every stacked ref with a single static leading index.
    for k in ("w_q", "w_k", "w_v", "b_q", "b_k", "b_v", "w_o", "cond_w2", "cond_b2"):
        stacked[k] = stacked[k].reshape((-1,) + stacked[k].shape[2:])
    return {k: stacked[k] for k in _PARAM_ORDER}


if __name__ == "__main__":
    key = jax.random.PRNGKey(0)
    k_x, k_cond, k_params = jax.random.split(key, 3)
    layer_keys = jax.random.split(k_params, NUM_LAYERS)
    layer_params = [_encoder_block_params(k, INPUT_DIM, DIM_FF) for k in layer_keys]
    packed = pack_params(layer_params)

    x = jax.random.normal(k_x, (BATCH, SEQ, INPUT_DIM), dtype=jnp.float32)
    x_cond = jax.random.normal(k_cond, (BATCH, INPUT_DIM), dtype=jnp.float32)

    out = jax.block_until_ready(transformer_encoder(x, x_cond, packed))
    ref = _reference(x, x_cond, layer_params)

    assert out.shape == (BATCH, SEQ, INPUT_DIM)
    assert jnp.allclose(out, ref, atol=1e-3, rtol=1e-3), \
        float(jnp.max(jnp.abs(out - ref)))
    print("KERNEL_OK")
</pallas_src>

<mosaic_0001>
module attributes {stable_mosaic.version = 11 : i64} {
  func.func @_encoder_kernel(%arg0: memref<16x32xf32, #tpu.memory_space<vmem>>, %arg1: memref<2x32xf32, #tpu.memory_space<vmem>>, %arg2: memref<16x16xf32, #tpu.memory_space<vmem>>, %arg3: memref<2x32x192xf32, #tpu.memory_space<vmem>>, %arg4: memref<2x1x192xf32, #tpu.memory_space<vmem>>, %arg5: memref<12x32x32xf32, #tpu.memory_space<vmem>>, %arg6: memref<12x1x32xf32, #tpu.memory_space<vmem>>, %arg7: memref<2x1x32xf32, #tpu.memory_space<vmem>>, %arg8: memref<2x1x32xf32, #tpu.memory_space<vmem>>, %arg9: memref<2x1x32xf32, #tpu.memory_space<vmem>>, %arg10: memref<2x1x32xf32, #tpu.memory_space<vmem>>, %arg11: memref<8x32x8xf32, #tpu.memory_space<vmem>>, %arg12: memref<8x32x8xf32, #tpu.memory_space<vmem>>, %arg13: memref<8x32x8xf32, #tpu.memory_space<vmem>>, %arg14: memref<8x1x8xf32, #tpu.memory_space<vmem>>, %arg15: memref<8x1x8xf32, #tpu.memory_space<vmem>>, %arg16: memref<8x1x8xf32, #tpu.memory_space<vmem>>, %arg17: memref<8x8x32xf32, #tpu.memory_space<vmem>>, %arg18: memref<2x1x32xf32, #tpu.memory_space<vmem>>, %arg19: memref<2x32x64xf32, #tpu.memory_space<vmem>>, %arg20: memref<2x1x64xf32, #tpu.memory_space<vmem>>, %arg21: memref<2x64x32xf32, #tpu.memory_space<vmem>>, %arg22: memref<2x1x32xf32, #tpu.memory_space<vmem>>, %arg23: memref<16x32xf32, #tpu.memory_space<vmem>>) attributes {dimension_semantics = [], scalar_prefetch = 0 : i64, scratch_operands = 0 : i64, tpu.core_type = #tpu.core_type<tc>} {
    %c0 = arith.constant 0 : index
    %c0_0 = arith.constant 0 : index
    %0 = vector.load %arg0[%c0, %c0_0] : memref<16x32xf32, #tpu.memory_space<vmem>>, vector<16x32xf32>
    %c0_1 = arith.constant 0 : index
    %c0_2 = arith.constant 0 : index
    %1 = vector.load %arg1[%c0_1, %c0_2] : memref<2x32xf32, #tpu.memory_space<vmem>>, vector<2x32xf32>
    %c0_3 = arith.constant 0 : index
    %c0_4 = arith.constant 0 : index
    %2 = vector.load %arg2[%c0_3, %c0_4] : memref<16x16xf32, #tpu.memory_space<vmem>>, vector<16x16xf32>
    %c0_5 = arith.constant 0 : index
    %c0_6 = arith.constant 0 : index
    %c0_7 = arith.constant 0 : index
    %3 = vector.load %arg3[%c0_5, %c0_6, %c0_7] : memref<2x32x192xf32, #tpu.memory_space<vmem>>, vector<1x32x192xf32>
    %4 = vector.shape_cast %3 : vector<1x32x192xf32> to vector<32x192xf32>
    %cst = arith.constant dense<0.000000e+00> : vector<2x192xf32>
    %5 = tpu.matmul %1, %4, %cst {dimension_numbers = #tpu.dot_dimension_numbers<[1], [0], [0], [1], [0, 0, 1, 1], [], []>} : vector<2x32xf32>, vector<32x192xf32>, vector<2x192xf32> -> vector<2x192xf32>
    %c0_8 = arith.constant 0 : index
    %c0_9 = arith.constant 0 : index
    %c0_10 = arith.constant 0 : index
    %6 = vector.load %arg4[%c0_8, %c0_9, %c0_10] : memref<2x1x192xf32, #tpu.memory_space<vmem>>, vector<1x1x192xf32>
    %7 = vector.shape_cast %6 : vector<1x1x192xf32> to vector<1x192xf32>
    %8 = vector.broadcast %7 : vector<1x192xf32> to vector<2x192xf32>
    %9 = arith.addf %5, %8 : vector<2x192xf32>
    %cst_11 = arith.constant 5.000000e-01 : f32
    %10 = vector.broadcast %cst_11 : f32 to vector<2x192xf32>
    %11 = arith.mulf %10, %9 : vector<2x192xf32>
    %cst_12 = arith.constant 0.707106769 : f32
    %12 = vector.broadcast %cst_12 : f32 to vector<2x192xf32>
    %13 = arith.mulf %9, %12 : vector<2x192xf32>
    %cst_13 = arith.constant 0.000000e+00 : f32
    %14 = vector.broadcast %cst_13 : f32 to vector<2x192xf32>
    %15 = arith.cmpf olt, %13, %14 : vector<2x192xf32>
    %cst_14 = arith.constant -1.000000e+00 : f32
    %cst_15 = arith.constant 1.000000e+00 : f32
    %16 = vector.broadcast %cst_14 : f32 to vector<2x192xf32>
    %17 = vector.broadcast %cst_15 : f32 to vector<2x192xf32>
    %18 = arith.select %15, %16, %17 : vector<2x192xi1>, vector<2x192xf32>
    %19 = arith.mulf %13, %18 : vector<2x192xf32>
    %cst_16 = arith.constant 0.327591091 : f32
    %20 = vector.broadcast %cst_16 : f32 to vector<2x192xf32>
    %21 = arith.mulf %20, %19 : vector<2x192xf32>
    %cst_17 = arith.constant 1.000000e+00 : f32
    %22 = vector.broadcast %cst_17 : f32 to vector<2x192xf32>
    %23 = arith.addf %22, %21 : vector<2x192xf32>
    %24 = tpu.reciprocal %23 {approx = true} : vector<2x192xf32> -> vector<2x192xf32>
    %25 = arith.mulf %23, %24 : vector<2x192xf32>
    %cst_18 = arith.constant 2.000000e+00 : f32
    %26 = vector.broadcast %cst_18 : f32 to vector<2x192xf32>
    %27 = arith.subf %26, %25 : vector<2x192xf32>
    %28 = arith.mulf %24, %27 : vector<2x192xf32>
    %cst_19 = arith.constant 1.06140542 : f32
    %29 = vector.broadcast %cst_19 : f32 to vector<2x192xf32>
    %30 = arith.mulf %29, %28 : vector<2x192xf32>
    %cst_20 = arith.constant -1.45315206 : f32
    %31 = vector.broadcast %cst_20 : f32 to vector<2x192xf32>
    %32 = arith.addf %30, %31 : vector<2x192xf32>
    %33 = arith.mulf %32, %28 : vector<2x192xf32>
    %cst_21 = arith.constant 1.42141378 : f32
    %34 = vector.broadcast %cst_21 : f32 to vector<2x192xf32>
    %35 = arith.addf %33, %34 : vector<2x192xf32>
    %36 = arith.mulf %35, %28 : vector<2x192xf32>
    %cst_22 = arith.constant -0.284496725 : f32
    %37 = vector.broadcast %cst_22 : f32 to vector<2x192xf32>
    %38 = arith.addf %36, %37 : vector<2x192xf32>
    %39 = arith.mulf %38, %28 : vector<2x192xf32>
    %cst_23 = arith.constant 0.254829586 : f32
    %40 = vector.broadcast %cst_23 : f32 to vector<2x192xf32>
    %41 = arith.addf %39, %40 : vector<2x192xf32>
    %42 = arith.mulf %41, %28 : vector<2x192xf32>
    %cst_24 = arith.constant 0.000000e+00 : f32
    %43 = vector.broadcast %cst_24 : f32 to vector<2x192xf32>
    %44 = arith.subf %43, %19 : vector<2x192xf32>
    %45 = arith.mulf %44, %19 : vector<2x192xf32>
    %46 = math.exp %45 : vector<2x192xf32>
    %47 = arith.mulf %42, %46 : vector<2x192xf32>
    %cst_25 = arith.constant 1.000000e+00 : f32
    %48 = vector.broadcast %cst_25 : f32 to vector<2x192xf32>
    %49 = arith.subf %48, %47 : vector<2x192xf32>
    %50 = arith.mulf %18, %49 : vector<2x192xf32>
    %cst_26 = arith.constant 1.000000e+00 : f32
    %51 = vector.broadcast %cst_26 : f32 to vector<2x192xf32>
    %52 = arith.addf %51, %50 : vector<2x192xf32>
    %53 = arith.mulf %11, %52 : vector<2x192xf32>
    %54 = vector.extract_strided_slice %53 {offsets = [0, 0], sizes = [2, 32], strides = [1, 1]} : vector<2x192xf32> to vector<2x32xf32>
    %c0_27 = arith.constant 0 : index
    %c0_28 = arith.constant 0 : index
    %c0_29 = arith.constant 0 : index
    %55 = vector.load %arg5[%c0_27, %c0_28, %c0_29] : memref<12x32x32xf32, #tpu.memory_space<vmem>>, vector<1x32x32xf32>
    %56 = vector.shape_cast %55 : vector<1x32x32xf32> to vector<32x32xf32>
    %cst_30 = arith.constant dense<0.000000e+00> : vector<2x32xf32>
    %57 = tpu.matmul %54, %56, %cst_30 {dimension_numbers = #tpu.dot_dimension_numbers<[1], [0], [0], [1], [0, 0, 1, 1], [], []>} : vector<2x32xf32>, vector<32x32xf32>, vector<2x32xf32> -> vector<2x32xf32>
    %c0_31 = arith.constant 0 : index
    %c0_32 = arith.constant 0 : index
    %c0_33 = arith.constant 0 : index
    %58 = vector.load %arg6[%c0_31, %c0_32, %c0_33] : memref<12x1x32xf32, #tpu.memory_space<vmem>>, vector<1x1x32xf32>
    %59 = vector.shape_cast %58 : vector<1x1x32xf32> to vector<1x32xf32>
    %60 = vector.broadcast %59 : vector<1x32xf32> to vector<2x32xf32>
    %61 = arith.addf %57, %60 : vector<2x32xf32>
    %62 = vector.shape_cast %61 : vector<2x32xf32> to vector<2x1x32xf32>
    %63 = vector.shape_cast %62 : vector<2x1x32xf32> to vector<2x1x32xf32>
    %64 = vector.broadcast %63 : vector<2x1x32xf32> to vector<2x8x32xf32>
    %65 = vector.shape_cast %64 : vector<2x8x32xf32> to vector<16x32xf32>
    %66 = vector.extract_strided_slice %53 {offsets = [0, 32], sizes = [2, 32], strides = [1, 1]} : vector<2x192xf32> to vector<2x32xf32>
    %c1 = arith.constant 1 : index
    %c0_34 = arith.constant 0 : index
    %c0_35 = arith.constant 0 : index
    %67 = vector.load %arg5[%c1, %c0_34, %c0_35] : memref<12x32x32xf32, #tpu.memory_space<vmem>>, vector<1x32x32xf32>
    %68 = vector.shape_cast %67 : vector<1x32x32xf32> to vector<32x32xf32>
    %cst_36 = arith.constant dense<0.000000e+00> : vector<2x32xf32>
    %69 = tpu.matmul %66, %68, %cst_36 {dimension_numbers = #tpu.dot_dimension_numbers<[1], [0], [0], [1], [0, 0, 1, 1], [], []>} : vector<2x32xf32>, vector<32x32xf32>, vector<2x32xf32> -> vector<2x32xf32>
    %c1_37 = arith.constant 1 : index
    %c0_38 = arith.constant 0 : index
    %c0_39 = arith.constant 0 : index
    %70 = vector.load %arg6[%c1_37, %c0_38, %c0_39] : memref<12x1x32xf32, #tpu.memory_space<vmem>>, vector<1x1x32xf32>
    %71 = vector.shape_cast %70 : vector<1x1x32xf32> to vector<1x32xf32>
    %72 = vector.broadcast %71 : vector<1x32xf32> to vector<2x32xf32>
    %73 = arith.addf %69, %72 : vector<2x32xf32>
    %74 = vector.shape_cast %73 : vector<2x32xf32> to vector<2x1x32xf32>
    %75 = vector.shape_cast %74 : vector<2x1x32xf32> to vector<2x1x32xf32>
    %76 = vector.broadcast %75 : vector<2x1x32xf32> to vector<2x8x32xf32>
    %77 = vector.shape_cast %76 : vector<2x8x32xf32> to vector<16x32xf32>
    %78 = vector.extract_strided_slice %53 {offsets = [0, 64], sizes = [2, 32], strides = [1, 1]} : vector<2x192xf32> to vector<2x32xf32>
    %c2 = arith.constant 2 : index
    %c0_40 = arith.constant 0 : index
    %c0_41 = arith.constant 0 : index
    %79 = vector.load %arg5[%c2, %c0_40, %c0_41] : memref<12x32x32xf32, #tpu.memory_space<vmem>>, vector<1x32x32xf32>
    %80 = vector.shape_cast %79 : vector<1x32x32xf32> to vector<32x32xf32>
    %cst_42 = arith.constant dense<0.000000e+00> : vector<2x32xf32>
    %81 = tpu.matmul %78, %80, %cst_42 {dimension_numbers = #tpu.dot_dimension_numbers<[1], [0], [0], [1], [0, 0, 1, 1], [], []>} : vector<2x32xf32>, vector<32x32xf32>, vector<2x32xf32> -> vector<2x32xf32>
    %c2_43 = arith.constant 2 : index
    %c0_44 = arith.constant 0 : index
    %c0_45 = arith.constant 0 : index
    %82 = vector.load %arg6[%c2_43, %c0_44, %c0_45] : memref<12x1x32xf32, #tpu.memory_space<vmem>>, vector<1x1x32xf32>
    %83 = vector.shape_cast %82 : vector<1x1x32xf32> to vector<1x32xf32>
    %84 = vector.broadcast %83 : vector<1x32xf32> to vector<2x32xf32>
    %85 = arith.addf %81, %84 : vector<2x32xf32>
    %86 = vector.shape_cast %85 : vector<2x32xf32> to vector<2x1x32xf32>
    %87 = vector.shape_cast %86 : vector<2x1x32xf32> to vector<2x1x32xf32>
    %88 = vector.broadcast %87 : vector<2x1x32xf32> to vector<2x8x32xf32>
    %89 = vector.shape_cast %88 : vector<2x8x32xf32> to vector<16x32xf32>
    %90 = vector.extract_strided_slice %53 {offsets = [0, 96], sizes = [2, 32], strides = [1, 1]} : vector<2x192xf32> to vector<2x32xf32>
    %c3 = arith.constant 3 : index
    %c0_46 = arith.constant 0 : index
    %c0_47 = arith.constant 0 : index
    %91 = vector.load %arg5[%c3, %c0_46, %c0_47] : memref<12x32x32xf32, #tpu.memory_space<vmem>>, vector<1x32x32xf32>
    %92 = vector.shape_cast %91 : vector<1x32x32xf32> to vector<32x32xf32>
    %cst_48 = arith.constant dense<0.000000e+00> : vector<2x32xf32>
    %93 = tpu.matmul %90, %92, %cst_48 {dimension_numbers = #tpu.dot_dimension_numbers<[1], [0], [0], [1], [0, 0, 1, 1], [], []>} : vector<2x32xf32>, vector<32x32xf32>, vector<2x32xf32> -> vector<2x32xf32>
    %c3_49 = arith.constant 3 : index
    %c0_50 = arith.constant 0 : index
    %c0_51 = arith.constant 0 : index
    %94 = vector.load %arg6[%c3_49, %c0_50, %c0_51] : memref<12x1x32xf32, #tpu.memory_space<vmem>>, vector<1x1x32xf32>
    %95 = vector.shape_cast %94 : vector<1x1x32xf32> to vector<1x32xf32>
    %96 = vector.broadcast %95 : vector<1x32xf32> to vector<2x32xf32>
    %97 = arith.addf %93, %96 : vector<2x32xf32>
    %98 = vector.shape_cast %97 : vector<2x32xf32> to vector<2x1x32xf32>
    %99 = vector.shape_cast %98 : vector<2x1x32xf32> to vector<2x1x32xf32>
    %100 = vector.broadcast %99 : vector<2x1x32xf32> to vector<2x8x32xf32>
    %101 = vector.shape_cast %100 : vector<2x8x32xf32> to vector<16x32xf32>
    %102 = vector.extract_strided_slice %53 {offsets = [0, 128], sizes = [2, 32], strides = [1, 1]} : vector<2x192xf32> to vector<2x32xf32>
    %c4 = arith.constant 4 : index
    %c0_52 = arith.constant 0 : index
    %c0_53 = arith.constant 0 : index
    %103 = vector.load %arg5[%c4, %c0_52, %c0_53] : memref<12x32x32xf32, #tpu.memory_space<vmem>>, vector<1x32x32xf32>
    %104 = vector.shape_cast %103 : vector<1x32x32xf32> to vector<32x32xf32>
    %cst_54 = arith.constant dense<0.000000e+00> : vector<2x32xf32>
    %105 = tpu.matmul %102, %104, %cst_54 {dimension_numbers = #tpu.dot_dimension_numbers<[1], [0], [0], [1], [0, 0, 1, 1], [], []>} : vector<2x32xf32>, vector<32x32xf32>, vector<2x32xf32> -> vector<2x32xf32>
    %c4_55 = arith.constant 4 : index
    %c0_56 = arith.constant 0 : index
    %c0_57 = arith.constant 0 : index
    %106 = vector.load %arg6[%c4_55, %c0_56, %c0_57] : memref<12x1x32xf32, #tpu.memory_space<vmem>>, vector<1x1x32xf32>
    %107 = vector.shape_cast %106 : vector<1x1x32xf32> to vector<1x32xf32>
    %108 = vector.broadcast %107 : vector<1x32xf32> to vector<2x32xf32>
    %109 = arith.addf %105, %108 : vector<2x32xf32>
    %110 = vector.shape_cast %109 : vector<2x32xf32> to vector<2x1x32xf32>
    %111 = vector.shape_cast %110 : vector<2x1x32xf32> to vector<2x1x32xf32>
    %112 = vector.broadcast %111 : vector<2x1x32xf32> to vector<2x8x32xf32>
    %113 = vector.shape_cast %112 : vector<2x8x32xf32> to vector<16x32xf32>
    %114 = vector.extract_strided_slice %53 {offsets = [0, 160], sizes = [2, 32], strides = [1, 1]} : vector<2x192xf32> to vector<2x32xf32>
    %c5 = arith.constant 5 : index
    %c0_58 = arith.constant 0 : index
    %c0_59 = arith.constant 0 : index
    %115 = vector.load %arg5[%c5, %c0_58, %c0_59] : memref<12x32x32xf32, #tpu.memory_space<vmem>>, vector<1x32x32xf32>
    %116 = vector.shape_cast %115 : vector<1x32x32xf32> to vector<32x32xf32>
    %cst_60 = arith.constant dense<0.000000e+00> : vector<2x32xf32>
    %117 = tpu.matmul %114, %116, %cst_60 {dimension_numbers = #tpu.dot_dimension_numbers<[1], [0], [0], [1], [0, 0, 1, 1], [], []>} : vector<2x32xf32>, vector<32x32xf32>, vector<2x32xf32> -> vector<2x32xf32>
    %c5_61 = arith.constant 5 : index
    %c0_62 = arith.constant 0 : index
    %c0_63 = arith.constant 0 : index
    %118 = vector.load %arg6[%c5_61, %c0_62, %c0_63] : memref<12x1x32xf32, #tpu.memory_space<vmem>>, vector<1x1x32xf32>
    %119 = vector.shape_cast %118 : vector<1x1x32xf32> to vector<1x32xf32>
    %120 = vector.broadcast %119 : vector<1x32xf32> to vector<2x32xf32>
    %121 = arith.addf %117, %120 : vector<2x32xf32>
    %122 = vector.shape_cast %121 : vector<2x32xf32> to vector<2x1x32xf32>
    %123 = vector.shape_cast %122 : vector<2x1x32xf32> to vector<2x1x32xf32>
    %124 = vector.broadcast %123 : vector<2x1x32xf32> to vector<2x8x32xf32>
    %125 = vector.shape_cast %124 : vector<2x8x32xf32> to vector<16x32xf32>
    %c0_64 = arith.constant 0 : index
    %c0_65 = arith.constant 0 : index
    %c0_66 = arith.constant 0 : index
    %126 = vector.load %arg7[%c0_64, %c0_65, %c0_66] : memref<2x1x32xf32, #tpu.memory_space<vmem>>, vector<1x1x32xf32>
    %127 = vector.shape_cast %126 : vector<1x1x32xf32> to vector<1x32xf32>
    %c0_67 = arith.constant 0 : index
    %c0_68 = arith.constant 0 : index
    %c0_69 = arith.constant 0 : index
    %128 = vector.load %arg8[%c0_67, %c0_68, %c0_69] : memref<2x1x32xf32, #tpu.memory_space<vmem>>, vector<1x1x32xf32>
    %129 = vector.shape_cast %128 : vector<1x1x32xf32> to vector<1x32xf32>
    %cst_70 = arith.constant dense<0.000000e+00> : vector<16xf32>
    %130 = vector.multi_reduction <add>, %0, %cst_70 [1] : vector<16x32xf32> to vector<16xf32>
    %131 = vector.shape_cast %130 : vector<16xf32> to vector<16x1xf32>
    %cst_71 = arith.constant 3.200000e+01 : f32
    %132 = vector.broadcast %cst_71 : f32 to vector<16x1xf32>
    %133 = arith.divf %131, %132 : vector<16x1xf32>
    %134 = vector.broadcast %133 : vector<16x1xf32> to vector<16x32xf32>
    %135 = arith.subf %0, %134 : vector<16x32xf32>
    %136 = arith.mulf %135, %135 : vector<16x32xf32>
    %cst_72 = arith.constant dense<0.000000e+00> : vector<16xf32>
    %137 = vector.multi_reduction <add>, %136, %cst_72 [1] : vector<16x32xf32> to vector<16xf32>
    %138 = vector.shape_cast %137 : vector<16xf32> to vector<16x1xf32>
    %cst_73 = arith.constant 3.200000e+01 : f32
    %139 = vector.broadcast %cst_73 : f32 to vector<16x1xf32>
    %140 = arith.divf %138, %139 : vector<16x1xf32>
    %cst_74 = arith.constant 9.99999974E-6 : f32
    %141 = vector.broadcast %cst_74 : f32 to vector<16x1xf32>
    %142 = arith.addf %140, %141 : vector<16x1xf32>
    %143 = math.rsqrt %142 : vector<16x1xf32>
    %144 = vector.broadcast %143 : vector<16x1xf32> to vector<16x32xf32>
    %145 = arith.mulf %135, %144 : vector<16x32xf32>
    %146 = vector.broadcast %127 : vector<1x32xf32> to vector<16x32xf32>
    %147 = arith.mulf %145, %146 : vector<16x32xf32>
    %148 = vector.broadcast %129 : vector<1x32xf32> to vector<16x32xf32>
    %149 = arith.addf %147, %148 : vector<16x32xf32>
    %150 = arith.mulf %149, %65 : vector<16x32xf32>
    %151 = arith.addf %150, %89 : vector<16x32xf32>
    %cst_75 = arith.constant 0.000000e+00 : f32
    %152 = vector.broadcast %cst_75 : f32 to vector<16x32xf32>
    %c0_76 = arith.constant 0 : index
    %c0_77 = arith.constant 0 : index
    %c0_78 = arith.constant 0 : index
    %153 = vector.load %arg11[%c0_76, %c0_77, %c0_78] : memref<8x32x8xf32, #tpu.memory_space<vmem>>, vector<1x32x8xf32>
    %154 = vector.shape_cast %153 : vector<1x32x8xf32> to vector<32x8xf32>
    %cst_79 = arith.constant dense<0.000000e+00> : vector<16x8xf32>
    %155 = tpu.matmul %151, %154, %cst_79 {dimension_numbers = #tpu.dot_dimension_numbers<[1], [0], [0], [1], [0, 0, 1, 1], [], []>} : vector<16x32xf32>, vector<32x8xf32>, vector<16x8xf32> -> vector<16x8xf32>
    %c0_80 = arith.constant 0 : index
    %c0_81 = arith.constant 0 : index
    %c0_82 = arith.constant 0 : index
    %156 = vector.load %arg14[%c0_80, %c0_81, %c0_82] : memref<8x1x8xf32, #tpu.memory_space<vmem>>, vector<1x1x8xf32>
    %157 = vector.shape_cast %156 : vector<1x1x8xf32> to vector<1x8xf32>
    %158 = vector.broadcast %157 : vector<1x8xf32> to vector<16x8xf32>
    %159 = arith.addf %155, %158 : vector<16x8xf32>
    %c0_83 = arith.constant 0 : index
    %c0_84 = arith.constant 0 : index
    %c0_85 = arith.constant 0 : index
    %160 = vector.load %arg12[%c0_83, %c0_84, %c0_85] : memref<8x32x8xf32, #tpu.memory_space<vmem>>, vector<1x32x8xf32>
    %161 = vector.shape_cast %160 : vector<1x32x8xf32> to vector<32x8xf32>
    %cst_86 = arith.constant dense<0.000000e+00> : vector<16x8xf32>
    %162 = tpu.matmul %151, %161, %cst_86 {dimension_numbers = #tpu.dot_dimension_numbers<[1], [0], [0], [1], [0, 0, 1, 1], [], []>} : vector<16x32xf32>, vector<32x8xf32>, vector<16x8xf32> -> vector<16x8xf32>
    %c0_87 = arith.constant 0 : index
    %c0_88 = arith.constant 0 : index
    %c0_89 = arith.constant 0 : index
    %163 = vector.load %arg15[%c0_87, %c0_88, %c0_89] : memref<8x1x8xf32, #tpu.memory_space<vmem>>, vector<1x1x8xf32>
    %164 = vector.shape_cast %163 : vector<1x1x8xf32> to vector<1x8xf32>
    %165 = vector.broadcast %164 : vector<1x8xf32> to vector<16x8xf32>
    %166 = arith.addf %162, %165 : vector<16x8xf32>
    %c0_90 = arith.constant 0 : index
    %c0_91 = arith.constant 0 : index
    %c0_92 = arith.constant 0 : index
    %167 = vector.load %arg13[%c0_90, %c0_91, %c0_92] : memref<8x32x8xf32, #tpu.memory_space<vmem>>, vector<1x32x8xf32>
    %168 = vector.shape_cast %167 : vector<1x32x8xf32> to vector<32x8xf32>
    %cst_93 = arith.constant dense<0.000000e+00> : vector<16x8xf32>
    %169 = tpu.matmul %151, %168, %cst_93 {dimension_numbers = #tpu.dot_dimension_numbers<[1], [0], [0], [1], [0, 0, 1, 1], [], []>} : vector<16x32xf32>, vector<32x8xf32>, vector<16x8xf32> -> vector<16x8xf32>
    %c0_94 = arith.constant 0 : index
    %c0_95 = arith.constant 0 : index
    %c0_96 = arith.constant 0 : index
    %170 = vector.load %arg16[%c0_94, %c0_95, %c0_96] : memref<8x1x8xf32, #tpu.memory_space<vmem>>, vector<1x1x8xf32>
    %171 = vector.shape_cast %170 : vector<1x1x8xf32> to vector<1x8xf32>
    %172 = vector.broadcast %171 : vector<1x8xf32> to vector<16x8xf32>
    %173 = arith.addf %169, %172 : vector<16x8xf32>
    %174 = tpu.transpose %166, [1, 0] : vector<16x8xf32> -> vector<8x16xf32>
    %cst_97 = arith.constant dense<0.000000e+00> : vector<16x16xf32>
    %175 = tpu.matmul %159, %174, %cst_97 {dimension_numbers = #tpu.dot_dimension_numbers<[1], [0], [0], [1], [0, 0, 1, 1], [], []>} : vector<16x8xf32>, vector<8x16xf32>, vector<16x16xf32> -> vector<16x16xf32>
    %cst_98 = arith.constant 0.353553385 : f32
    %176 = vector.broadcast %cst_98 : f32 to vector<16x16xf32>
    %177 = arith.mulf %175, %176 : vector<16x16xf32>
    %178 = arith.addf %177, %2 : vector<16x16xf32>
    %cst_99 = arith.constant dense<0xFF800000> : vector<16xf32>
    %179 = vector.multi_reduction <maximumf>, %178, %cst_99 [1] : vector<16x16xf32> to vector<16xf32>
    %180 = vector.shape_cast %179 : vector<16xf32> to vector<16x1xf32>
    %181 = vector.broadcast %180 : vector<16x1xf32> to vector<16x16xf32>
    %182 = arith.subf %178, %181 : vector<16x16xf32>
    %183 = math.exp %182 : vector<16x16xf32>
    %cst_100 = arith.constant dense<0.000000e+00> : vector<16xf32>
    %184 = vector.multi_reduction <add>, %183, %cst_100 [1] : vector<16x16xf32> to vector<16xf32>
    %185 = vector.shape_cast %184 : vector<16xf32> to vector<16x1xf32>
    %186 = tpu.reciprocal %185 {approx = true} : vector<16x1xf32> -> vector<16x1xf32>
    %187 = arith.mulf %185, %186 : vector<16x1xf32>
    %cst_101 = arith.constant 2.000000e+00 : f32
    %188 = vector.broadcast %cst_101 : f32 to vector<16x1xf32>
    %189 = arith.subf %188, %187 : vector<16x1xf32>
    %190 = arith.mulf %186, %189 : vector<16x1xf32>
    %191 = vector.broadcast %190 : vector<16x1xf32> to vector<16x16xf32>
    %192 = arith.mulf %183, %191 : vector<16x16xf32>
    %cst_102 = arith.constant dense<0.000000e+00> : vector<16x8xf32>
    %193 = tpu.matmul %192, %173, %cst_102 {dimension_numbers = #tpu.dot_dimension_numbers<[1], [0], [0], [1], [0, 0, 1, 1], [], []>} : vector<16x16xf32>, vector<16x8xf32>, vector<16x8xf32> -> vector<16x8xf32>
    %c0_103 = arith.constant 0 : index
    %c0_104 = arith.constant 0 : index
    %c0_105 = arith.constant 0 : index
    %194 = vector.load %arg17[%c0_103, %c0_104, %c0_105] : memref<8x8x32xf32, #tpu.memory_space<vmem>>, vector<1x8x32xf32>
    %195 = vector.shape_cast %194 : vector<1x8x32xf32> to vector<8x32xf32>
    %cst_106 = arith.constant dense<0.000000e+00> : vector<16x32xf32>
    %196 = tpu.matmul %193, %195, %cst_106 {dimension_numbers = #tpu.dot_dimension_numbers<[1], [0], [0], [1], [0, 0, 1, 1], [], []>} : vector<16x8xf32>, vector<8x32xf32>, vector<16x32xf32> -> vector<16x32xf32>
    %197 = arith.addf %152, %196 : vector<16x32xf32>
    %c1_107 = arith.constant 1 : index
    %c0_108 = arith.constant 0 : index
    %c0_109 = arith.constant 0 : index
    %198 = vector.load %arg11[%c1_107, %c0_108, %c0_109] : memref<8x32x8xf32, #tpu.memory_space<vmem>>, vector<1x32x8xf32>
    %199 = vector.shape_cast %198 : vector<1x32x8xf32> to vector<32x8xf32>
    %cst_110 = arith.constant dense<0.000000e+00> : vector<16x8xf32>
    %200 = tpu.matmul %151, %199, %cst_110 {dimension_numbers = #tpu.dot_dimension_numbers<[1], [0], [0], [1], [0, 0, 1, 1], [], []>} : vector<16x32xf32>, vector<32x8xf32>, vector<16x8xf32> -> vector<16x8xf32>
    %c1_111 = arith.constant 1 : index
    %c0_112 = arith.constant 0 : index
    %c0_113 = arith.constant 0 : index
    %201 = vector.load %arg14[%c1_111, %c0_112, %c0_113] : memref<8x1x8xf32, #tpu.memory_space<vmem>>, vector<1x1x8xf32>
    %202 = vector.shape_cast %201 : vector<1x1x8xf32> to vector<1x8xf32>
    %203 = vector.broadcast %202 : vector<1x8xf32> to vector<16x8xf32>
    %204 = arith.addf %200, %203 : vector<16x8xf32>
    %c1_114 = arith.constant 1 : index
    %c0_115 = arith.constant 0 : index
    %c0_116 = arith.constant 0 : index
    %205 = vector.load %arg12[%c1_114, %c0_115, %c0_116] : memref<8x32x8xf32, #tpu.memory_space<vmem>>, vector<1x32x8xf32>
    %206 = vector.shape_cast %205 : vector<1x32x8xf32> to vector<32x8xf32>
    %cst_117 = arith.constant dense<0.000000e+00> : vector<16x8xf32>
    %207 = tpu.matmul %151, %206, %cst_117 {dimension_numbers = #tpu.dot_dimension_numbers<[1], [0], [0], [1], [0, 0, 1, 1], [], []>} : vector<16x32xf32>, vector<32x8xf32>, vector<16x8xf32> -> vector<16x8xf32>
    %c1_118 = arith.constant 1 : index
    %c0_119 = arith.constant 0 : index
    %c0_120 = arith.constant 0 : index
    %208 = vector.load %arg15[%c1_118, %c0_119, %c0_120] : memref<8x1x8xf32, #tpu.memory_space<vmem>>, vector<1x1x8xf32>
    %209 = vector.shape_cast %208 : vector<1x1x8xf32> to vector<1x8xf32>
    %210 = vector.broadcast %209 : vector<1x8xf32> to vector<16x8xf32>
    %211 = arith.addf %207, %210 : vector<16x8xf32>
    %c1_121 = arith.constant 1 : index
    %c0_122 = arith.constant 0 : index
    %c0_123 = arith.constant 0 : index
    %212 = vector.load %arg13[%c1_121, %c0_122, %c0_123] : memref<8x32x8xf32, #tpu.memory_space<vmem>>, vector<1x32x8xf32>
    %213 = vector.shape_cast %212 : vector<1x32x8xf32> to vector<32x8xf32>
    %cst_124 = arith.constant dense<0.000000e+00> : vector<16x8xf32>
    %214 = tpu.matmul %151, %213, %cst_124 {dimension_numbers = #tpu.dot_dimension_numbers<[1], [0], [0], [1], [0, 0, 1, 1], [], []>} : vector<16x32xf32>, vector<32x8xf32>, vector<16x8xf32> -> vector<16x8xf32>
    %c1_125 = arith.constant 1 : index
    %c0_126 = arith.constant 0 : index
    %c0_127 = arith.constant 0 : index
    %215 = vector.load %arg16[%c1_125, %c0_126, %c0_127] : memref<8x1x8xf32, #tpu.memory_space<vmem>>, vector<1x1x8xf32>
    %216 = vector.shape_cast %215 : vector<1x1x8xf32> to vector<1x8xf32>
    %217 = vector.broadcast %216 : vector<1x8xf32> to vector<16x8xf32>
    %218 = arith.addf %214, %217 : vector<16x8xf32>
    %219 = tpu.transpose %211, [1, 0] : vector<16x8xf32> -> vector<8x16xf32>
    %cst_128 = arith.constant dense<0.000000e+00> : vector<16x16xf32>
    %220 = tpu.matmul %204, %219, %cst_128 {dimension_numbers = #tpu.dot_dimension_numbers<[1], [0], [0], [1], [0, 0, 1, 1], [], []>} : vector<16x8xf32>, vector<8x16xf32>, vector<16x16xf32> -> vector<16x16xf32>
    %cst_129 = arith.constant 0.353553385 : f32
    %221 = vector.broadcast %cst_129 : f32 to vector<16x16xf32>
    %222 = arith.mulf %220, %221 : vector<16x16xf32>
    %223 = arith.addf %222, %2 : vector<16x16xf32>
    %cst_130 = arith.constant dense<0xFF800000> : vector<16xf32>
    %224 = vector.multi_reduction <maximumf>, %223, %cst_130 [1] : vector<16x16xf32> to vector<16xf32>
    %225 = vector.shape_cast %224 : vector<16xf32> to vector<16x1xf32>
    %226 = vector.broadcast %225 : vector<16x1xf32> to vector<16x16xf32>
    %227 = arith.subf %223, %226 : vector<16x16xf32>
    %228 = math.exp %227 : vector<16x16xf32>
    %cst_131 = arith.constant dense<0.000000e+00> : vector<16xf32>
    %229 = vector.multi_reduction <add>, %228, %cst_131 [1] : vector<16x16xf32> to vector<16xf32>
    %230 = vector.shape_cast %229 : vector<16xf32> to vector<16x1xf32>
    %231 = tpu.reciprocal %230 {approx = true} : vector<16x1xf32> -> vector<16x1xf32>
    %232 = arith.mulf %230, %231 : vector<16x1xf32>
    %cst_132 = arith.constant 2.000000e+00 : f32
    %233 = vector.broadcast %cst_132 : f32 to vector<16x1xf32>
    %234 = arith.subf %233, %232 : vector<16x1xf32>
    %235 = arith.mulf %231, %234 : vector<16x1xf32>
    %236 = vector.broadcast %235 : vector<16x1xf32> to vector<16x16xf32>
    %237 = arith.mulf %228, %236 : vector<16x16xf32>
    %cst_133 = arith.constant dense<0.000000e+00> : vector<16x8xf32>
    %238 = tpu.matmul %237, %218, %cst_133 {dimension_numbers = #tpu.dot_dimension_numbers<[1], [0], [0], [1], [0, 0, 1, 1], [], []>} : vector<16x16xf32>, vector<16x8xf32>, vector<16x8xf32> -> vector<16x8xf32>
    %c1_134 = arith.constant 1 : index
    %c0_135 = arith.constant 0 : index
    %c0_136 = arith.constant 0 : index
    %239 = vector.load %arg17[%c1_134, %c0_135, %c0_136] : memref<8x8x32xf32, #tpu.memory_space<vmem>>, vector<1x8x32xf32>
    %240 = vector.shape_cast %239 : vector<1x8x32xf32> to vector<8x32xf32>
    %cst_137 = arith.constant dense<0.000000e+00> : vector<16x32xf32>
    %241 = tpu.matmul %238, %240, %cst_137 {dimension_numbers = #tpu.dot_dimension_numbers<[1], [0], [0], [1], [0, 0, 1, 1], [], []>} : vector<16x8xf32>, vector<8x32xf32>, vector<16x32xf32> -> vector<16x32xf32>
    %242 = arith.addf %197, %241 : vector<16x32xf32>
    %c2_138 = arith.constant 2 : index
    %c0_139 = arith.constant 0 : index
    %c0_140 = arith.constant 0 : index
    %243 = vector.load %arg11[%c2_138, %c0_139, %c0_140] : memref<8x32x8xf32, #tpu.memory_space<vmem>>, vector<1x32x8xf32>
    %244 = vector.shape_cast %243 : vector<1x32x8xf32> to vector<32x8xf32>
    %cst_141 = arith.constant dense<0.000000e+00> : vector<16x8xf32>
    %245 = tpu.matmul %151, %244, %cst_141 {dimension_numbers = #tpu.dot_dimension_numbers<[1], [0], [0], [1], [0, 0, 1, 1], [], []>} : vector<16x32xf32>, vector<32x8xf32>, vector<16x8xf32> -> vector<16x8xf32>
    %c2_142 = arith.constant 2 : index
    %c0_143 = arith.constant 0 : index
    %c0_144 = arith.constant 0 : index
    %246 = vector.load %arg14[%c2_142, %c0_143, %c0_144] : memref<8x1x8xf32, #tpu.memory_space<vmem>>, vector<1x1x8xf32>
    %247 = vector.shape_cast %246 : vector<1x1x8xf32> to vector<1x8xf32>
    %248 = vector.broadcast %247 : vector<1x8xf32> to vector<16x8xf32>
    %249 = arith.addf %245, %248 : vector<16x8xf32>
    %c2_145 = arith.constant 2 : index
    %c0_146 = arith.constant 0 : index
    %c0_147 = arith.constant 0 : index
    %250 = vector.load %arg12[%c2_145, %c0_146, %c0_147] : memref<8x32x8xf32, #tpu.memory_space<vmem>>, vector<1x32x8xf32>
    %251 = vector.shape_cast %250 : vector<1x32x8xf32> to vector<32x8xf32>
    %cst_148 = arith.constant dense<0.000000e+00> : vector<16x8xf32>
    %252 = tpu.matmul %151, %251, %cst_148 {dimension_numbers = #tpu.dot_dimension_numbers<[1], [0], [0], [1], [0, 0, 1, 1], [], []>} : vector<16x32xf32>, vector<32x8xf32>, vector<16x8xf32> -> vector<16x8xf32>
    %c2_149 = arith.constant 2 : index
    %c0_150 = arith.constant 0 : index
    %c0_151 = arith.constant 0 : index
    %253 = vector.load %arg15[%c2_149, %c0_150, %c0_151] : memref<8x1x8xf32, #tpu.memory_space<vmem>>, vector<1x1x8xf32>
    %254 = vector.shape_cast %253 : vector<1x1x8xf32> to vector<1x8xf32>
    %255 = vector.broadcast %254 : vector<1x8xf32> to vector<16x8xf32>
    %256 = arith.addf %252, %255 : vector<16x8xf32>
    %c2_152 = arith.constant 2 : index
    %c0_153 = arith.constant 0 : index
    %c0_154 = arith.constant 0 : index
    %257 = vector.load %arg13[%c2_152, %c0_153, %c0_154] : memref<8x32x8xf32, #tpu.memory_space<vmem>>, vector<1x32x8xf32>
    %258 = vector.shape_cast %257 : vector<1x32x8xf32> to vector<32x8xf32>
    %cst_155 = arith.constant dense<0.000000e+00> : vector<16x8xf32>
    %259 = tpu.matmul %151, %258, %cst_155 {dimension_numbers = #tpu.dot_dimension_numbers<[1], [0], [0], [1], [0, 0, 1, 1], [], []>} : vector<16x32xf32>, vector<32x8xf32>, vector<16x8xf32> -> vector<16x8xf32>
    %c2_156 = arith.constant 2 : index
    %c0_157 = arith.constant 0 : index
    %c0_158 = arith.constant 0 : index
    %260 = vector.load %arg16[%c2_156, %c0_157, %c0_158] : memref<8x1x8xf32, #tpu.memory_space<vmem>>, vector<1x1x8xf32>
    %261 = vector.shape_cast %260 : vector<1x1x8xf32> to vector<1x8xf32>
    %262 = vector.broadcast %261 : vector<1x8xf32> to vector<16x8xf32>
    %263 = arith.addf %259, %262 : vector<16x8xf32>
    %264 = tpu.transpose %256, [1, 0] : vector<16x8xf32> -> vector<8x16xf32>
    %cst_159 = arith.constant dense<0.000000e+00> : vector<16x16xf32>
    %265 = tpu.matmul %249, %264, %cst_159 {dimension_numbers = #tpu.dot_dimension_numbers<[1], [0], [0], [1], [0, 0, 1, 1], [], []>} : vector<16x8xf32>, vector<8x16xf32>, vector<16x16xf32> -> vector<16x16xf32>
    %cst_160 = arith.constant 0.353553385 : f32
    %266 = vector.broadcast %cst_160 : f32 to vector<16x16xf32>
    %267 = arith.mulf %265, %266 : vector<16x16xf32>
    %268 = arith.addf %267, %2 : vector<16x16xf32>
    %cst_161 = arith.constant dense<0xFF800000> : vector<16xf32>
    %269 = vector.multi_reduction <maximumf>, %268, %cst_161 [1] : vector<16x16xf32> to vector<16xf32>
    %270 = vector.shape_cast %269 : vector<16xf32> to vector<16x1xf32>
    %271 = vector.broadcast %270 : vector<16x1xf32> to vector<16x16xf32>
    %272 = arith.subf %268, %271 : vector<16x16xf32>
    %273 = math.exp %272 : vector<16x16xf32>
    %cst_162 = arith.constant dense<0.000000e+00> : vector<16xf32>
    %274 = vector.multi_reduction <add>, %273, %cst_162 [1] : vector<16x16xf32> to vector<16xf32>
    %275 = vector.shape_cast %274 : vector<16xf32> to vector<16x1xf32>
    %276 = tpu.reciprocal %275 {approx = true} : vector<16x1xf32> -> vector<16x1xf32>
    %277 = arith.mulf %275, %276 : vector<16x1xf32>
    %cst_163 = arith.constant 2.000000e+00 : f32
    %278 = vector.broadcast %cst_163 : f32 to vector<16x1xf32>
    %279 = arith.subf %278, %277 : vector<16x1xf32>
    %280 = arith.mulf %276, %279 : vector<16x1xf32>
    %281 = vector.broadcast %280 : vector<16x1xf32> to vector<16x16xf32>
    %282 = arith.mulf %273, %281 : vector<16x16xf32>
    %cst_164 = arith.constant dense<0.000000e+00> : vector<16x8xf32>
    %283 = tpu.matmul %282, %263, %cst_164 {dimension_numbers = #tpu.dot_dimension_numbers<[1], [0], [0], [1], [0, 0, 1, 1], [], []>} : vector<16x16xf32>, vector<16x8xf32>, vector<16x8xf32> -> vector<16x8xf32>
    %c2_165 = arith.constant 2 : index
    %c0_166 = arith.constant 0 : index
    %c0_167 = arith.constant 0 : index
    %284 = vector.load %arg17[%c2_165, %c0_166, %c0_167] : memref<8x8x32xf32, #tpu.memory_space<vmem>>, vector<1x8x32xf32>
    %285 = vector.shape_cast %284 : vector<1x8x32xf32> to vector<8x32xf32>
    %cst_168 = arith.constant dense<0.000000e+00> : vector<16x32xf32>
    %286 = tpu.matmul %283, %285, %cst_168 {dimension_numbers = #tpu.dot_dimension_numbers<[1], [0], [0], [1], [0, 0, 1, 1], [], []>} : vector<16x8xf32>, vector<8x32xf32>, vector<16x32xf32> -> vector<16x32xf32>
    %287 = arith.addf %242, %286 : vector<16x32xf32>
    %c3_169 = arith.constant 3 : index
    %c0_170 = arith.constant 0 : index
    %c0_171 = arith.constant 0 : index
    %288 = vector.load %arg11[%c3_169, %c0_170, %c0_171] : memref<8x32x8xf32, #tpu.memory_space<vmem>>, vector<1x32x8xf32>
    %289 = vector.shape_cast %288 : vector<1x32x8xf32> to vector<32x8xf32>
    %cst_172 = arith.constant dense<0.000000e+00> : vector<16x8xf32>
    %290 = tpu.matmul %151, %289, %cst_172 {dimension_numbers = #tpu.dot_dimension_numbers<[1], [0], [0], [1], [0, 0, 1, 1], [], []>} : vector<16x32xf32>, vector<32x8xf32>, vector<16x8xf32> -> vector<16x8xf32>
    %c3_173 = arith.constant 3 : index
    %c0_174 = arith.constant 0 : index
    %c0_175 = arith.constant 0 : index
    %291 = vector.load %arg14[%c3_173, %c0_174, %c0_175] : memref<8x1x8xf32, #tpu.memory_space<vmem>>, vector<1x1x8xf32>
    %292 = vector.shape_cast %291 : vector<1x1x8xf32> to vector<1x8xf32>
    %293 = vector.broadcast %292 : vector<1x8xf32> to vector<16x8xf32>
    %294 = arith.addf %290, %293 : vector<16x8xf32>
    %c3_176 = arith.constant 3 : index
    %c0_177 = arith.constant 0 : index
    %c0_178 = arith.constant 0 : index
    %295 = vector.load %arg12[%c3_176, %c0_177, %c0_178] : memref<8x32x8xf32, #tpu.memory_space<vmem>>, vector<1x32x8xf32>
    %296 = vector.shape_cast %295 : vector<1x32x8xf32> to vector<32x8xf32>
    %cst_179 = arith.constant dense<0.000000e+00> : vector<16x8xf32>
    %297 = tpu.matmul %151, %296, %cst_179 {dimension_numbers = #tpu.dot_dimension_numbers<[1], [0], [0], [1], [0, 0, 1, 1], [], []>} : vector<16x32xf32>, vector<32x8xf32>, vector<16x8xf32> -> vector<16x8xf32>
    %c3_180 = arith.constant 3 : index
    %c0_181 = arith.constant 0 : index
    %c0_182 = arith.constant 0 : index
    %298 = vector.load %arg15[%c3_180, %c0_181, %c0_182] : memref<8x1x8xf32, #tpu.memory_space<vmem>>, vector<1x1x8xf32>
    %299 = vector.shape_cast %298 : vector<1x1x8xf32> to vector<1x8xf32>
    %300 = vector.broadcast %299 : vector<1x8xf32> to vector<16x8xf32>
    %301 = arith.addf %297, %300 : vector<16x8xf32>
    %c3_183 = arith.constant 3 : index
    %c0_184 = arith.constant 0 : index
    %c0_185 = arith.constant 0 : index
    %302 = vector.load %arg13[%c3_183, %c0_184, %c0_185] : memref<8x32x8xf32, #tpu.memory_space<vmem>>, vector<1x32x8xf32>
    %303 = vector.shape_cast %302 : vector<1x32x8xf32> to vector<32x8xf32>
    %cst_186 = arith.constant dense<0.000000e+00> : vector<16x8xf32>
    %304 = tpu.matmul %151, %303, %cst_186 {dimension_numbers = #tpu.dot_dimension_numbers<[1], [0], [0], [1], [0, 0, 1, 1], [], []>} : vector<16x32xf32>, vector<32x8xf32>, vector<16x8xf32> -> vector<16x8xf32>
    %c3_187 = arith.constant 3 : index
    %c0_188 = arith.constant 0 : index
    %c0_189 = arith.constant 0 : index
    %305 = vector.load %arg16[%c3_187, %c0_188, %c0_189] : memref<8x1x8xf32, #tpu.memory_space<vmem>>, vector<1x1x8xf32>
    %306 = vector.shape_cast %305 : vector<1x1x8xf32> to vector<1x8xf32>
    %307 = vector.broadcast %306 : vector<1x8xf32> to vector<16x8xf32>
    %308 = arith.addf %304, %307 : vector<16x8xf32>
    %309 = tpu.transpose %301, [1, 0] : vector<16x8xf32> -> vector<8x16xf32>
    %cst_190 = arith.constant dense<0.000000e+00> : vector<16x16xf32>
    %310 = tpu.matmul %294, %309, %cst_190 {dimension_numbers = #tpu.dot_dimension_numbers<[1], [0], [0], [1], [0, 0, 1, 1], [], []>} : vector<16x8xf32>, vector<8x16xf32>, vector<16x16xf32> -> vector<16x16xf32>
    %cst_191 = arith.constant 0.353553385 : f32
    %311 = vector.broadcast %cst_191 : f32 to vector<16x16xf32>
    %312 = arith.mulf %310, %311 : vector<16x16xf32>
    %313 = arith.addf %312, %2 : vector<16x16xf32>
    %cst_192 = arith.constant dense<0xFF800000> : vector<16xf32>
    %314 = vector.multi_reduction <maximumf>, %313, %cst_192 [1] : vector<16x16xf32> to vector<16xf32>
    %315 = vector.shape_cast %314 : vector<16xf32> to vector<16x1xf32>
    %316 = vector.broadcast %315 : vector<16x1xf32> to vector<16x16xf32>
    %317 = arith.subf %313, %316 : vector<16x16xf32>
    %318 = math.exp %317 : vector<16x16xf32>
    %cst_193 = arith.constant dense<0.000000e+00> : vector<16xf32>
    %319 = vector.multi_reduction <add>, %318, %cst_193 [1] : vector<16x16xf32> to vector<16xf32>
    %320 = vector.shape_cast %319 : vector<16xf32> to vector<16x1xf32>
    %321 = tpu.reciprocal %320 {approx = true} : vector<16x1xf32> -> vector<16x1xf32>
    %322 = arith.mulf %320, %321 : vector<16x1xf32>
    %cst_194 = arith.constant 2.000000e+00 : f32
    %323 = vector.broadcast %cst_194 : f32 to vector<16x1xf32>
    %324 = arith.subf %323, %322 : vector<16x1xf32>
    %325 = arith.mulf %321, %324 : vector<16x1xf32>
    %326 = vector.broadcast %325 : vector<16x1xf32> to vector<16x16xf32>
    %327 = arith.mulf %318, %326 : vector<16x16xf32>
    %cst_195 = arith.constant dense<0.000000e+00> : vector<16x8xf32>
    %328 = tpu.matmul %327, %308, %cst_195 {dimension_numbers = #tpu.dot_dimension_numbers<[1], [0], [0], [1], [0, 0, 1, 1], [], []>} : vector<16x16xf32>, vector<16x8xf32>, vector<16x8xf32> -> vector<16x8xf32>
    %c3_196 = arith.constant 3 : index
    %c0_197 = arith.constant 0 : index
    %c0_198 = arith.constant 0 : index
    %329 = vector.load %arg17[%c3_196, %c0_197, %c0_198] : memref<8x8x32xf32, #tpu.memory_space<vmem>>, vector<1x8x32xf32>
    %330 = vector.shape_cast %329 : vector<1x8x32xf32> to vector<8x32xf32>
    %cst_199 = arith.constant dense<0.000000e+00> : vector<16x32xf32>
    %331 = tpu.matmul %328, %330, %cst_199 {dimension_numbers = #tpu.dot_dimension_numbers<[1], [0], [0], [1], [0, 0, 1, 1], [], []>} : vector<16x8xf32>, vector<8x32xf32>, vector<16x32xf32> -> vector<16x32xf32>
    %332 = arith.addf %287, %331 : vector<16x32xf32>
    %c0_200 = arith.constant 0 : index
    %c0_201 = arith.constant 0 : index
    %c0_202 = arith.constant 0 : index
    %333 = vector.load %arg18[%c0_200, %c0_201, %c0_202] : memref<2x1x32xf32, #tpu.memory_space<vmem>>, vector<1x1x32xf32>
    %334 = vector.shape_cast %333 : vector<1x1x32xf32> to vector<1x32xf32>
    %335 = vector.broadcast %334 : vector<1x32xf32> to vector<16x32xf32>
    %336 = arith.addf %332, %335 : vector<16x32xf32>
    %337 = arith.mulf %336, %77 : vector<16x32xf32>
    %338 = arith.addf %0, %337 : vector<16x32xf32>
    %c0_203 = arith.constant 0 : index
    %c0_204 = arith.constant 0 : index
    %c0_205 = arith.constant 0 : index
    %339 = vector.load %arg9[%c0_203, %c0_204, %c0_205] : memref<2x1x32xf32, #tpu.memory_space<vmem>>, vector<1x1x32xf32>
    %340 = vector.shape_cast %339 : vector<1x1x32xf32> to vector<1x32xf32>
    %c0_206 = arith.constant 0 : index
    %c0_207 = arith.constant 0 : index
    %c0_208 = arith.constant 0 : index
    %341 = vector.load %arg10[%c0_206, %c0_207, %c0_208] : memref<2x1x32xf32, #tpu.memory_space<vmem>>, vector<1x1x32xf32>
    %342 = vector.shape_cast %341 : vector<1x1x32xf32> to vector<1x32xf32>
    %cst_209 = arith.constant dense<0.000000e+00> : vector<16xf32>
    %343 = vector.multi_reduction <add>, %338, %cst_209 [1] : vector<16x32xf32> to vector<16xf32>
    %344 = vector.shape_cast %343 : vector<16xf32> to vector<16x1xf32>
    %cst_210 = arith.constant 3.200000e+01 : f32
    %345 = vector.broadcast %cst_210 : f32 to vector<16x1xf32>
    %346 = arith.divf %344, %345 : vector<16x1xf32>
    %347 = vector.broadcast %346 : vector<16x1xf32> to vector<16x32xf32>
    %348 = arith.subf %338, %347 : vector<16x32xf32>
    %349 = arith.mulf %348, %348 : vector<16x32xf32>
    %cst_211 = arith.constant dense<0.000000e+00> : vector<16xf32>
    %350 = vector.multi_reduction <add>, %349, %cst_211 [1] : vector<16x32xf32> to vector<16xf32>
    %351 = vector.shape_cast %350 : vector<16xf32> to vector<16x1xf32>
    %cst_212 = arith.constant 3.200000e+01 : f32
    %352 = vector.broadcast %cst_212 : f32 to vector<16x1xf32>
    %353 = arith.divf %351, %352 : vector<16x1xf32>
    %cst_213 = arith.constant 9.99999974E-6 : f32
    %354 = vector.broadcast %cst_213 : f32 to vector<16x1xf32>
    %355 = arith.addf %353, %354 : vector<16x1xf32>
    %356 = math.rsqrt %355 : vector<16x1xf32>
    %357 = vector.broadcast %356 : vector<16x1xf32> to vector<16x32xf32>
    %358 = arith.mulf %348, %357 : vector<16x32xf32>
    %359 = vector.broadcast %340 : vector<1x32xf32> to vector<16x32xf32>
    %360 = arith.mulf %358, %359 : vector<16x32xf32>
    %361 = vector.broadcast %342 : vector<1x32xf32> to vector<16x32xf32>
    %362 = arith.addf %360, %361 : vector<16x32xf32>
    %363 = arith.mulf %362, %101 : vector<16x32xf32>
    %364 = arith.addf %363, %125 : vector<16x32xf32>
    %c0_214 = arith.constant 0 : index
    %c0_215 = arith.constant 0 : index
    %c0_216 = arith.constant 0 : index
    %365 = vector.load %arg19[%c0_214, %c0_215, %c0_216] : memref<2x32x64xf32, #tpu.memory_space<vmem>>, vector<1x32x64xf32>
    %366 = vector.shape_cast %365 : vector<1x32x64xf32> to vector<32x64xf32>
    %cst_217 = arith.constant dense<0.000000e+00> : vector<16x64xf32>
    %367 = tpu.matmul %364, %366, %cst_217 {dimension_numbers = #tpu.dot_dimension_numbers<[1], [0], [0], [1], [0, 0, 1, 1], [], []>} : vector<16x32xf32>, vector<32x64xf32>, vector<16x64xf32> -> vector<16x64xf32>
    %c0_218 = arith.constant 0 : index
    %c0_219 = arith.constant 0 : index
    %c0_220 = arith.constant 0 : index
    %368 = vector.load %arg20[%c0_218, %c0_219, %c0_220] : memref<2x1x64xf32, #tpu.memory_space<vmem>>, vector<1x1x64xf32>
    %369 = vector.shape_cast %368 : vector<1x1x64xf32> to vector<1x64xf32>
    %370 = vector.broadcast %369 : vector<1x64xf32> to vector<16x64xf32>
    %371 = arith.addf %367, %370 : vector<16x64xf32>
    %cst_221 = arith.constant 5.000000e-01 : f32
    %372 = vector.broadcast %cst_221 : f32 to vector<16x64xf32>
    %373 = arith.mulf %372, %371 : vector<16x64xf32>
    %cst_222 = arith.constant 0.707106769 : f32
    %374 = vector.broadcast %cst_222 : f32 to vector<16x64xf32>
    %375 = arith.mulf %371, %374 : vector<16x64xf32>
    %cst_223 = arith.constant 0.000000e+00 : f32
    %376 = vector.broadcast %cst_223 : f32 to vector<16x64xf32>
    %377 = arith.cmpf olt, %375, %376 : vector<16x64xf32>
    %cst_224 = arith.constant -1.000000e+00 : f32
    %cst_225 = arith.constant 1.000000e+00 : f32
    %378 = vector.broadcast %cst_224 : f32 to vector<16x64xf32>
    %379 = vector.broadcast %cst_225 : f32 to vector<16x64xf32>
    %380 = arith.select %377, %378, %379 : vector<16x64xi1>, vector<16x64xf32>
    %381 = arith.mulf %375, %380 : vector<16x64xf32>
    %cst_226 = arith.constant 0.327591091 : f32
    %382 = vector.broadcast %cst_226 : f32 to vector<16x64xf32>
    %383 = arith.mulf %382, %381 : vector<16x64xf32>
    %cst_227 = arith.constant 1.000000e+00 : f32
    %384 = vector.broadcast %cst_227 : f32 to vector<16x64xf32>
    %385 = arith.addf %384, %383 : vector<16x64xf32>
    %386 = tpu.reciprocal %385 {approx = true} : vector<16x64xf32> -> vector<16x64xf32>
    %387 = arith.mulf %385, %386 : vector<16x64xf32>
    %cst_228 = arith.constant 2.000000e+00 : f32
    %388 = vector.broadcast %cst_228 : f32 to vector<16x64xf32>
    %389 = arith.subf %388, %387 : vector<16x64xf32>
    %390 = arith.mulf %386, %389 : vector<16x64xf32>
    %cst_229 = arith.constant 1.06140542 : f32
    %391 = vector.broadcast %cst_229 : f32 to vector<16x64xf32>
    %392 = arith.mulf %391, %390 : vector<16x64xf32>
    %cst_230 = arith.constant -1.45315206 : f32
    %393 = vector.broadcast %cst_230 : f32 to vector<16x64xf32>
    %394 = arith.addf %392, %393 : vector<16x64xf32>
    %395 = arith.mulf %394, %390 : vector<16x64xf32>
    %cst_231 = arith.constant 1.42141378 : f32
    %396 = vector.broadcast %cst_231 : f32 to vector<16x64xf32>
    %397 = arith.addf %395, %396 : vector<16x64xf32>
    %398 = arith.mulf %397, %390 : vector<16x64xf32>
    %cst_232 = arith.constant -0.284496725 : f32
    %399 = vector.broadcast %cst_232 : f32 to vector<16x64xf32>
    %400 = arith.addf %398, %399 : vector<16x64xf32>
    %401 = arith.mulf %400, %390 : vector<16x64xf32>
    %cst_233 = arith.constant 0.254829586 : f32
    %402 = vector.broadcast %cst_233 : f32 to vector<16x64xf32>
    %403 = arith.addf %401, %402 : vector<16x64xf32>
    %404 = arith.mulf %403, %390 : vector<16x64xf32>
    %cst_234 = arith.constant 0.000000e+00 : f32
    %405 = vector.broadcast %cst_234 : f32 to vector<16x64xf32>
    %406 = arith.subf %405, %381 : vector<16x64xf32>
    %407 = arith.mulf %406, %381 : vector<16x64xf32>
    %408 = math.exp %407 : vector<16x64xf32>
    %409 = arith.mulf %404, %408 : vector<16x64xf32>
    %cst_235 = arith.constant 1.000000e+00 : f32
    %410 = vector.broadcast %cst_235 : f32 to vector<16x64xf32>
    %411 = arith.subf %410, %409 : vector<16x64xf32>
    %412 = arith.mulf %380, %411 : vector<16x64xf32>
    %cst_236 = arith.constant 1.000000e+00 : f32
    %413 = vector.broadcast %cst_236 : f32 to vector<16x64xf32>
    %414 = arith.addf %413, %412 : vector<16x64xf32>
    %415 = arith.mulf %373, %414 : vector<16x64xf32>
    %c0_237 = arith.constant 0 : index
    %c0_238 = arith.constant 0 : index
    %c0_239 = arith.constant 0 : index
    %416 = vector.load %arg21[%c0_237, %c0_238, %c0_239] : memref<2x64x32xf32, #tpu.memory_space<vmem>>, vector<1x64x32xf32>
    %417 = vector.shape_cast %416 : vector<1x64x32xf32> to vector<64x32xf32>
    %cst_240 = arith.constant dense<0.000000e+00> : vector<16x32xf32>
    %418 = tpu.matmul %415, %417, %cst_240 {dimension_numbers = #tpu.dot_dimension_numbers<[1], [0], [0], [1], [0, 0, 1, 1], [], []>} : vector<16x64xf32>, vector<64x32xf32>, vector<16x32xf32> -> vector<16x32xf32>
    %c0_241 = arith.constant 0 : index
    %c0_242 = arith.constant 0 : index
    %c0_243 = arith.constant 0 : index
    %419 = vector.load %arg22[%c0_241, %c0_242, %c0_243] : memref<2x1x32xf32, #tpu.memory_space<vmem>>, vector<1x1x32xf32>
    %420 = vector.shape_cast %419 : vector<1x1x32xf32> to vector<1x32xf32>
    %421 = vector.broadcast %420 : vector<1x32xf32> to vector<16x32xf32>
    %422 = arith.addf %418, %421 : vector<16x32xf32>
    %423 = arith.mulf %422, %113 : vector<16x32xf32>
    %424 = arith.addf %338, %423 : vector<16x32xf32>
    %c1_244 = arith.constant 1 : index
    %c0_245 = arith.constant 0 : index
    %c0_246 = arith.constant 0 : index
    %425 = vector.load %arg3[%c1_244, %c0_245, %c0_246] : memref<2x32x192xf32, #tpu.memory_space<vmem>>, vector<1x32x192xf32>
    %426 = vector.shape_cast %425 : vector<1x32x192xf32> to vector<32x192xf32>
    %cst_247 = arith.constant dense<0.000000e+00> : vector<2x192xf32>
    %427 = tpu.matmul %1, %426, %cst_247 {dimension_numbers = #tpu.dot_dimension_numbers<[1], [0], [0], [1], [0, 0, 1, 1], [], []>} : vector<2x32xf32>, vector<32x192xf32>, vector<2x192xf32> -> vector<2x192xf32>
    %c1_248 = arith.constant 1 : index
    %c0_249 = arith.constant 0 : index
    %c0_250 = arith.constant 0 : index
    %428 = vector.load %arg4[%c1_248, %c0_249, %c0_250] : memref<2x1x192xf32, #tpu.memory_space<vmem>>, vector<1x1x192xf32>
    %429 = vector.shape_cast %428 : vector<1x1x192xf32> to vector<1x192xf32>
    %430 = vector.broadcast %429 : vector<1x192xf32> to vector<2x192xf32>
    %431 = arith.addf %427, %430 : vector<2x192xf32>
    %cst_251 = arith.constant 5.000000e-01 : f32
    %432 = vector.broadcast %cst_251 : f32 to vector<2x192xf32>
    %433 = arith.mulf %432, %431 : vector<2x192xf32>
    %cst_252 = arith.constant 0.707106769 : f32
    %434 = vector.broadcast %cst_252 : f32 to vector<2x192xf32>
    %435 = arith.mulf %431, %434 : vector<2x192xf32>
    %cst_253 = arith.constant 0.000000e+00 : f32
    %436 = vector.broadcast %cst_253 : f32 to vector<2x192xf32>
    %437 = arith.cmpf olt, %435, %436 : vector<2x192xf32>
    %cst_254 = arith.constant -1.000000e+00 : f32
    %cst_255 = arith.constant 1.000000e+00 : f32
    %438 = vector.broadcast %cst_254 : f32 to vector<2x192xf32>
    %439 = vector.broadcast %cst_255 : f32 to vector<2x192xf32>
    %440 = arith.select %437, %438, %439 : vector<2x192xi1>, vector<2x192xf32>
    %441 = arith.mulf %435, %440 : vector<2x192xf32>
    %cst_256 = arith.constant 0.327591091 : f32
    %442 = vector.broadcast %cst_256 : f32 to vector<2x192xf32>
    %443 = arith.mulf %442, %441 : vector<2x192xf32>
    %cst_257 = arith.constant 1.000000e+00 : f32
    %444 = vector.broadcast %cst_257 : f32 to vector<2x192xf32>
    %445 = arith.addf %444, %443 : vector<2x192xf32>
    %446 = tpu.reciprocal %445 {approx = true} : vector<2x192xf32> -> vector<2x192xf32>
    %447 = arith.mulf %445, %446 : vector<2x192xf32>
    %cst_258 = arith.constant 2.000000e+00 : f32
    %448 = vector.broadcast %cst_258 : f32 to vector<2x192xf32>
    %449 = arith.subf %448, %447 : vector<2x192xf32>
    %450 = arith.mulf %446, %449 : vector<2x192xf32>
    %cst_259 = arith.constant 1.06140542 : f32
    %451 = vector.broadcast %cst_259 : f32 to vector<2x192xf32>
    %452 = arith.mulf %451, %450 : vector<2x192xf32>
    %cst_260 = arith.constant -1.45315206 : f32
    %453 = vector.broadcast %cst_260 : f32 to vector<2x192xf32>
    %454 = arith.addf %452, %453 : vector<2x192xf32>
    %455 = arith.mulf %454, %450 : vector<2x192xf32>
    %cst_261 = arith.constant 1.42141378 : f32
    %456 = vector.broadcast %cst_261 : f32 to vector<2x192xf32>
    %457 = arith.addf %455, %456 : vector<2x192xf32>
    %458 = arith.mulf %457, %450 : vector<2x192xf32>
    %cst_262 = arith.constant -0.284496725 : f32
    %459 = vector.broadcast %cst_262 : f32 to vector<2x192xf32>
    %460 = arith.addf %458, %459 : vector<2x192xf32>
    %461 = arith.mulf %460, %450 : vector<2x192xf32>
    %cst_263 = arith.constant 0.254829586 : f32
    %462 = vector.broadcast %cst_263 : f32 to vector<2x192xf32>
    %463 = arith.addf %461, %462 : vector<2x192xf32>
    %464 = arith.mulf %463, %450 : vector<2x192xf32>
    %cst_264 = arith.constant 0.000000e+00 : f32
    %465 = vector.broadcast %cst_264 : f32 to vector<2x192xf32>
    %466 = arith.subf %465, %441 : vector<2x192xf32>
    %467 = arith.mulf %466, %441 : vector<2x192xf32>
    %468 = math.exp %467 : vector<2x192xf32>
    %469 = arith.mulf %464, %468 : vector<2x192xf32>
    %cst_265 = arith.constant 1.000000e+00 : f32
    %470 = vector.broadcast %cst_265 : f32 to vector<2x192xf32>
    %471 = arith.subf %470, %469 : vector<2x192xf32>
    %472 = arith.mulf %440, %471 : vector<2x192xf32>
    %cst_266 = arith.constant 1.000000e+00 : f32
    %473 = vector.broadcast %cst_266 : f32 to vector<2x192xf32>
    %474 = arith.addf %473, %472 : vector<2x192xf32>
    %475 = arith.mulf %433, %474 : vector<2x192xf32>
    %476 = vector.extract_strided_slice %475 {offsets = [0, 0], sizes = [2, 32], strides = [1, 1]} : vector<2x192xf32> to vector<2x32xf32>
    %c6 = arith.constant 6 : index
    %c0_267 = arith.constant 0 : index
    %c0_268 = arith.constant 0 : index
    %477 = vector.load %arg5[%c6, %c0_267, %c0_268] : memref<12x32x32xf32, #tpu.memory_space<vmem>>, vector<1x32x32xf32>
    %478 = vector.shape_cast %477 : vector<1x32x32xf32> to vector<32x32xf32>
    %cst_269 = arith.constant dense<0.000000e+00> : vector<2x32xf32>
    %479 = tpu.matmul %476, %478, %cst_269 {dimension_numbers = #tpu.dot_dimension_numbers<[1], [0], [0], [1], [0, 0, 1, 1], [], []>} : vector<2x32xf32>, vector<32x32xf32>, vector<2x32xf32> -> vector<2x32xf32>
    %c6_270 = arith.constant 6 : index
    %c0_271 = arith.constant 0 : index
    %c0_272 = arith.constant 0 : index
    %480 = vector.load %arg6[%c6_270, %c0_271, %c0_272] : memref<12x1x32xf32, #tpu.memory_space<vmem>>, vector<1x1x32xf32>
    %481 = vector.shape_cast %480 : vector<1x1x32xf32> to vector<1x32xf32>
    %482 = vector.broadcast %481 : vector<1x32xf32> to vector<2x32xf32>
    %483 = arith.addf %479, %482 : vector<2x32xf32>
    %484 = vector.shape_cast %483 : vector<2x32xf32> to vector<2x1x32xf32>
    %485 = vector.shape_cast %484 : vector<2x1x32xf32> to vector<2x1x32xf32>
    %486 = vector.broadcast %485 : vector<2x1x32xf32> to vector<2x8x32xf32>
    %487 = vector.shape_cast %486 : vector<2x8x32xf32> to vector<16x32xf32>
    %488 = vector.extract_strided_slice %475 {offsets = [0, 32], sizes = [2, 32], strides = [1, 1]} : vector<2x192xf32> to vector<2x32xf32>
    %c7 = arith.constant 7 : index
    %c0_273 = arith.constant 0 : index
    %c0_274 = arith.constant 0 : index
    %489 = vector.load %arg5[%c7, %c0_273, %c0_274] : memref<12x32x32xf32, #tpu.memory_space<vmem>>, vector<1x32x32xf32>
    %490 = vector.shape_cast %489 : vector<1x32x32xf32> to vector<32x32xf32>
    %cst_275 = arith.constant dense<0.000000e+00> : vector<2x32xf32>
    %491 = tpu.matmul %488, %490, %cst_275 {dimension_numbers = #tpu.dot_dimension_numbers<[1], [0], [0], [1], [0, 0, 1, 1], [], []>} : vector<2x32xf32>, vector<32x32xf32>, vector<2x32xf32> -> vector<2x32xf32>
    %c7_276 = arith.constant 7 : index
    %c0_277 = arith.constant 0 : index
    %c0_278 = arith.constant 0 : index
    %492 = vector.load %arg6[%c7_276, %c0_277, %c0_278] : memref<12x1x32xf32, #tpu.memory_space<vmem>>, vector<1x1x32xf32>
    %493 = vector.shape_cast %492 : vector<1x1x32xf32> to vector<1x32xf32>
    %494 = vector.broadcast %493 : vector<1x32xf32> to vector<2x32xf32>
    %495 = arith.addf %491, %494 : vector<2x32xf32>
    %496 = vector.shape_cast %495 : vector<2x32xf32> to vector<2x1x32xf32>
    %497 = vector.shape_cast %496 : vector<2x1x32xf32> to vector<2x1x32xf32>
    %498 = vector.broadcast %497 : vector<2x1x32xf32> to vector<2x8x32xf32>
    %499 = vector.shape_cast %498 : vector<2x8x32xf32> to vector<16x32xf32>
    %500 = vector.extract_strided_slice %475 {offsets = [0, 64], sizes = [2, 32], strides = [1, 1]} : vector<2x192xf32> to vector<2x32xf32>
    %c8 = arith.constant 8 : index
    %c0_279 = arith.constant 0 : index
    %c0_280 = arith.constant 0 : index
    %501 = vector.load %arg5[%c8, %c0_279, %c0_280] : memref<12x32x32xf32, #tpu.memory_space<vmem>>, vector<1x32x32xf32>
    %502 = vector.shape_cast %501 : vector<1x32x32xf32> to vector<32x32xf32>
    %cst_281 = arith.constant dense<0.000000e+00> : vector<2x32xf32>
    %503 = tpu.matmul %500, %502, %cst_281 {dimension_numbers = #tpu.dot_dimension_numbers<[1], [0], [0], [1], [0, 0, 1, 1], [], []>} : vector<2x32xf32>, vector<32x32xf32>, vector<2x32xf32> -> vector<2x32xf32>
    %c8_282 = arith.constant 8 : index
    %c0_283 = arith.constant 0 : index
    %c0_284 = arith.constant 0 : index
    %504 = vector.load %arg6[%c8_282, %c0_283, %c0_284] : memref<12x1x32xf32, #tpu.memory_space<vmem>>, vector<1x1x32xf32>
    %505 = vector.shape_cast %504 : vector<1x1x32xf32> to vector<1x32xf32>
    %506 = vector.broadcast %505 : vector<1x32xf32> to vector<2x32xf32>
    %507 = arith.addf %503, %506 : vector<2x32xf32>
    %508 = vector.shape_cast %507 : vector<2x32xf32> to vector<2x1x32xf32>
    %509 = vector.shape_cast %508 : vector<2x1x32xf32> to vector<2x1x32xf32>
    %510 = vector.broadcast %509 : vector<2x1x32xf32> to vector<2x8x32xf32>
    %511 = vector.shape_cast %510 : vector<2x8x32xf32> to vector<16x32xf32>
    %512 = vector.extract_strided_slice %475 {offsets = [0, 96], sizes = [2, 32], strides = [1, 1]} : vector<2x192xf32> to vector<2x32xf32>
    %c9 = arith.constant 9 : index
    %c0_285 = arith.constant 0 : index
    %c0_286 = arith.constant 0 : index
    %513 = vector.load %arg5[%c9, %c0_285, %c0_286] : memref<12x32x32xf32, #tpu.memory_space<vmem>>, vector<1x32x32xf32>
    %514 = vector.shape_cast %513 : vector<1x32x32xf32> to vector<32x32xf32>
    %cst_287 = arith.constant dense<0.000000e+00> : vector<2x32xf32>
    %515 = tpu.matmul %512, %514, %cst_287 {dimension_numbers = #tpu.dot_dimension_numbers<[1], [0], [0], [1], [0, 0, 1, 1], [], []>} : vector<2x32xf32>, vector<32x32xf32>, vector<2x32xf32> -> vector<2x32xf32>
    %c9_288 = arith.constant 9 : index
    %c0_289 = arith.constant 0 : index
    %c0_290 = arith.constant 0 : index
    %516 = vector.load %arg6[%c9_288, %c0_289, %c0_290] : memref<12x1x32xf32, #tpu.memory_space<vmem>>, vector<1x1x32xf32>
    %517 = vector.shape_cast %516 : vector<1x1x32xf32> to vector<1x32xf32>
    %518 = vector.broadcast %517 : vector<1x32xf32> to vector<2x32xf32>
    %519 = arith.addf %515, %518 : vector<2x32xf32>
    %520 = vector.shape_cast %519 : vector<2x32xf32> to vector<2x1x32xf32>
    %521 = vector.shape_cast %520 : vector<2x1x32xf32> to vector<2x1x32xf32>
    %522 = vector.broadcast %521 : vector<2x1x32xf32> to vector<2x8x32xf32>
    %523 = vector.shape_cast %522 : vector<2x8x32xf32> to vector<16x32xf32>
    %524 = vector.extract_strided_slice %475 {offsets = [0, 128], sizes = [2, 32], strides = [1, 1]} : vector<2x192xf32> to vector<2x32xf32>
    %c10 = arith.constant 10 : index
    %c0_291 = arith.constant 0 : index
    %c0_292 = arith.constant 0 : index
    %525 = vector.load %arg5[%c10, %c0_291, %c0_292] : memref<12x32x32xf32, #tpu.memory_space<vmem>>, vector<1x32x32xf32>
    %526 = vector.shape_cast %525 : vector<1x32x32xf32> to vector<32x32xf32>
    %cst_293 = arith.constant dense<0.000000e+00> : vector<2x32xf32>
    %527 = tpu.matmul %524, %526, %cst_293 {dimension_numbers = #tpu.dot_dimension_numbers<[1], [0], [0], [1], [0, 0, 1, 1], [], []>} : vector<2x32xf32>, vector<32x32xf32>, vector<2x32xf32> -> vector<2x32xf32>
    %c10_294 = arith.constant 10 : index
    %c0_295 = arith.constant 0 : index
    %c0_296 = arith.constant 0 : index
    %528 = vector.load %arg6[%c10_294, %c0_295, %c0_296] : memref<12x1x32xf32, #tpu.memory_space<vmem>>, vector<1x1x32xf32>
    %529 = vector.shape_cast %528 : vector<1x1x32xf32> to vector<1x32xf32>
    %530 = vector.broadcast %529 : vector<1x32xf32> to vector<2x32xf32>
    %531 = arith.addf %527, %530 : vector<2x32xf32>
    %532 = vector.shape_cast %531 : vector<2x32xf32> to vector<2x1x32xf32>
    %533 = vector.shape_cast %532 : vector<2x1x32xf32> to vector<2x1x32xf32>
    %534 = vector.broadcast %533 : vector<2x1x32xf32> to vector<2x8x32xf32>
    %535 = vector.shape_cast %534 : vector<2x8x32xf32> to vector<16x32xf32>
    %536 = vector.extract_strided_slice %475 {offsets = [0, 160], sizes = [2, 32], strides = [1, 1]} : vector<2x192xf32> to vector<2x32xf32>
    %c11 = arith.constant 11 : index
    %c0_297 = arith.constant 0 : index
    %c0_298 = arith.constant 0 : index
    %537 = vector.load %arg5[%c11, %c0_297, %c0_298] : memref<12x32x32xf32, #tpu.memory_space<vmem>>, vector<1x32x32xf32>
    %538 = vector.shape_cast %537 : vector<1x32x32xf32> to vector<32x32xf32>
    %cst_299 = arith.constant dense<0.000000e+00> : vector<2x32xf32>
    %539 = tpu.matmul %536, %538, %cst_299 {dimension_numbers = #tpu.dot_dimension_numbers<[1], [0], [0], [1], [0, 0, 1, 1], [], []>} : vector<2x32xf32>, vector<32x32xf32>, vector<2x32xf32> -> vector<2x32xf32>
    %c11_300 = arith.constant 11 : index
    %c0_301 = arith.constant 0 : index
    %c0_302 = arith.constant 0 : index
    %540 = vector.load %arg6[%c11_300, %c0_301, %c0_302] : memref<12x1x32xf32, #tpu.memory_space<vmem>>, vector<1x1x32xf32>
    %541 = vector.shape_cast %540 : vector<1x1x32xf32> to vector<1x32xf32>
    %542 = vector.broadcast %541 : vector<1x32xf32> to vector<2x32xf32>
    %543 = arith.addf %539, %542 : vector<2x32xf32>
    %544 = vector.shape_cast %543 : vector<2x32xf32> to vector<2x1x32xf32>
    %545 = vector.shape_cast %544 : vector<2x1x32xf32> to vector<2x1x32xf32>
    %546 = vector.broadcast %545 : vector<2x1x32xf32> to vector<2x8x32xf32>
    %547 = vector.shape_cast %546 : vector<2x8x32xf32> to vector<16x32xf32>
    %c1_303 = arith.constant 1 : index
    %c0_304 = arith.constant 0 : index
    %c0_305 = arith.constant 0 : index
    %548 = vector.load %arg7[%c1_303, %c0_304, %c0_305] : memref<2x1x32xf32, #tpu.memory_space<vmem>>, vector<1x1x32xf32>
    %549 = vector.shape_cast %548 : vector<1x1x32xf32> to vector<1x32xf32>
    %c1_306 = arith.constant 1 : index
    %c0_307 = arith.constant 0 : index
    %c0_308 = arith.constant 0 : index
    %550 = vector.load %arg8[%c1_306, %c0_307, %c0_308] : memref<2x1x32xf32, #tpu.memory_space<vmem>>, vector<1x1x32xf32>
    %551 = vector.shape_cast %550 : vector<1x1x32xf32> to vector<1x32xf32>
    %cst_309 = arith.constant dense<0.000000e+00> : vector<16xf32>
    %552 = vector.multi_reduction <add>, %424, %cst_309 [1] : vector<16x32xf32> to vector<16xf32>
    %553 = vector.shape_cast %552 : vector<16xf32> to vector<16x1xf32>
    %cst_310 = arith.constant 3.200000e+01 : f32
    %554 = vector.broadcast %cst_310 : f32 to vector<16x1xf32>
    %555 = arith.divf %553, %554 : vector<16x1xf32>
    %556 = vector.broadcast %555 : vector<16x1xf32> to vector<16x32xf32>
    %557 = arith.subf %424, %556 : vector<16x32xf32>
    %558 = arith.mulf %557, %557 : vector<16x32xf32>
    %cst_311 = arith.constant dense<0.000000e+00> : vector<16xf32>
    %559 = vector.multi_reduction <add>, %558, %cst_311 [1] : vector<16x32xf32> to vector<16xf32>
    %560 = vector.shape_cast %559 : vector<16xf32> to vector<16x1xf32>
    %cst_312 = arith.constant 3.200000e+01 : f32
    %561 = vector.broadcast %cst_312 : f32 to vector<16x1xf32>
    %562 = arith.divf %560, %561 : vector<16x1xf32>
    %cst_313 = arith.constant 9.99999974E-6 : f32
    %563 = vector.broadcast %cst_313 : f32 to vector<16x1xf32>
    %564 = arith.addf %562, %563 : vector<16x1xf32>
    %565 = math.rsqrt %564 : vector<16x1xf32>
    %566 = vector.broadcast %565 : vector<16x1xf32> to vector<16x32xf32>
    %567 = arith.mulf %557, %566 : vector<16x32xf32>
    %568 = vector.broadcast %549 : vector<1x32xf32> to vector<16x32xf32>
    %569 = arith.mulf %567, %568 : vector<16x32xf32>
    %570 = vector.broadcast %551 : vector<1x32xf32> to vector<16x32xf32>
    %571 = arith.addf %569, %570 : vector<16x32xf32>
    %572 = arith.mulf %571, %487 : vector<16x32xf32>
    %573 = arith.addf %572, %511 : vector<16x32xf32>
    %cst_314 = arith.constant 0.000000e+00 : f32
    %574 = vector.broadcast %cst_314 : f32 to vector<16x32xf32>
    %c4_315 = arith.constant 4 : index
    %c0_316 = arith.constant 0 : index
    %c0_317 = arith.constant 0 : index
    %575 = vector.load %arg11[%c4_315, %c0_316, %c0_317] : memref<8x32x8xf32, #tpu.memory_space<vmem>>, vector<1x32x8xf32>
    %576 = vector.shape_cast %575 : vector<1x32x8xf32> to vector<32x8xf32>
    %cst_318 = arith.constant dense<0.000000e+00> : vector<16x8xf32>
    %577 = tpu.matmul %573, %576, %cst_318 {dimension_numbers = #tpu.dot_dimension_numbers<[1], [0], [0], [1], [0, 0, 1, 1], [], []>} : vector<16x32xf32>, vector<32x8xf32>, vector<16x8xf32> -> vector<16x8xf32>
    %c4_319 = arith.constant 4 : index
    %c0_320 = arith.constant 0 : index
    %c0_321 = arith.constant 0 : index
    %578 = vector.load %arg14[%c4_319, %c0_320, %c0_321] : memref<8x1x8xf32, #tpu.memory_space<vmem>>, vector<1x1x8xf32>
    %579 = vector.shape_cast %578 : vector<1x1x8xf32> to vector<1x8xf32>
    %580 = vector.broadcast %579 : vector<1x8xf32> to vector<16x8xf32>
    %581 = arith.addf %577, %580 : vector<16x8xf32>
    %c4_322 = arith.constant 4 : index
    %c0_323 = arith.constant 0 : index
    %c0_324 = arith.constant 0 : index
    %582 = vector.load %arg12[%c4_322, %c0_323, %c0_324] : memref<8x32x8xf32, #tpu.memory_space<vmem>>, vector<1x32x8xf32>
    %583 = vector.shape_cast %582 : vector<1x32x8xf32> to vector<32x8xf32>
    %cst_325 = arith.constant dense<0.000000e+00> : vector<16x8xf32>
    %584 = tpu.matmul %573, %583, %cst_325 {dimension_numbers = #tpu.dot_dimension_numbers<[1], [0], [0], [1], [0, 0, 1, 1], [], []>} : vector<16x32xf32>, vector<32x8xf32>, vector<16x8xf32> -> vector<16x8xf32>
    %c4_326 = arith.constant 4 : index
    %c0_327 = arith.constant 0 : index
    %c0_328 = arith.constant 0 : index
    %585 = vector.load %arg15[%c4_326, %c0_327, %c0_328] : memref<8x1x8xf32, #tpu.memory_space<vmem>>, vector<1x1x8xf32>
    %586 = vector.shape_cast %585 : vector<1x1x8xf32> to vector<1x8xf32>
    %587 = vector.broadcast %586 : vector<1x8xf32> to vector<16x8xf32>
    %588 = arith.addf %584, %587 : vector<16x8xf32>
    %c4_329 = arith.constant 4 : index
    %c0_330 = arith.constant 0 : index
    %c0_331 = arith.constant 0 : index
    %589 = vector.load %arg13[%c4_329, %c0_330, %c0_331] : memref<8x32x8xf32, #tpu.memory_space<vmem>>, vector<1x32x8xf32>
    %590 = vector.shape_cast %589 : vector<1x32x8xf32> to vector<32x8xf32>
    %cst_332 = arith.constant dense<0.000000e+00> : vector<16x8xf32>
    %591 = tpu.matmul %573, %590, %cst_332 {dimension_numbers = #tpu.dot_dimension_numbers<[1], [0], [0], [1], [0, 0, 1, 1], [], []>} : vector<16x32xf32>, vector<32x8xf32>, vector<16x8xf32> -> vector<16x8xf32>
    %c4_333 = arith.constant 4 : index
    %c0_334 = arith.constant 0 : index
    %c0_335 = arith.constant 0 : index
    %592 = vector.load %arg16[%c4_333, %c0_334, %c0_335] : memref<8x1x8xf32, #tpu.memory_space<vmem>>, vector<1x1x8xf32>
    %593 = vector.shape_cast %592 : vector<1x1x8xf32> to vector<1x8xf32>
    %594 = vector.broadcast %593 : vector<1x8xf32> to vector<16x8xf32>
    %595 = arith.addf %591, %594 : vector<16x8xf32>
    %596 = tpu.transpose %588, [1, 0] : vector<16x8xf32> -> vector<8x16xf32>
    %cst_336 = arith.constant dense<0.000000e+00> : vector<16x16xf32>
    %597 = tpu.matmul %581, %596, %cst_336 {dimension_numbers = #tpu.dot_dimension_numbers<[1], [0], [0], [1], [0, 0, 1, 1], [], []>} : vector<16x8xf32>, vector<8x16xf32>, vector<16x16xf32> -> vector<16x16xf32>
    %cst_337 = arith.constant 0.353553385 : f32
    %598 = vector.broadcast %cst_337 : f32 to vector<16x16xf32>
    %599 = arith.mulf %597, %598 : vector<16x16xf32>
    %600 = arith.addf %599, %2 : vector<16x16xf32>
    %cst_338 = arith.constant dense<0xFF800000> : vector<16xf32>
    %601 = vector.multi_reduction <maximumf>, %600, %cst_338 [1] : vector<16x16xf32> to vector<16xf32>
    %602 = vector.shape_cast %601 : vector<16xf32> to vector<16x1xf32>
    %603 = vector.broadcast %602 : vector<16x1xf32> to vector<16x16xf32>
    %604 = arith.subf %600, %603 : vector<16x16xf32>
    %605 = math.exp %604 : vector<16x16xf32>
    %cst_339 = arith.constant dense<0.000000e+00> : vector<16xf32>
    %606 = vector.multi_reduction <add>, %605, %cst_339 [1] : vector<16x16xf32> to vector<16xf32>
    %607 = vector.shape_cast %606 : vector<16xf32> to vector<16x1xf32>
    %608 = tpu.reciprocal %607 {approx = true} : vector<16x1xf32> -> vector<16x1xf32>
    %609 = arith.mulf %607, %608 : vector<16x1xf32>
    %cst_340 = arith.constant 2.000000e+00 : f32
    %610 = vector.broadcast %cst_340 : f32 to vector<16x1xf32>
    %611 = arith.subf %610, %609 : vector<16x1xf32>
    %612 = arith.mulf %608, %611 : vector<16x1xf32>
    %613 = vector.broadcast %612 : vector<16x1xf32> to vector<16x16xf32>
    %614 = arith.mulf %605, %613 : vector<16x16xf32>
    %cst_341 = arith.constant dense<0.000000e+00> : vector<16x8xf32>
    %615 = tpu.matmul %614, %595, %cst_341 {dimension_numbers = #tpu.dot_dimension_numbers<[1], [0], [0], [1], [0, 0, 1, 1], [], []>} : vector<16x16xf32>, vector<16x8xf32>, vector<16x8xf32> -> vector<16x8xf32>
    %c4_342 = arith.constant 4 : index
    %c0_343 = arith.constant 0 : index
    %c0_344 = arith.constant 0 : index
    %616 = vector.load %arg17[%c4_342, %c0_343, %c0_344] : memref<8x8x32xf32, #tpu.memory_space<vmem>>, vector<1x8x32xf32>
    %617 = vector.shape_cast %616 : vector<1x8x32xf32> to vector<8x32xf32>
    %cst_345 = arith.constant dense<0.000000e+00> : vector<16x32xf32>
    %618 = tpu.matmul %615, %617, %cst_345 {dimension_numbers = #tpu.dot_dimension_numbers<[1], [0], [0], [1], [0, 0, 1, 1], [], []>} : vector<16x8xf32>, vector<8x32xf32>, vector<16x32xf32> -> vector<16x32xf32>
    %619 = arith.addf %574, %618 : vector<16x32xf32>
    %c5_346 = arith.constant 5 : index
    %c0_347 = arith.constant 0 : index
    %c0_348 = arith.constant 0 : index
    %620 = vector.load %arg11[%c5_346, %c0_347, %c0_348] : memref<8x32x8xf32, #tpu.memory_space<vmem>>, vector<1x32x8xf32>
    %621 = vector.shape_cast %620 : vector<1x32x8xf32> to vector<32x8xf32>
    %cst_349 = arith.constant dense<0.000000e+00> : vector<16x8xf32>
    %622 = tpu.matmul %573, %621, %cst_349 {dimension_numbers = #tpu.dot_dimension_numbers<[1], [0], [0], [1], [0, 0, 1, 1], [], []>} : vector<16x32xf32>, vector<32x8xf32>, vector<16x8xf32> -> vector<16x8xf32>
    %c5_350 = arith.constant 5 : index
    %c0_351 = arith.constant 0 : index
    %c0_352 = arith.constant 0 : index
    %623 = vector.load %arg14[%c5_350, %c0_351, %c0_352] : memref<8x1x8xf32, #tpu.memory_space<vmem>>, vector<1x1x8xf32>
    %624 = vector.shape_cast %623 : vector<1x1x8xf32> to vector<1x8xf32>
    %625 = vector.broadcast %624 : vector<1x8xf32> to vector<16x8xf32>
    %626 = arith.addf %622, %625 : vector<16x8xf32>
    %c5_353 = arith.constant 5 : index
    %c0_354 = arith.constant 0 : index
    %c0_355 = arith.constant 0 : index
    %627 = vector.load %arg12[%c5_353, %c0_354, %c0_355] : memref<8x32x8xf32, #tpu.memory_space<vmem>>, vector<1x32x8xf32>
    %628 = vector.shape_cast %627 : vector<1x32x8xf32> to vector<32x8xf32>
    %cst_356 = arith.constant dense<0.000000e+00> : vector<16x8xf32>
    %629 = tpu.matmul %573, %628, %cst_356 {dimension_numbers = #tpu.dot_dimension_numbers<[1], [0], [0], [1], [0, 0, 1, 1], [], []>} : vector<16x32xf32>, vector<32x8xf32>, vector<16x8xf32> -> vector<16x8xf32>
    %c5_357 = arith.constant 5 : index
    %c0_358 = arith.constant 0 : index
    %c0_359 = arith.constant 0 : index
    %630 = vector.load %arg15[%c5_357, %c0_358, %c0_359] : memref<8x1x8xf32, #tpu.memory_space<vmem>>, vector<1x1x8xf32>
    %631 = vector.shape_cast %630 : vector<1x1x8xf32> to vector<1x8xf32>
    %632 = vector.broadcast %631 : vector<1x8xf32> to vector<16x8xf32>
    %633 = arith.addf %629, %632 : vector<16x8xf32>
    %c5_360 = arith.constant 5 : index
    %c0_361 = arith.constant 0 : index
    %c0_362 = arith.constant 0 : index
    %634 = vector.load %arg13[%c5_360, %c0_361, %c0_362] : memref<8x32x8xf32, #tpu.memory_space<vmem>>, vector<1x32x8xf32>
    %635 = vector.shape_cast %634 : vector<1x32x8xf32> to vector<32x8xf32>
    %cst_363 = arith.constant dense<0.000000e+00> : vector<16x8xf32>
    %636 = tpu.matmul %573, %635, %cst_363 {dimension_numbers = #tpu.dot_dimension_numbers<[1], [0], [0], [1], [0, 0, 1, 1], [], []>} : vector<16x32xf32>, vector<32x8xf32>, vector<16x8xf32> -> vector<16x8xf32>
    %c5_364 = arith.constant 5 : index
    %c0_365 = arith.constant 0 : index
    %c0_366 = arith.constant 0 : index
    %637 = vector.load %arg16[%c5_364, %c0_365, %c0_366] : memref<8x1x8xf32, #tpu.memory_space<vmem>>, vector<1x1x8xf32>
    %638 = vector.shape_cast %637 : vector<1x1x8xf32> to vector<1x8xf32>
    %639 = vector.broadcast %638 : vector<1x8xf32> to vector<16x8xf32>
    %640 = arith.addf %636, %639 : vector<16x8xf32>
    %641 = tpu.transpose %633, [1, 0] : vector<16x8xf32> -> vector<8x16xf32>
    %cst_367 = arith.constant dense<0.000000e+00> : vector<16x16xf32>
    %642 = tpu.matmul %626, %641, %cst_367 {dimension_numbers = #tpu.dot_dimension_numbers<[1], [0], [0], [1], [0, 0, 1, 1], [], []>} : vector<16x8xf32>, vector<8x16xf32>, vector<16x16xf32> -> vector<16x16xf32>
    %cst_368 = arith.constant 0.353553385 : f32
    %643 = vector.broadcast %cst_368 : f32 to vector<16x16xf32>
    %644 = arith.mulf %642, %643 : vector<16x16xf32>
    %645 = arith.addf %644, %2 : vector<16x16xf32>
    %cst_369 = arith.constant dense<0xFF800000> : vector<16xf32>
    %646 = vector.multi_reduction <maximumf>, %645, %cst_369 [1] : vector<16x16xf32> to vector<16xf32>
    %647 = vector.shape_cast %646 : vector<16xf32> to vector<16x1xf32>
    %648 = vector.broadcast %647 : vector<16x1xf32> to vector<16x16xf32>
    %649 = arith.subf %645, %648 : vector<16x16xf32>
    %650 = math.exp %649 : vector<16x16xf32>
    %cst_370 = arith.constant dense<0.000000e+00> : vector<16xf32>
    %651 = vector.multi_reduction <add>, %650, %cst_370 [1] : vector<16x16xf32> to vector<16xf32>
    %652 = vector.shape_cast %651 : vector<16xf32> to vector<16x1xf32>
    %653 = tpu.reciprocal %652 {approx = true} : vector<16x1xf32> -> vector<16x1xf32>
    %654 = arith.mulf %652, %653 : vector<16x1xf32>
    %cst_371 = arith.constant 2.000000e+00 : f32
    %655 = vector.broadcast %cst_371 : f32 to vector<16x1xf32>
    %656 = arith.subf %655, %654 : vector<16x1xf32>
    %657 = arith.mulf %653, %656 : vector<16x1xf32>
    %658 = vector.broadcast %657 : vector<16x1xf32> to vector<16x16xf32>
    %659 = arith.mulf %650, %658 : vector<16x16xf32>
    %cst_372 = arith.constant dense<0.000000e+00> : vector<16x8xf32>
    %660 = tpu.matmul %659, %640, %cst_372 {dimension_numbers = #tpu.dot_dimension_numbers<[1], [0], [0], [1], [0, 0, 1, 1], [], []>} : vector<16x16xf32>, vector<16x8xf32>, vector<16x8xf32> -> vector<16x8xf32>
    %c5_373 = arith.constant 5 : index
    %c0_374 = arith.constant 0 : index
    %c0_375 = arith.constant 0 : index
    %661 = vector.load %arg17[%c5_373, %c0_374, %c0_375] : memref<8x8x32xf32, #tpu.memory_space<vmem>>, vector<1x8x32xf32>
    %662 = vector.shape_cast %661 : vector<1x8x32xf32> to vector<8x32xf32>
    %cst_376 = arith.constant dense<0.000000e+00> : vector<16x32xf32>
    %663 = tpu.matmul %660, %662, %cst_376 {dimension_numbers = #tpu.dot_dimension_numbers<[1], [0], [0], [1], [0, 0, 1, 1], [], []>} : vector<16x8xf32>, vector<8x32xf32>, vector<16x32xf32> -> vector<16x32xf32>
    %664 = arith.addf %619, %663 : vector<16x32xf32>
    %c6_377 = arith.constant 6 : index
    %c0_378 = arith.constant 0 : index
    %c0_379 = arith.constant 0 : index
    %665 = vector.load %arg11[%c6_377, %c0_378, %c0_379] : memref<8x32x8xf32, #tpu.memory_space<vmem>>, vector<1x32x8xf32>
    %666 = vector.shape_cast %665 : vector<1x32x8xf32> to vector<32x8xf32>
    %cst_380 = arith.constant dense<0.000000e+00> : vector<16x8xf32>
    %667 = tpu.matmul %573, %666, %cst_380 {dimension_numbers = #tpu.dot_dimension_numbers<[1], [0], [0], [1], [0, 0, 1, 1], [], []>} : vector<16x32xf32>, vector<32x8xf32>, vector<16x8xf32> -> vector<16x8xf32>
    %c6_381 = arith.constant 6 : index
    %c0_382 = arith.constant 0 : index
    %c0_383 = arith.constant 0 : index
    %668 = vector.load %arg14[%c6_381, %c0_382, %c0_383] : memref<8x1x8xf32, #tpu.memory_space<vmem>>, vector<1x1x8xf32>
    %669 = vector.shape_cast %668 : vector<1x1x8xf32> to vector<1x8xf32>
    %670 = vector.broadcast %669 : vector<1x8xf32> to vector<16x8xf32>
    %671 = arith.addf %667, %670 : vector<16x8xf32>
    %c6_384 = arith.constant 6 : index
    %c0_385 = arith.constant 0 : index
    %c0_386 = arith.constant 0 : index
    %672 = vector.load %arg12[%c6_384, %c0_385, %c0_386] : memref<8x32x8xf32, #tpu.memory_space<vmem>>, vector<1x32x8xf32>
    %673 = vector.shape_cast %672 : vector<1x32x8xf32> to vector<32x8xf32>
    %cst_387 = arith.constant dense<0.000000e+00> : vector<16x8xf32>
    %674 = tpu.matmul %573, %673, %cst_387 {dimension_numbers = #tpu.dot_dimension_numbers<[1], [0], [0], [1], [0, 0, 1, 1], [], []>} : vector<16x32xf32>, vector<32x8xf32>, vector<16x8xf32> -> vector<16x8xf32>
    %c6_388 = arith.constant 6 : index
    %c0_389 = arith.constant 0 : index
    %c0_390 = arith.constant 0 : index
    %675 = vector.load %arg15[%c6_388, %c0_389, %c0_390] : memref<8x1x8xf32, #tpu.memory_space<vmem>>, vector<1x1x8xf32>
    %676 = vector.shape_cast %675 : vector<1x1x8xf32> to vector<1x8xf32>
    %677 = vector.broadcast %676 : vector<1x8xf32> to vector<16x8xf32>
    %678 = arith.addf %674, %677 : vector<16x8xf32>
    %c6_391 = arith.constant 6 : index
    %c0_392 = arith.constant 0 : index
    %c0_393 = arith.constant 0 : index
    %679 = vector.load %arg13[%c6_391, %c0_392, %c0_393] : memref<8x32x8xf32, #tpu.memory_space<vmem>>, vector<1x32x8xf32>
    %680 = vector.shape_cast %679 : vector<1x32x8xf32> to vector<32x8xf32>
    %cst_394 = arith.constant dense<0.000000e+00> : vector<16x8xf32>
    %681 = tpu.matmul %573, %680, %cst_394 {dimension_numbers = #tpu.dot_dimension_numbers<[1], [0], [0], [1], [0, 0, 1, 1], [], []>} : vector<16x32xf32>, vector<32x8xf32>, vector<16x8xf32> -> vector<16x8xf32>
    %c6_395 = arith.constant 6 : index
    %c0_396 = arith.constant 0 : index
    %c0_397 = arith.constant 0 : index
    %682 = vector.load %arg16[%c6_395, %c0_396, %c0_397] : memref<8x1x8xf32, #tpu.memory_space<vmem>>, vector<1x1x8xf32>
    %683 = vector.shape_cast %682 : vector<1x1x8xf32> to vector<1x8xf32>
    %684 = vector.broadcast %683 : vector<1x8xf32> to vector<16x8xf32>
    %685 = arith.addf %681, %684 : vector<16x8xf32>
    %686 = tpu.transpose %678, [1, 0] : vector<16x8xf32> -> vector<8x16xf32>
    %cst_398 = arith.constant dense<0.000000e+00> : vector<16x16xf32>
    %687 = tpu.matmul %671, %686, %cst_398 {dimension_numbers = #tpu.dot_dimension_numbers<[1], [0], [0], [1], [0, 0, 1, 1], [], []>} : vector<16x8xf32>, vector<8x16xf32>, vector<16x16xf32> -> vector<16x16xf32>
    %cst_399 = arith.constant 0.353553385 : f32
    %688 = vector.broadcast %cst_399 : f32 to vector<16x16xf32>
    %689 = arith.mulf %687, %688 : vector<16x16xf32>
    %690 = arith.addf %689, %2 : vector<16x16xf32>
    %cst_400 = arith.constant dense<0xFF800000> : vector<16xf32>
    %691 = vector.multi_reduction <maximumf>, %690, %cst_400 [1] : vector<16x16xf32> to vector<16xf32>
    %692 = vector.shape_cast %691 : vector<16xf32> to vector<16x1xf32>
    %693 = vector.broadcast %692 : vector<16x1xf32> to vector<16x16xf32>
    %694 = arith.subf %690, %693 : vector<16x16xf32>
    %695 = math.exp %694 : vector<16x16xf32>
    %cst_401 = arith.constant dense<0.000000e+00> : vector<16xf32>
    %696 = vector.multi_reduction <add>, %695, %cst_401 [1] : vector<16x16xf32> to vector<16xf32>
    %697 = vector.shape_cast %696 : vector<16xf32> to vector<16x1xf32>
    %698 = tpu.reciprocal %697 {approx = true} : vector<16x1xf32> -> vector<16x1xf32>
    %699 = arith.mulf %697, %698 : vector<16x1xf32>
    %cst_402 = arith.constant 2.000000e+00 : f32
    %700 = vector.broadcast %cst_402 : f32 to vector<16x1xf32>
    %701 = arith.subf %700, %699 : vector<16x1xf32>
    %702 = arith.mulf %698, %701 : vector<16x1xf32>
    %703 = vector.broadcast %702 : vector<16x1xf32> to vector<16x16xf32>
    %704 = arith.mulf %695, %703 : vector<16x16xf32>
    %cst_403 = arith.constant dense<0.000000e+00> : vector<16x8xf32>
    %705 = tpu.matmul %704, %685, %cst_403 {dimension_numbers = #tpu.dot_dimension_numbers<[1], [0], [0], [1], [0, 0, 1, 1], [], []>} : vector<16x16xf32>, vector<16x8xf32>, vector<16x8xf32> -> vector<16x8xf32>
    %c6_404 = arith.constant 6 : index
    %c0_405 = arith.constant 0 : index
    %c0_406 = arith.constant 0 : index
    %706 = vector.load %arg17[%c6_404, %c0_405, %c0_406] : memref<8x8x32xf32, #tpu.memory_space<vmem>>, vector<1x8x32xf32>
    %707 = vector.shape_cast %706 : vector<1x8x32xf32> to vector<8x32xf32>
    %cst_407 = arith.constant dense<0.000000e+00> : vector<16x32xf32>
    %708 = tpu.matmul %705, %707, %cst_407 {dimension_numbers = #tpu.dot_dimension_numbers<[1], [0], [0], [1], [0, 0, 1, 1], [], []>} : vector<16x8xf32>, vector<8x32xf32>, vector<16x32xf32> -> vector<16x32xf32>
    %709 = arith.addf %664, %708 : vector<16x32xf32>
    %c7_408 = arith.constant 7 : index
    %c0_409 = arith.constant 0 : index
    %c0_410 = arith.constant 0 : index
    %710 = vector.load %arg11[%c7_408, %c0_409, %c0_410] : memref<8x32x8xf32, #tpu.memory_space<vmem>>, vector<1x32x8xf32>
    %711 = vector.shape_cast %710 : vector<1x32x8xf32> to vector<32x8xf32>
    %cst_411 = arith.constant dense<0.000000e+00> : vector<16x8xf32>
    %712 = tpu.matmul %573, %711, %cst_411 {dimension_numbers = #tpu.dot_dimension_numbers<[1], [0], [0], [1], [0, 0, 1, 1], [], []>} : vector<16x32xf32>, vector<32x8xf32>, vector<16x8xf32> -> vector<16x8xf32>
    %c7_412 = arith.constant 7 : index
    %c0_413 = arith.constant 0 : index
    %c0_414 = arith.constant 0 : index
    %713 = vector.load %arg14[%c7_412, %c0_413, %c0_414] : memref<8x1x8xf32, #tpu.memory_space<vmem>>, vector<1x1x8xf32>
    %714 = vector.shape_cast %713 : vector<1x1x8xf32> to vector<1x8xf32>
    %715 = vector.broadcast %714 : vector<1x8xf32> to vector<16x8xf32>
    %716 = arith.addf %712, %715 : vector<16x8xf32>
    %c7_415 = arith.constant 7 : index
    %c0_416 = arith.constant 0 : index
    %c0_417 = arith.constant 0 : index
    %717 = vector.load %arg12[%c7_415, %c0_416, %c0_417] : memref<8x32x8xf32, #tpu.memory_space<vmem>>, vector<1x32x8xf32>
    %718 = vector.shape_cast %717 : vector<1x32x8xf32> to vector<32x8xf32>
    %cst_418 = arith.constant dense<0.000000e+00> : vector<16x8xf32>
    %719 = tpu.matmul %573, %718, %cst_418 {dimension_numbers = #tpu.dot_dimension_numbers<[1], [0], [0], [1], [0, 0, 1, 1], [], []>} : vector<16x32xf32>, vector<32x8xf32>, vector<16x8xf32> -> vector<16x8xf32>
    %c7_419 = arith.constant 7 : index
    %c0_420 = arith.constant 0 : index
    %c0_421 = arith.constant 0 : index
    %720 = vector.load %arg15[%c7_419, %c0_420, %c0_421] : memref<8x1x8xf32, #tpu.memory_space<vmem>>, vector<1x1x8xf32>
    %721 = vector.shape_cast %720 : vector<1x1x8xf32> to vector<1x8xf32>
    %722 = vector.broadcast %721 : vector<1x8xf32> to vector<16x8xf32>
    %723 = arith.addf %719, %722 : vector<16x8xf32>
    %c7_422 = arith.constant 7 : index
    %c0_423 = arith.constant 0 : index
    %c0_424 = arith.constant 0 : index
    %724 = vector.load %arg13[%c7_422, %c0_423, %c0_424] : memref<8x32x8xf32, #tpu.memory_space<vmem>>, vector<1x32x8xf32>
    %725 = vector.shape_cast %724 : vector<1x32x8xf32> to vector<32x8xf32>
    %cst_425 = arith.constant dense<0.000000e+00> : vector<16x8xf32>
    %726 = tpu.matmul %573, %725, %cst_425 {dimension_numbers = #tpu.dot_dimension_numbers<[1], [0], [0], [1], [0, 0, 1, 1], [], []>} : vector<16x32xf32>, vector<32x8xf32>, vector<16x8xf32> -> vector<16x8xf32>
    %c7_426 = arith.constant 7 : index
    %c0_427 = arith.constant 0 : index
    %c0_428 = arith.constant 0 : index
    %727 = vector.load %arg16[%c7_426, %c0_427, %c0_428] : memref<8x1x8xf32, #tpu.memory_space<vmem>>, vector<1x1x8xf32>
    %728 = vector.shape_cast %727 : vector<1x1x8xf32> to vector<1x8xf32>
    %729 = vector.broadcast %728 : vector<1x8xf32> to vector<16x8xf32>
    %730 = arith.addf %726, %729 : vector<16x8xf32>
    %731 = tpu.transpose %723, [1, 0] : vector<16x8xf32> -> vector<8x16xf32>
    %cst_429 = arith.constant dense<0.000000e+00> : vector<16x16xf32>
    %732 = tpu.matmul %716, %731, %cst_429 {dimension_numbers = #tpu.dot_dimension_numbers<[1], [0], [0], [1], [0, 0, 1, 1], [], []>} : vector<16x8xf32>, vector<8x16xf32>, vector<16x16xf32> -> vector<16x16xf32>
    %cst_430 = arith.constant 0.353553385 : f32
    %733 = vector.broadcast %cst_430 : f32 to vector<16x16xf32>
    %734 = arith.mulf %732, %733 : vector<16x16xf32>
    %735 = arith.addf %734, %2 : vector<16x16xf32>
    %cst_431 = arith.constant dense<0xFF800000> : vector<16xf32>
    %736 = vector.multi_reduction <maximumf>, %735, %cst_431 [1] : vector<16x16xf32> to vector<16xf32>
    %737 = vector.shape_cast %736 : vector<16xf32> to vector<16x1xf32>
    %738 = vector.broadcast %737 : vector<16x1xf32> to vector<16x16xf32>
    %739 = arith.subf %735, %738 : vector<16x16xf32>
    %740 = math.exp %739 : vector<16x16xf32>
    %cst_432 = arith.constant dense<0.000000e+00> : vector<16xf32>
    %741 = vector.multi_reduction <add>, %740, %cst_432 [1] : vector<16x16xf32> to vector<16xf32>
    %742 = vector.shape_cast %741 : vector<16xf32> to vector<16x1xf32>
    %743 = tpu.reciprocal %742 {approx = true} : vector<16x1xf32> -> vector<16x1xf32>
    %744 = arith.mulf %742, %743 : vector<16x1xf32>
    %cst_433 = arith.constant 2.000000e+00 : f32
    %745 = vector.broadcast %cst_433 : f32 to vector<16x1xf32>
    %746 = arith.subf %745, %744 : vector<16x1xf32>
    %747 = arith.mulf %743, %746 : vector<16x1xf32>
    %748 = vector.broadcast %747 : vector<16x1xf32> to vector<16x16xf32>
    %749 = arith.mulf %740, %748 : vector<16x16xf32>
    %cst_434 = arith.constant dense<0.000000e+00> : vector<16x8xf32>
    %750 = tpu.matmul %749, %730, %cst_434 {dimension_numbers = #tpu.dot_dimension_numbers<[1], [0], [0], [1], [0, 0, 1, 1], [], []>} : vector<16x16xf32>, vector<16x8xf32>, vector<16x8xf32> -> vector<16x8xf32>
    %c7_435 = arith.constant 7 : index
    %c0_436 = arith.constant 0 : index
    %c0_437 = arith.constant 0 : index
    %751 = vector.load %arg17[%c7_435, %c0_436, %c0_437] : memref<8x8x32xf32, #tpu.memory_space<vmem>>, vector<1x8x32xf32>
    %752 = vector.shape_cast %751 : vector<1x8x32xf32> to vector<8x32xf32>
    %cst_438 = arith.constant dense<0.000000e+00> : vector<16x32xf32>
    %753 = tpu.matmul %750, %752, %cst_438 {dimension_numbers = #tpu.dot_dimension_numbers<[1], [0], [0], [1], [0, 0, 1, 1], [], []>} : vector<16x8xf32>, vector<8x32xf32>, vector<16x32xf32> -> vector<16x32xf32>
    %754 = arith.addf %709, %753 : vector<16x32xf32>
    %c1_439 = arith.constant 1 : index
    %c0_440 = arith.constant 0 : index
    %c0_441 = arith.constant 0 : index
    %755 = vector.load %arg18[%c1_439, %c0_440, %c0_441] : memref<2x1x32xf32, #tpu.memory_space<vmem>>, vector<1x1x32xf32>
    %756 = vector.shape_cast %755 : vector<1x1x32xf32> to vector<1x32xf32>
    %757 = vector.broadcast %756 : vector<1x32xf32> to vector<16x32xf32>
    %758 = arith.addf %754, %757 : vector<16x32xf32>
    %759 = arith.mulf %758, %499 : vector<16x32xf32>
    %760 = arith.addf %424, %759 : vector<16x32xf32>
    %c1_442 = arith.constant 1 : index
    %c0_443 = arith.constant 0 : index
    %c0_444 = arith.constant 0 : index
    %761 = vector.load %arg9[%c1_442, %c0_443, %c0_444] : memref<2x1x32xf32, #tpu.memory_space<vmem>>, vector<1x1x32xf32>
    %762 = vector.shape_cast %761 : vector<1x1x32xf32> to vector<1x32xf32>
    %c1_445 = arith.constant 1 : index
    %c0_446 = arith.constant 0 : index
    %c0_447 = arith.constant 0 : index
    %763 = vector.load %arg10[%c1_445, %c0_446, %c0_447] : memref<2x1x32xf32, #tpu.memory_space<vmem>>, vector<1x1x32xf32>
    %764 = vector.shape_cast %763 : vector<1x1x32xf32> to vector<1x32xf32>
    %cst_448 = arith.constant dense<0.000000e+00> : vector<16xf32>
    %765 = vector.multi_reduction <add>, %760, %cst_448 [1] : vector<16x32xf32> to vector<16xf32>
    %766 = vector.shape_cast %765 : vector<16xf32> to vector<16x1xf32>
    %cst_449 = arith.constant 3.200000e+01 : f32
    %767 = vector.broadcast %cst_449 : f32 to vector<16x1xf32>
    %768 = arith.divf %766, %767 : vector<16x1xf32>
    %769 = vector.broadcast %768 : vector<16x1xf32> to vector<16x32xf32>
    %770 = arith.subf %760, %769 : vector<16x32xf32>
    %771 = arith.mulf %770, %770 : vector<16x32xf32>
    %cst_450 = arith.constant dense<0.000000e+00> : vector<16xf32>
    %772 = vector.multi_reduction <add>, %771, %cst_450 [1] : vector<16x32xf32> to vector<16xf32>
    %773 = vector.shape_cast %772 : vector<16xf32> to vector<16x1xf32>
    %cst_451 = arith.constant 3.200000e+01 : f32
    %774 = vector.broadcast %cst_451 : f32 to vector<16x1xf32>
    %775 = arith.divf %773, %774 : vector<16x1xf32>
    %cst_452 = arith.constant 9.99999974E-6 : f32
    %776 = vector.broadcast %cst_452 : f32 to vector<16x1xf32>
    %777 = arith.addf %775, %776 : vector<16x1xf32>
    %778 = math.rsqrt %777 : vector<16x1xf32>
    %779 = vector.broadcast %778 : vector<16x1xf32> to vector<16x32xf32>
    %780 = arith.mulf %770, %779 : vector<16x32xf32>
    %781 = vector.broadcast %762 : vector<1x32xf32> to vector<16x32xf32>
    %782 = arith.mulf %780, %781 : vector<16x32xf32>
    %783 = vector.broadcast %764 : vector<1x32xf32> to vector<16x32xf32>
    %784 = arith.addf %782, %783 : vector<16x32xf32>
    %785 = arith.mulf %784, %523 : vector<16x32xf32>
    %786 = arith.addf %785, %547 : vector<16x32xf32>
    %c1_453 = arith.constant 1 : index
    %c0_454 = arith.constant 0 : index
    %c0_455 = arith.constant 0 : index
    %787 = vector.load %arg19[%c1_453, %c0_454, %c0_455] : memref<2x32x64xf32, #tpu.memory_space<vmem>>, vector<1x32x64xf32>
    %788 = vector.shape_cast %787 : vector<1x32x64xf32> to vector<32x64xf32>
    %cst_456 = arith.constant dense<0.000000e+00> : vector<16x64xf32>
    %789 = tpu.matmul %786, %788, %cst_456 {dimension_numbers = #tpu.dot_dimension_numbers<[1], [0], [0], [1], [0, 0, 1, 1], [], []>} : vector<16x32xf32>, vector<32x64xf32>, vector<16x64xf32> -> vector<16x64xf32>
    %c1_457 = arith.constant 1 : index
    %c0_458 = arith.constant 0 : index
    %c0_459 = arith.constant 0 : index
    %790 = vector.load %arg20[%c1_457, %c0_458, %c0_459] : memref<2x1x64xf32, #tpu.memory_space<vmem>>, vector<1x1x64xf32>
    %791 = vector.shape_cast %790 : vector<1x1x64xf32> to vector<1x64xf32>
    %792 = vector.broadcast %791 : vector<1x64xf32> to vector<16x64xf32>
    %793 = arith.addf %789, %792 : vector<16x64xf32>
    %cst_460 = arith.constant 5.000000e-01 : f32
    %794 = vector.broadcast %cst_460 : f32 to vector<16x64xf32>
    %795 = arith.mulf %794, %793 : vector<16x64xf32>
    %cst_461 = arith.constant 0.707106769 : f32
    %796 = vector.broadcast %cst_461 : f32 to vector<16x64xf32>
    %797 = arith.mulf %793, %796 : vector<16x64xf32>
    %cst_462 = arith.constant 0.000000e+00 : f32
    %798 = vector.broadcast %cst_462 : f32 to vector<16x64xf32>
    %799 = arith.cmpf olt, %797, %798 : vector<16x64xf32>
    %cst_463 = arith.constant -1.000000e+00 : f32
    %cst_464 = arith.constant 1.000000e+00 : f32
    %800 = vector.broadcast %cst_463 : f32 to vector<16x64xf32>
    %801 = vector.broadcast %cst_464 : f32 to vector<16x64xf32>
    %802 = arith.select %799, %800, %801 : vector<16x64xi1>, vector<16x64xf32>
    %803 = arith.mulf %797, %802 : vector<16x64xf32>
    %cst_465 = arith.constant 0.327591091 : f32
    %804 = vector.broadcast %cst_465 : f32 to vector<16x64xf32>
    %805 = arith.mulf %804, %803 : vector<16x64xf32>
    %cst_466 = arith.constant 1.000000e+00 : f32
    %806 = vector.broadcast %cst_466 : f32 to vector<16x64xf32>
    %807 = arith.addf %806, %805 : vector<16x64xf32>
    %808 = tpu.reciprocal %807 {approx = true} : vector<16x64xf32> -> vector<16x64xf32>
    %809 = arith.mulf %807, %808 : vector<16x64xf32>
    %cst_467 = arith.constant 2.000000e+00 : f32
    %810 = vector.broadcast %cst_467 : f32 to vector<16x64xf32>
    %811 = arith.subf %810, %809 : vector<16x64xf32>
    %812 = arith.mulf %808, %811 : vector<16x64xf32>
    %cst_468 = arith.constant 1.06140542 : f32
    %813 = vector.broadcast %cst_468 : f32 to vector<16x64xf32>
    %814 = arith.mulf %813, %812 : vector<16x64xf32>
    %cst_469 = arith.constant -1.45315206 : f32
    %815 = vector.broadcast %cst_469 : f32 to vector<16x64xf32>
    %816 = arith.addf %814, %815 : vector<16x64xf32>
    %817 = arith.mulf %816, %812 : vector<16x64xf32>
    %cst_470 = arith.constant 1.42141378 : f32
    %818 = vector.broadcast %cst_470 : f32 to vector<16x64xf32>
    %819 = arith.addf %817, %818 : vector<16x64xf32>
    %820 = arith.mulf %819, %812 : vector<16x64xf32>
    %cst_471 = arith.constant -0.284496725 : f32
    %821 = vector.broadcast %cst_471 : f32 to vector<16x64xf32>
    %822 = arith.addf %820, %821 : vector<16x64xf32>
    %823 = arith.mulf %822, %812 : vector<16x64xf32>
    %cst_472 = arith.constant 0.254829586 : f32
    %824 = vector.broadcast %cst_472 : f32 to vector<16x64xf32>
    %825 = arith.addf %823, %824 : vector<16x64xf32>
    %826 = arith.mulf %825, %812 : vector<16x64xf32>
    %cst_473 = arith.constant 0.000000e+00 : f32
    %827 = vector.broadcast %cst_473 : f32 to vector<16x64xf32>
    %828 = arith.subf %827, %803 : vector<16x64xf32>
    %829 = arith.mulf %828, %803 : vector<16x64xf32>
    %830 = math.exp %829 : vector<16x64xf32>
    %831 = arith.mulf %826, %830 : vector<16x64xf32>
    %cst_474 = arith.constant 1.000000e+00 : f32
    %832 = vector.broadcast %cst_474 : f32 to vector<16x64xf32>
    %833 = arith.subf %832, %831 : vector<16x64xf32>
    %834 = arith.mulf %802, %833 : vector<16x64xf32>
    %cst_475 = arith.constant 1.000000e+00 : f32
    %835 = vector.broadcast %cst_475 : f32 to vector<16x64xf32>
    %836 = arith.addf %835, %834 : vector<16x64xf32>
    %837 = arith.mulf %795, %836 : vector<16x64xf32>
    %c1_476 = arith.constant 1 : index
    %c0_477 = arith.constant 0 : index
    %c0_478 = arith.constant 0 : index
    %838 = vector.load %arg21[%c1_476, %c0_477, %c0_478] : memref<2x64x32xf32, #tpu.memory_space<vmem>>, vector<1x64x32xf32>
    %839 = vector.shape_cast %838 : vector<1x64x32xf32> to vector<64x32xf32>
    %cst_479 = arith.constant dense<0.000000e+00> : vector<16x32xf32>
    %840 = tpu.matmul %837, %839, %cst_479 {dimension_numbers = #tpu.dot_dimension_numbers<[1], [0], [0], [1], [0, 0, 1, 1], [], []>} : vector<16x64xf32>, vector<64x32xf32>, vector<16x32xf32> -> vector<16x32xf32>
    %c1_480 = arith.constant 1 : index
    %c0_481 = arith.constant 0 : index
    %c0_482 = arith.constant 0 : index
    %841 = vector.load %arg22[%c1_480, %c0_481, %c0_482] : memref<2x1x32xf32, #tpu.memory_space<vmem>>, vector<1x1x32xf32>
    %842 = vector.shape_cast %841 : vector<1x1x32xf32> to vector<1x32xf32>
    %843 = vector.broadcast %842 : vector<1x32xf32> to vector<16x32xf32>
    %844 = arith.addf %840, %843 : vector<16x32xf32>
    %845 = arith.mulf %844, %535 : vector<16x32xf32>
    %846 = arith.addf %760, %845 : vector<16x32xf32>
    %c0_483 = arith.constant 0 : index
    %c0_484 = arith.constant 0 : index
    %847 = vector.load %arg23[%c0_483, %c0_484] : memref<16x32xf32, #tpu.memory_space<vmem>>, vector<16x32xf32>
    tpu.vector_store %arg23[%c0_483, %c0_484], %846 {strides = array<i32>} : memref<16x32xf32, #tpu.memory_space<vmem>>, vector<16x32xf32>,
    return
  }
}

</mosaic_0001>

<llo_original>
// kernel: tpu_custom_call.1
$region0: #{tpu_custom_call.1}
  #allocation0 [shape = 'u32[]', space=smem, size = 0x4, offset = 0x4, fixed_abs, tag = 'smem constant byte address 0x4 - core index']
  #allocation1 [shape = 'u32[144,128]{1,0:T(1,128)}', space=vmem, size = 0x12000, scoped, tag = 'internal scratch']
  %s0 = inlined_call_operand.vmem [shape: f32[16,32], index: 0, kind: input, shape index: {}]
  %s1 = inlined_call_operand.vmem [shape: f32[2,32], index: 1, kind: input, shape index: {}]
  %s2 = inlined_call_operand.vmem [shape: f32[16,16], index: 2, kind: input, shape index: {}]
  %s3 = inlined_call_operand.vmem [shape: f32[2,32,192], index: 3, kind: input, shape index: {}]
  %s4 = inlined_call_operand.vmem [shape: f32[2,1,192], index: 4, kind: input, shape index: {}]
  %s5 = inlined_call_operand.vmem [shape: f32[12,32,32], index: 5, kind: input, shape index: {}]
  %s6 = inlined_call_operand.vmem [shape: f32[12,1,32], index: 6, kind: input, shape index: {}]
  %s7 = inlined_call_operand.vmem [shape: f32[2,1,32], index: 7, kind: input, shape index: {}]
  %s8 = inlined_call_operand.vmem [shape: f32[2,1,32], index: 8, kind: input, shape index: {}]
  %s9 = inlined_call_operand.vmem [shape: f32[2,1,32], index: 9, kind: input, shape index: {}]
  %s10 = inlined_call_operand.vmem [shape: f32[2,1,32], index: 10, kind: input, shape index: {}]
  %s11 = inlined_call_operand.vmem [shape: f32[8,32,8], index: 11, kind: input, shape index: {}]
  %s12 = inlined_call_operand.vmem [shape: f32[8,32,8], index: 12, kind: input, shape index: {}]
  %s13 = inlined_call_operand.vmem [shape: f32[8,32,8], index: 13, kind: input, shape index: {}]
  %s14 = inlined_call_operand.vmem [shape: f32[8,1,8], index: 14, kind: input, shape index: {}]
  %s15 = inlined_call_operand.vmem [shape: f32[8,1,8], index: 15, kind: input, shape index: {}]
  %s16 = inlined_call_operand.vmem [shape: f32[8,1,8], index: 16, kind: input, shape index: {}]
  %s17 = inlined_call_operand.vmem [shape: f32[8,8,32], index: 17, kind: input, shape index: {}]
  %s18 = inlined_call_operand.vmem [shape: f32[2,1,32], index: 18, kind: input, shape index: {}]
  %s19 = inlined_call_operand.vmem [shape: f32[2,32,64], index: 19, kind: input, shape index: {}]
  %s20 = inlined_call_operand.vmem [shape: f32[2,1,64], index: 20, kind: input, shape index: {}]
  %s21 = inlined_call_operand.vmem [shape: f32[2,64,32], index: 21, kind: input, shape index: {}]
  %s22 = inlined_call_operand.vmem [shape: f32[2,1,32], index: 22, kind: input, shape index: {}]
  %s23 = inlined_call_operand.hbm [shape: f32[16,32], index: 23, kind: output, shape index: {}]
  %s24 = sld [smem:[#allocation0]]
  $region102: #{tpu_custom_call.1} parent=0
    _
  %s26 = ssub.s32 1, %s24
  %s27 = scalar_select 0, %s26, %s24
  $region1: #{tpu_custom_call.1} parent=0
    #allocation2 [shape = 'u8[8192]{0}', space=vmem, size = 0x2000, scoped, tag = 'output window, operand 0, single buffered']
    #allocation3 [shape = 's32[1]{0}', space=sflag, size = 0x4, scoped, tag = 'scoped memory for tpu_custom_call.1']
    %28 = vsyncpa [#allocation3], 0
    // Predicated region
    $region2: #{tpu_custom_call.1} parent=1 // pred_check
      _
    $region3: #{tpu_custom_call.1} parent=1 // pred_check_branch
      %30 = sbr.rel (0) target = $region5
    $region4: #{tpu_custom_call.1} parent=1 // pred_region
      _
    $region5: #{tpu_custom_call.1} parent=1 // pred_fallthru
      _
    // Predicated region
    $region6: #{tpu_custom_call.1} parent=1 // pred_check
      _
    $region7: #{tpu_custom_call.1} parent=1 // pred_check_branch
      %32 = sbr.rel (0) target = $region9
    $region8: #{tpu_custom_call.1} parent=1 // pred_region
      _
    $region9: #{tpu_custom_call.1} parent=1 // pred_fallthru
      _
    // Predicated region
    $region10: #{tpu_custom_call.1} parent=1 // pred_check
      _
    $region11: #{tpu_custom_call.1} parent=1 // pred_check_branch
      %34 = sbr.rel (0) target = $region13
    $region12: #{tpu_custom_call.1} parent=1 // pred_region
      _
    $region13: #{tpu_custom_call.1} parent=1 // pred_fallthru
      _
    // Predicated region
    $region14: #{tpu_custom_call.1} parent=1 // pred_check
      _
    $region15: #{tpu_custom_call.1} parent=1 // pred_check_branch
      %36 = sbr.rel (0) target = $region17
    $region16: #{tpu_custom_call.1} parent=1 // pred_region
      _
    $region17: #{tpu_custom_call.1} parent=1 // pred_fallthru
      _
    // Predicated region
    $region18: #{tpu_custom_call.1} parent=1 // pred_check
      _
    $region19: #{tpu_custom_call.1} parent=1 // pred_check_branch
      %38 = sbr.rel (0) target = $region21
    $region20: #{tpu_custom_call.1} parent=1 // pred_region
      _
    $region21: #{tpu_custom_call.1} parent=1 // pred_fallthru
      _
    // Predicated region
    $region22: #{tpu_custom_call.1} parent=1 // pred_check
      _
    $region23: #{tpu_custom_call.1} parent=1 // pred_check_branch
      %40 = sbr.rel (0) target = $region25
    $region24: #{tpu_custom_call.1} parent=1 // pred_region
      _
    $region25: #{tpu_custom_call.1} parent=1 // pred_fallthru
      _
    // Predicated region
    $region26: #{tpu_custom_call.1} parent=1 // pred_check
      _
    $region27: #{tpu_custom_call.1} parent=1 // pred_check_branch
      %42 = sbr.rel (0) target = $region29
    $region28: #{tpu_custom_call.1} parent=1 // pred_region
      _
    $region29: #{tpu_custom_call.1} parent=1 // pred_fallthru
      _
    // Predicated region
    $region30: #{tpu_custom_call.1} parent=1 // pred_check
      _
    $region31: #{tpu_custom_call.1} parent=1 // pred_check_branch
      %44 = sbr.rel (0) target = $region33
    $region32: #{tpu_custom_call.1} parent=1 // pred_region
      _
    $region33: #{tpu_custom_call.1} parent=1 // pred_fallthru
      _
    // Predicated region
    $region34: #{tpu_custom_call.1} parent=1 // pred_check
      _
    $region35: #{tpu_custom_call.1} parent=1 // pred_check_branch
      %46 = sbr.rel (0) target = $region37
    $region36: #{tpu_custom_call.1} parent=1 // pred_region
      _
    $region37: #{tpu_custom_call.1} parent=1 // pred_fallthru
      _
    // Predicated region
    $region38: #{tpu_custom_call.1} parent=1 // pred_check
      _
    $region39: #{tpu_custom_call.1} parent=1 // pred_check_branch
      %48 = sbr.rel (0) target = $region41
    $region40: #{tpu_custom_call.1} parent=1 // pred_region
      _
    $region41: #{tpu_custom_call.1} parent=1 // pred_fallthru
      _
    // Predicated region
    $region42: #{tpu_custom_call.1} parent=1 // pred_check
      _
    $region43: #{tpu_custom_call.1} parent=1 // pred_check_branch
      %50 = sbr.rel (0) target = $region45
    $region44: #{tpu_custom_call.1} parent=1 // pred_region
      _
    $region45: #{tpu_custom_call.1} parent=1 // pred_fallthru
      _
    // Predicated region
    $region46: #{tpu_custom_call.1} parent=1 // pred_check
      _
    $region47: #{tpu_custom_call.1} parent=1 // pred_check_branch
      %52 = sbr.rel (0) target = $region49
    $region48: #{tpu_custom_call.1} parent=1 // pred_region
      _
    $region49: #{tpu_custom_call.1} parent=1 // pred_fallthru
      _
    // Predicated region
    $region50: #{tpu_custom_call.1} parent=1 // pred_check
      _
    $region51: #{tpu_custom_call.1} parent=1 // pred_check_branch
      %54 = sbr.rel (0) target = $region53
    $region52: #{tpu_custom_call.1} parent=1 // pred_region
      _
    $region53: #{tpu_custom_call.1} parent=1 // pred_fallthru
      _
    // Predicated region
    $region54: #{tpu_custom_call.1} parent=1 // pred_check
      _
    $region55: #{tpu_custom_call.1} parent=1 // pred_check_branch
      %56 = sbr.rel (0) target = $region57
    $region56: #{tpu_custom_call.1} parent=1 // pred_region
      _
    $region57: #{tpu_custom_call.1} parent=1 // pred_fallthru
      _
    // Predicated region
    $region58: #{tpu_custom_call.1} parent=1 // pred_check
      _
    $region59: #{tpu_custom_call.1} parent=1 // pred_check_branch
      %58 = sbr.rel (0) target = $region61
    $region60: #{tpu_custom_call.1} parent=1 // pred_region
      _
    $region61: #{tpu_custom_call.1} parent=1 // pred_fallthru
      _
    // Predicated region
    $region62: #{tpu_custom_call.1} parent=1 // pred_check
      _
    $region63: #{tpu_custom_call.1} parent=1 // pred_check_branch
      %60 = sbr.rel (0) target = $region65
    $region64: #{tpu_custom_call.1} parent=1 // pred_region
      _
    $region65: #{tpu_custom_call.1} parent=1 // pred_fallthru
      _
    // Predicated region
    $region66: #{tpu_custom_call.1} parent=1 // pred_check
      _
    $region67: #{tpu_custom_call.1} parent=1 // pred_check_branch
      %62 = sbr.rel (0) target = $region69
    $region68: #{tpu_custom_call.1} parent=1 // pred_region
      _
    $region69: #{tpu_custom_call.1} parent=1 // pred_fallthru
      _
    // Predicated region
    $region70: #{tpu_custom_call.1} parent=1 // pred_check
      _
    $region71: #{tpu_custom_call.1} parent=1 // pred_check_branch
      %64 = sbr.rel (0) target = $region73
    $region72: #{tpu_custom_call.1} parent=1 // pred_region
      _
    $region73: #{tpu_custom_call.1} parent=1 // pred_fallthru
      _
    // Predicated region
    $region74: #{tpu_custom_call.1} parent=1 // pred_check
      _
    $region75: #{tpu_custom_call.1} parent=1 // pred_check_branch
      %66 = sbr.rel (0) target = $region77
    $region76: #{tpu_custom_call.1} parent=1 // pred_region
      _
    $region77: #{tpu_custom_call.1} parent=1 // pred_fallthru
      _
    // Predicated region
    $region78: #{tpu_custom_call.1} parent=1 // pred_check
      _
    $region79: #{tpu_custom_call.1} parent=1 // pred_check_branch
      %68 = sbr.rel (0) target = $region81
    $region80: #{tpu_custom_call.1} parent=1 // pred_region
      _
    $region81: #{tpu_custom_call.1} parent=1 // pred_fallthru
      _
    // Predicated region
    $region82: #{tpu_custom_call.1} parent=1 // pred_check
      _
    $region83: #{tpu_custom_call.1} parent=1 // pred_check_branch
      %70 = sbr.rel (0) target = $region85
    $region84: #{tpu_custom_call.1} parent=1 // pred_region
      _
    $region85: #{tpu_custom_call.1} parent=1 // pred_fallthru
      _
    // Predicated region
    $region86: #{tpu_custom_call.1} parent=1 // pred_check
      _
    $region87: #{tpu_custom_call.1} parent=1 // pred_check_branch
      %72 = sbr.rel (0) target = $region89
    $region88: #{tpu_custom_call.1} parent=1 // pred_region
      _
    $region89: #{tpu_custom_call.1} parent=1 // pred_fallthru
      _
    // Predicated region
    $region90: #{tpu_custom_call.1} parent=1 // pred_check
      _
    $region91: #{tpu_custom_call.1} parent=1 // pred_check_branch
      %74 = sbr.rel (0) target = $region93
    $region92: #{tpu_custom_call.1} parent=1 // pred_region
      _
    $region93: #{tpu_custom_call.1} parent=1 // pred_fallthru
      _
    %v75 = vld [vmem:[%s0] sm:$0xff]
    %v76 = vld [vmem:[%s0 + $0x8] sm:$0xff]
    %v77 = vld [vmem:[%s1] sm:$0x3]
    %v78 = vld [vmem:[%s2] sm:$0xff]
    %v79 = vld [vmem:[%s2 + $0x8] sm:$0xff]
    %v80 = vld [vmem:[%s3] sm:$0xff]
    %v81 = vld [vmem:[%s3 + $0x8] sm:$0xff]
    %v82 = vld [vmem:[%s3 + $0x10] sm:$0xff]
    %v83 = vld [vmem:[%s3 + $0x18] sm:$0xff]
    %v84 = vld [vmem:[%s3 + $0x20] sm:$0xff]
    %v85 = vld [vmem:[%s3 + $0x28] sm:$0xff]
    %v86 = vld [vmem:[%s3 + $0x30] sm:$0xff]
    %v87 = vld [vmem:[%s3 + $0x38] sm:$0xff]
    %v88 = vld [vmem:[%s4] sm:$0x3]
    %v90 = vlaneseq
    %v91 = vshrl.u32 %v90, 7
    %v92 = vsub.s32 0, %v91
    %v93 = vrot.slane %v88, %v92
    %v94 = vlaneseq
    %v95 = vshrl.u32 %v94, 7
    %v96 = vsub.s32 1, %v95
    %v97 = vrot.slane %v88, %v96
    %vm100 = vcmask 261120
    %v102 = vsel %vm100, %v77, 0
    %104 = vmatprep.subr.mxu0 %v81
    %105 = vmatpush1.msra.mxu0 %v80
    %106 = vmatprep.subr.mxu0 %v83
    %107 = vmatpush1.msra.mxu0 %v82
    %108 = vmatprep.subr.mxu0 %v85
    %109 = vmatpush1.msra.mxu0 %v84
    %110 = vmatprep.subr.mxu0 %v87
    %111 = vmatpush1.msra.mxu0 %v86
    %112 = vmatprep.subr.mxu0 0.0
    %113 = vmatpush1.msra.mxu0 0.0
    %114 = vmatprep.subr.mxu0 0.0
    %115 = vmatpush1.msra.mxu0 0.0
    %116 = vmatprep.subr.mxu0 0.0
    %117 = vmatpush1.msra.mxu0 0.0
    %118 = vmatprep.subr.mxu0 0.0
    %119 = vmatpush1.msra.mxu0 0.0
    %120 = vmatprep.subr.mxu0 0.0
    %121 = vmatpush1.msra.mxu0 0.0
    %122 = vmatprep.subr.mxu0 0.0
    %123 = vmatpush1.msra.mxu0 0.0
    %124 = vmatprep.subr.mxu0 0.0
    %125 = vmatpush1.msra.mxu0 0.0
    %126 = vmatprep.subr.mxu0 0.0
    %127 = vmatpush1.msra.mxu0 0.0
    %128 = vmatprep.subr.mxu0 0.0
    %129 = vmatpush1.msra.mxu0 0.0
    %130 = vmatprep.subr.mxu0 0.0
    %131 = vmatpush1.msra.mxu0 0.0
    %132 = vmatprep.subr.mxu0 0.0
    %133 = vmatpush1.msra.mxu0 0.0
    %134 = vmatprep.subr.mxu0 0.0
    %135 = vmatpush1.msra.mxu0 0.0
    %136 = vmatprep.subr.mxu0 0.0
    %137 = vmatpush1.msra.mxu0 0.0
    %138 = vmatprep.subr.mxu0 0.0
    %139 = vmatpush1.msra.mxu0 0.0
    %140 = vmatprep.subr.mxu0 0.0
    %141 = vmatpush1.msra.mxu0 0.0
    %142 = vmatprep.subr.mxu0 0.0
    %143 = vmatpush1.msra.mxu0 0.0
    %144 = vmatprep.subr.mxu0 0.0
    %145 = vmatpush1.msra.mxu0 0.0
    %146 = vmatprep.subr.mxu0 0.0
    %147 = vmatpush1.msra.mxu0 0.0
    %148 = vmatprep.subr.mxu0 0.0
    %149 = vmatpush1.msra.mxu0 0.0
    %150 = vmatprep.subr.mxu0 0.0
    %151 = vmatpush1.msra.mxu0 0.0
    %152 = vmatprep.subr.mxu0 0.0
    %153 = vmatpush1.msra.mxu0 0.0
    %154 = vmatprep.subr.mxu0 0.0
    %155 = vmatpush1.msra.mxu0 0.0
    %156 = vmatprep.subr.mxu0 0.0
    %157 = vmatpush1.msra.mxu0 0.0
    %158 = vmatprep.subr.mxu0 0.0
    %159 = vmatpush1.msra.mxu0 0.0
    %160 = vmatprep.subr.mxu0 0.0
    %161 = vmatpush1.msra.mxu0 0.0
    %162 = vmatprep.subr.mxu0 0.0
    %163 = vmatpush1.msra.mxu0 0.0
    %164 = vmatprep.subr.mxu0 0.0
    %165 = vmatpush1.msra.mxu0 0.0
    %166 = vmatprep.subr.mxu0 0.0
    %167 = vmatpush1.msra.mxu0 0.0
    %168 = vmatprep.mubr.f32.mxu0 0.0
    %169 = vmatmul.mubr.f32.gmra.mrb[0].mxu0 %v102
    %v170 = vpop.f32.mrb[0].mxu0
    %v171 = vadd.f32 %v93, %v170
    %v172 = vpop.f32.mrb[0].mxu0
    %v173 = vadd.f32 %v97, %v172
    %174 = vdwg.mxu0
    %v175 = vmul.f32 %v171, 0.5
    %v176 = vmul.f32 %v173, 0.5
    %v177 = vmul.f32 %v171, 0.70710677
    %v178 = vmul.f32 %v173, 0.70710677
    %vm179 = vcmp.lt.f32.partialorder %v177, 0.0
    %vm180 = vcmp.lt.f32.partialorder %v178, 0.0
    %v181 = vsel %vm179, -1.0, 1.0
    %v182 = vsel %vm180, -1.0, 1.0
    %v183 = vmul.f32 %v177, %v181
    %v184 = vmul.f32 %v178, %v182
    %v185 = vmul.f32 %v183, 0.3275911
    %v186 = vmul.f32 %v184, 0.3275911
    %v187 = vadd.f32 %v185, 1.0
    %v188 = vadd.f32 %v186, 1.0
    %v189 = vrcp.pop %v187
    %v190 = vrcp.pop %v188
    %v191 = vmul.f32 %v187, %v189
    %v192 = vmul.f32 %v188, %v190
    %v193 = vsub.f32 2.0, %v191
    %v194 = vsub.f32 2.0, %v192
    %v195 = vmul.f32 %v189, %v193
    %v196 = vmul.f32 %v190, %v194
    %v197 = vmul.f32 %v195, 1.0614054
    %v198 = vmul.f32 %v196, 1.0614054
    %v199 = vadd.f32 %v197, -1.4531521
    %v200 = vadd.f32 %v198, -1.4531521
    %v201 = vmul.f32 %v199, %v195
    %v202 = vmul.f32 %v200, %v196
    %v203 = vadd.f32 %v201, 1.4214138
    %v204 = vadd.f32 %v202, 1.4214138
    %v205 = vmul.f32 %v203, %v195
    %v206 = vmul.f32 %v204, %v196
    %v207 = vadd.f32 %v205, -0.28449672
    %v208 = vadd.f32 %v206, -0.28449672
    %v209 = vmul.f32 %v207, %v195
    %v210 = vmul.f32 %v208, %v196
    %v211 = vadd.f32 %v209, 0.2548296
    %v212 = vadd.f32 %v210, 0.2548296
    %v213 = vmul.f32 %v211, %v195
    %v214 = vmul.f32 %v212, %v196
    %v215 = vsub.f32 0.0, %v183
    %v216 = vsub.f32 0.0, %v184
    %v217 = vmul.f32 %v215, %v183
    %v218 = vmul.f32 %v216, %v184
    %v219 = vmul.f32 %v217, 1.442695
    %v220 = vpow.pop %v219
    %v221 = vmul.f32 %v218, 1.442695
    %v222 = vpow.pop %v221
    %v223 = vmul.f32 %v213, %v220
    %v224 = vmul.f32 %v214, %v222
    %v225 = vsub.f32 1.0, %v223
    %v226 = vsub.f32 1.0, %v224
    %v227 = vmul.f32 %v181, %v225
    %v228 = vmul.f32 %v182, %v226
    %v229 = vadd.f32 %v227, 1.0
    %v230 = vadd.f32 %v228, 1.0
    %v231 = vmul.f32 %v175, %v229
    %v232 = vmul.f32 %v176, %v230
    %v233 = vld [vmem:[%s5] sm:$0xff]
    %v234 = vld [vmem:[%s5 + $0x8] sm:$0xff]
    %v235 = vld [vmem:[%s5 + $0x10] sm:$0xff]
    %v236 = vld [vmem:[%s5 + $0x18] sm:$0xff]
    %v237 = vld [vmem:[%s6] sm:$0x1]
    %v239 = vlaneseq
    %v240 = vshrl.u32 %v239, 7
    %v241 = vsub.s32 0, %v240
    %v242 = vrot.slane %v237, %v241
    %v245 = vsel %vm100, %v231, 0
    %247 = vmatprep.subr.mxu0 0.0
    %248 = vmatpush1.msra.mxu0 %v233
    %249 = vmatprep.subr.mxu0 0.0
    %250 = vmatpush1.msra.mxu0 %v234
    %251 = vmatprep.subr.mxu0 0.0
    %252 = vmatpush1.msra.mxu0 %v235
    %253 = vmatprep.subr.mxu0 0.0
    %254 = vmatpush1.msra.mxu0 %v236
    %255 = vmatprep.subr.mxu0 0.0
    %256 = vmatpush1.msra.mxu0 0.0
    %257 = vmatprep.subr.mxu0 0.0
    %258 = vmatpush1.msra.mxu0 0.0
    %259 = vmatprep.subr.mxu0 0.0
    %260 = vmatpush1.msra.mxu0 0.0
    %261 = vmatprep.subr.mxu0 0.0
    %262 = vmatpush1.msra.mxu0 0.0
    %263 = vmatprep.subr.mxu0 0.0
    %264 = vmatpush1.msra.mxu0 0.0
    %265 = vmatprep.subr.mxu0 0.0
    %266 = vmatpush1.msra.mxu0 0.0
    %267 = vmatprep.subr.mxu0 0.0
    %268 = vmatpush1.msra.mxu0 0.0
    %269 = vmatprep.subr.mxu0 0.0
    %270 = vmatpush1.msra.mxu0 0.0
    %271 = vmatprep.subr.mxu0 0.0
    %272 = vmatpush1.msra.mxu0 0.0
    %273 = vmatprep.subr.mxu0 0.0
    %274 = vmatpush1.msra.mxu0 0.0
    %275 = vmatprep.subr.mxu0 0.0
    %276 = vmatpush1.msra.mxu0 0.0
    %277 = vmatprep.subr.mxu0 0.0
    %278 = vmatpush1.msra.mxu0 0.0
    %279 = vmatprep.subr.mxu0 0.0
    %280 = vmatpush1.msra.mxu0 0.0
    %281 = vmatprep.subr.mxu0 0.0
    %282 = vmatpush1.msra.mxu0 0.0
    %283 = vmatprep.subr.mxu0 0.0
    %284 = vmatpush1.msra.mxu0 0.0
    %285 = vmatprep.subr.mxu0 0.0
    %286 = vmatpush1.msra.mxu0 0.0
    %287 = vmatprep.subr.mxu0 0.0
    %288 = vmatpush1.msra.mxu0 0.0
    %289 = vmatprep.subr.mxu0 0.0
    %290 = vmatpush1.msra.mxu0 0.0
    %291 = vmatprep.subr.mxu0 0.0
    %292 = vmatpush1.msra.mxu0 0.0
    %293 = vmatprep.subr.mxu0 0.0
    %294 = vmatpush1.msra.mxu0 0.0
    %295 = vmatprep.subr.mxu0 0.0
    %296 = vmatpush1.msra.mxu0 0.0
    %297 = vmatprep.subr.mxu0 0.0
    %298 = vmatpush1.msra.mxu0 0.0
    %299 = vmatprep.subr.mxu0 0.0
    %300 = vmatpush1.msra.mxu0 0.0
    %301 = vmatprep.subr.mxu0 0.0
    %302 = vmatpush1.msra.mxu0 0.0
    %303 = vmatprep.subr.mxu0 0.0
    %304 = vmatpush1.msra.mxu0 0.0
    %305 = vmatprep.subr.mxu0 0.0
    %306 = vmatpush1.msra.mxu0 0.0
    %307 = vmatprep.subr.mxu0 0.0
    %308 = vmatpush1.msra.mxu0 0.0
    %309 = vmatprep.subr.mxu0 0.0
    %310 = vmatpush1.msra.mxu0 0.0
    %311 = vmatprep.mubr.f32.mxu0 0.0
    %312 = vmatmul.mubr.f32.gmra.mrb[0].mxu0 %v245
    %v313 = vpop.f32.mrb[0].mxu0
    %v314 = vadd.f32 %v242, %v313
    %v315 = vpop.f32.mrb[0].mxu0
    %316 = vdwg.mxu0
    %v319 = vunpack.c.l.s4 1966171168
    %v320 = vunpack.c.0.s8 %v319
    %v321 = vlaneseq
    %v322 = vshrl.u32 %v321, 7
    %v323 = vsub.s32 %v320, %v322
    %v324 = vrot.slane %v314, %v323
    %v325 = vcombine.high %v324, %v324
    %v327 = vunpack.c.l.s4 1966171168
    %v328 = vunpack.c.0.s8 %v327
    %v329 = vlaneseq
    %v330 = vshrl.u32 %v329, 7
    %v331 = vsub.s32 %v328, %v330
    %v332 = vrot.slane %v324, %v331
    %v334 = vunpack.c.l.s4 1966171168
    %v335 = vunpack.c.0.s8 %v334
    %v336 = vlaneseq
    %v337 = vshrl.u32 %v336, 7
    %v338 = vsub.s32 %v335, %v337
    %v339 = vrot.slane %v325, %v338
    %v340 = vlaneseq
    %v341 = vshrl.u32 %v340, 7
    %v342 = vsub.s32 0, %v341
    %v343 = vrot.slane %v332, %v342
    %v344 = vlaneseq
    %v345 = vshrl.u32 %v344, 7
    %v346 = vsub.s32 0, %v345
    %v347 = vrot.slane %v339, %v346
    %s350 = scalar_lea.vmem %s5, 32
    %v351 = vld [vmem:[%s350] sm:$0xff]
    %v352 = vld [vmem:[%s350 + $0x8] sm:$0xff]
    %v353 = vld [vmem:[%s350 + $0x10] sm:$0xff]
    %v354 = vld [vmem:[%s350 + $0x18] sm:$0xff]
    %s355 = scalar_lea.vmem %s6, 1
    %v356 = vld [vmem:[%s355] sm:$0x1]
    %v358 = vlaneseq
    %v359 = vshrl.u32 %v358, 7
    %v360 = vsub.s32 0, %v359
    %v361 = vrot.slane %v356, %v360
    %363 = vrot.lane.b32.xlu0 %v231, 96
    %v364 = vpop.permute.xlu0 %363
    %v365 = vsel %vm100, %v364, 0
    %367 = vmatprep.subr.mxu0 0.0
    %368 = vmatpush1.msra.mxu0 %v351
    %369 = vmatprep.subr.mxu0 0.0
    %370 = vmatpush1.msra.mxu0 %v352
    %371 = vmatprep.subr.mxu0 0.0
    %372 = vmatpush1.msra.mxu0 %v353
    %373 = vmatprep.subr.mxu0 0.0
    %374 = vmatpush1.msra.mxu0 %v354
    %375 = vmatprep.subr.mxu0 0.0
    %376 = vmatpush1.msra.mxu0 0.0
    %377 = vmatprep.subr.mxu0 0.0
    %378 = vmatpush1.msra.mxu0 0.0
    %379 = vmatprep.subr.mxu0 0.0
    %380 = vmatpush1.msra.mxu0 0.0
    %381 = vmatprep.subr.mxu0 0.0
    %382 = vmatpush1.msra.mxu0 0.0
    %383 = vmatprep.subr.mxu0 0.0
    %384 = vmatpush1.msra.mxu0 0.0
    %385 = vmatprep.subr.mxu0 0.0
    %386 = vmatpush1.msra.mxu0 0.0
    %387 = vmatprep.subr.mxu0 0.0
    %388 = vmatpush1.msra.mxu0 0.0
    %389 = vmatprep.subr.mxu0 0.0
    %390 = vmatpush1.msra.mxu0 0.0
    %391 = vmatprep.subr.mxu0 0.0
    %392 = vmatpush1.msra.mxu0 0.0
    %393 = vmatprep.subr.mxu0 0.0
    %394 = vmatpush1.msra.mxu0 0.0
    %395 = vmatprep.subr.mxu0 0.0
    %396 = vmatpush1.msra.mxu0 0.0
    %397 = vmatprep.subr.mxu0 0.0
    %398 = vmatpush1.msra.mxu0 0.0
    %399 = vmatprep.subr.mxu0 0.0
    %400 = vmatpush1.msra.mxu0 0.0
    %401 = vmatprep.subr.mxu0 0.0
    %402 = vmatpush1.msra.mxu0 0.0
    %403 = vmatprep.subr.mxu0 0.0
    %404 = vmatpush1.msra.mxu0 0.0
    %405 = vmatprep.subr.mxu0 0.0
    %406 = vmatpush1.msra.mxu0 0.0
    %407 = vmatprep.subr.mxu0 0.0
    %408 = vmatpush1.msra.mxu0 0.0
    %409 = vmatprep.subr.mxu0 0.0
    %410 = vmatpush1.msra.mxu0 0.0
    %411 = vmatprep.subr.mxu0 0.0
    %412 = vmatpush1.msra.mxu0 0.0
    %413 = vmatprep.subr.mxu0 0.0
    %414 = vmatpush1.msra.mxu0 0.0
    %415 = vmatprep.subr.mxu0 0.0
    %416 = vmatpush1.msra.mxu0 0.0
    %417 = vmatprep.subr.mxu0 0.0
    %418 = vmatpush1.msra.mxu0 0.0
    %419 = vmatprep.subr.mxu0 0.0
    %420 = vmatpush1.msra.mxu0 0.0
    %421 = vmatprep.subr.mxu0 0.0
    %422 = vmatpush1.msra.mxu0 0.0
    %423 = vmatprep.subr.mxu0 0.0
    %424 = vmatpush1.msra.mxu0 0.0
    %425 = vmatprep.subr.mxu0 0.0
    %426 = vmatpush1.msra.mxu0 0.0
    %427 = vmatprep.subr.mxu0 0.0
    %428 = vmatpush1.msra.mxu0 0.0
    %429 = vmatprep.subr.mxu0 0.0
    %430 = vmatpush1.msra.mxu0 0.0
    %431 = vmatprep.mubr.f32.mxu0 0.0
    %432 = vmatmul.mubr.f32.gmra.mrb[0].mxu0 %v365
    %v433 = vpop.f32.mrb[0].mxu0
    %v434 = vadd.f32 %v361, %v433
    %v435 = vpop.f32.mrb[0].mxu0
    %436 = vdwg.mxu0
    %v439 = vunpack.c.l.s4 1966171168
    %v440 = vunpack.c.0.s8 %v439
    %v441 = vlaneseq
    %v442 = vshrl.u32 %v441, 7
    %v443 = vsub.s32 %v440, %v442
    %v444 = vrot.slane %v434, %v443
    %v445 = vcombine.high %v444, %v444
    %v447 = vunpack.c.l.s4 1966171168
    %v448 = vunpack.c.0.s8 %v447
    %v449 = vlaneseq
    %v450 = vshrl.u32 %v449, 7
    %v451 = vsub.s32 %v448, %v450
    %v452 = vrot.slane %v444, %v451
    %v454 = vunpack.c.l.s4 1966171168
    %v455 = vunpack.c.0.s8 %v454
    %v456 = vlaneseq
    %v457 = vshrl.u32 %v456, 7
    %v458 = vsub.s32 %v455, %v457
    %v459 = vrot.slane %v445, %v458
    %v460 = vlaneseq
    %v461 = vshrl.u32 %v460, 7
    %v462 = vsub.s32 0, %v461
    %v463 = vrot.slane %v452, %v462
    %v464 = vlaneseq
    %v465 = vshrl.u32 %v464, 7
    %v466 = vsub.s32 0, %v465
    %v467 = vrot.slane %v459, %v466
    %s470 = scalar_lea.vmem %s5, 64
    %v471 = vld [vmem:[%s470] sm:$0xff]
    %v472 = vld [vmem:[%s470 + $0x8] sm:$0xff]
    %v473 = vld [vmem:[%s470 + $0x10] sm:$0xff]
    %v474 = vld [vmem:[%s470 + $0x18] sm:$0xff]
    %s475 = scalar_lea.vmem %s6, 2
    %v476 = vld [vmem:[%s475] sm:$0x1]
    %v478 = vlaneseq
    %v479 = vshrl.u32 %v478, 7
    %v480 = vsub.s32 0, %v479
    %v481 = vrot.slane %v476, %v480
    %483 = vrot.lane.b32.xlu0 %v231, 64
    %v484 = vpop.permute.xlu0 %483
    %v485 = vsel %vm100, %v484, 0
    %487 = vmatprep.subr.mxu0 0.0
    %488 = vmatpush1.msra.mxu0 %v471
    %489 = vmatprep.subr.mxu0 0.0
    %490 = vmatpush1.msra.mxu0 %v472
    %491 = vmatprep.subr.mxu0 0.0
    %492 = vmatpush1.msra.mxu0 %v473
    %493 = vmatprep.subr.mxu0 0.0
    %494 = vmatpush1.msra.mxu0 %v474
    %495 = vmatprep.subr.mxu0 0.0
    %496 = vmatpush1.msra.mxu0 0.0
    %497 = vmatprep.subr.mxu0 0.0
    %498 = vmatpush1.msra.mxu0 0.0
    %499 = vmatprep.subr.mxu0 0.0
    %500 = vmatpush1.msra.mxu0 0.0
    %501 = vmatprep.subr.mxu0 0.0
    %502 = vmatpush1.msra.mxu0 0.0
    %503 = vmatprep.subr.mxu0 0.0
    %504 = vmatpush1.msra.mxu0 0.0
    %505 = vmatprep.subr.mxu0 0.0
    %506 = vmatpush1.msra.mxu0 0.0
    %507 = vmatprep.subr.mxu0 0.0
    %508 = vmatpush1.msra.mxu0 0.0
    %509 = vmatprep.subr.mxu0 0.0
    %510 = vmatpush1.msra.mxu0 0.0
    %511 = vmatprep.subr.mxu0 0.0
    %512 = vmatpush1.msra.mxu0 0.0
    %513 = vmatprep.subr.mxu0 0.0
    %514 = vmatpush1.msra.mxu0 0.0
    %515 = vmatprep.subr.mxu0 0.0
    %516 = vmatpush1.msra.mxu0 0.0
    %517 = vmatprep.subr.mxu0 0.0
    %518 = vmatpush1.msra.mxu0 0.0
    %519 = vmatprep.subr.mxu0 0.0
    %520 = vmatpush1.msra.mxu0 0.0
    %521 = vmatprep.subr.mxu0 0.0
    %522 = vmatpush1.msra.mxu0 0.0
    %523 = vmatprep.subr.mxu0 0.0
    %524 = vmatpush1.msra.mxu0 0.0
    %525 = vmatprep.subr.mxu0 0.0
    %526 = vmatpush1.msra.mxu0 0.0
    %527 = vmatprep.subr.mxu0 0.0
    %528 = vmatpush1.msra.mxu0 0.0
    %529 = vmatprep.subr.mxu0 0.0
    %530 = vmatpush1.msra.mxu0 0.0
    %531 = vmatprep.subr.mxu0 0.0
    %532 = vmatpush1.msra.mxu0 0.0
    %533 = vmatprep.subr.mxu0 0.0
    %534 = vmatpush1.msra.mxu0 0.0
    %535 = vmatprep.subr.mxu0 0.0
    %536 = vmatpush1.msra.mxu0 0.0
    %537 = vmatprep.subr.mxu0 0.0
    %538 = vmatpush1.msra.mxu0 0.0
    %539 = vmatprep.subr.mxu0 0.0
    %540 = vmatpush1.msra.mxu0 0.0
    %541 = vmatprep.subr.mxu0 0.0
    %542 = vmatpush1.msra.mxu0 0.0
    %543 = vmatprep.subr.mxu0 0.0
    %544 = vmatpush1.msra.mxu0 0.0
    %545 = vmatprep.subr.mxu0 0.0
    %546 = vmatpush1.msra.mxu0 0.0
    %547 = vmatprep.subr.mxu0 0.0
    %548 = vmatpush1.msra.mxu0 0.0
    %549 = vmatprep.subr.mxu0 0.0
    %550 = vmatpush1.msra.mxu0 0.0
    %551 = vmatprep.mubr.f32.mxu0 0.0
    %552 = vmatmul.mubr.f32.gmra.mrb[0].mxu0 %v485
    %v553 = vpop.f32.mrb[0].mxu0
    %v554 = vadd.f32 %v481, %v553
    %v555 = vpop.f32.mrb[0].mxu0
    %556 = vdwg.mxu0
    %v559 = vunpack.c.l.s4 1966171168
    %v560 = vunpack.c.0.s8 %v559
    %v561 = vlaneseq
    %v562 = vshrl.u32 %v561, 7
    %v563 = vsub.s32 %v560, %v562
    %v564 = vrot.slane %v554, %v563
    %v565 = vcombine.high %v564, %v564
    %v567 = vunpack.c.l.s4 1966171168
    %v568 = vunpack.c.0.s8 %v567
    %v569 = vlaneseq
    %v570 = vshrl.u32 %v569, 7
    %v571 = vsub.s32 %v568, %v570
    %v572 = vrot.slane %v564, %v571
    %v574 = vunpack.c.l.s4 1966171168
    %v575 = vunpack.c.0.s8 %v574
    %v576 = vlaneseq
    %v577 = vshrl.u32 %v576, 7
    %v578 = vsub.s32 %v575, %v577
    %v579 = vrot.slane %v565, %v578
    %v580 = vlaneseq
    %v581 = vshrl.u32 %v580, 7
    %v582 = vsub.s32 0, %v581
    %v583 = vrot.slane %v572, %v582
    %v584 = vlaneseq
    %v585 = vshrl.u32 %v584, 7
    %v586 = vsub.s32 0, %v585
    %v587 = vrot.slane %v579, %v586
    %s590 = scalar_lea.vmem %s5, 96
    %v591 = vld [vmem:[%s590] sm:$0xff]
    %v592 = vld [vmem:[%s590 + $0x8] sm:$0xff]
    %v593 = vld [vmem:[%s590 + $0x10] sm:$0xff]
    %v594 = vld [vmem:[%s590 + $0x18] sm:$0xff]
    %s595 = scalar_lea.vmem %s6, 3
    %v596 = vld [vmem:[%s595] sm:$0x1]
    %v598 = vlaneseq
    %v599 = vshrl.u32 %v598, 7
    %v600 = vsub.s32 0, %v599
    %v601 = vrot.slane %v596, %v600
    %603 = vrot.lane.b32.xlu0 %v231, 32
    %v604 = vpop.permute.xlu0 %603
    %v605 = vsel %vm100, %v604, 0
    %607 = vmatprep.subr.mxu0 0.0
    %608 = vmatpush1.msra.mxu0 %v591
    %609 = vmatprep.subr.mxu0 0.0
    %610 = vmatpush1.msra.mxu0 %v592
    %611 = vmatprep.subr.mxu0 0.0
    %612 = vmatpush1.msra.mxu0 %v593
    %613 = vmatprep.subr.mxu0 0.0
    %614 = vmatpush1.msra.mxu0 %v594
    %615 = vmatprep.subr.mxu0 0.0
    %616 = vmatpush1.msra.mxu0 0.0
    %617 = vmatprep.subr.mxu0 0.0
    %618 = vmatpush1.msra.mxu0 0.0
    %619 = vmatprep.subr.mxu0 0.0
    %620 = vmatpush1.msra.mxu0 0.0
    %621 = vmatprep.subr.mxu0 0.0
    %622 = vmatpush1.msra.mxu0 0.0
    %623 = vmatprep.subr.mxu0 0.0
    %624 = vmatpush1.msra.mxu0 0.0
    %625 = vmatprep.subr.mxu0 0.0
    %626 = vmatpush1.msra.mxu0 0.0
    %627 = vmatprep.subr.mxu0 0.0
    %628 = vmatpush1.msra.mxu0 0.0
    %629 = vmatprep.subr.mxu0 0.0
    %630 = vmatpush1.msra.mxu0 0.0
    %631 = vmatprep.subr.mxu0 0.0
    %632 = vmatpush1.msra.mxu0 0.0
    %633 = vmatprep.subr.mxu0 0.0
    %634 = vmatpush1.msra.mxu0 0.0
    %635 = vmatprep.subr.mxu0 0.0
    %636 = vmatpush1.msra.mxu0 0.0
    %637 = vmatprep.subr.mxu0 0.0
    %638 = vmatpush1.msra.mxu0 0.0
    %639 = vmatprep.subr.mxu0 0.0
    %640 = vmatpush1.msra.mxu0 0.0
    %641 = vmatprep.subr.mxu0 0.0
    %642 = vmatpush1.msra.mxu0 0.0
    %643 = vmatprep.subr.mxu0 0.0
    %644 = vmatpush1.msra.mxu0 0.0
    %645 = vmatprep.subr.mxu0 0.0
    %646 = vmatpush1.msra.mxu0 0.0
    %647 = vmatprep.subr.mxu0 0.0
    %648 = vmatpush1.msra.mxu0 0.0
    %649 = vmatprep.subr.mxu0 0.0
    %650 = vmatpush1.msra.mxu0 0.0
    %651 = vmatprep.subr.mxu0 0.0
    %652 = vmatpush1.msra.mxu0 0.0
    %653 = vmatprep.subr.mxu0 0.0
    %654 = vmatpush1.msra.mxu0 0.0
    %655 = vmatprep.subr.mxu0 0.0
    %656 = vmatpush1.msra.mxu0 0.0
    %657 = vmatprep.subr.mxu0 0.0
    %658 = vmatpush1.msra.mxu0 0.0
    %659 = vmatprep.subr.mxu0 0.0
    %660 = vmatpush1.msra.mxu0 0.0
    %661 = vmatprep.subr.mxu0 0.0
    %662 = vmatpush1.msra.mxu0 0.0
    %663 = vmatprep.subr.mxu0 0.0
    %664 = vmatpush1.msra.mxu0 0.0
    %665 = vmatprep.subr.mxu0 0.0
    %666 = vmatpush1.msra.mxu0 0.0
    %667 = vmatprep.subr.mxu0 0.0
    %668 = vmatpush1.msra.mxu0 0.0
    %669 = vmatprep.subr.mxu0 0.0
    %670 = vmatpush1.msra.mxu0 0.0
    %671 = vmatprep.mubr.f32.mxu0 0.0
    %672 = vmatmul.mubr.f32.gmra.mrb[0].mxu0 %v605
    %v673 = vpop.f32.mrb[0].mxu0
    %v674 = vadd.f32 %v601, %v673
    %v675 = vpop.f32.mrb[0].mxu0
    %676 = vdwg.mxu0
    %v679 = vunpack.c.l.s4 1966171168
    %v680 = vunpack.c.0.s8 %v679
    %v681 = vlaneseq
    %v682 = vshrl.u32 %v681, 7
    %v683 = vsub.s32 %v680, %v682
    %v684 = vrot.slane %v674, %v683
    %v685 = vcombine.high %v684, %v684
    %v687 = vunpack.c.l.s4 1966171168
    %v688 = vunpack.c.0.s8 %v687
    %v689 = vlaneseq
    %v690 = vshrl.u32 %v689, 7
    %v691 = vsub.s32 %v688, %v690
    %v692 = vrot.slane %v684, %v691
    %v694 = vunpack.c.l.s4 1966171168
    %v695 = vunpack.c.0.s8 %v694
    %v696 = vlaneseq
    %v697 = vshrl.u32 %v696, 7
    %v698 = vsub.s32 %v695, %v697
    %v699 = vrot.slane %v685, %v698
    %v700 = vlaneseq
    %v701 = vshrl.u32 %v700, 7
    %v702 = vsub.s32 0, %v701
    %v703 = vrot.slane %v692, %v702
    %v704 = vlaneseq
    %v705 = vshrl.u32 %v704, 7
    %v706 = vsub.s32 0, %v705
    %v707 = vrot.slane %v699, %v706
    %s710 = scalar_lea.vmem %s5, 128
    %v711 = vld [vmem:[%s710] sm:$0xff]
    %v712 = vld [vmem:[%s710 + $0x8] sm:$0xff]
    %v713 = vld [vmem:[%s710 + $0x10] sm:$0xff]
    %v714 = vld [vmem:[%s710 + $0x18] sm:$0xff]
    %s715 = scalar_lea.vmem %s6, 4
    %v716 = vld [vmem:[%s715] sm:$0x1]
    %v718 = vlaneseq
    %v719 = vshrl.u32 %v718, 7
    %v720 = vsub.s32 0, %v719
    %v721 = vrot.slane %v716, %v720
    %v724 = vsel %vm100, %v232, 0
    %726 = vmatprep.subr.mxu0 0.0
    %727 = vmatpush1.msra.mxu0 %v711
    %728 = vmatprep.subr.mxu0 0.0
    %729 = vmatpush1.msra.mxu0 %v712
    %730 = vmatprep.subr.mxu0 0.0
    %731 = vmatpush1.msra.mxu0 %v713
    %732 = vmatprep.subr.mxu0 0.0
    %733 = vmatpush1.msra.mxu0 %v714
    %734 = vmatprep.subr.mxu0 0.0
    %735 = vmatpush1.msra.mxu0 0.0
    %736 = vmatprep.subr.mxu0 0.0
    %737 = vmatpush1.msra.mxu0 0.0
    %738 = vmatprep.subr.mxu0 0.0
    %739 = vmatpush1.msra.mxu0 0.0
    %740 = vmatprep.subr.mxu0 0.0
    %741 = vmatpush1.msra.mxu0 0.0
    %742 = vmatprep.subr.mxu0 0.0
    %743 = vmatpush1.msra.mxu0 0.0
    %744 = vmatprep.subr.mxu0 0.0
    %745 = vmatpush1.msra.mxu0 0.0
    %746 = vmatprep.subr.mxu0 0.0
    %747 = vmatpush1.msra.mxu0 0.0
    %748 = vmatprep.subr.mxu0 0.0
    %749 = vmatpush1.msra.mxu0 0.0
    %750 = vmatprep.subr.mxu0 0.0
    %751 = vmatpush1.msra.mxu0 0.0
    %752 = vmatprep.subr.mxu0 0.0
    %753 = vmatpush1.msra.mxu0 0.0
    %754 = vmatprep.subr.mxu0 0.0
    %755 = vmatpush1.msra.mxu0 0.0
    %756 = vmatprep.subr.mxu0 0.0
    %757 = vmatpush1.msra.mxu0 0.0
    %758 = vmatprep.subr.mxu0 0.0
    %759 = vmatpush1.msra.mxu0 0.0
    %760 = vmatprep.subr.mxu0 0.0
    %761 = vmatpush1.msra.mxu0 0.0
    %762 = vmatprep.subr.mxu0 0.0
    %763 = vmatpush1.msra.mxu0 0.0
    %764 = vmatprep.subr.mxu0 0.0
    %765 = vmatpush1.msra.mxu0 0.0
    %766 = vmatprep.subr.mxu0 0.0
    %767 = vmatpush1.msra.mxu0 0.0
    %768 = vmatprep.subr.mxu0 0.0
    %769 = vmatpush1.msra.mxu0 0.0
    %770 = vmatprep.subr.mxu0 0.0
    %771 = vmatpush1.msra.mxu0 0.0
    %772 = vmatprep.subr.mxu0 0.0
    %773 = vmatpush1.msra.mxu0 0.0
    %774 = vmatprep.subr.mxu0 0.0
    %775 = vmatpush1.msra.mxu0 0.0
    %776 = vmatprep.subr.mxu0 0.0
    %777 = vmatpush1.msra.mxu0 0.0
    %778 = vmatprep.subr.mxu0 0.0
    %779 = vmatpush1.msra.mxu0 0.0
    %780 = vmatprep.subr.mxu0 0.0
    %781 = vmatpush1.msra.mxu0 0.0
    %782 = vmatprep.subr.mxu0 0.0
    %783 = vmatpush1.msra.mxu0 0.0
    %784 = vmatprep.subr.mxu0 0.0
    %785 = vmatpush1.msra.mxu0 0.0
    %786 = vmatprep.subr.mxu0 0.0
    %787 = vmatpush1.msra.mxu0 0.0
    %788 = vmatprep.subr.mxu0 0.0
    %789 = vmatpush1.msra.mxu0 0.0
    %790 = vmatprep.mubr.f32.mxu0 0.0
    %791 = vmatmul.mubr.f32.gmra.mrb[0].mxu0 %v724
    %v792 = vpop.f32.mrb[0].mxu0
    %v793 = vadd.f32 %v721, %v792
    %v794 = vpop.f32.mrb[0].mxu0
    %795 = vdwg.mxu0
    %v798 = vunpack.c.l.s4 1966171168
    %v799 = vunpack.c.0.s8 %v798
    %v800 = vlaneseq
    %v801 = vshrl.u32 %v800, 7
    %v802 = vsub.s32 %v799, %v801
    %v803 = vrot.slane %v793, %v802
    %v804 = vcombine.high %v803, %v803
    %v806 = vunpack.c.l.s4 1966171168
    %v807 = vunpack.c.0.s8 %v806
    %v808 = vlaneseq
    %v809 = vshrl.u32 %v808, 7
    %v810 = vsub.s32 %v807, %v809
    %v811 = vrot.slane %v803, %v810
    %v813 = vunpack.c.l.s4 1966171168
    %v814 = vunpack.c.0.s8 %v813
    %v815 = vlaneseq
    %v816 = vshrl.u32 %v815, 7
    %v817 = vsub.s32 %v814, %v816
    %v818 = vrot.slane %v804, %v817
    %v819 = vlaneseq
    %v820 = vshrl.u32 %v819, 7
    %v821 = vsub.s32 0, %v820
    %v822 = vrot.slane %v811, %v821
    %v823 = vlaneseq
    %v824 = vshrl.u32 %v823, 7
    %v825 = vsub.s32 0, %v824
    %v826 = vrot.slane %v818, %v825
    %s829 = scalar_lea.vmem %s5, 160
    %v830 = vld [vmem:[%s829] sm:$0xff]
    %v831 = vld [vmem:[%s829 + $0x8] sm:$0xff]
    %v832 = vld [vmem:[%s829 + $0x10] sm:$0xff]
    %v833 = vld [vmem:[%s829 + $0x18] sm:$0xff]
    %s834 = scalar_lea.vmem %s6, 5
    %v835 = vld [vmem:[%s834] sm:$0x1]
    %v837 = vlaneseq
    %v838 = vshrl.u32 %v837, 7
    %v839 = vsub.s32 0, %v838
    %v840 = vrot.slane %v835, %v839
    %842 = vrot.lane.b32.xlu0 %v232, 96
    %v843 = vpop.permute.xlu0 %842
    %v844 = vsel %vm100, %v843, 0
    %846 = vmatprep.subr.mxu0 0.0
    %847 = vmatpush1.msra.mxu0 %v830
    %848 = vmatprep.subr.mxu0 0.0
    %849 = vmatpush1.msra.mxu0 %v831
    %850 = vmatprep.subr.mxu0 0.0
    %851 = vmatpush1.msra.mxu0 %v832
    %852 = vmatprep.subr.mxu0 0.0
    %853 = vmatpush1.msra.mxu0 %v833
    %854 = vmatprep.subr.mxu0 0.0
    %855 = vmatpush1.msra.mxu0 0.0
    %856 = vmatprep.subr.mxu0 0.0
    %857 = vmatpush1.msra.mxu0 0.0
    %858 = vmatprep.subr.mxu0 0.0
    %859 = vmatpush1.msra.mxu0 0.0
    %860 = vmatprep.subr.mxu0 0.0
    %861 = vmatpush1.msra.mxu0 0.0
    %862 = vmatprep.subr.mxu0 0.0
    %863 = vmatpush1.msra.mxu0 0.0
    %864 = vmatprep.subr.mxu0 0.0
    %865 = vmatpush1.msra.mxu0 0.0
    %866 = vmatprep.subr.mxu0 0.0
    %867 = vmatpush1.msra.mxu0 0.0
    %868 = vmatprep.subr.mxu0 0.0
    %869 = vmatpush1.msra.mxu0 0.0
    %870 = vmatprep.subr.mxu0 0.0
    %871 = vmatpush1.msra.mxu0 0.0
    %872 = vmatprep.subr.mxu0 0.0
    %873 = vmatpush1.msra.mxu0 0.0
    %874 = vmatprep.subr.mxu0 0.0
    %875 = vmatpush1.msra.mxu0 0.0
    %876 = vmatprep.subr.mxu0 0.0
    %877 = vmatpush1.msra.mxu0 0.0
    %878 = vmatprep.subr.mxu0 0.0
    %879 = vmatpush1.msra.mxu0 0.0
    %880 = vmatprep.subr.mxu0 0.0
    %881 = vmatpush1.msra.mxu0 0.0
    %882 = vmatprep.subr.mxu0 0.0
    %883 = vmatpush1.msra.mxu0 0.0
    %884 = vmatprep.subr.mxu0 0.0
    %885 = vmatpush1.msra.mxu0 0.0
    %886 = vmatprep.subr.mxu0 0.0
    %887 = vmatpush1.msra.mxu0 0.0
    %888 = vmatprep.subr.mxu0 0.0
    %889 = vmatpush1.msra.mxu0 0.0
    %890 = vmatprep.subr.mxu0 0.0
    %891 = vmatpush1.msra.mxu0 0.0
    %892 = vmatprep.subr.mxu0 0.0
    %893 = vmatpush1.msra.mxu0 0.0
    %894 = vmatprep.subr.mxu0 0.0
    %895 = vmatpush1.msra.mxu0 0.0
    %896 = vmatprep.subr.mxu0 0.0
    %897 = vmatpush1.msra.mxu0 0.0
    %898 = vmatprep.subr.mxu0 0.0
    %899 = vmatpush1.msra.mxu0 0.0
    %900 = vmatprep.subr.mxu0 0.0
    %901 = vmatpush1.msra.mxu0 0.0
    %902 = vmatprep.subr.mxu0 0.0
    %903 = vmatpush1.msra.mxu0 0.0
    %904 = vmatprep.subr.mxu0 0.0
    %905 = vmatpush1.msra.mxu0 0.0
    %906 = vmatprep.subr.mxu0 0.0
    %907 = vmatpush1.msra.mxu0 0.0
    %908 = vmatprep.subr.mxu0 0.0
    %909 = vmatpush1.msra.mxu0 0.0
    %910 = vmatprep.mubr.f32.mxu0 0.0
    %911 = vmatmul.mubr.f32.gmra.mrb[0].mxu0 %v844
    %v912 = vpop.f32.mrb[0].mxu0
    %v913 = vadd.f32 %v840, %v912
    %v914 = vpop.f32.mrb[0].mxu0
    %915 = vdwg.mxu0
    %v918 = vunpack.c.l.s4 1966171168
    %v919 = vunpack.c.0.s8 %v918
    %v920 = vlaneseq
    %v921 = vshrl.u32 %v920, 7
    %v922 = vsub.s32 %v919, %v921
    %v923 = vrot.slane %v913, %v922
    %v924 = vcombine.high %v923, %v923
    %v926 = vunpack.c.l.s4 1966171168
    %v927 = vunpack.c.0.s8 %v926
    %v928 = vlaneseq
    %v929 = vshrl.u32 %v928, 7
    %v930 = vsub.s32 %v927, %v929
    %v931 = vrot.slane %v923, %v930
    %v933 = vunpack.c.l.s4 1966171168
    %v934 = vunpack.c.0.s8 %v933
    %v935 = vlaneseq
    %v936 = vshrl.u32 %v935, 7
    %v937 = vsub.s32 %v934, %v936
    %v938 = vrot.slane %v924, %v937
    %v939 = vlaneseq
    %v940 = vshrl.u32 %v939, 7
    %v941 = vsub.s32 0, %v940
    %v942 = vrot.slane %v931, %v941
    %v943 = vlaneseq
    %v944 = vshrl.u32 %v943, 7
    %v945 = vsub.s32 0, %v944
    %v946 = vrot.slane %v938, %v945
    %v949 = vld [vmem:[%s7] sm:$0x1]
    %v950 = vld [vmem:[%s8] sm:$0x1]
    %v951 = vsel %vm100, %v75, 0.0
    %952 = vadd.xlane.f32.xlu0 %v951
    %v953 = vpop.xlane.xlu0 %952
    %v954 = vsel %vm100, %v76, 0.0
    %955 = vadd.xlane.f32.xlu0 %v954
    %v956 = vpop.xlane.xlu0 %955
    %v957 = vrcp.pop 32.0
    %v958 = vmul.f32 %v953, %v957
    %v959 = vmul.f32 %v956, %v957
    %v960 = vsub.f32 %v75, %v958
    %v961 = vsub.f32 %v76, %v959
    %v962 = vmul.f32 %v960, %v960
    %v963 = vmul.f32 %v961, %v961
    %v964 = vsel %vm100, %v962, 0.0
    %965 = vadd.xlane.f32.xlu0 %v964
    %v966 = vpop.xlane.xlu0 %965
    %v967 = vsel %vm100, %v963, 0.0
    %968 = vadd.xlane.f32.xlu0 %v967
    %v969 = vpop.xlane.xlu0 %968
    %v970 = vmul.f32 %v966, %v957
    %v971 = vmul.f32 %v969, %v957
    %v972 = vadd.f32 %v970, 1e-05
    %v973 = vadd.f32 %v971, 1e-05
    %v974 = vrsqrt.pop %v972
    %v975 = vrsqrt.pop %v973
    %v976 = vmul.f32 %v960, %v974
    %v977 = vmul.f32 %v961, %v975
    %v979 = vlaneseq
    %v980 = vshrl.u32 %v979, 7
    %v981 = vsub.s32 0, %v980
    %v982 = vrot.slane %v949, %v981
    %v984 = vmul.f32 %v976, %v982
    %v985 = vmul.f32 %v977, %v982
    %v987 = vlaneseq
    %v988 = vshrl.u32 %v987, 7
    %v989 = vsub.s32 0, %v988
    %v990 = vrot.slane %v950, %v989
    %v992 = vadd.f32 %v984, %v990
    %v993 = vadd.f32 %v985, %v990
    %v994 = vmul.f32 %v992, %v343
    %v995 = vmul.f32 %v993, %v347
    %v996 = vadd.f32 %v994, %v583
    %v997 = vadd.f32 %v995, %v587
    %v998 = vld [vmem:[%s11] sm:$0xff]
    %v999 = vld [vmem:[%s11 + $0x8] sm:$0xff]
    %v1000 = vld [vmem:[%s11 + $0x10] sm:$0xff]
    %v1001 = vld [vmem:[%s11 + $0x18] sm:$0xff]
    %v1002 = vld [vmem:[%s14] sm:$0x1]
    %v1004 = vlaneseq
    %v1005 = vshrl.u32 %v1004, 7
    %v1006 = vsub.s32 0, %v1005
    %v1007 = vrot.slane %v1002, %v1006
    %v1010 = vsel %vm100, %v996, 0
    %v1013 = vsel %vm100, %v997, 0
    %1015 = vmatprep.subr.mxu0 0.0
    %1016 = vmatpush1.msra.mxu0 %v998
    %1017 = vmatprep.subr.mxu0 0.0
    %1018 = vmatpush1.msra.mxu0 %v999
    %1019 = vmatprep.subr.mxu0 0.0
    %1020 = vmatpush1.msra.mxu0 %v1000
    %1021 = vmatprep.subr.mxu0 0.0
    %1022 = vmatpush1.msra.mxu0 %v1001
    %1023 = vmatprep.subr.mxu0 0.0
    %1024 = vmatpush1.msra.mxu0 0.0
    %1025 = vmatprep.subr.mxu0 0.0
    %1026 = vmatpush1.msra.mxu0 0.0
    %1027 = vmatprep.subr.mxu0 0.0
    %1028 = vmatpush1.msra.mxu0 0.0
    %1029 = vmatprep.subr.mxu0 0.0
    %1030 = vmatpush1.msra.mxu0 0.0
    %1031 = vmatprep.subr.mxu0 0.0
    %1032 = vmatpush1.msra.mxu0 0.0
    %1033 = vmatprep.subr.mxu0 0.0
    %1034 = vmatpush1.msra.mxu0 0.0
    %1035 = vmatprep.subr.mxu0 0.0
    %1036 = vmatpush1.msra.mxu0 0.0
    %1037 = vmatprep.subr.mxu0 0.0
    %1038 = vmatpush1.msra.mxu0 0.0
    %1039 = vmatprep.subr.mxu0 0.0
    %1040 = vmatpush1.msra.mxu0 0.0
    %1041 = vmatprep.subr.mxu0 0.0
    %1042 = vmatpush1.msra.mxu0 0.0
    %1043 = vmatprep.subr.mxu0 0.0
    %1044 = vmatpush1.msra.mxu0 0.0
    %1045 = vmatprep.subr.mxu0 0.0
    %1046 = vmatpush1.msra.mxu0 0.0
    %1047 = vmatprep.subr.mxu0 0.0
    %1048 = vmatpush1.msra.mxu0 0.0
    %1049 = vmatprep.subr.mxu0 0.0
    %1050 = vmatpush1.msra.mxu0 0.0
    %1051 = vmatprep.subr.mxu0 0.0
    %1052 = vmatpush1.msra.mxu0 0.0
    %1053 = vmatprep.subr.mxu0 0.0
    %1054 = vmatpush1.msra.mxu0 0.0
    %1055 = vmatprep.subr.mxu0 0.0
    %1056 = vmatpush1.msra.mxu0 0.0
    %1057 = vmatprep.subr.mxu0 0.0
    %1058 = vmatpush1.msra.mxu0 0.0
    %1059 = vmatprep.subr.mxu0 0.0
    %1060 = vmatpush1.msra.mxu0 0.0
    %1061 = vmatprep.subr.mxu0 0.0
    %1062 = vmatpush1.msra.mxu0 0.0
    %1063 = vmatprep.subr.mxu0 0.0
    %1064 = vmatpush1.msra.mxu0 0.0
    %1065 = vmatprep.subr.mxu0 0.0
    %1066 = vmatpush1.msra.mxu0 0.0
    %1067 = vmatprep.subr.mxu0 0.0
    %1068 = vmatpush1.msra.mxu0 0.0
    %1069 = vmatprep.subr.mxu0 0.0
    %1070 = vmatpush1.msra.mxu0 0.0
    %1071 = vmatprep.subr.mxu0 0.0
    %1072 = vmatpush1.msra.mxu0 0.0
    %1073 = vmatprep.subr.mxu0 0.0
    %1074 = vmatpush1.msra.mxu0 0.0
    %1075 = vmatprep.subr.mxu0 0.0
    %1076 = vmatpush1.msra.mxu0 0.0
    %1077 = vmatprep.subr.mxu0 0.0
    %1078 = vmatpush1.msra.mxu0 0.0
    %1079 = vmatprep.mubr.f32.mxu0 0.0
    %1080 = vmatmul.mubr.f32.gmra.mrb[0].mxu0 %v1010
    %v1081 = vpop.f32.mrb[0].mxu0
    %v1082 = vadd.f32 %v1007, %v1081
    %v1083 = vpop.f32.mrb[0].mxu0
    %1084 = vmatprep.mubr.f32.mxu0 0.0
    %1085 = vmatmul.mubr.f32.gmra.mrb[0].mxu0 %v1013
    %v1086 = vpop.f32.mrb[0].mxu0
    %v1087 = vadd.f32 %v1007, %v1086
    %v1088 = vpop.f32.mrb[0].mxu0
    %1089 = vdwg.mxu0
    %v1090 = vld [vmem:[%s12] sm:$0xff]
    %v1091 = vld [vmem:[%s12 + $0x8] sm:$0xff]
    %v1092 = vld [vmem:[%s12 + $0x10] sm:$0xff]
    %v1093 = vld [vmem:[%s12 + $0x18] sm:$0xff]
    %v1094 = vld [vmem:[%s15] sm:$0x1]
    %v1096 = vlaneseq
    %v1097 = vshrl.u32 %v1096, 7
    %v1098 = vsub.s32 0, %v1097
    %v1099 = vrot.slane %v1094, %v1098
    %1101 = vmatprep.subr.mxu0 0.0
    %1102 = vmatpush1.msra.mxu0 %v1090
    %1103 = vmatprep.subr.mxu0 0.0
    %1104 = vmatpush1.msra.mxu0 %v1091
    %1105 = vmatprep.subr.mxu0 0.0
    %1106 = vmatpush1.msra.mxu0 %v1092
    %1107 = vmatprep.subr.mxu0 0.0
    %1108 = vmatpush1.msra.mxu0 %v1093
    %1109 = vmatprep.subr.mxu0 0.0
    %1110 = vmatpush1.msra.mxu0 0.0
    %1111 = vmatprep.subr.mxu0 0.0
    %1112 = vmatpush1.msra.mxu0 0.0
    %1113 = vmatprep.subr.mxu0 0.0
    %1114 = vmatpush1.msra.mxu0 0.0
    %1115 = vmatprep.subr.mxu0 0.0
    %1116 = vmatpush1.msra.mxu0 0.0
    %1117 = vmatprep.subr.mxu0 0.0
    %1118 = vmatpush1.msra.mxu0 0.0
    %1119 = vmatprep.subr.mxu0 0.0
    %1120 = vmatpush1.msra.mxu0 0.0
    %1121 = vmatprep.subr.mxu0 0.0
    %1122 = vmatpush1.msra.mxu0 0.0
    %1123 = vmatprep.subr.mxu0 0.0
    %1124 = vmatpush1.msra.mxu0 0.0
    %1125 = vmatprep.subr.mxu0 0.0
    %1126 = vmatpush1.msra.mxu0 0.0
    %1127 = vmatprep.subr.mxu0 0.0
    %1128 = vmatpush1.msra.mxu0 0.0
    %1129 = vmatprep.subr.mxu0 0.0
    %1130 = vmatpush1.msra.mxu0 0.0
    %1131 = vmatprep.subr.mxu0 0.0
    %1132 = vmatpush1.msra.mxu0 0.0
    %1133 = vmatprep.subr.mxu0 0.0
    %1134 = vmatpush1.msra.mxu0 0.0
    %1135 = vmatprep.subr.mxu0 0.0
    %1136 = vmatpush1.msra.mxu0 0.0
    %1137 = vmatprep.subr.mxu0 0.0
    %1138 = vmatpush1.msra.mxu0 0.0
    %1139 = vmatprep.subr.mxu0 0.0
    %1140 = vmatpush1.msra.mxu0 0.0
    %1141 = vmatprep.subr.mxu0 0.0
    %1142 = vmatpush1.msra.mxu0 0.0
    %1143 = vmatprep.subr.mxu0 0.0
    %1144 = vmatpush1.msra.mxu0 0.0
    %1145 = vmatprep.subr.mxu0 0.0
    %1146 = vmatpush1.msra.mxu0 0.0
    %1147 = vmatprep.subr.mxu0 0.0
    %1148 = vmatpush1.msra.mxu0 0.0
    %1149 = vmatprep.subr.mxu0 0.0
    %1150 = vmatpush1.msra.mxu0 0.0
    %1151 = vmatprep.subr.mxu0 0.0
    %1152 = vmatpush1.msra.mxu0 0.0
    %1153 = vmatprep.subr.mxu0 0.0
    %1154 = vmatpush1.msra.mxu0 0.0
    %1155 = vmatprep.subr.mxu0 0.0
    %1156 = vmatpush1.msra.mxu0 0.0
    %1157 = vmatprep.subr.mxu0 0.0
    %1158 = vmatpush1.msra.mxu0 0.0
    %1159 = vmatprep.subr.mxu0 0.0
    %1160 = vmatpush1.msra.mxu0 0.0
    %1161 = vmatprep.subr.mxu0 0.0
    %1162 = vmatpush1.msra.mxu0 0.0
    %1163 = vmatprep.subr.mxu0 0.0
    %1164 = vmatpush1.msra.mxu0 0.0
    %1165 = vmatprep.mubr.f32.mxu0 0.0
    %1166 = vmatmul.mubr.f32.gmra.mrb[0].mxu0 %v1010
    %v1167 = vpop.f32.mrb[0].mxu0
    %v1168 = vadd.f32 %v1099, %v1167
    %v1169 = vpop.f32.mrb[0].mxu0
    %1170 = vmatprep.mubr.f32.mxu0 0.0
    %1171 = vmatmul.mubr.f32.gmra.mrb[0].mxu0 %v1013
    %v1172 = vpop.f32.mrb[0].mxu0
    %v1173 = vadd.f32 %v1099, %v1172
    %v1174 = vpop.f32.mrb[0].mxu0
    %1175 = vdwg.mxu0
    %v1176 = vld [vmem:[%s13] sm:$0xff]
    %v1177 = vld [vmem:[%s13 + $0x8] sm:$0xff]
    %v1178 = vld [vmem:[%s13 + $0x10] sm:$0xff]
    %v1179 = vld [vmem:[%s13 + $0x18] sm:$0xff]
    %v1180 = vld [vmem:[%s16] sm:$0x1]
    %v1182 = vlaneseq
    %v1183 = vshrl.u32 %v1182, 7
    %v1184 = vsub.s32 0, %v1183
    %v1185 = vrot.slane %v1180, %v1184
    %1187 = vmatprep.subr.mxu0 0.0
    %1188 = vmatpush1.msra.mxu0 %v1176
    %1189 = vmatprep.subr.mxu0 0.0
    %1190 = vmatpush1.msra.mxu0 %v1177
    %1191 = vmatprep.subr.mxu0 0.0
    %1192 = vmatpush1.msra.mxu0 %v1178
    %1193 = vmatprep.subr.mxu0 0.0
    %1194 = vmatpush1.msra.mxu0 %v1179
    %1195 = vmatprep.subr.mxu0 0.0
    %1196 = vmatpush1.msra.mxu0 0.0
    %1197 = vmatprep.subr.mxu0 0.0
    %1198 = vmatpush1.msra.mxu0 0.0
    %1199 = vmatprep.subr.mxu0 0.0
    %1200 = vmatpush1.msra.mxu0 0.0
    %1201 = vmatprep.subr.mxu0 0.0
    %1202 = vmatpush1.msra.mxu0 0.0
    %1203 = vmatprep.subr.mxu0 0.0
    %1204 = vmatpush1.msra.mxu0 0.0
    %1205 = vmatprep.subr.mxu0 0.0
    %1206 = vmatpush1.msra.mxu0 0.0
    %1207 = vmatprep.subr.mxu0 0.0
    %1208 = vmatpush1.msra.mxu0 0.0
    %1209 = vmatprep.subr.mxu0 0.0
    %1210 = vmatpush1.msra.mxu0 0.0
    %1211 = vmatprep.subr.mxu0 0.0
    %1212 = vmatpush1.msra.mxu0 0.0
    %1213 = vmatprep.subr.mxu0 0.0
    %1214 = vmatpush1.msra.mxu0 0.0
    %1215 = vmatprep.subr.mxu0 0.0
    %1216 = vmatpush1.msra.mxu0 0.0
    %1217 = vmatprep.subr.mxu0 0.0
    %1218 = vmatpush1.msra.mxu0 0.0
    %1219 = vmatprep.subr.mxu0 0.0
    %1220 = vmatpush1.msra.mxu0 0.0
    %1221 = vmatprep.subr.mxu0 0.0
    %1222 = vmatpush1.msra.mxu0 0.0
    %1223 = vmatprep.subr.mxu0 0.0
    %1224 = vmatpush1.msra.mxu0 0.0
    %1225 = vmatprep.subr.mxu0 0.0
    %1226 = vmatpush1.msra.mxu0 0.0
    %1227 = vmatprep.subr.mxu0 0.0
    %1228 = vmatpush1.msra.mxu0 0.0
    %1229 = vmatprep.subr.mxu0 0.0
    %1230 = vmatpush1.msra.mxu0 0.0
    %1231 = vmatprep.subr.mxu0 0.0
    %1232 = vmatpush1.msra.mxu0 0.0
    %1233 = vmatprep.subr.mxu0 0.0
    %1234 = vmatpush1.msra.mxu0 0.0
    %1235 = vmatprep.subr.mxu0 0.0
    %1236 = vmatpush1.msra.mxu0 0.0
    %1237 = vmatprep.subr.mxu0 0.0
    %1238 = vmatpush1.msra.mxu0 0.0
    %1239 = vmatprep.subr.mxu0 0.0
    %1240 = vmatpush1.msra.mxu0 0.0
    %1241 = vmatprep.subr.mxu0 0.0
    %1242 = vmatpush1.msra.mxu0 0.0
    %1243 = vmatprep.subr.mxu0 0.0
    %1244 = vmatpush1.msra.mxu0 0.0
    %1245 = vmatprep.subr.mxu0 0.0
    %1246 = vmatpush1.msra.mxu0 0.0
    %1247 = vmatprep.subr.mxu0 0.0
    %1248 = vmatpush1.msra.mxu0 0.0
    %1249 = vmatprep.subr.mxu0 0.0
    %1250 = vmatpush1.msra.mxu0 0.0
    %1251 = vmatprep.mubr.f32.mxu0 0.0
    %1252 = vmatmul.mubr.f32.gmra.mrb[0].mxu0 %v1010
    %v1253 = vpop.f32.mrb[0].mxu0
    %v1254 = vadd.f32 %v1185, %v1253
    %v1255 = vpop.f32.mrb[0].mxu0
    %1256 = vmatprep.mubr.f32.mxu0 0.0
    %1257 = vmatmul.mubr.f32.gmra.mrb[0].mxu0 %v1013
    %v1258 = vpop.f32.mrb[0].mxu0
    %v1259 = vadd.f32 %v1185, %v1258
    %v1260 = vpop.f32.mrb[0].mxu0
    %1261 = vdwg.mxu0
    %vm1262 = vcmask 64512
    %v1264 = vsel %vm1262, %v1082, 0
    %v1267 = vsel %vm1262, %v1087, 0
    %v1270 = vsel %vm1262, %v1168, 0
    %v1273 = vsel %vm1262, %v1173, 0
    %1275 = vmatprep.subr.mxu0 0.0
    %1276 = vmatpush1.xpose.msra.mxu0 %v1270
    %1277 = vmatprep.subr.mxu0 0.0
    %1278 = vmatpush1.xpose.msra.mxu0 %v1273
    %1279 = vmatprep.subr.mxu0 0.0
    %1280 = vmatpush1.xpose.msra.mxu0 0.0
    %1281 = vmatprep.subr.mxu0 0.0
    %1282 = vmatpush1.xpose.msra.mxu0 0.0
    %1283 = vmatprep.subr.mxu0 0.0
    %1284 = vmatpush1.xpose.msra.mxu0 0.0
    %1285 = vmatprep.subr.mxu0 0.0
    %1286 = vmatpush1.xpose.msra.mxu0 0.0
    %1287 = vmatprep.subr.mxu0 0.0
    %1288 = vmatpush1.xpose.msra.mxu0 0.0
    %1289 = vmatprep.subr.mxu0 0.0
    %1290 = vmatpush1.xpose.msra.mxu0 0.0
    %1291 = vmatprep.subr.mxu0 0.0
    %1292 = vmatpush1.xpose.msra.mxu0 0.0
    %1293 = vmatprep.subr.mxu0 0.0
    %1294 = vmatpush1.xpose.msra.mxu0 0.0
    %1295 = vmatprep.subr.mxu0 0.0
    %1296 = vmatpush1.xpose.msra.mxu0 0.0
    %1297 = vmatprep.subr.mxu0 0.0
    %1298 = vmatpush1.xpose.msra.mxu0 0.0
    %1299 = vmatprep.subr.mxu0 0.0
    %1300 = vmatpush1.xpose.msra.mxu0 0.0
    %1301 = vmatprep.subr.mxu0 0.0
    %1302 = vmatpush1.xpose.msra.mxu0 0.0
    %1303 = vmatprep.subr.mxu0 0.0
    %1304 = vmatpush1.xpose.msra.mxu0 0.0
    %1305 = vmatprep.subr.mxu0 0.0
    %1306 = vmatpush1.xpose.msra.mxu0 0.0
    %1307 = vmatprep.subr.mxu0 0.0
    %1308 = vmatpush1.xpose.msra.mxu0 0.0
    %1309 = vmatprep.subr.mxu0 0.0
    %1310 = vmatpush1.xpose.msra.mxu0 0.0
    %1311 = vmatprep.subr.mxu0 0.0
    %1312 = vmatpush1.xpose.msra.mxu0 0.0
    %1313 = vmatprep.subr.mxu0 0.0
    %1314 = vmatpush1.xpose.msra.mxu0 0.0
    %1315 = vmatprep.subr.mxu0 0.0
    %1316 = vmatpush1.xpose.msra.mxu0 0.0
    %1317 = vmatprep.subr.mxu0 0.0
    %1318 = vmatpush1.xpose.msra.mxu0 0.0
    %1319 = vmatprep.subr.mxu0 0.0
    %1320 = vmatpush1.xpose.msra.mxu0 0.0
    %1321 = vmatprep.subr.mxu0 0.0
    %1322 = vmatpush1.xpose.msra.mxu0 0.0
    %1323 = vmatprep.subr.mxu0 0.0
    %1324 = vmatpush1.xpose.msra.mxu0 0.0
    %1325 = vmatprep.subr.mxu0 0.0
    %1326 = vmatpush1.xpose.msra.mxu0 0.0
    %1327 = vmatprep.subr.mxu0 0.0
    %1328 = vmatpush1.xpose.msra.mxu0 0.0
    %1329 = vmatprep.subr.mxu0 0.0
    %1330 = vmatpush1.xpose.msra.mxu0 0.0
    %1331 = vmatprep.subr.mxu0 0.0
    %1332 = vmatpush1.xpose.msra.mxu0 0.0
    %1333 = vmatprep.subr.mxu0 0.0
    %1334 = vmatpush1.xpose.msra.mxu0 0.0
    %1335 = vmatprep.subr.mxu0 0.0
    %1336 = vmatpush1.xpose.msra.mxu0 0.0
    %1337 = vmatprep.subr.mxu0 0.0
    %1338 = vmatpush1.xpose.msra.mxu0 0.0
    %1339 = vmatprep.mubr.f32.mxu0 0.0
    %1340 = vmatmul.mubr.f32.gmra.mrb[0].mxu0 %v1264
    %v1341 = vpop.f32.mrb[0].mxu0
    %v1342 = vadd.f32 0.0, %v1341
    %v1343 = vpop.f32.mrb[0].mxu0
    %1344 = vmatprep.mubr.f32.mxu0 0.0
    %1345 = vmatmul.mubr.f32.gmra.mrb[0].mxu0 %v1267
    %v1346 = vpop.f32.mrb[0].mxu0
    %v1347 = vadd.f32 0.0, %v1346
    %v1348 = vpop.f32.mrb[0].mxu0
    %1349 = vdwg.mxu0
    %v1350 = vmul.f32 %v1342, 0.35355338
    %v1351 = vmul.f32 %v1347, 0.35355338
    %v1352 = vadd.f32 %v1350, %v78
    %v1353 = vadd.f32 %v1351, %v79
    %vm1354 = vcmask 130048
    %v1355 = vsel %vm1354, %v1352, -inf
    %1356 = vmax.xlane.f32.xlu0 %v1355
    %v1357 = vpop.xlane.xlu0 %1356
    %v1358 = vsel %vm1354, %v1353, -inf
    %1359 = vmax.xlane.f32.xlu0 %v1358
    %v1360 = vpop.xlane.xlu0 %1359
    %v1361 = vsub.f32 %v1352, %v1357
    %v1362 = vsub.f32 %v1353, %v1360
    %v1363 = vmul.f32 %v1361, 1.442695
    %v1364 = vpow.pop %v1363
    %v1365 = vmul.f32 %v1362, 1.442695
    %v1366 = vpow.pop %v1365
    %v1367 = vsel %vm1354, %v1364, 0.0
    %1368 = vadd.xlane.f32.xlu0 %v1367
    %v1369 = vpop.xlane.xlu0 %1368
    %v1370 = vsel %vm1354, %v1366, 0.0
    %1371 = vadd.xlane.f32.xlu0 %v1370
    %v1372 = vpop.xlane.xlu0 %1371
    %v1373 = vrcp.pop %v1369
    %v1374 = vrcp.pop %v1372
    %v1375 = vmul.f32 %v1369, %v1373
    %v1376 = vmul.f32 %v1372, %v1374
    %v1377 = vsub.f32 2.0, %v1375
    %v1378 = vsub.f32 2.0, %v1376
    %v1379 = vmul.f32 %v1373, %v1377
    %v1380 = vmul.f32 %v1374, %v1378
    %v1381 = vmul.f32 %v1364, %v1379
    %v1382 = vmul.f32 %v1366, %v1380
    %v1384 = vsel %vm1354, %v1381, 0
    %v1387 = vsel %vm1354, %v1382, 0
    %1389 = vmatprep.subr.mxu0 0.0
    %1390 = vmatpush1.msra.mxu0 %v1254
    %1391 = vmatprep.subr.mxu0 0.0
    %1392 = vmatpush1.msra.mxu0 %v1259
    %1393 = vmatprep.subr.mxu0 0.0
    %1394 = vmatpush1.msra.mxu0 0.0
    %1395 = vmatprep.subr.mxu0 0.0
    %1396 = vmatpush1.msra.mxu0 0.0
    %1397 = vmatprep.subr.mxu0 0.0
    %1398 = vmatpush1.msra.mxu0 0.0
    %1399 = vmatprep.subr.mxu0 0.0
    %1400 = vmatpush1.msra.mxu0 0.0
    %1401 = vmatprep.subr.mxu0 0.0
    %1402 = vmatpush1.msra.mxu0 0.0
    %1403 = vmatprep.subr.mxu0 0.0
    %1404 = vmatpush1.msra.mxu0 0.0
    %1405 = vmatprep.subr.mxu0 0.0
    %1406 = vmatpush1.msra.mxu0 0.0
    %1407 = vmatprep.subr.mxu0 0.0
    %1408 = vmatpush1.msra.mxu0 0.0
    %1409 = vmatprep.subr.mxu0 0.0
    %1410 = vmatpush1.msra.mxu0 0.0
    %1411 = vmatprep.subr.mxu0 0.0
    %1412 = vmatpush1.msra.mxu0 0.0
    %1413 = vmatprep.subr.mxu0 0.0
    %1414 = vmatpush1.msra.mxu0 0.0
    %1415 = vmatprep.subr.mxu0 0.0
    %1416 = vmatpush1.msra.mxu0 0.0
    %1417 = vmatprep.subr.mxu0 0.0
    %1418 = vmatpush1.msra.mxu0 0.0
    %1419 = vmatprep.subr.mxu0 0.0
    %1420 = vmatpush1.msra.mxu0 0.0
    %1421 = vmatprep.subr.mxu0 0.0
    %1422 = vmatpush1.msra.mxu0 0.0
    %1423 = vmatprep.subr.mxu0 0.0
    %1424 = vmatpush1.msra.mxu0 0.0
    %1425 = vmatprep.subr.mxu0 0.0
    %1426 = vmatpush1.msra.mxu0 0.0
    %1427 = vmatprep.subr.mxu0 0.0
    %1428 = vmatpush1.msra.mxu0 0.0
    %1429 = vmatprep.subr.mxu0 0.0
    %1430 = vmatpush1.msra.mxu0 0.0
    %1431 = vmatprep.subr.mxu0 0.0
    %1432 = vmatpush1.msra.mxu0 0.0
    %1433 = vmatprep.subr.mxu0 0.0
    %1434 = vmatpush1.msra.mxu0 0.0
    %1435 = vmatprep.subr.mxu0 0.0
    %1436 = vmatpush1.msra.mxu0 0.0
    %1437 = vmatprep.subr.mxu0 0.0
    %1438 = vmatpush1.msra.mxu0 0.0
    %1439 = vmatprep.subr.mxu0 0.0
    %1440 = vmatpush1.msra.mxu0 0.0
    %1441 = vmatprep.subr.mxu0 0.0
    %1442 = vmatpush1.msra.mxu0 0.0
    %1443 = vmatprep.subr.mxu0 0.0
    %1444 = vmatpush1.msra.mxu0 0.0
    %1445 = vmatprep.subr.mxu0 0.0
    %1446 = vmatpush1.msra.mxu0 0.0
    %1447 = vmatprep.subr.mxu0 0.0
    %1448 = vmatpush1.msra.mxu0 0.0
    %1449 = vmatprep.subr.mxu0 0.0
    %1450 = vmatpush1.msra.mxu0 0.0
    %1451 = vmatprep.subr.mxu0 0.0
    %1452 = vmatpush1.msra.mxu0 0.0
    %1453 = vmatprep.mubr.f32.mxu0 0.0
    %1454 = vmatmul.mubr.f32.gmra.mrb[0].mxu0 %v1384
    %v1455 = vpop.f32.mrb[0].mxu0
    %v1456 = vadd.f32 0.0, %v1455
    %v1457 = vpop.f32.mrb[0].mxu0
    %1458 = vmatprep.mubr.f32.mxu0 0.0
    %1459 = vmatmul.mubr.f32.gmra.mrb[0].mxu0 %v1387
    %v1460 = vpop.f32.mrb[0].mxu0
    %v1461 = vadd.f32 0.0, %v1460
    %v1462 = vpop.f32.mrb[0].mxu0
    %1463 = vdwg.mxu0
    %v1464 = vld [vmem:[%s17] sm:$0xff]
    %s1465 = scalar_lea.vmem %s11, 32
    %v1466 = vld [vmem:[%s1465] sm:$0xff]
    %v1467 = vld [vmem:[%s1465 + $0x8] sm:$0xff]
    %v1468 = vld [vmem:[%s1465 + $0x10] sm:$0xff]
    %v1469 = vld [vmem:[%s1465 + $0x18] sm:$0xff]
    %s1470 = scalar_lea.vmem %s14, 1
    %v1471 = vld [vmem:[%s1470] sm:$0x1]
    %v1473 = vlaneseq
    %v1474 = vshrl.u32 %v1473, 7
    %v1475 = vsub.s32 0, %v1474
    %v1476 = vrot.slane %v1471, %v1475
    %1478 = vmatprep.subr.mxu0 0.0
    %1479 = vmatpush1.msra.mxu0 %v1466
    %1480 = vmatprep.subr.mxu0 0.0
    %1481 = vmatpush1.msra.mxu0 %v1467
    %1482 = vmatprep.subr.mxu0 0.0
    %1483 = vmatpush1.msra.mxu0 %v1468
    %1484 = vmatprep.subr.mxu0 0.0
    %1485 = vmatpush1.msra.mxu0 %v1469
    %1486 = vmatprep.subr.mxu0 0.0
    %1487 = vmatpush1.msra.mxu0 0.0
    %1488 = vmatprep.subr.mxu0 0.0
    %1489 = vmatpush1.msra.mxu0 0.0
    %1490 = vmatprep.subr.mxu0 0.0
    %1491 = vmatpush1.msra.mxu0 0.0
    %1492 = vmatprep.subr.mxu0 0.0
    %1493 = vmatpush1.msra.mxu0 0.0
    %1494 = vmatprep.subr.mxu0 0.0
    %1495 = vmatpush1.msra.mxu0 0.0
    %1496 = vmatprep.subr.mxu0 0.0
    %1497 = vmatpush1.msra.mxu0 0.0
    %1498 = vmatprep.subr.mxu0 0.0
    %1499 = vmatpush1.msra.mxu0 0.0
    %1500 = vmatprep.subr.mxu0 0.0
    %1501 = vmatpush1.msra.mxu0 0.0
    %1502 = vmatprep.subr.mxu0 0.0
    %1503 = vmatpush1.msra.mxu0 0.0
    %1504 = vmatprep.subr.mxu0 0.0
    %1505 = vmatpush1.msra.mxu0 0.0
    %1506 = vmatprep.subr.mxu0 0.0
    %1507 = vmatpush1.msra.mxu0 0.0
    %1508 = vmatprep.subr.mxu0 0.0
    %1509 = vmatpush1.msra.mxu0 0.0
    %1510 = vmatprep.subr.mxu0 0.0
    %1511 = vmatpush1.msra.mxu0 0.0
    %1512 = vmatprep.subr.mxu0 0.0
    %1513 = vmatpush1.msra.mxu0 0.0
    %1514 = vmatprep.subr.mxu0 0.0
    %1515 = vmatpush1.msra.mxu0 0.0
    %1516 = vmatprep.subr.mxu0 0.0
    %1517 = vmatpush1.msra.mxu0 0.0
    %1518 = vmatprep.subr.mxu0 0.0
    %1519 = vmatpush1.msra.mxu0 0.0
    %1520 = vmatprep.subr.mxu0 0.0
    %1521 = vmatpush1.msra.mxu0 0.0
    %1522 = vmatprep.subr.mxu0 0.0
    %1523 = vmatpush1.msra.mxu0 0.0
    %1524 = vmatprep.subr.mxu0 0.0
    %1525 = vmatpush1.msra.mxu0 0.0
    %1526 = vmatprep.subr.mxu0 0.0
    %1527 = vmatpush1.msra.mxu0 0.0
    %1528 = vmatprep.subr.mxu0 0.0
    %1529 = vmatpush1.msra.mxu0 0.0
    %1530 = vmatprep.subr.mxu0 0.0
    %1531 = vmatpush1.msra.mxu0 0.0
    %1532 = vmatprep.subr.mxu0 0.0
    %1533 = vmatpush1.msra.mxu0 0.0
    %1534 = vmatprep.subr.mxu0 0.0
    %1535 = vmatpush1.msra.mxu0 0.0
    %1536 = vmatprep.subr.mxu0 0.0
    %1537 = vmatpush1.msra.mxu0 0.0
    %1538 = vmatprep.subr.mxu0 0.0
    %1539 = vmatpush1.msra.mxu0 0.0
    %1540 = vmatprep.subr.mxu0 0.0
    %1541 = vmatpush1.msra.mxu0 0.0
    %1542 = vmatprep.mubr.f32.mxu0 0.0
    %1543 = vmatmul.mubr.f32.gmra.mrb[0].mxu0 %v1010
    %v1544 = vpop.f32.mrb[0].mxu0
    %v1545 = vadd.f32 %v1476, %v1544
    %v1546 = vpop.f32.mrb[0].mxu0
    %1547 = vmatprep.mubr.f32.mxu0 0.0
    %1548 = vmatmul.mubr.f32.gmra.mrb[0].mxu0 %v1013
    %v1549 = vpop.f32.mrb[0].mxu0
    %v1550 = vadd.f32 %v1476, %v1549
    %v1551 = vpop.f32.mrb[0].mxu0
    %1552 = vdwg.mxu0
    %s1553 = scalar_lea.vmem %s12, 32
    %v1554 = vld [vmem:[%s1553] sm:$0xff]
    %v1555 = vld [vmem:[%s1553 + $0x8] sm:$0xff]
    %v1556 = vld [vmem:[%s1553 + $0x10] sm:$0xff]
    %v1557 = vld [vmem:[%s1553 + $0x18] sm:$0xff]
    %s1558 = scalar_lea.vmem %s15, 1
    %v1559 = vld [vmem:[%s1558] sm:$0x1]
    %v1561 = vlaneseq
    %v1562 = vshrl.u32 %v1561, 7
    %v1563 = vsub.s32 0, %v1562
    %v1564 = vrot.slane %v1559, %v1563
    %1566 = vmatprep.subr.mxu0 0.0
    %1567 = vmatpush1.msra.mxu0 %v1554
    %1568 = vmatprep.subr.mxu0 0.0
    %1569 = vmatpush1.msra.mxu0 %v1555
    %1570 = vmatprep.subr.mxu0 0.0
    %1571 = vmatpush1.msra.mxu0 %v1556
    %1572 = vmatprep.subr.mxu0 0.0
    %1573 = vmatpush1.msra.mxu0 %v1557
    %1574 = vmatprep.subr.mxu0 0.0
    %1575 = vmatpush1.msra.mxu0 0.0
    %1576 = vmatprep.subr.mxu0 0.0
    %1577 = vmatpush1.msra.mxu0 0.0
    %1578 = vmatprep.subr.mxu0 0.0
    %1579 = vmatpush1.msra.mxu0 0.0
    %1580 = vmatprep.subr.mxu0 0.0
    %1581 = vmatpush1.msra.mxu0 0.0
    %1582 = vmatprep.subr.mxu0 0.0
    %1583 = vmatpush1.msra.mxu0 0.0
    %1584 = vmatprep.subr.mxu0 0.0
    %1585 = vmatpush1.msra.mxu0 0.0
    %1586 = vmatprep.subr.mxu0 0.0
    %1587 = vmatpush1.msra.mxu0 0.0
    %1588 = vmatprep.subr.mxu0 0.0
    %1589 = vmatpush1.msra.mxu0 0.0
    %1590 = vmatprep.subr.mxu0 0.0
    %1591 = vmatpush1.msra.mxu0 0.0
    %1592 = vmatprep.subr.mxu0 0.0
    %1593 = vmatpush1.msra.mxu0 0.0
    %1594 = vmatprep.subr.mxu0 0.0
    %1595 = vmatpush1.msra.mxu0 0.0
    %1596 = vmatprep.subr.mxu0 0.0
    %1597 = vmatpush1.msra.mxu0 0.0
    %1598 = vmatprep.subr.mxu0 0.0
    %1599 = vmatpush1.msra.mxu0 0.0
    %1600 = vmatprep.subr.mxu0 0.0
    %1601 = vmatpush1.msra.mxu0 0.0
    %1602 = vmatprep.subr.mxu0 0.0
    %1603 = vmatpush1.msra.mxu0 0.0
    %1604 = vmatprep.subr.mxu0 0.0
    %1605 = vmatpush1.msra.mxu0 0.0
    %1606 = vmatprep.subr.mxu0 0.0
    %1607 = vmatpush1.msra.mxu0 0.0
    %1608 = vmatprep.subr.mxu0 0.0
    %1609 = vmatpush1.msra.mxu0 0.0
    %1610 = vmatprep.subr.mxu0 0.0
    %1611 = vmatpush1.msra.mxu0 0.0
    %1612 = vmatprep.subr.mxu0 0.0
    %1613 = vmatpush1.msra.mxu0 0.0
    %1614 = vmatprep.subr.mxu0 0.0
    %1615 = vmatpush1.msra.mxu0 0.0
    %1616 = vmatprep.subr.mxu0 0.0
    %1617 = vmatpush1.msra.mxu0 0.0
    %1618 = vmatprep.subr.mxu0 0.0
    %1619 = vmatpush1.msra.mxu0 0.0
    %1620 = vmatprep.subr.mxu0 0.0
    %1621 = vmatpush1.msra.mxu0 0.0
    %1622 = vmatprep.subr.mxu0 0.0
    %1623 = vmatpush1.msra.mxu0 0.0
    %1624 = vmatprep.subr.mxu0 0.0
    %1625 = vmatpush1.msra.mxu0 0.0
    %1626 = vmatprep.subr.mxu0 0.0
    %1627 = vmatpush1.msra.mxu0 0.0
    %1628 = vmatprep.subr.mxu0 0.0
    %1629 = vmatpush1.msra.mxu0 0.0
    %1630 = vmatprep.mubr.f32.mxu0 0.0
    %1631 = vmatmul.mubr.f32.gmra.mrb[0].mxu0 %v1010
    %v1632 = vpop.f32.mrb[0].mxu0
    %v1633 = vadd.f32 %v1564, %v1632
    %v1634 = vpop.f32.mrb[0].mxu0
    %1635 = vmatprep.mubr.f32.mxu0 0.0
    %1636 = vmatmul.mubr.f32.gmra.mrb[0].mxu0 %v1013
    %v1637 = vpop.f32.mrb[0].mxu0
    %v1638 = vadd.f32 %v1564, %v1637
    %v1639 = vpop.f32.mrb[0].mxu0
    %1640 = vdwg.mxu0
    %s1641 = scalar_lea.vmem %s13, 32
    %v1642 = vld [vmem:[%s1641] sm:$0xff]
    %v1643 = vld [vmem:[%s1641 + $0x8] sm:$0xff]
    %v1644 = vld [vmem:[%s1641 + $0x10] sm:$0xff]
    %v1645 = vld [vmem:[%s1641 + $0x18] sm:$0xff]
    %s1646 = scalar_lea.vmem %s16, 1
    %v1647 = vld [vmem:[%s1646] sm:$0x1]
    %v1649 = vlaneseq
    %v1650 = vshrl.u32 %v1649, 7
    %v1651 = vsub.s32 0, %v1650
    %v1652 = vrot.slane %v1647, %v1651
    %1654 = vmatprep.subr.mxu0 0.0
    %1655 = vmatpush1.msra.mxu0 %v1642
    %1656 = vmatprep.subr.mxu0 0.0
    %1657 = vmatpush1.msra.mxu0 %v1643
    %1658 = vmatprep.subr.mxu0 0.0
    %1659 = vmatpush1.msra.mxu0 %v1644
    %1660 = vmatprep.subr.mxu0 0.0
    %1661 = vmatpush1.msra.mxu0 %v1645
    %1662 = vmatprep.subr.mxu0 0.0
    %1663 = vmatpush1.msra.mxu0 0.0
    %1664 = vmatprep.subr.mxu0 0.0
    %1665 = vmatpush1.msra.mxu0 0.0
    %1666 = vmatprep.subr.mxu0 0.0
    %1667 = vmatpush1.msra.mxu0 0.0
    %1668 = vmatprep.subr.mxu0 0.0
    %1669 = vmatpush1.msra.mxu0 0.0
    %1670 = vmatprep.subr.mxu0 0.0
    %1671 = vmatpush1.msra.mxu0 0.0
    %1672 = vmatprep.subr.mxu0 0.0
    %1673 = vmatpush1.msra.mxu0 0.0
    %1674 = vmatprep.subr.mxu0 0.0
    %1675 = vmatpush1.msra.mxu0 0.0
    %1676 = vmatprep.subr.mxu0 0.0
    %1677 = vmatpush1.msra.mxu0 0.0
    %1678 = vmatprep.subr.mxu0 0.0
    %1679 = vmatpush1.msra.mxu0 0.0
    %1680 = vmatprep.subr.mxu0 0.0
    %1681 = vmatpush1.msra.mxu0 0.0
    %1682 = vmatprep.subr.mxu0 0.0
    %1683 = vmatpush1.msra.mxu0 0.0
    %1684 = vmatprep.subr.mxu0 0.0
    %1685 = vmatpush1.msra.mxu0 0.0
    %1686 = vmatprep.subr.mxu0 0.0
    %1687 = vmatpush1.msra.mxu0 0.0
    %1688 = vmatprep.subr.mxu0 0.0
    %1689 = vmatpush1.msra.mxu0 0.0
    %1690 = vmatprep.subr.mxu0 0.0
    %1691 = vmatpush1.msra.mxu0 0.0
    %1692 = vmatprep.subr.mxu0 0.0
    %1693 = vmatpush1.msra.mxu0 0.0
    %1694 = vmatprep.subr.mxu0 0.0
    %1695 = vmatpush1.msra.mxu0 0.0
    %1696 = vmatprep.subr.mxu0 0.0
    %1697 = vmatpush1.msra.mxu0 0.0
    %1698 = vmatprep.subr.mxu0 0.0
    %1699 = vmatpush1.msra.mxu0 0.0
    %1700 = vmatprep.subr.mxu0 0.0
    %1701 = vmatpush1.msra.mxu0 0.0
    %1702 = vmatprep.subr.mxu0 0.0
    %1703 = vmatpush1.msra.mxu0 0.0
    %1704 = vmatprep.subr.mxu0 0.0
    %1705 = vmatpush1.msra.mxu0 0.0
    %1706 = vmatprep.subr.mxu0 0.0
    %1707 = vmatpush1.msra.mxu0 0.0
    %1708 = vmatprep.subr.mxu0 0.0
    %1709 = vmatpush1.msra.mxu0 0.0
    %1710 = vmatprep.subr.mxu0 0.0
    %1711 = vmatpush1.msra.mxu0 0.0
    %1712 = vmatprep.subr.mxu0 0.0
    %1713 = vmatpush1.msra.mxu0 0.0
    %1714 = vmatprep.subr.mxu0 0.0
    %1715 = vmatpush1.msra.mxu0 0.0
    %1716 = vmatprep.subr.mxu0 0.0
    %1717 = vmatpush1.msra.mxu0 0.0
    %1718 = vmatprep.mubr.f32.mxu0 0.0
    %1719 = vmatmul.mubr.f32.gmra.mrb[0].mxu0 %v1010
    %v1720 = vpop.f32.mrb[0].mxu0
    %v1721 = vadd.f32 %v1652, %v1720
    %v1722 = vpop.f32.mrb[0].mxu0
    %1723 = vmatprep.mubr.f32.mxu0 0.0
    %1724 = vmatmul.mubr.f32.gmra.mrb[0].mxu0 %v1013
    %v1725 = vpop.f32.mrb[0].mxu0
    %v1726 = vadd.f32 %v1652, %v1725
    %v1727 = vpop.f32.mrb[0].mxu0
    %1728 = vdwg.mxu0
    %v1730 = vsel %vm1262, %v1545, 0
    %v1733 = vsel %vm1262, %v1550, 0
    %v1736 = vsel %vm1262, %v1633, 0
    %v1739 = vsel %vm1262, %v1638, 0
    %1741 = vmatprep.subr.mxu0 0.0
    %1742 = vmatpush1.xpose.msra.mxu0 %v1736
    %1743 = vmatprep.subr.mxu0 0.0
    %1744 = vmatpush1.xpose.msra.mxu0 %v1739
    %1745 = vmatprep.subr.mxu0 0.0
    %1746 = vmatpush1.xpose.msra.mxu0 0.0
    %1747 = vmatprep.subr.mxu0 0.0
    %1748 = vmatpush1.xpose.msra.mxu0 0.0
    %1749 = vmatprep.subr.mxu0 0.0
    %1750 = vmatpush1.xpose.msra.mxu0 0.0
    %1751 = vmatprep.subr.mxu0 0.0
    %1752 = vmatpush1.xpose.msra.mxu0 0.0
    %1753 = vmatprep.subr.mxu0 0.0
    %1754 = vmatpush1.xpose.msra.mxu0 0.0
    %1755 = vmatprep.subr.mxu0 0.0
    %1756 = vmatpush1.xpose.msra.mxu0 0.0
    %1757 = vmatprep.subr.mxu0 0.0
    %1758 = vmatpush1.xpose.msra.mxu0 0.0
    %1759 = vmatprep.subr.mxu0 0.0
    %1760 = vmatpush1.xpose.msra.mxu0 0.0
    %1761 = vmatprep.subr.mxu0 0.0
    %1762 = vmatpush1.xpose.msra.mxu0 0.0
    %1763 = vmatprep.subr.mxu0 0.0
    %1764 = vmatpush1.xpose.msra.mxu0 0.0
    %1765 = vmatprep.subr.mxu0 0.0
    %1766 = vmatpush1.xpose.msra.mxu0 0.0
    %1767 = vmatprep.subr.mxu0 0.0
    %1768 = vmatpush1.xpose.msra.mxu0 0.0
    %1769 = vmatprep.subr.mxu0 0.0
    %1770 = vmatpush1.xpose.msra.mxu0 0.0
    %1771 = vmatprep.subr.mxu0 0.0
    %1772 = vmatpush1.xpose.msra.mxu0 0.0
    %1773 = vmatprep.subr.mxu0 0.0
    %1774 = vmatpush1.xpose.msra.mxu0 0.0
    %1775 = vmatprep.subr.mxu0 0.0
    %1776 = vmatpush1.xpose.msra.mxu0 0.0
    %1777 = vmatprep.subr.mxu0 0.0
    %1778 = vmatpush1.xpose.msra.mxu0 0.0
    %1779 = vmatprep.subr.mxu0 0.0
    %1780 = vmatpush1.xpose.msra.mxu0 0.0
    %1781 = vmatprep.subr.mxu0 0.0
    %1782 = vmatpush1.xpose.msra.mxu0 0.0
    %1783 = vmatprep.subr.mxu0 0.0
    %1784 = vmatpush1.xpose.msra.mxu0 0.0
    %1785 = vmatprep.subr.mxu0 0.0
    %1786 = vmatpush1.xpose.msra.mxu0 0.0
    %1787 = vmatprep.subr.mxu0 0.0
    %1788 = vmatpush1.xpose.msra.mxu0 0.0
    %1789 = vmatprep.subr.mxu0 0.0
    %1790 = vmatpush1.xpose.msra.mxu0 0.0
    %1791 = vmatprep.subr.mxu0 0.0
    %1792 = vmatpush1.xpose.msra.mxu0 0.0
    %1793 = vmatprep.subr.mxu0 0.0
    %1794 = vmatpush1.xpose.msra.mxu0 0.0
    %1795 = vmatprep.subr.mxu0 0.0
    %1796 = vmatpush1.xpose.msra.mxu0 0.0
    %1797 = vmatprep.subr.mxu0 0.0
    %1798 = vmatpush1.xpose.msra.mxu0 0.0
    %1799 = vmatprep.subr.mxu0 0.0
    %1800 = vmatpush1.xpose.msra.mxu0 0.0
    %1801 = vmatprep.subr.mxu0 0.0
    %1802 = vmatpush1.xpose.msra.mxu0 0.0
    %1803 = vmatprep.subr.mxu0 0.0
    %1804 = vmatpush1.xpose.msra.mxu0 0.0
    %1805 = vmatprep.mubr.f32.mxu0 0.0
    %1806 = vmatmul.mubr.f32.gmra.mrb[0].mxu0 %v1730
    %v1807 = vpop.f32.mrb[0].mxu0
    %v1808 = vadd.f32 0.0, %v1807
    %v1809 = vpop.f32.mrb[0].mxu0
    %1810 = vmatprep.mubr.f32.mxu0 0.0
    %1811 = vmatmul.mubr.f32.gmra.mrb[0].mxu0 %v1733
    %v1812 = vpop.f32.mrb[0].mxu0
    %v1813 = vadd.f32 0.0, %v1812
    %v1814 = vpop.f32.mrb[0].mxu0
    %1815 = vdwg.mxu0
    %v1816 = vmul.f32 %v1808, 0.35355338
    %v1817 = vmul.f32 %v1813, 0.35355338
    %v1818 = vadd.f32 %v1816, %v78
    %v1819 = vadd.f32 %v1817, %v79
    %v1820 = vsel %vm1354, %v1818, -inf
    %1821 = vmax.xlane.f32.xlu0 %v1820
    %v1822 = vpop.xlane.xlu0 %1821
    %v1823 = vsel %vm1354, %v1819, -inf
    %1824 = vmax.xlane.f32.xlu0 %v1823
    %v1825 = vpop.xlane.xlu0 %1824
    %v1826 = vsub.f32 %v1818, %v1822
    %v1827 = vsub.f32 %v1819, %v1825
    %v1828 = vmul.f32 %v1826, 1.442695
    %v1829 = vpow.pop %v1828
    %v1830 = vmul.f32 %v1827, 1.442695
    %v1831 = vpow.pop %v1830
    %v1832 = vsel %vm1354, %v1829, 0.0
    %1833 = vadd.xlane.f32.xlu0 %v1832
    %v1834 = vpop.xlane.xlu0 %1833
    %v1835 = vsel %vm1354, %v1831, 0.0
    %1836 = vadd.xlane.f32.xlu0 %v1835
    %v1837 = vpop.xlane.xlu0 %1836
    %v1838 = vrcp.pop %v1834
    %v1839 = vrcp.pop %v1837
    %v1840 = vmul.f32 %v1834, %v1838
    %v1841 = vmul.f32 %v1837, %v1839
    %v1842 = vsub.f32 2.0, %v1840
    %v1843 = vsub.f32 2.0, %v1841
    %v1844 = vmul.f32 %v1838, %v1842
    %v1845 = vmul.f32 %v1839, %v1843
    %v1846 = vmul.f32 %v1829, %v1844
    %v1847 = vmul.f32 %v1831, %v1845
    %v1849 = vsel %vm1354, %v1846, 0
    %v1852 = vsel %vm1354, %v1847, 0
    %1854 = vmatprep.subr.mxu0 0.0
    %1855 = vmatpush1.msra.mxu0 %v1721
    %1856 = vmatprep.subr.mxu0 0.0
    %1857 = vmatpush1.msra.mxu0 %v1726
    %1858 = vmatprep.subr.mxu0 0.0
    %1859 = vmatpush1.msra.mxu0 0.0
    %1860 = vmatprep.subr.mxu0 0.0
    %1861 = vmatpush1.msra.mxu0 0.0
    %1862 = vmatprep.subr.mxu0 0.0
    %1863 = vmatpush1.msra.mxu0 0.0
    %1864 = vmatprep.subr.mxu0 0.0
    %1865 = vmatpush1.msra.mxu0 0.0
    %1866 = vmatprep.subr.mxu0 0.0
    %1867 = vmatpush1.msra.mxu0 0.0
    %1868 = vmatprep.subr.mxu0 0.0
    %1869 = vmatpush1.msra.mxu0 0.0
    %1870 = vmatprep.subr.mxu0 0.0
    %1871 = vmatpush1.msra.mxu0 0.0
    %1872 = vmatprep.subr.mxu0 0.0
    %1873 = vmatpush1.msra.mxu0 0.0
    %1874 = vmatprep.subr.mxu0 0.0
    %1875 = vmatpush1.msra.mxu0 0.0
    %1876 = vmatprep.subr.mxu0 0.0
    %1877 = vmatpush1.msra.mxu0 0.0
    %1878 = vmatprep.subr.mxu0 0.0
    %1879 = vmatpush1.msra.mxu0 0.0
    %1880 = vmatprep.subr.mxu0 0.0
    %1881 = vmatpush1.msra.mxu0 0.0
    %1882 = vmatprep.subr.mxu0 0.0
    %1883 = vmatpush1.msra.mxu0 0.0
    %1884 = vmatprep.subr.mxu0 0.0
    %1885 = vmatpush1.msra.mxu0 0.0
    %1886 = vmatprep.subr.mxu0 0.0
    %1887 = vmatpush1.msra.mxu0 0.0
    %1888 = vmatprep.subr.mxu0 0.0
    %1889 = vmatpush1.msra.mxu0 0.0
    %1890 = vmatprep.subr.mxu0 0.0
    %1891 = vmatpush1.msra.mxu0 0.0
    %1892 = vmatprep.subr.mxu0 0.0
    %1893 = vmatpush1.msra.mxu0 0.0
    %1894 = vmatprep.subr.mxu0 0.0
    %1895 = vmatpush1.msra.mxu0 0.0
    %1896 = vmatprep.subr.mxu0 0.0
    %1897 = vmatpush1.msra.mxu0 0.0
    %1898 = vmatprep.subr.mxu0 0.0
    %1899 = vmatpush1.msra.mxu0 0.0
    %1900 = vmatprep.subr.mxu0 0.0
    %1901 = vmatpush1.msra.mxu0 0.0
    %1902 = vmatprep.subr.mxu0 0.0
    %1903 = vmatpush1.msra.mxu0 0.0
    %1904 = vmatprep.subr.mxu0 0.0
    %1905 = vmatpush1.msra.mxu0 0.0
    %1906 = vmatprep.subr.mxu0 0.0
    %1907 = vmatpush1.msra.mxu0 0.0
    %1908 = vmatprep.subr.mxu0 0.0
    %1909 = vmatpush1.msra.mxu0 0.0
    %1910 = vmatprep.subr.mxu0 0.0
    %1911 = vmatpush1.msra.mxu0 0.0
    %1912 = vmatprep.subr.mxu0 0.0
    %1913 = vmatpush1.msra.mxu0 0.0
    %1914 = vmatprep.subr.mxu0 0.0
    %1915 = vmatpush1.msra.mxu0 0.0
    %1916 = vmatprep.subr.mxu0 0.0
    %1917 = vmatpush1.msra.mxu0 0.0
    %1918 = vmatprep.mubr.f32.mxu0 0.0
    %1919 = vmatmul.mubr.f32.gmra.mrb[0].mxu0 %v1849
    %v1920 = vpop.f32.mrb[0].mxu0
    %v1921 = vadd.f32 0.0, %v1920
    %v1922 = vpop.f32.mrb[0].mxu0
    %1923 = vmatprep.mubr.f32.mxu0 0.0
    %1924 = vmatmul.mubr.f32.gmra.mrb[0].mxu0 %v1852
    %v1925 = vpop.f32.mrb[0].mxu0
    %v1926 = vadd.f32 0.0, %v1925
    %v1927 = vpop.f32.mrb[0].mxu0
    %1928 = vdwg.mxu0
    %s1929 = scalar_lea.vmem %s17, 8
    %v1930 = vld [vmem:[%s1929] sm:$0xff]
    %v1932 = vsel %vm1262, %v1921, 0
    %v1935 = vsel %vm1262, %v1926, 0
    %1937 = vmatprep.subr.mxu0 0.0
    %1938 = vmatpush1.msra.mxu0 %v1930
    %1939 = vmatprep.subr.mxu0 0.0
    %1940 = vmatpush1.msra.mxu0 0.0
    %1941 = vmatprep.subr.mxu0 0.0
    %1942 = vmatpush1.msra.mxu0 0.0
    %1943 = vmatprep.subr.mxu0 0.0
    %1944 = vmatpush1.msra.mxu0 0.0
    %1945 = vmatprep.subr.mxu0 0.0
    %1946 = vmatpush1.msra.mxu0 0.0
    %1947 = vmatprep.subr.mxu0 0.0
    %1948 = vmatpush1.msra.mxu0 0.0
    %1949 = vmatprep.subr.mxu0 0.0
    %1950 = vmatpush1.msra.mxu0 0.0
    %1951 = vmatprep.subr.mxu0 0.0
    %1952 = vmatpush1.msra.mxu0 0.0
    %1953 = vmatprep.subr.mxu0 0.0
    %1954 = vmatpush1.msra.mxu0 0.0
    %1955 = vmatprep.subr.mxu0 0.0
    %1956 = vmatpush1.msra.mxu0 0.0
    %1957 = vmatprep.subr.mxu0 0.0
    %1958 = vmatpush1.msra.mxu0 0.0
    %1959 = vmatprep.subr.mxu0 0.0
    %1960 = vmatpush1.msra.mxu0 0.0
    %1961 = vmatprep.subr.mxu0 0.0
    %1962 = vmatpush1.msra.mxu0 0.0
    %1963 = vmatprep.subr.mxu0 0.0
    %1964 = vmatpush1.msra.mxu0 0.0
    %1965 = vmatprep.subr.mxu0 0.0
    %1966 = vmatpush1.msra.mxu0 0.0
    %1967 = vmatprep.subr.mxu0 0.0
    %1968 = vmatpush1.msra.mxu0 0.0
    %1969 = vmatprep.subr.mxu0 0.0
    %1970 = vmatpush1.msra.mxu0 0.0
    %1971 = vmatprep.subr.mxu0 0.0
    %1972 = vmatpush1.msra.mxu0 0.0
    %1973 = vmatprep.subr.mxu0 0.0
    %1974 = vmatpush1.msra.mxu0 0.0
    %1975 = vmatprep.subr.mxu0 0.0
    %1976 = vmatpush1.msra.mxu0 0.0
    %1977 = vmatprep.subr.mxu0 0.0
    %1978 = vmatpush1.msra.mxu0 0.0
    %1979 = vmatprep.subr.mxu0 0.0
    %1980 = vmatpush1.msra.mxu0 0.0
    %1981 = vmatprep.subr.mxu0 0.0
    %1982 = vmatpush1.msra.mxu0 0.0
    %1983 = vmatprep.subr.mxu0 0.0
    %1984 = vmatpush1.msra.mxu0 0.0
    %1985 = vmatprep.subr.mxu0 0.0
    %1986 = vmatpush1.msra.mxu0 0.0
    %1987 = vmatprep.subr.mxu0 0.0
    %1988 = vmatpush1.msra.mxu0 0.0
    %1989 = vmatprep.subr.mxu0 0.0
    %1990 = vmatpush1.msra.mxu0 0.0
    %1991 = vmatprep.subr.mxu0 0.0
    %1992 = vmatpush1.msra.mxu0 0.0
    %1993 = vmatprep.subr.mxu0 0.0
    %1994 = vmatpush1.msra.mxu0 0.0
    %1995 = vmatprep.subr.mxu0 0.0
    %1996 = vmatpush1.msra.mxu0 0.0
    %1997 = vmatprep.subr.mxu0 0.0
    %1998 = vmatpush1.msra.mxu0 0.0
    %1999 = vmatprep.subr.mxu0 0.0
    %2000 = vmatpush1.msra.mxu0 0.0
    %2001 = vmatprep.mubr.f32.mxu0 0.0
    %2002 = vmatmul.mubr.f32.gmra.mrb[0].mxu0 %v1932
    %v2003 = vpop.f32.mrb[0].mxu0
    %v2004 = vadd.f32 0.0, %v2003
    %v2005 = vpop.f32.mrb[0].mxu0
    %2006 = vmatprep.mubr.f32.mxu0 0.0
    %2007 = vmatmul.mubr.f32.gmra.mrb[0].mxu0 %v1935
    %v2008 = vpop.f32.mrb[0].mxu0
    %v2009 = vadd.f32 0.0, %v2008
    %v2010 = vpop.f32.mrb[0].mxu0
    %2011 = vdwg.mxu0
    %v2013 = vsel %vm1262, %v1456, 0
    %v2016 = vsel %vm1262, %v1461, 0
    %2018 = vmatprep.subr.mxu0 0.0
    %2019 = vmatpush1.msra.mxu0 %v1464
    %2020 = vmatprep.subr.mxu0 0.0
    %2021 = vmatpush1.msra.mxu0 0.0
    %2022 = vmatprep.subr.mxu0 0.0
    %2023 = vmatpush1.msra.mxu0 0.0
    %2024 = vmatprep.subr.mxu0 0.0
    %2025 = vmatpush1.msra.mxu0 0.0
    %2026 = vmatprep.subr.mxu0 0.0
    %2027 = vmatpush1.msra.mxu0 0.0
    %2028 = vmatprep.subr.mxu0 0.0
    %2029 = vmatpush1.msra.mxu0 0.0
    %2030 = vmatprep.subr.mxu0 0.0
    %2031 = vmatpush1.msra.mxu0 0.0
    %2032 = vmatprep.subr.mxu0 0.0
    %2033 = vmatpush1.msra.mxu0 0.0
    %2034 = vmatprep.subr.mxu0 0.0
    %2035 = vmatpush1.msra.mxu0 0.0
    %2036 = vmatprep.subr.mxu0 0.0
    %2037 = vmatpush1.msra.mxu0 0.0
    %2038 = vmatprep.subr.mxu0 0.0
    %2039 = vmatpush1.msra.mxu0 0.0
    %2040 = vmatprep.subr.mxu0 0.0
    %2041 = vmatpush1.msra.mxu0 0.0
    %2042 = vmatprep.subr.mxu0 0.0
    %2043 = vmatpush1.msra.mxu0 0.0
    %2044 = vmatprep.subr.mxu0 0.0
    %2045 = vmatpush1.msra.mxu0 0.0
    %2046 = vmatprep.subr.mxu0 0.0
    %2047 = vmatpush1.msra.mxu0 0.0
    %2048 = vmatprep.subr.mxu0 0.0
    %2049 = vmatpush1.msra.mxu0 0.0
    %2050 = vmatprep.subr.mxu0 0.0
    %2051 = vmatpush1.msra.mxu0 0.0
    %2052 = vmatprep.subr.mxu0 0.0
    %2053 = vmatpush1.msra.mxu0 0.0
    %2054 = vmatprep.subr.mxu0 0.0
    %2055 = vmatpush1.msra.mxu0 0.0
    %2056 = vmatprep.subr.mxu0 0.0
    %2057 = vmatpush1.msra.mxu0 0.0
    %2058 = vmatprep.subr.mxu0 0.0
    %2059 = vmatpush1.msra.mxu0 0.0
    %2060 = vmatprep.subr.mxu0 0.0
    %2061 = vmatpush1.msra.mxu0 0.0
    %2062 = vmatprep.subr.mxu0 0.0
    %2063 = vmatpush1.msra.mxu0 0.0
    %2064 = vmatprep.subr.mxu0 0.0
    %2065 = vmatpush1.msra.mxu0 0.0
    %2066 = vmatprep.subr.mxu0 0.0
    %2067 = vmatpush1.msra.mxu0 0.0
    %2068 = vmatprep.subr.mxu0 0.0
    %2069 = vmatpush1.msra.mxu0 0.0
    %2070 = vmatprep.subr.mxu0 0.0
    %2071 = vmatpush1.msra.mxu0 0.0
    %2072 = vmatprep.subr.mxu0 0.0
    %2073 = vmatpush1.msra.mxu0 0.0
    %2074 = vmatprep.subr.mxu0 0.0
    %2075 = vmatpush1.msra.mxu0 0.0
    %2076 = vmatprep.subr.mxu0 0.0
    %2077 = vmatpush1.msra.mxu0 0.0
    %2078 = vmatprep.subr.mxu0 0.0
    %2079 = vmatpush1.msra.mxu0 0.0
    %2080 = vmatprep.subr.mxu0 0.0
    %2081 = vmatpush1.msra.mxu0 0.0
    %2082 = vmatprep.mubr.f32.mxu0 0.0
    %2083 = vmatmul.mubr.f32.gmra.mrb[0].mxu0 %v2013
    %v2084 = vpop.f32.mrb[0].mxu0
    %v2085 = vadd.f32 %v2004, %v2084
    %v2086 = vpop.f32.mrb[0].mxu0
    %2087 = vmatprep.mubr.f32.mxu0 0.0
    %2088 = vmatmul.mubr.f32.gmra.mrb[0].mxu0 %v2016
    %v2089 = vpop.f32.mrb[0].mxu0
    %v2090 = vadd.f32 %v2009, %v2089
    %v2091 = vpop.f32.mrb[0].mxu0
    %2092 = vdwg.mxu0
    %s2093 = scalar_lea.vmem %s11, 64
    %v2094 = vld [vmem:[%s2093] sm:$0xff]
    %v2095 = vld [vmem:[%s2093 + $0x8] sm:$0xff]
    %v2096 = vld [vmem:[%s2093 + $0x10] sm:$0xff]
    %v2097 = vld [vmem:[%s2093 + $0x18] sm:$0xff]
    %s2098 = scalar_lea.vmem %s14, 2
    %v2099 = vld [vmem:[%s2098] sm:$0x1]
    %v2101 = vlaneseq
    %v2102 = vshrl.u32 %v2101, 7
    %v2103 = vsub.s32 0, %v2102
    %v2104 = vrot.slane %v2099, %v2103
    %2106 = vmatprep.subr.mxu0 0.0
    %2107 = vmatpush1.msra.mxu0 %v2094
    %2108 = vmatprep.subr.mxu0 0.0
    %2109 = vmatpush1.msra.mxu0 %v2095
    %2110 = vmatprep.subr.mxu0 0.0
    %2111 = vmatpush1.msra.mxu0 %v2096
    %2112 = vmatprep.subr.mxu0 0.0
    %2113 = vmatpush1.msra.mxu0 %v2097
    %2114 = vmatprep.subr.mxu0 0.0
    %2115 = vmatpush1.msra.mxu0 0.0
    %2116 = vmatprep.subr.mxu0 0.0
    %2117 = vmatpush1.msra.mxu0 0.0
    %2118 = vmatprep.subr.mxu0 0.0
    %2119 = vmatpush1.msra.mxu0 0.0
    %2120 = vmatprep.subr.mxu0 0.0
    %2121 = vmatpush1.msra.mxu0 0.0
    %2122 = vmatprep.subr.mxu0 0.0
    %2123 = vmatpush1.msra.mxu0 0.0
    %2124 = vmatprep.subr.mxu0 0.0
    %2125 = vmatpush1.msra.mxu0 0.0
    %2126 = vmatprep.subr.mxu0 0.0
    %2127 = vmatpush1.msra.mxu0 0.0
    %2128 = vmatprep.subr.mxu0 0.0
    %2129 = vmatpush1.msra.mxu0 0.0
    %2130 = vmatprep.subr.mxu0 0.0
    %2131 = vmatpush1.msra.mxu0 0.0
    %2132 = vmatprep.subr.mxu0 0.0
    %2133 = vmatpush1.msra.mxu0 0.0
    %2134 = vmatprep.subr.mxu0 0.0
    %2135 = vmatpush1.msra.mxu0 0.0
    %2136 = vmatprep.subr.mxu0 0.0
    %2137 = vmatpush1.msra.mxu0 0.0
    %2138 = vmatprep.subr.mxu0 0.0
    %2139 = vmatpush1.msra.mxu0 0.0
    %2140 = vmatprep.subr.mxu0 0.0
    %2141 = vmatpush1.msra.mxu0 0.0
    %2142 = vmatprep.subr.mxu0 0.0
    %2143 = vmatpush1.msra.mxu0 0.0
    %2144 = vmatprep.subr.mxu0 0.0
    %2145 = vmatpush1.msra.mxu0 0.0
    %2146 = vmatprep.subr.mxu0 0.0
    %2147 = vmatpush1.msra.mxu0 0.0
    %2148 = vmatprep.subr.mxu0 0.0
    %2149 = vmatpush1.msra.mxu0 0.0
    %2150 = vmatprep.subr.mxu0 0.0
    %2151 = vmatpush1.msra.mxu0 0.0
    %2152 = vmatprep.subr.mxu0 0.0
    %2153 = vmatpush1.msra.mxu0 0.0
    %2154 = vmatprep.subr.mxu0 0.0
    %2155 = vmatpush1.msra.mxu0 0.0
    %2156 = vmatprep.subr.mxu0 0.0
    %2157 = vmatpush1.msra.mxu0 0.0
    %2158 = vmatprep.subr.mxu0 0.0
    %2159 = vmatpush1.msra.mxu0 0.0
    %2160 = vmatprep.subr.mxu0 0.0
    %2161 = vmatpush1.msra.mxu0 0.0
    %2162 = vmatprep.subr.mxu0 0.0
    %2163 = vmatpush1.msra.mxu0 0.0
    %2164 = vmatprep.subr.mxu0 0.0
    %2165 = vmatpush1.msra.mxu0 0.0
    %2166 = vmatprep.subr.mxu0 0.0
    %2167 = vmatpush1.msra.mxu0 0.0
    %2168 = vmatprep.subr.mxu0 0.0
    %2169 = vmatpush1.msra.mxu0 0.0
    %2170 = vmatprep.mubr.f32.mxu0 0.0
    %2171 = vmatmul.mubr.f32.gmra.mrb[0].mxu0 %v1010
    %v2172 = vpop.f32.mrb[0].mxu0
    %v2173 = vadd.f32 %v2104, %v2172
    %v2174 = vpop.f32.mrb[0].mxu0
    %2175 = vmatprep.mubr.f32.mxu0 0.0
    %2176 = vmatmul.mubr.f32.gmra.mrb[0].mxu0 %v1013
    %v2177 = vpop.f32.mrb[0].mxu0
    %v2178 = vadd.f32 %v2104, %v2177
    %v2179 = vpop.f32.mrb[0].mxu0
    %2180 = vdwg.mxu0
    %s2181 = scalar_lea.vmem %s12, 64
    %v2182 = vld [vmem:[%s2181] sm:$0xff]
    %v2183 = vld [vmem:[%s2181 + $0x8] sm:$0xff]
    %v2184 = vld [vmem:[%s2181 + $0x10] sm:$0xff]
    %v2185 = vld [vmem:[%s2181 + $0x18] sm:$0xff]
    %s2186 = scalar_lea.vmem %s15, 2
    %v2187 = vld [vmem:[%s2186] sm:$0x1]
    %v2189 = vlaneseq
    %v2190 = vshrl.u32 %v2189, 7
    %v2191 = vsub.s32 0, %v2190
    %v2192 = vrot.slane %v2187, %v2191
    %2194 = vmatprep.subr.mxu0 0.0
    %2195 = vmatpush1.msra.mxu0 %v2182
    %2196 = vmatprep.subr.mxu0 0.0
    %2197 = vmatpush1.msra.mxu0 %v2183
    %2198 = vmatprep.subr.mxu0 0.0
    %2199 = vmatpush1.msra.mxu0 %v2184
    %2200 = vmatprep.subr.mxu0 0.0
    %2201 = vmatpush1.msra.mxu0 %v2185
    %2202 = vmatprep.subr.mxu0 0.0
    %2203 = vmatpush1.msra.mxu0 0.0
    %2204 = vmatprep.subr.mxu0 0.0
    %2205 = vmatpush1.msra.mxu0 0.0
    %2206 = vmatprep.subr.mxu0 0.0
    %2207 = vmatpush1.msra.mxu0 0.0
    %2208 = vmatprep.subr.mxu0 0.0
    %2209 = vmatpush1.msra.mxu0 0.0
    %2210 = vmatprep.subr.mxu0 0.0
    %2211 = vmatpush1.msra.mxu0 0.0
    %2212 = vmatprep.subr.mxu0 0.0
    %2213 = vmatpush1.msra.mxu0 0.0
    %2214 = vmatprep.subr.mxu0 0.0
    %2215 = vmatpush1.msra.mxu0 0.0
    %2216 = vmatprep.subr.mxu0 0.0
    %2217 = vmatpush1.msra.mxu0 0.0
    %2218 = vmatprep.subr.mxu0 0.0
    %2219 = vmatpush1.msra.mxu0 0.0
    %2220 = vmatprep.subr.mxu0 0.0
    %2221 = vmatpush1.msra.mxu0 0.0
    %2222 = vmatprep.subr.mxu0 0.0
    %2223 = vmatpush1.msra.mxu0 0.0
    %2224 = vmatprep.subr.mxu0 0.0
    %2225 = vmatpush1.msra.mxu0 0.0
    %2226 = vmatprep.subr.mxu0 0.0
    %2227 = vmatpush1.msra.mxu0 0.0
    %2228 = vmatprep.subr.mxu0 0.0
    %2229 = vmatpush1.msra.mxu0 0.0
    %2230 = vmatprep.subr.mxu0 0.0
    %2231 = vmatpush1.msra.mxu0 0.0
    %2232 = vmatprep.subr.mxu0 0.0
    %2233 = vmatpush1.msra.mxu0 0.0
    %2234 = vmatprep.subr.mxu0 0.0
    %2235 = vmatpush1.msra.mxu0 0.0
    %2236 = vmatprep.subr.mxu0 0.0
    %2237 = vmatpush1.msra.mxu0 0.0
    %2238 = vmatprep.subr.mxu0 0.0
    %2239 = vmatpush1.msra.mxu0 0.0
    %2240 = vmatprep.subr.mxu0 0.0
    %2241 = vmatpush1.msra.mxu0 0.0
    %2242 = vmatprep.subr.mxu0 0.0
    %2243 = vmatpush1.msra.mxu0 0.0
    %2244 = vmatprep.subr.mxu0 0.0
    %2245 = vmatpush1.msra.mxu0 0.0
    %2246 = vmatprep.subr.mxu0 0.0
    %2247 = vmatpush1.msra.mxu0 0.0
    %2248 = vmatprep.subr.mxu0 0.0
    %2249 = vmatpush1.msra.mxu0 0.0
    %2250 = vmatprep.subr.mxu0 0.0
    %2251 = vmatpush1.msra.mxu0 0.0
    %2252 = vmatprep.subr.mxu0 0.0
    %2253 = vmatpush1.msra.mxu0 0.0
    %2254 = vmatprep.subr.mxu0 0.0
    %2255 = vmatpush1.msra.mxu0 0.0
    %2256 = vmatprep.subr.mxu0 0.0
    %2257 = vmatpush1.msra.mxu0 0.0
    %2258 = vmatprep.mubr.f32.mxu0 0.0
    %2259 = vmatmul.mubr.f32.gmra.mrb[0].mxu0 %v1010
    %v2260 = vpop.f32.mrb[0].mxu0
    %v2261 = vadd.f32 %v2192, %v2260
    %v2262 = vpop.f32.mrb[0].mxu0
    %2263 = vmatprep.mubr.f32.mxu0 0.0
    %2264 = vmatmul.mubr.f32.gmra.mrb[0].mxu0 %v1013
    %v2265 = vpop.f32.mrb[0].mxu0
    %v2266 = vadd.f32 %v2192, %v2265
    %v2267 = vpop.f32.mrb[0].mxu0
    %2268 = vdwg.mxu0
    %s2269 = scalar_lea.vmem %s13, 64
    %v2270 = vld [vmem:[%s2269] sm:$0xff]
    %v2271 = vld [vmem:[%s2269 + $0x8] sm:$0xff]
    %v2272 = vld [vmem:[%s2269 + $0x10] sm:$0xff]
    %v2273 = vld [vmem:[%s2269 + $0x18] sm:$0xff]
    %s2274 = scalar_lea.vmem %s16, 2
    %v2275 = vld [vmem:[%s2274] sm:$0x1]
    %v2277 = vlaneseq
    %v2278 = vshrl.u32 %v2277, 7
    %v2279 = vsub.s32 0, %v2278
    %v2280 = vrot.slane %v2275, %v2279
    %2282 = vmatprep.subr.mxu0 0.0
    %2283 = vmatpush1.msra.mxu0 %v2270
    %2284 = vmatprep.subr.mxu0 0.0
    %2285 = vmatpush1.msra.mxu0 %v2271
    %2286 = vmatprep.subr.mxu0 0.0
    %2287 = vmatpush1.msra.mxu0 %v2272
    %2288 = vmatprep.subr.mxu0 0.0
    %2289 = vmatpush1.msra.mxu0 %v2273
    %2290 = vmatprep.subr.mxu0 0.0
    %2291 = vmatpush1.msra.mxu0 0.0
    %2292 = vmatprep.subr.mxu0 0.0
    %2293 = vmatpush1.msra.mxu0 0.0
    %2294 = vmatprep.subr.mxu0 0.0
    %2295 = vmatpush1.msra.mxu0 0.0
    %2296 = vmatprep.subr.mxu0 0.0
    %2297 = vmatpush1.msra.mxu0 0.0
    %2298 = vmatprep.subr.mxu0 0.0
    %2299 = vmatpush1.msra.mxu0 0.0
    %2300 = vmatprep.subr.mxu0 0.0
    %2301 = vmatpush1.msra.mxu0 0.0
    %2302 = vmatprep.subr.mxu0 0.0
    %2303 = vmatpush1.msra.mxu0 0.0
    %2304 = vmatprep.subr.mxu0 0.0
    %2305 = vmatpush1.msra.mxu0 0.0
    %2306 = vmatprep.subr.mxu0 0.0
    %2307 = vmatpush1.msra.mxu0 0.0
    %2308 = vmatprep.subr.mxu0 0.0
    %2309 = vmatpush1.msra.mxu0 0.0
    %2310 = vmatprep.subr.mxu0 0.0
    %2311 = vmatpush1.msra.mxu0 0.0
    %2312 = vmatprep.subr.mxu0 0.0
    %2313 = vmatpush1.msra.mxu0 0.0
    %2314 = vmatprep.subr.mxu0 0.0
    %2315 = vmatpush1.msra.mxu0 0.0
    %2316 = vmatprep.subr.mxu0 0.0
    %2317 = vmatpush1.msra.mxu0 0.0
    %2318 = vmatprep.subr.mxu0 0.0
    %2319 = vmatpush1.msra.mxu0 0.0
    %2320 = vmatprep.subr.mxu0 0.0
    %2321 = vmatpush1.msra.mxu0 0.0
    %2322 = vmatprep.subr.mxu0 0.0
    %2323 = vmatpush1.msra.mxu0 0.0
    %2324 = vmatprep.subr.mxu0 0.0
    %2325 = vmatpush1.msra.mxu0 0.0
    %2326 = vmatprep.subr.mxu0 0.0
    %2327 = vmatpush1.msra.mxu0 0.0
    %2328 = vmatprep.subr.mxu0 0.0
    %2329 = vmatpush1.msra.mxu0 0.0
    %2330 = vmatprep.subr.mxu0 0.0
    %2331 = vmatpush1.msra.mxu0 0.0
    %2332 = vmatprep.subr.mxu0 0.0
    %2333 = vmatpush1.msra.mxu0 0.0
    %2334 = vmatprep.subr.mxu0 0.0
    %2335 = vmatpush1.msra.mxu0 0.0
    %2336 = vmatprep.subr.mxu0 0.0
    %2337 = vmatpush1.msra.mxu0 0.0
    %2338 = vmatprep.subr.mxu0 0.0
    %2339 = vmatpush1.msra.mxu0 0.0
    %2340 = vmatprep.subr.mxu0 0.0
    %2341 = vmatpush1.msra.mxu0 0.0
    %2342 = vmatprep.subr.mxu0 0.0
    %2343 = vmatpush1.msra.mxu0 0.0
    %2344 = vmatprep.subr.mxu0 0.0
    %2345 = vmatpush1.msra.mxu0 0.0
    %2346 = vmatprep.mubr.f32.mxu0 0.0
    %2347 = vmatmul.mubr.f32.gmra.mrb[0].mxu0 %v1010
    %v2348 = vpop.f32.mrb[0].mxu0
    %v2349 = vadd.f32 %v2280, %v2348
    %v2350 = vpop.f32.mrb[0].mxu0
    %2351 = vmatprep.mubr.f32.mxu0 0.0
    %2352 = vmatmul.mubr.f32.gmra.mrb[0].mxu0 %v1013
    %v2353 = vpop.f32.mrb[0].mxu0
    %v2354 = vadd.f32 %v2280, %v2353
    %v2355 = vpop.f32.mrb[0].mxu0
    %2356 = vdwg.mxu0
    %v2358 = vsel %vm1262, %v2173, 0
    %v2361 = vsel %vm1262, %v2178, 0
    %v2364 = vsel %vm1262, %v2261, 0
    %v2367 = vsel %vm1262, %v2266, 0
    %2369 = vmatprep.subr.mxu0 0.0
    %2370 = vmatpush1.xpose.msra.mxu0 %v2364
    %2371 = vmatprep.subr.mxu0 0.0
    %2372 = vmatpush1.xpose.msra.mxu0 %v2367
    %2373 = vmatprep.subr.mxu0 0.0
    %2374 = vmatpush1.xpose.msra.mxu0 0.0
    %2375 = vmatprep.subr.mxu0 0.0
    %2376 = vmatpush1.xpose.msra.mxu0 0.0
    %2377 = vmatprep.subr.mxu0 0.0
    %2378 = vmatpush1.xpose.msra.mxu0 0.0
    %2379 = vmatprep.subr.mxu0 0.0
    %2380 = vmatpush1.xpose.msra.mxu0 0.0
    %2381 = vmatprep.subr.mxu0 0.0
    %2382 = vmatpush1.xpose.msra.mxu0 0.0
    %2383 = vmatprep.subr.mxu0 0.0
    %2384 = vmatpush1.xpose.msra.mxu0 0.0
    %2385 = vmatprep.subr.mxu0 0.0
    %2386 = vmatpush1.xpose.msra.mxu0 0.0
    %2387 = vmatprep.subr.mxu0 0.0
    %2388 = vmatpush1.xpose.msra.mxu0 0.0
    %2389 = vmatprep.subr.mxu0 0.0
    %2390 = vmatpush1.xpose.msra.mxu0 0.0
    %2391 = vmatprep.subr.mxu0 0.0
    %2392 = vmatpush1.xpose.msra.mxu0 0.0
    %2393 = vmatprep.subr.mxu0 0.0
    %2394 = vmatpush1.xpose.msra.mxu0 0.0
    %2395 = vmatprep.subr.mxu0 0.0
    %2396 = vmatpush1.xpose.msra.mxu0 0.0
    %2397 = vmatprep.subr.mxu0 0.0
    %2398 = vmatpush1.xpose.msra.mxu0 0.0
    %2399 = vmatprep.subr.mxu0 0.0
    %2400 = vmatpush1.xpose.msra.mxu0 0.0
    %2401 = vmatprep.subr.mxu0 0.0
    %2402 = vmatpush1.xpose.msra.mxu0 0.0
    %2403 = vmatprep.subr.mxu0 0.0
    %2404 = vmatpush1.xpose.msra.mxu0 0.0
    %2405 = vmatprep.subr.mxu0 0.0
    %2406 = vmatpush1.xpose.msra.mxu0 0.0
    %2407 = vmatprep.subr.mxu0 0.0
    %2408 = vmatpush1.xpose.msra.mxu0 0.0
    %2409 = vmatprep.subr.mxu0 0.0
    %2410 = vmatpush1.xpose.msra.mxu0 0.0
    %2411 = vmatprep.subr.mxu0 0.0
    %2412 = vmatpush1.xpose.msra.mxu0 0.0
    %2413 = vmatprep.subr.mxu0 0.0
    %2414 = vmatpush1.xpose.msra.mxu0 0.0
    %2415 = vmatprep.subr.mxu0 0.0
    %2416 = vmatpush1.xpose.msra.mxu0 0.0
    %2417 = vmatprep.subr.mxu0 0.0
    %2418 = vmatpush1.xpose.msra.mxu0 0.0
    %2419 = vmatprep.subr.mxu0 0.0
    %2420 = vmatpush1.xpose.msra.mxu0 0.0
    %2421 = vmatprep.subr.mxu0 0.0
    %2422 = vmatpush1.xpose.msra.mxu0 0.0
    %2423 = vmatprep.subr.mxu0 0.0
    %2424 = vmatpush1.xpose.msra.mxu0 0.0
    %2425 = vmatprep.subr.mxu0 0.0
    %2426 = vmatpush1.xpose.msra.mxu0 0.0
    %2427 = vmatprep.subr.mxu0 0.0
    %2428 = vmatpush1.xpose.msra.mxu0 0.0
    %2429 = vmatprep.subr.mxu0 0.0
    %2430 = vmatpush1.xpose.msra.mxu0 0.0
    %2431 = vmatprep.subr.mxu0 0.0
    %2432 = vmatpush1.xpose.msra.mxu0 0.0
    %2433 = vmatprep.mubr.f32.mxu0 0.0
    %2434 = vmatmul.mubr.f32.gmra.mrb[0].mxu0 %v2358
    %v2435 = vpop.f32.mrb[0].mxu0
    %v2436 = vadd.f32 0.0, %v2435
    %v2437 = vpop.f32.mrb[0].mxu0
    %2438 = vmatprep.mubr.f32.mxu0 0.0
    %2439 = vmatmul.mubr.f32.gmra.mrb[0].mxu0 %v2361
    %v2440 = vpop.f32.mrb[0].mxu0
    %v2441 = vadd.f32 0.0, %v2440
    %v2442 = vpop.f32.mrb[0].mxu0
    %2443 = vdwg.mxu0
    %v2444 = vmul.f32 %v2436, 0.35355338
    %v2445 = vmul.f32 %v2441, 0.35355338
    %v2446 = vadd.f32 %v2444, %v78
    %v2447 = vadd.f32 %v2445, %v79
    %v2448 = vsel %vm1354, %v2446, -inf
    %2449 = vmax.xlane.f32.xlu0 %v2448
    %v2450 = vpop.xlane.xlu0 %2449
    %v2451 = vsel %vm1354, %v2447, -inf
    %2452 = vmax.xlane.f32.xlu0 %v2451
    %v2453 = vpop.xlane.xlu0 %2452
    %v2454 = vsub.f32 %v2446, %v2450
    %v2455 = vsub.f32 %v2447, %v2453
    %v2456 = vmul.f32 %v2454, 1.442695
    %v2457 = vpow.pop %v2456
    %v2458 = vmul.f32 %v2455, 1.442695
    %v2459 = vpow.pop %v2458
    %v2460 = vsel %vm1354, %v2457, 0.0
    %2461 = vadd.xlane.f32.xlu0 %v2460
    %v2462 = vpop.xlane.xlu0 %2461
    %v2463 = vsel %vm1354, %v2459, 0.0
    %2464 = vadd.xlane.f32.xlu0 %v2463
    %v2465 = vpop.xlane.xlu0 %2464
    %v2466 = vrcp.pop %v2462
    %v2467 = vrcp.pop %v2465
    %v2468 = vmul.f32 %v2462, %v2466
    %v2469 = vmul.f32 %v2465, %v2467
    %v2470 = vsub.f32 2.0, %v2468
    %v2471 = vsub.f32 2.0, %v2469
    %v2472 = vmul.f32 %v2466, %v2470
    %v2473 = vmul.f32 %v2467, %v2471
    %v2474 = vmul.f32 %v2457, %v2472
    %v2475 = vmul.f32 %v2459, %v2473
    %v2477 = vsel %vm1354, %v2474, 0
    %v2480 = vsel %vm1354, %v2475, 0
    %2482 = vmatprep.subr.mxu0 0.0
    %2483 = vmatpush1.msra.mxu0 %v2349
    %2484 = vmatprep.subr.mxu0 0.0
    %2485 = vmatpush1.msra.mxu0 %v2354
    %2486 = vmatprep.subr.mxu0 0.0
    %2487 = vmatpush1.msra.mxu0 0.0
    %2488 = vmatprep.subr.mxu0 0.0
    %2489 = vmatpush1.msra.mxu0 0.0
    %2490 = vmatprep.subr.mxu0 0.0
    %2491 = vmatpush1.msra.mxu0 0.0
    %2492 = vmatprep.subr.mxu0 0.0
    %2493 = vmatpush1.msra.mxu0 0.0
    %2494 = vmatprep.subr.mxu0 0.0
    %2495 = vmatpush1.msra.mxu0 0.0
    %2496 = vmatprep.subr.mxu0 0.0
    %2497 = vmatpush1.msra.mxu0 0.0
    %2498 = vmatprep.subr.mxu0 0.0
    %2499 = vmatpush1.msra.mxu0 0.0
    %2500 = vmatprep.subr.mxu0 0.0
    %2501 = vmatpush1.msra.mxu0 0.0
    %2502 = vmatprep.subr.mxu0 0.0
    %2503 = vmatpush1.msra.mxu0 0.0
    %2504 = vmatprep.subr.mxu0 0.0
    %2505 = vmatpush1.msra.mxu0 0.0
    %2506 = vmatprep.subr.mxu0 0.0
    %2507 = vmatpush1.msra.mxu0 0.0
    %2508 = vmatprep.subr.mxu0 0.0
    %2509 = vmatpush1.msra.mxu0 0.0
    %2510 = vmatprep.subr.mxu0 0.0
    %2511 = vmatpush1.msra.mxu0 0.0
    %2512 = vmatprep.subr.mxu0 0.0
    %2513 = vmatpush1.msra.mxu0 0.0
    %2514 = vmatprep.subr.mxu0 0.0
    %2515 = vmatpush1.msra.mxu0 0.0
    %2516 = vmatprep.subr.mxu0 0.0
    %2517 = vmatpush1.msra.mxu0 0.0
    %2518 = vmatprep.subr.mxu0 0.0
    %2519 = vmatpush1.msra.mxu0 0.0
    %2520 = vmatprep.subr.mxu0 0.0
    %2521 = vmatpush1.msra.mxu0 0.0
    %2522 = vmatprep.subr.mxu0 0.0
    %2523 = vmatpush1.msra.mxu0 0.0
    %2524 = vmatprep.subr.mxu0 0.0
    %2525 = vmatpush1.msra.mxu0 0.0
    %2526 = vmatprep.subr.mxu0 0.0
    %2527 = vmatpush1.msra.mxu0 0.0
    %2528 = vmatprep.subr.mxu0 0.0
    %2529 = vmatpush1.msra.mxu0 0.0
    %2530 = vmatprep.subr.mxu0 0.0
    %2531 = vmatpush1.msra.mxu0 0.0
    %2532 = vmatprep.subr.mxu0 0.0
    %2533 = vmatpush1.msra.mxu0 0.0
    %2534 = vmatprep.subr.mxu0 0.0
    %2535 = vmatpush1.msra.mxu0 0.0
    %2536 = vmatprep.subr.mxu0 0.0
    %2537 = vmatpush1.msra.mxu0 0.0
    %2538 = vmatprep.subr.mxu0 0.0
    %2539 = vmatpush1.msra.mxu0 0.0
    %2540 = vmatprep.subr.mxu0 0.0
    %2541 = vmatpush1.msra.mxu0 0.0
    %2542 = vmatprep.subr.mxu0 0.0
    %2543 = vmatpush1.msra.mxu0 0.0
    %2544 = vmatprep.subr.mxu0 0.0
    %2545 = vmatpush1.msra.mxu0 0.0
    %2546 = vmatprep.mubr.f32.mxu0 0.0
    %2547 = vmatmul.mubr.f32.gmra.mrb[0].mxu0 %v2477
    %v2548 = vpop.f32.mrb[0].mxu0
    %v2549 = vadd.f32 0.0, %v2548
    %v2550 = vpop.f32.mrb[0].mxu0
    %2551 = vmatprep.mubr.f32.mxu0 0.0
    %2552 = vmatmul.mubr.f32.gmra.mrb[0].mxu0 %v2480
    %v2553 = vpop.f32.mrb[0].mxu0
    %v2554 = vadd.f32 0.0, %v2553
    %v2555 = vpop.f32.mrb[0].mxu0
    %2556 = vdwg.mxu0
    %s2557 = scalar_lea.vmem %s17, 16
    %v2558 = vld [vmem:[%s2557] sm:$0xff]
    %v2560 = vsel %vm1262, %v2549, 0
    %v2563 = vsel %vm1262, %v2554, 0
    %2565 = vmatprep.subr.mxu0 0.0
    %2566 = vmatpush1.msra.mxu0 %v2558
    %2567 = vmatprep.subr.mxu0 0.0
    %2568 = vmatpush1.msra.mxu0 0.0
    %2569 = vmatprep.subr.mxu0 0.0
    %2570 = vmatpush1.msra.mxu0 0.0
    %2571 = vmatprep.subr.mxu0 0.0
    %2572 = vmatpush1.msra.mxu0 0.0
    %2573 = vmatprep.subr.mxu0 0.0
    %2574 = vmatpush1.msra.mxu0 0.0
    %2575 = vmatprep.subr.mxu0 0.0
    %2576 = vmatpush1.msra.mxu0 0.0
    %2577 = vmatprep.subr.mxu0 0.0
    %2578 = vmatpush1.msra.mxu0 0.0
    %2579 = vmatprep.subr.mxu0 0.0
    %2580 = vmatpush1.msra.mxu0 0.0
    %2581 = vmatprep.subr.mxu0 0.0
    %2582 = vmatpush1.msra.mxu0 0.0
    %2583 = vmatprep.subr.mxu0 0.0
    %2584 = vmatpush1.msra.mxu0 0.0
    %2585 = vmatprep.subr.mxu0 0.0
    %2586 = vmatpush1.msra.mxu0 0.0
    %2587 = vmatprep.subr.mxu0 0.0
    %2588 = vmatpush1.msra.mxu0 0.0
    %2589 = vmatprep.subr.mxu0 0.0
    %2590 = vmatpush1.msra.mxu0 0.0
    %2591 = vmatprep.subr.mxu0 0.0
    %2592 = vmatpush1.msra.mxu0 0.0
    %2593 = vmatprep.subr.mxu0 0.0
    %2594 = vmatpush1.msra.mxu0 0.0
    %2595 = vmatprep.subr.mxu0 0.0
    %2596 = vmatpush1.msra.mxu0 0.0
    %2597 = vmatprep.subr.mxu0 0.0
    %2598 = vmatpush1.msra.mxu0 0.0
    %2599 = vmatprep.subr.mxu0 0.0
    %2600 = vmatpush1.msra.mxu0 0.0
    %2601 = vmatprep.subr.mxu0 0.0
    %2602 = vmatpush1.msra.mxu0 0.0
    %2603 = vmatprep.subr.mxu0 0.0
    %2604 = vmatpush1.msra.mxu0 0.0
    %2605 = vmatprep.subr.mxu0 0.0
    %2606 = vmatpush1.msra.mxu0 0.0
    %2607 = vmatprep.subr.mxu0 0.0
    %2608 = vmatpush1.msra.mxu0 0.0
    %2609 = vmatprep.subr.mxu0 0.0
    %2610 = vmatpush1.msra.mxu0 0.0
    %2611 = vmatprep.subr.mxu0 0.0
    %2612 = vmatpush1.msra.mxu0 0.0
    %2613 = vmatprep.subr.mxu0 0.0
    %2614 = vmatpush1.msra.mxu0 0.0
    %2615 = vmatprep.subr.mxu0 0.0
    %2616 = vmatpush1.msra.mxu0 0.0
    %2617 = vmatprep.subr.mxu0 0.0
    %2618 = vmatpush1.msra.mxu0 0.0
    %2619 = vmatprep.subr.mxu0 0.0
    %2620 = vmatpush1.msra.mxu0 0.0
    %2621 = vmatprep.subr.mxu0 0.0
    %2622 = vmatpush1.msra.mxu0 0.0
    %2623 = vmatprep.subr.mxu0 0.0
    %2624 = vmatpush1.msra.mxu0 0.0
    %2625 = vmatprep.subr.mxu0 0.0
    %2626 = vmatpush1.msra.mxu0 0.0
    %2627 = vmatprep.subr.mxu0 0.0
    %2628 = vmatpush1.msra.mxu0 0.0
    %2629 = vmatprep.mubr.f32.mxu0 0.0
    %2630 = vmatmul.mubr.f32.gmra.mrb[0].mxu0 %v2560
    %v2631 = vpop.f32.mrb[0].mxu0
    %v2632 = vadd.f32 0.0, %v2631
    %v2633 = vpop.f32.mrb[0].mxu0
    %2634 = vmatprep.mubr.f32.mxu0 0.0
    %2635 = vmatmul.mubr.f32.gmra.mrb[0].mxu0 %v2563
    %v2636 = vpop.f32.mrb[0].mxu0
    %v2637 = vadd.f32 0.0, %v2636
    %v2638 = vpop.f32.mrb[0].mxu0
    %2639 = vdwg.mxu0
    %v2640 = vadd.f32 %v2085, %v2632
    %v2641 = vadd.f32 %v2090, %v2637
    %s2642 = scalar_lea.vmem %s11, 96
    %v2643 = vld [vmem:[%s2642] sm:$0xff]
    %v2644 = vld [vmem:[%s2642 + $0x8] sm:$0xff]
    %v2645 = vld [vmem:[%s2642 + $0x10] sm:$0xff]
    %v2646 = vld [vmem:[%s2642 + $0x18] sm:$0xff]
    %s2647 = scalar_lea.vmem %s14, 3
    %v2648 = vld [vmem:[%s2647] sm:$0x1]
    %v2650 = vlaneseq
    %v2651 = vshrl.u32 %v2650, 7
    %v2652 = vsub.s32 0, %v2651
    %v2653 = vrot.slane %v2648, %v2652
    %2655 = vmatprep.subr.mxu0 0.0
    %2656 = vmatpush1.msra.mxu0 %v2643
    %2657 = vmatprep.subr.mxu0 0.0
    %2658 = vmatpush1.msra.mxu0 %v2644
    %2659 = vmatprep.subr.mxu0 0.0
    %2660 = vmatpush1.msra.mxu0 %v2645
    %2661 = vmatprep.subr.mxu0 0.0
    %2662 = vmatpush1.msra.mxu0 %v2646
    %2663 = vmatprep.subr.mxu0 0.0
    %2664 = vmatpush1.msra.mxu0 0.0
    %2665 = vmatprep.subr.mxu0 0.0
    %2666 = vmatpush1.msra.mxu0 0.0
    %2667 = vmatprep.subr.mxu0 0.0
    %2668 = vmatpush1.msra.mxu0 0.0
    %2669 = vmatprep.subr.mxu0 0.0
    %2670 = vmatpush1.msra.mxu0 0.0
    %2671 = vmatprep.subr.mxu0 0.0
    %2672 = vmatpush1.msra.mxu0 0.0
    %2673 = vmatprep.subr.mxu0 0.0
    %2674 = vmatpush1.msra.mxu0 0.0
    %2675 = vmatprep.subr.mxu0 0.0
    %2676 = vmatpush1.msra.mxu0 0.0
    %2677 = vmatprep.subr.mxu0 0.0
    %2678 = vmatpush1.msra.mxu0 0.0
    %2679 = vmatprep.subr.mxu0 0.0
    %2680 = vmatpush1.msra.mxu0 0.0
    %2681 = vmatprep.subr.mxu0 0.0
    %2682 = vmatpush1.msra.mxu0 0.0
    %2683 = vmatprep.subr.mxu0 0.0
    %2684 = vmatpush1.msra.mxu0 0.0
    %2685 = vmatprep.subr.mxu0 0.0
    %2686 = vmatpush1.msra.mxu0 0.0
    %2687 = vmatprep.subr.mxu0 0.0
    %2688 = vmatpush1.msra.mxu0 0.0
    %2689 = vmatprep.subr.mxu0 0.0
    %2690 = vmatpush1.msra.mxu0 0.0
    %2691 = vmatprep.subr.mxu0 0.0
    %2692 = vmatpush1.msra.mxu0 0.0
    %2693 = vmatprep.subr.mxu0 0.0
    %2694 = vmatpush1.msra.mxu0 0.0
    %2695 = vmatprep.subr.mxu0 0.0
    %2696 = vmatpush1.msra.mxu0 0.0
    %2697 = vmatprep.subr.mxu0 0.0
    %2698 = vmatpush1.msra.mxu0 0.0
    %2699 = vmatprep.subr.mxu0 0.0
    %2700 = vmatpush1.msra.mxu0 0.0
    %2701 = vmatprep.subr.mxu0 0.0
    %2702 = vmatpush1.msra.mxu0 0.0
    %2703 = vmatprep.subr.mxu0 0.0
    %2704 = vmatpush1.msra.mxu0 0.0
    %2705 = vmatprep.subr.mxu0 0.0
    %2706 = vmatpush1.msra.mxu0 0.0
    %2707 = vmatprep.subr.mxu0 0.0
    %2708 = vmatpush1.msra.mxu0 0.0
    %2709 = vmatprep.subr.mxu0 0.0
    %2710 = vmatpush1.msra.mxu0 0.0
    %2711 = vmatprep.subr.mxu0 0.0
    %2712 = vmatpush1.msra.mxu0 0.0
    %2713 = vmatprep.subr.mxu0 0.0
    %2714 = vmatpush1.msra.mxu0 0.0
    %2715 = vmatprep.subr.mxu0 0.0
    %2716 = vmatpush1.msra.mxu0 0.0
    %2717 = vmatprep.subr.mxu0 0.0
    %2718 = vmatpush1.msra.mxu0 0.0
    %2719 = vmatprep.mubr.f32.mxu0 0.0
    %2720 = vmatmul.mubr.f32.gmra.mrb[0].mxu0 %v1010
    %v2721 = vpop.f32.mrb[0].mxu0
    %v2722 = vadd.f32 %v2653, %v2721
    %v2723 = vpop.f32.mrb[0].mxu0
    %2724 = vmatprep.mubr.f32.mxu0 0.0
    %2725 = vmatmul.mubr.f32.gmra.mrb[0].mxu0 %v1013
    %v2726 = vpop.f32.mrb[0].mxu0
    %v2727 = vadd.f32 %v2653, %v2726
    %v2728 = vpop.f32.mrb[0].mxu0
    %2729 = vdwg.mxu0
    %s2730 = scalar_lea.vmem %s12, 96
    %v2731 = vld [vmem:[%s2730] sm:$0xff]
    %v2732 = vld [vmem:[%s2730 + $0x8] sm:$0xff]
    %v2733 = vld [vmem:[%s2730 + $0x10] sm:$0xff]
    %v2734 = vld [vmem:[%s2730 + $0x18] sm:$0xff]
    %s2735 = scalar_lea.vmem %s15, 3
    %v2736 = vld [vmem:[%s2735] sm:$0x1]
    %v2738 = vlaneseq
    %v2739 = vshrl.u32 %v2738, 7
    %v2740 = vsub.s32 0, %v2739
    %v2741 = vrot.slane %v2736, %v2740
    %2743 = vmatprep.subr.mxu0 0.0
    %2744 = vmatpush1.msra.mxu0 %v2731
    %2745 = vmatprep.subr.mxu0 0.0
    %2746 = vmatpush1.msra.mxu0 %v2732
    %2747 = vmatprep.subr.mxu0 0.0
    %2748 = vmatpush1.msra.mxu0 %v2733
    %2749 = vmatprep.subr.mxu0 0.0
    %2750 = vmatpush1.msra.mxu0 %v2734
    %2751 = vmatprep.subr.mxu0 0.0
    %2752 = vmatpush1.msra.mxu0 0.0
    %2753 = vmatprep.subr.mxu0 0.0
    %2754 = vmatpush1.msra.mxu0 0.0
    %2755 = vmatprep.subr.mxu0 0.0
    %2756 = vmatpush1.msra.mxu0 0.0
    %2757 = vmatprep.subr.mxu0 0.0
    %2758 = vmatpush1.msra.mxu0 0.0
    %2759 = vmatprep.subr.mxu0 0.0
    %2760 = vmatpush1.msra.mxu0 0.0
    %2761 = vmatprep.subr.mxu0 0.0
    %2762 = vmatpush1.msra.mxu0 0.0
    %2763 = vmatprep.subr.mxu0 0.0
    %2764 = vmatpush1.msra.mxu0 0.0
    %2765 = vmatprep.subr.mxu0 0.0
    %2766 = vmatpush1.msra.mxu0 0.0
    %2767 = vmatprep.subr.mxu0 0.0
    %2768 = vmatpush1.msra.mxu0 0.0
    %2769 = vmatprep.subr.mxu0 0.0
    %2770 = vmatpush1.msra.mxu0 0.0
    %2771 = vmatprep.subr.mxu0 0.0
    %2772 = vmatpush1.msra.mxu0 0.0
    %2773 = vmatprep.subr.mxu0 0.0
    %2774 = vmatpush1.msra.mxu0 0.0
    %2775 = vmatprep.subr.mxu0 0.0
    %2776 = vmatpush1.msra.mxu0 0.0
    %2777 = vmatprep.subr.mxu0 0.0
    %2778 = vmatpush1.msra.mxu0 0.0
    %2779 = vmatprep.subr.mxu0 0.0
    %2780 = vmatpush1.msra.mxu0 0.0
    %2781 = vmatprep.subr.mxu0 0.0
    %2782 = vmatpush1.msra.mxu0 0.0
    %2783 = vmatprep.subr.mxu0 0.0
    %2784 = vmatpush1.msra.mxu0 0.0
    %2785 = vmatprep.subr.mxu0 0.0
    %2786 = vmatpush1.msra.mxu0 0.0
    %2787 = vmatprep.subr.mxu0 0.0
    %2788 = vmatpush1.msra.mxu0 0.0
    %2789 = vmatprep.subr.mxu0 0.0
    %2790 = vmatpush1.msra.mxu0 0.0
    %2791 = vmatprep.subr.mxu0 0.0
    %2792 = vmatpush1.msra.mxu0 0.0
    %2793 = vmatprep.subr.mxu0 0.0
    %2794 = vmatpush1.msra.mxu0 0.0
    %2795 = vmatprep.subr.mxu0 0.0
    %2796 = vmatpush1.msra.mxu0 0.0
    %2797 = vmatprep.subr.mxu0 0.0
    %2798 = vmatpush1.msra.mxu0 0.0
    %2799 = vmatprep.subr.mxu0 0.0
    %2800 = vmatpush1.msra.mxu0 0.0
    %2801 = vmatprep.subr.mxu0 0.0
    %2802 = vmatpush1.msra.mxu0 0.0
    %2803 = vmatprep.subr.mxu0 0.0
    %2804 = vmatpush1.msra.mxu0 0.0
    %2805 = vmatprep.subr.mxu0 0.0
    %2806 = vmatpush1.msra.mxu0 0.0
    %2807 = vmatprep.mubr.f32.mxu0 0.0
    %2808 = vmatmul.mubr.f32.gmra.mrb[0].mxu0 %v1010
    %v2809 = vpop.f32.mrb[0].mxu0
    %v2810 = vadd.f32 %v2741, %v2809
    %v2811 = vpop.f32.mrb[0].mxu0
    %2812 = vmatprep.mubr.f32.mxu0 0.0
    %2813 = vmatmul.mubr.f32.gmra.mrb[0].mxu0 %v1013
    %v2814 = vpop.f32.mrb[0].mxu0
    %v2815 = vadd.f32 %v2741, %v2814
    %v2816 = vpop.f32.mrb[0].mxu0
    %2817 = vdwg.mxu0
    %s2818 = scalar_lea.vmem %s13, 96
    %v2819 = vld [vmem:[%s2818] sm:$0xff]
    %v2820 = vld [vmem:[%s2818 + $0x8] sm:$0xff]
    %v2821 = vld [vmem:[%s2818 + $0x10] sm:$0xff]
    %v2822 = vld [vmem:[%s2818 + $0x18] sm:$0xff]
    %s2823 = scalar_lea.vmem %s16, 3
    %v2824 = vld [vmem:[%s2823] sm:$0x1]
    %v2826 = vlaneseq
    %v2827 = vshrl.u32 %v2826, 7
    %v2828 = vsub.s32 0, %v2827
    %v2829 = vrot.slane %v2824, %v2828
    %2831 = vmatprep.subr.mxu0 0.0
    %2832 = vmatpush1.msra.mxu0 %v2819
    %2833 = vmatprep.subr.mxu0 0.0
    %2834 = vmatpush1.msra.mxu0 %v2820
    %2835 = vmatprep.subr.mxu0 0.0
    %2836 = vmatpush1.msra.mxu0 %v2821
    %2837 = vmatprep.subr.mxu0 0.0
    %2838 = vmatpush1.msra.mxu0 %v2822
    %2839 = vmatprep.subr.mxu0 0.0
    %2840 = vmatpush1.msra.mxu0 0.0
    %2841 = vmatprep.subr.mxu0 0.0
    %2842 = vmatpush1.msra.mxu0 0.0
    %2843 = vmatprep.subr.mxu0 0.0
    %2844 = vmatpush1.msra.mxu0 0.0
    %2845 = vmatprep.subr.mxu0 0.0
    %2846 = vmatpush1.msra.mxu0 0.0
    %2847 = vmatprep.subr.mxu0 0.0
    %2848 = vmatpush1.msra.mxu0 0.0
    %2849 = vmatprep.subr.mxu0 0.0
    %2850 = vmatpush1.msra.mxu0 0.0
    %2851 = vmatprep.subr.mxu0 0.0
    %2852 = vmatpush1.msra.mxu0 0.0
    %2853 = vmatprep.subr.mxu0 0.0
    %2854 = vmatpush1.msra.mxu0 0.0
    %2855 = vmatprep.subr.mxu0 0.0
    %2856 = vmatpush1.msra.mxu0 0.0
    %2857 = vmatprep.subr.mxu0 0.0
    %2858 = vmatpush1.msra.mxu0 0.0
    %2859 = vmatprep.subr.mxu0 0.0
    %2860 = vmatpush1.msra.mxu0 0.0
    %2861 = vmatprep.subr.mxu0 0.0
    %2862 = vmatpush1.msra.mxu0 0.0
    %2863 = vmatprep.subr.mxu0 0.0
    %2864 = vmatpush1.msra.mxu0 0.0
    %2865 = vmatprep.subr.mxu0 0.0
    %2866 = vmatpush1.msra.mxu0 0.0
    %2867 = vmatprep.subr.mxu0 0.0
    %2868 = vmatpush1.msra.mxu0 0.0
    %2869 = vmatprep.subr.mxu0 0.0
    %2870 = vmatpush1.msra.mxu0 0.0
    %2871 = vmatprep.subr.mxu0 0.0
    %2872 = vmatpush1.msra.mxu0 0.0
    %2873 = vmatprep.subr.mxu0 0.0
    %2874 = vmatpush1.msra.mxu0 0.0
    %2875 = vmatprep.subr.mxu0 0.0
    %2876 = vmatpush1.msra.mxu0 0.0
    %2877 = vmatprep.subr.mxu0 0.0
    %2878 = vmatpush1.msra.mxu0 0.0
    %2879 = vmatprep.subr.mxu0 0.0
    %2880 = vmatpush1.msra.mxu0 0.0
    %2881 = vmatprep.subr.mxu0 0.0
    %2882 = vmatpush1.msra.mxu0 0.0
    %2883 = vmatprep.subr.mxu0 0.0
    %2884 = vmatpush1.msra.mxu0 0.0
    %2885 = vmatprep.subr.mxu0 0.0
    %2886 = vmatpush1.msra.mxu0 0.0
    %2887 = vmatprep.subr.mxu0 0.0
    %2888 = vmatpush1.msra.mxu0 0.0
    %2889 = vmatprep.subr.mxu0 0.0
    %2890 = vmatpush1.msra.mxu0 0.0
    %2891 = vmatprep.subr.mxu0 0.0
    %2892 = vmatpush1.msra.mxu0 0.0
    %2893 = vmatprep.subr.mxu0 0.0
    %2894 = vmatpush1.msra.mxu0 0.0
    %2895 = vmatprep.mubr.f32.mxu0 0.0
    %2896 = vmatmul.mubr.f32.gmra.mrb[0].mxu0 %v1010
    %v2897 = vpop.f32.mrb[0].mxu0
    %v2898 = vadd.f32 %v2829, %v2897
    %v2899 = vpop.f32.mrb[0].mxu0
    %2900 = vmatprep.mubr.f32.mxu0 0.0
    %2901 = vmatmul.mubr.f32.gmra.mrb[0].mxu0 %v1013
    %v2902 = vpop.f32.mrb[0].mxu0
    %v2903 = vadd.f32 %v2829, %v2902
    %v2904 = vpop.f32.mrb[0].mxu0
    %2905 = vdwg.mxu0
    %v2907 = vsel %vm1262, %v2722, 0
    %v2910 = vsel %vm1262, %v2727, 0
    %v2913 = vsel %vm1262, %v2810, 0
    %v2916 = vsel %vm1262, %v2815, 0
    %2918 = vmatprep.subr.mxu0 0.0
    %2919 = vmatpush1.xpose.msra.mxu0 %v2913
    %2920 = vmatprep.subr.mxu0 0.0
    %2921 = vmatpush1.xpose.msra.mxu0 %v2916
    %2922 = vmatprep.subr.mxu0 0.0
    %2923 = vmatpush1.xpose.msra.mxu0 0.0
    %2924 = vmatprep.subr.mxu0 0.0
    %2925 = vmatpush1.xpose.msra.mxu0 0.0
    %2926 = vmatprep.subr.mxu0 0.0
    %2927 = vmatpush1.xpose.msra.mxu0 0.0
    %2928 = vmatprep.subr.mxu0 0.0
    %2929 = vmatpush1.xpose.msra.mxu0 0.0
    %2930 = vmatprep.subr.mxu0 0.0
    %2931 = vmatpush1.xpose.msra.mxu0 0.0
    %2932 = vmatprep.subr.mxu0 0.0
    %2933 = vmatpush1.xpose.msra.mxu0 0.0
    %2934 = vmatprep.subr.mxu0 0.0
    %2935 = vmatpush1.xpose.msra.mxu0 0.0
    %2936 = vmatprep.subr.mxu0 0.0
    %2937 = vmatpush1.xpose.msra.mxu0 0.0
    %2938 = vmatprep.subr.mxu0 0.0
    %2939 = vmatpush1.xpose.msra.mxu0 0.0
    %2940 = vmatprep.subr.mxu0 0.0
    %2941 = vmatpush1.xpose.msra.mxu0 0.0
    %2942 = vmatprep.subr.mxu0 0.0
    %2943 = vmatpush1.xpose.msra.mxu0 0.0
    %2944 = vmatprep.subr.mxu0 0.0
    %2945 = vmatpush1.xpose.msra.mxu0 0.0
    %2946 = vmatprep.subr.mxu0 0.0
    %2947 = vmatpush1.xpose.msra.mxu0 0.0
    %2948 = vmatprep.subr.mxu0 0.0
    %2949 = vmatpush1.xpose.msra.mxu0 0.0
    %2950 = vmatprep.subr.mxu0 0.0
    %2951 = vmatpush1.xpose.msra.mxu0 0.0
    %2952 = vmatprep.subr.mxu0 0.0
    %2953 = vmatpush1.xpose.msra.mxu0 0.0
    %2954 = vmatprep.subr.mxu0 0.0
    %2955 = vmatpush1.xpose.msra.mxu0 0.0
    %2956 = vmatprep.subr.mxu0 0.0
    %2957 = vmatpush1.xpose.msra.mxu0 0.0
    %2958 = vmatprep.subr.mxu0 0.0
    %2959 = vmatpush1.xpose.msra.mxu0 0.0
    %2960 = vmatprep.subr.mxu0 0.0
    %2961 = vmatpush1.xpose.msra.mxu0 0.0
    %2962 = vmatprep.subr.mxu0 0.0
    %2963 = vmatpush1.xpose.msra.mxu0 0.0
    %2964 = vmatprep.subr.mxu0 0.0
    %2965 = vmatpush1.xpose.msra.mxu0 0.0
    %2966 = vmatprep.subr.mxu0 0.0
    %2967 = vmatpush1.xpose.msra.mxu0 0.0
    %2968 = vmatprep.subr.mxu0 0.0
    %2969 = vmatpush1.xpose.msra.mxu0 0.0
    %2970 = vmatprep.subr.mxu0 0.0
    %2971 = vmatpush1.xpose.msra.mxu0 0.0
    %2972 = vmatprep.subr.mxu0 0.0
    %2973 = vmatpush1.xpose.msra.mxu0 0.0
    %2974 = vmatprep.subr.mxu0 0.0
    %2975 = vmatpush1.xpose.msra.mxu0 0.0
    %2976 = vmatprep.subr.mxu0 0.0
    %2977 = vmatpush1.xpose.msra.mxu0 0.0
    %2978 = vmatprep.subr.mxu0 0.0
    %2979 = vmatpush1.xpose.msra.mxu0 0.0
    %2980 = vmatprep.subr.mxu0 0.0
    %2981 = vmatpush1.xpose.msra.mxu0 0.0
    %2982 = vmatprep.mubr.f32.mxu0 0.0
    %2983 = vmatmul.mubr.f32.gmra.mrb[0].mxu0 %v2907
    %v2984 = vpop.f32.mrb[0].mxu0
    %v2985 = vadd.f32 0.0, %v2984
    %v2986 = vpop.f32.mrb[0].mxu0
    %2987 = vmatprep.mubr.f32.mxu0 0.0
    %2988 = vmatmul.mubr.f32.gmra.mrb[0].mxu0 %v2910
    %v2989 = vpop.f32.mrb[0].mxu0
    %v2990 = vadd.f32 0.0, %v2989
    %v2991 = vpop.f32.mrb[0].mxu0
    %2992 = vdwg.mxu0
    %v2993 = vmul.f32 %v2985, 0.35355338
    %v2994 = vmul.f32 %v2990, 0.35355338
    %v2995 = vadd.f32 %v2993, %v78
    %v2996 = vadd.f32 %v2994, %v79
    %v2997 = vsel %vm1354, %v2995, -inf
    %2998 = vmax.xlane.f32.xlu0 %v2997
    %v2999 = vpop.xlane.xlu0 %2998
    %v3000 = vsel %vm1354, %v2996, -inf
    %3001 = vmax.xlane.f32.xlu0 %v3000
    %v3002 = vpop.xlane.xlu0 %3001
    %v3003 = vsub.f32 %v2995, %v2999
    %v3004 = vsub.f32 %v2996, %v3002
    %v3005 = vmul.f32 %v3003, 1.442695
    %v3006 = vpow.pop %v3005
    %v3007 = vmul.f32 %v3004, 1.442695
    %v3008 = vpow.pop %v3007
    %v3009 = vsel %vm1354, %v3006, 0.0
    %3010 = vadd.xlane.f32.xlu0 %v3009
    %v3011 = vpop.xlane.xlu0 %3010
    %v3012 = vsel %vm1354, %v3008, 0.0
    %3013 = vadd.xlane.f32.xlu0 %v3012
    %v3014 = vpop.xlane.xlu0 %3013
    %v3015 = vrcp.pop %v3011
    %v3016 = vrcp.pop %v3014
    %v3017 = vmul.f32 %v3011, %v3015
    %v3018 = vmul.f32 %v3014, %v3016
    %v3019 = vsub.f32 2.0, %v3017
    %v3020 = vsub.f32 2.0, %v3018
    %v3021 = vmul.f32 %v3015, %v3019
    %v3022 = vmul.f32 %v3016, %v3020
    %v3023 = vmul.f32 %v3006, %v3021
    %v3024 = vmul.f32 %v3008, %v3022
    %v3026 = vsel %vm1354, %v3023, 0
    %v3029 = vsel %vm1354, %v3024, 0
    %3031 = vmatprep.subr.mxu0 0.0
    %3032 = vmatpush1.msra.mxu0 %v2898
    %3033 = vmatprep.subr.mxu0 0.0
    %3034 = vmatpush1.msra.mxu0 %v2903
    %3035 = vmatprep.subr.mxu0 0.0
    %3036 = vmatpush1.msra.mxu0 0.0
    %3037 = vmatprep.subr.mxu0 0.0
    %3038 = vmatpush1.msra.mxu0 0.0
    %3039 = vmatprep.subr.mxu0 0.0
    %3040 = vmatpush1.msra.mxu0 0.0
    %3041 = vmatprep.subr.mxu0 0.0
    %3042 = vmatpush1.msra.mxu0 0.0
    %3043 = vmatprep.subr.mxu0 0.0
    %3044 = vmatpush1.msra.mxu0 0.0
    %3045 = vmatprep.subr.mxu0 0.0
    %3046 = vmatpush1.msra.mxu0 0.0
    %3047 = vmatprep.subr.mxu0 0.0
    %3048 = vmatpush1.msra.mxu0 0.0
    %3049 = vmatprep.subr.mxu0 0.0
    %3050 = vmatpush1.msra.mxu0 0.0
    %3051 = vmatprep.subr.mxu0 0.0
    %3052 = vmatpush1.msra.mxu0 0.0
    %3053 = vmatprep.subr.mxu0 0.0
    %3054 = vmatpush1.msra.mxu0 0.0
    %3055 = vmatprep.subr.mxu0 0.0
    %3056 = vmatpush1.msra.mxu0 0.0
    %3057 = vmatprep.subr.mxu0 0.0
    %3058 = vmatpush1.msra.mxu0 0.0
    %3059 = vmatprep.subr.mxu0 0.0
    %3060 = vmatpush1.msra.mxu0 0.0
    %3061 = vmatprep.subr.mxu0 0.0
    %3062 = vmatpush1.msra.mxu0 0.0
    %3063 = vmatprep.subr.mxu0 0.0
    %3064 = vmatpush1.msra.mxu0 0.0
    %3065 = vmatprep.subr.mxu0 0.0
    %3066 = vmatpush1.msra.mxu0 0.0
    %3067 = vmatprep.subr.mxu0 0.0
    %3068 = vmatpush1.msra.mxu0 0.0
    %3069 = vmatprep.subr.mxu0 0.0
    %3070 = vmatpush1.msra.mxu0 0.0
    %3071 = vmatprep.subr.mxu0 0.0
    %3072 = vmatpush1.msra.mxu0 0.0
    %3073 = vmatprep.subr.mxu0 0.0
    %3074 = vmatpush1.msra.mxu0 0.0
    %3075 = vmatprep.subr.mxu0 0.0
    %3076 = vmatpush1.msra.mxu0 0.0
    %3077 = vmatprep.subr.mxu0 0.0
    %3078 = vmatpush1.msra.mxu0 0.0
    %3079 = vmatprep.subr.mxu0 0.0
    %3080 = vmatpush1.msra.mxu0 0.0
    %3081 = vmatprep.subr.mxu0 0.0
    %3082 = vmatpush1.msra.mxu0 0.0
    %3083 = vmatprep.subr.mxu0 0.0
    %3084 = vmatpush1.msra.mxu0 0.0
    %3085 = vmatprep.subr.mxu0 0.0
    %3086 = vmatpush1.msra.mxu0 0.0
    %3087 = vmatprep.subr.mxu0 0.0
    %3088 = vmatpush1.msra.mxu0 0.0
    %3089 = vmatprep.subr.mxu0 0.0
    %3090 = vmatpush1.msra.mxu0 0.0
    %3091 = vmatprep.subr.mxu0 0.0
    %3092 = vmatpush1.msra.mxu0 0.0
    %3093 = vmatprep.subr.mxu0 0.0
    %3094 = vmatpush1.msra.mxu0 0.0
    %3095 = vmatprep.mubr.f32.mxu0 0.0
    %3096 = vmatmul.mubr.f32.gmra.mrb[0].mxu0 %v3026
    %v3097 = vpop.f32.mrb[0].mxu0
    %v3098 = vadd.f32 0.0, %v3097
    %v3099 = vpop.f32.mrb[0].mxu0
    %3100 = vmatprep.mubr.f32.mxu0 0.0
    %3101 = vmatmul.mubr.f32.gmra.mrb[0].mxu0 %v3029
    %v3102 = vpop.f32.mrb[0].mxu0
    %v3103 = vadd.f32 0.0, %v3102
    %v3104 = vpop.f32.mrb[0].mxu0
    %3105 = vdwg.mxu0
    %s3106 = scalar_lea.vmem %s17, 24
    %v3107 = vld [vmem:[%s3106] sm:$0xff]
    %v3109 = vsel %vm1262, %v3098, 0
    %v3112 = vsel %vm1262, %v3103, 0
    %3114 = vmatprep.subr.mxu0 0.0
    %3115 = vmatpush1.msra.mxu0 %v3107
    %3116 = vmatprep.subr.mxu0 0.0
    %3117 = vmatpush1.msra.mxu0 0.0
    %3118 = vmatprep.subr.mxu0 0.0
    %3119 = vmatpush1.msra.mxu0 0.0
    %3120 = vmatprep.subr.mxu0 0.0
    %3121 = vmatpush1.msra.mxu0 0.0
    %3122 = vmatprep.subr.mxu0 0.0
    %3123 = vmatpush1.msra.mxu0 0.0
    %3124 = vmatprep.subr.mxu0 0.0
    %3125 = vmatpush1.msra.mxu0 0.0
    %3126 = vmatprep.subr.mxu0 0.0
    %3127 = vmatpush1.msra.mxu0 0.0
    %3128 = vmatprep.subr.mxu0 0.0
    %3129 = vmatpush1.msra.mxu0 0.0
    %3130 = vmatprep.subr.mxu0 0.0
    %3131 = vmatpush1.msra.mxu0 0.0
    %3132 = vmatprep.subr.mxu0 0.0
    %3133 = vmatpush1.msra.mxu0 0.0
    %3134 = vmatprep.subr.mxu0 0.0
    %3135 = vmatpush1.msra.mxu0 0.0
    %3136 = vmatprep.subr.mxu0 0.0
    %3137 = vmatpush1.msra.mxu0 0.0
    %3138 = vmatprep.subr.mxu0 0.0
    %3139 = vmatpush1.msra.mxu0 0.0
    %3140 = vmatprep.subr.mxu0 0.0
    %3141 = vmatpush1.msra.mxu0 0.0
    %3142 = vmatprep.subr.mxu0 0.0
    %3143 = vmatpush1.msra.mxu0 0.0
    %3144 = vmatprep.subr.mxu0 0.0
    %3145 = vmatpush1.msra.mxu0 0.0
    %3146 = vmatprep.subr.mxu0 0.0
    %3147 = vmatpush1.msra.mxu0 0.0
    %3148 = vmatprep.subr.mxu0 0.0
    %3149 = vmatpush1.msra.mxu0 0.0
    %3150 = vmatprep.subr.mxu0 0.0
    %3151 = vmatpush1.msra.mxu0 0.0
    %3152 = vmatprep.subr.mxu0 0.0
    %3153 = vmatpush1.msra.mxu0 0.0
    %3154 = vmatprep.subr.mxu0 0.0
    %3155 = vmatpush1.msra.mxu0 0.0
    %3156 = vmatprep.subr.mxu0 0.0
    %3157 = vmatpush1.msra.mxu0 0.0
    %3158 = vmatprep.subr.mxu0 0.0
    %3159 = vmatpush1.msra.mxu0 0.0
    %3160 = vmatprep.subr.mxu0 0.0
    %3161 = vmatpush1.msra.mxu0 0.0
    %3162 = vmatprep.subr.mxu0 0.0
    %3163 = vmatpush1.msra.mxu0 0.0
    %3164 = vmatprep.subr.mxu0 0.0
    %3165 = vmatpush1.msra.mxu0 0.0
    %3166 = vmatprep.subr.mxu0 0.0
    %3167 = vmatpush1.msra.mxu0 0.0
    %3168 = vmatprep.subr.mxu0 0.0
    %3169 = vmatpush1.msra.mxu0 0.0
    %3170 = vmatprep.subr.mxu0 0.0
    %3171 = vmatpush1.msra.mxu0 0.0
    %3172 = vmatprep.subr.mxu0 0.0
    %3173 = vmatpush1.msra.mxu0 0.0
    %3174 = vmatprep.subr.mxu0 0.0
    %3175 = vmatpush1.msra.mxu0 0.0
    %3176 = vmatprep.subr.mxu0 0.0
    %3177 = vmatpush1.msra.mxu0 0.0
    %3178 = vmatprep.mubr.f32.mxu0 0.0
    %3179 = vmatmul.mubr.f32.gmra.mrb[0].mxu0 %v3109
    %v3180 = vpop.f32.mrb[0].mxu0
    %v3181 = vadd.f32 0.0, %v3180
    %v3182 = vpop.f32.mrb[0].mxu0
    %3183 = vmatprep.mubr.f32.mxu0 0.0
    %3184 = vmatmul.mubr.f32.gmra.mrb[0].mxu0 %v3112
    %v3185 = vpop.f32.mrb[0].mxu0
    %v3186 = vadd.f32 0.0, %v3185
    %v3187 = vpop.f32.mrb[0].mxu0
    %3188 = vdwg.mxu0
    %v3189 = vadd.f32 %v2640, %v3181
    %v3190 = vadd.f32 %v2641, %v3186
    %v3191 = vld [vmem:[%s18] sm:$0x1]
    %v3193 = vlaneseq
    %v3194 = vshrl.u32 %v3193, 7
    %v3195 = vsub.s32 0, %v3194
    %v3196 = vrot.slane %v3191, %v3195
    %v3198 = vadd.f32 %v3189, %v3196
    %v3199 = vadd.f32 %v3190, %v3196
    %v3200 = vmul.f32 %v3198, %v463
    %v3201 = vmul.f32 %v3199, %v467
    %v3202 = vadd.f32 %v75, %v3200
    %v3203 = vadd.f32 %v76, %v3201
    %v3204 = vld [vmem:[%s9] sm:$0x1]
    %v3205 = vld [vmem:[%s10] sm:$0x1]
    %v3206 = vsel %vm100, %v3202, 0.0
    %3207 = vadd.xlane.f32.xlu0 %v3206
    %v3208 = vpop.xlane.xlu0 %3207
    %v3209 = vsel %vm100, %v3203, 0.0
    %3210 = vadd.xlane.f32.xlu0 %v3209
    %v3211 = vpop.xlane.xlu0 %3210
    %v3212 = vmul.f32 %v3208, %v957
    %v3213 = vmul.f32 %v3211, %v957
    %v3214 = vsub.f32 %v3202, %v3212
    %v3215 = vsub.f32 %v3203, %v3213
    %v3216 = vmul.f32 %v3214, %v3214
    %v3217 = vmul.f32 %v3215, %v3215
    %v3218 = vsel %vm100, %v3216, 0.0
    %3219 = vadd.xlane.f32.xlu0 %v3218
    %v3220 = vpop.xlane.xlu0 %3219
    %v3221 = vsel %vm100, %v3217, 0.0
    %3222 = vadd.xlane.f32.xlu0 %v3221
    %v3223 = vpop.xlane.xlu0 %3222
    %v3224 = vmul.f32 %v3220, %v957
    %v3225 = vmul.f32 %v3223, %v957
    %v3226 = vadd.f32 %v3224, 1e-05
    %v3227 = vadd.f32 %v3225, 1e-05
    %v3228 = vrsqrt.pop %v3226
    %v3229 = vrsqrt.pop %v3227
    %v3230 = vmul.f32 %v3214, %v3228
    %v3231 = vmul.f32 %v3215, %v3229
    %v3233 = vlaneseq
    %v3234 = vshrl.u32 %v3233, 7
    %v3235 = vsub.s32 0, %v3234
    %v3236 = vrot.slane %v3204, %v3235
    %v3238 = vmul.f32 %v3230, %v3236
    %v3239 = vmul.f32 %v3231, %v3236
    %v3241 = vlaneseq
    %v3242 = vshrl.u32 %v3241, 7
    %v3243 = vsub.s32 0, %v3242
    %v3244 = vrot.slane %v3205, %v3243
    %v3246 = vadd.f32 %v3238, %v3244
    %v3247 = vadd.f32 %v3239, %v3244
    %v3248 = vmul.f32 %v3246, %v703
    %v3249 = vmul.f32 %v3247, %v707
    %v3250 = vadd.f32 %v3248, %v942
    %v3251 = vadd.f32 %v3249, %v946
    %v3252 = vld [vmem:[%s19] sm:$0xff]
    %v3253 = vld [vmem:[%s19 + $0x8] sm:$0xff]
    %v3254 = vld [vmem:[%s19 + $0x10] sm:$0xff]
    %v3255 = vld [vmem:[%s19 + $0x18] sm:$0xff]
    %v3256 = vld [vmem:[%s20] sm:$0x1]
    %v3258 = vlaneseq
    %v3259 = vshrl.u32 %v3258, 7
    %v3260 = vsub.s32 0, %v3259
    %v3261 = vrot.slane %v3256, %v3260
    %v3264 = vsel %vm100, %v3250, 0
    %v3267 = vsel %vm100, %v3251, 0
    %3269 = vmatprep.subr.mxu0 0.0
    %3270 = vmatpush1.msra.mxu0 %v3252
    %3271 = vmatprep.subr.mxu0 0.0
    %3272 = vmatpush1.msra.mxu0 %v3253
    %3273 = vmatprep.subr.mxu0 0.0
    %3274 = vmatpush1.msra.mxu0 %v3254
    %3275 = vmatprep.subr.mxu0 0.0
    %3276 = vmatpush1.msra.mxu0 %v3255
    %3277 = vmatprep.subr.mxu0 0.0
    %3278 = vmatpush1.msra.mxu0 0.0
    %3279 = vmatprep.subr.mxu0 0.0
    %3280 = vmatpush1.msra.mxu0 0.0
    %3281 = vmatprep.subr.mxu0 0.0
    %3282 = vmatpush1.msra.mxu0 0.0
    %3283 = vmatprep.subr.mxu0 0.0
    %3284 = vmatpush1.msra.mxu0 0.0
    %3285 = vmatprep.subr.mxu0 0.0
    %3286 = vmatpush1.msra.mxu0 0.0
    %3287 = vmatprep.subr.mxu0 0.0
    %3288 = vmatpush1.msra.mxu0 0.0
    %3289 = vmatprep.subr.mxu0 0.0
    %3290 = vmatpush1.msra.mxu0 0.0
    %3291 = vmatprep.subr.mxu0 0.0
    %3292 = vmatpush1.msra.mxu0 0.0
    %3293 = vmatprep.subr.mxu0 0.0
    %3294 = vmatpush1.msra.mxu0 0.0
    %3295 = vmatprep.subr.mxu0 0.0
    %3296 = vmatpush1.msra.mxu0 0.0
    %3297 = vmatprep.subr.mxu0 0.0
    %3298 = vmatpush1.msra.mxu0 0.0
    %3299 = vmatprep.subr.mxu0 0.0
    %3300 = vmatpush1.msra.mxu0 0.0
    %3301 = vmatprep.subr.mxu0 0.0
    %3302 = vmatpush1.msra.mxu0 0.0
    %3303 = vmatprep.subr.mxu0 0.0
    %3304 = vmatpush1.msra.mxu0 0.0
    %3305 = vmatprep.subr.mxu0 0.0
    %3306 = vmatpush1.msra.mxu0 0.0
    %3307 = vmatprep.subr.mxu0 0.0
    %3308 = vmatpush1.msra.mxu0 0.0
    %3309 = vmatprep.subr.mxu0 0.0
    %3310 = vmatpush1.msra.mxu0 0.0
    %3311 = vmatprep.subr.mxu0 0.0
    %3312 = vmatpush1.msra.mxu0 0.0
    %3313 = vmatprep.subr.mxu0 0.0
    %3314 = vmatpush1.msra.mxu0 0.0
    %3315 = vmatprep.subr.mxu0 0.0
    %3316 = vmatpush1.msra.mxu0 0.0
    %3317 = vmatprep.subr.mxu0 0.0
    %3318 = vmatpush1.msra.mxu0 0.0
    %3319 = vmatprep.subr.mxu0 0.0
    %3320 = vmatpush1.msra.mxu0 0.0
    %3321 = vmatprep.subr.mxu0 0.0
    %3322 = vmatpush1.msra.mxu0 0.0
    %3323 = vmatprep.subr.mxu0 0.0
    %3324 = vmatpush1.msra.mxu0 0.0
    %3325 = vmatprep.subr.mxu0 0.0
    %3326 = vmatpush1.msra.mxu0 0.0
    %3327 = vmatprep.subr.mxu0 0.0
    %3328 = vmatpush1.msra.mxu0 0.0
    %3329 = vmatprep.subr.mxu0 0.0
    %3330 = vmatpush1.msra.mxu0 0.0
    %3331 = vmatprep.subr.mxu0 0.0
    %3332 = vmatpush1.msra.mxu0 0.0
    %3333 = vmatprep.mubr.f32.mxu0 0.0
    %3334 = vmatmul.mubr.f32.gmra.mrb[0].mxu0 %v3264
    %v3335 = vpop.f32.mrb[0].mxu0
    %v3336 = vadd.f32 %v3261, %v3335
    %v3337 = vpop.f32.mrb[0].mxu0
    %3338 = vmatprep.mubr.f32.mxu0 0.0
    %3339 = vmatmul.mubr.f32.gmra.mrb[0].mxu0 %v3267
    %v3340 = vpop.f32.mrb[0].mxu0
    %v3341 = vadd.f32 %v3261, %v3340
    %v3342 = vpop.f32.mrb[0].mxu0
    %3343 = vdwg.mxu0
    %v3344 = vmul.f32 %v3336, 0.5
    %v3345 = vmul.f32 %v3341, 0.5
    %v3346 = vmul.f32 %v3336, 0.70710677
    %v3347 = vmul.f32 %v3341, 0.70710677
    %vm3348 = vcmp.lt.f32.partialorder %v3346, 0.0
    %vm3349 = vcmp.lt.f32.partialorder %v3347, 0.0
    %v3350 = vsel %vm3348, -1.0, 1.0
    %v3351 = vsel %vm3349, -1.0, 1.0
    %v3352 = vmul.f32 %v3346, %v3350
    %v3353 = vmul.f32 %v3347, %v3351
    %v3354 = vmul.f32 %v3352, 0.3275911
    %v3355 = vmul.f32 %v3353, 0.3275911
    %v3356 = vadd.f32 %v3354, 1.0
    %v3357 = vadd.f32 %v3355, 1.0
    %v3358 = vrcp.pop %v3356
    %v3359 = vrcp.pop %v3357
    %v3360 = vmul.f32 %v3356, %v3358
    %v3361 = vmul.f32 %v3357, %v3359
    %v3362 = vsub.f32 2.0, %v3360
    %v3363 = vsub.f32 2.0, %v3361
    %v3364 = vmul.f32 %v3358, %v3362
    %v3365 = vmul.f32 %v3359, %v3363
    %v3366 = vmul.f32 %v3364, 1.0614054
    %v3367 = vmul.f32 %v3365, 1.0614054
    %v3368 = vadd.f32 %v3366, -1.4531521
    %v3369 = vadd.f32 %v3367, -1.4531521
    %v3370 = vmul.f32 %v3368, %v3364
    %v3371 = vmul.f32 %v3369, %v3365
    %v3372 = vadd.f32 %v3370, 1.4214138
    %v3373 = vadd.f32 %v3371, 1.4214138
    %v3374 = vmul.f32 %v3372, %v3364
    %v3375 = vmul.f32 %v3373, %v3365
    %v3376 = vadd.f32 %v3374, -0.28449672
    %v3377 = vadd.f32 %v3375, -0.28449672
    %v3378 = vmul.f32 %v3376, %v3364
    %v3379 = vmul.f32 %v3377, %v3365
    %v3380 = vadd.f32 %v3378, 0.2548296
    %v3381 = vadd.f32 %v3379, 0.2548296
    %v3382 = vmul.f32 %v3380, %v3364
    %v3383 = vmul.f32 %v3381, %v3365
    %v3384 = vsub.f32 0.0, %v3352
    %v3385 = vsub.f32 0.0, %v3353
    %v3386 = vmul.f32 %v3384, %v3352
    %v3387 = vmul.f32 %v3385, %v3353
    %v3388 = vmul.f32 %v3386, 1.442695
    %v3389 = vpow.pop %v3388
    %v3390 = vmul.f32 %v3387, 1.442695
    %v3391 = vpow.pop %v3390
    %v3392 = vmul.f32 %v3382, %v3389
    %v3393 = vmul.f32 %v3383, %v3391
    %v3394 = vsub.f32 1.0, %v3392
    %v3395 = vsub.f32 1.0, %v3393
    %v3396 = vmul.f32 %v3350, %v3394
    %v3397 = vmul.f32 %v3351, %v3395
    %v3398 = vadd.f32 %v3396, 1.0
    %v3399 = vadd.f32 %v3397, 1.0
    %v3400 = vmul.f32 %v3344, %v3398
    %v3401 = vmul.f32 %v3345, %v3399
    %v3402 = vld [vmem:[%s21] sm:$0xff]
    %v3403 = vld [vmem:[%s21 + $0x8] sm:$0xff]
    %v3404 = vld [vmem:[%s21 + $0x10] sm:$0xff]
    %v3405 = vld [vmem:[%s21 + $0x18] sm:$0xff]
    %v3406 = vld [vmem:[%s21 + $0x20] sm:$0xff]
    %v3407 = vld [vmem:[%s21 + $0x28] sm:$0xff]
    %v3408 = vld [vmem:[%s21 + $0x30] sm:$0xff]
    %v3409 = vld [vmem:[%s21 + $0x38] sm:$0xff]
    %v3410 = vld [vmem:[%s22] sm:$0x1]
    %v3412 = vlaneseq
    %v3413 = vshrl.u32 %v3412, 7
    %v3414 = vsub.s32 0, %v3413
    %v3415 = vrot.slane %v3410, %v3414
    %vm3417 = vcmask 523264
    %v3419 = vsel %vm3417, %v3400, 0
    %v3422 = vsel %vm3417, %v3401, 0
    %3424 = vmatprep.subr.mxu0 0.0
    %3425 = vmatpush1.msra.mxu0 %v3402
    %3426 = vmatprep.subr.mxu0 0.0
    %3427 = vmatpush1.msra.mxu0 %v3403
    %3428 = vmatprep.subr.mxu0 0.0
    %3429 = vmatpush1.msra.mxu0 %v3404
    %3430 = vmatprep.subr.mxu0 0.0
    %3431 = vmatpush1.msra.mxu0 %v3405
    %3432 = vmatprep.subr.mxu0 0.0
    %3433 = vmatpush1.msra.mxu0 %v3406
    %3434 = vmatprep.subr.mxu0 0.0
    %3435 = vmatpush1.msra.mxu0 %v3407
    %3436 = vmatprep.subr.mxu0 0.0
    %3437 = vmatpush1.msra.mxu0 %v3408
    %3438 = vmatprep.subr.mxu0 0.0
    %3439 = vmatpush1.msra.mxu0 %v3409
    %3440 = vmatprep.subr.mxu0 0.0
    %3441 = vmatpush1.msra.mxu0 0.0
    %3442 = vmatprep.subr.mxu0 0.0
    %3443 = vmatpush1.msra.mxu0 0.0
    %3444 = vmatprep.subr.mxu0 0.0
    %3445 = vmatpush1.msra.mxu0 0.0
    %3446 = vmatprep.subr.mxu0 0.0
    %3447 = vmatpush1.msra.mxu0 0.0
    %3448 = vmatprep.subr.mxu0 0.0
    %3449 = vmatpush1.msra.mxu0 0.0
    %3450 = vmatprep.subr.mxu0 0.0
    %3451 = vmatpush1.msra.mxu0 0.0
    %3452 = vmatprep.subr.mxu0 0.0
    %3453 = vmatpush1.msra.mxu0 0.0
    %3454 = vmatprep.subr.mxu0 0.0
    %3455 = vmatpush1.msra.mxu0 0.0
    %3456 = vmatprep.subr.mxu0 0.0
    %3457 = vmatpush1.msra.mxu0 0.0
    %3458 = vmatprep.subr.mxu0 0.0
    %3459 = vmatpush1.msra.mxu0 0.0
    %3460 = vmatprep.subr.mxu0 0.0
    %3461 = vmatpush1.msra.mxu0 0.0
    %3462 = vmatprep.subr.mxu0 0.0
    %3463 = vmatpush1.msra.mxu0 0.0
    %3464 = vmatprep.subr.mxu0 0.0
    %3465 = vmatpush1.msra.mxu0 0.0
    %3466 = vmatprep.subr.mxu0 0.0
    %3467 = vmatpush1.msra.mxu0 0.0
    %3468 = vmatprep.subr.mxu0 0.0
    %3469 = vmatpush1.msra.mxu0 0.0
    %3470 = vmatprep.subr.mxu0 0.0
    %3471 = vmatpush1.msra.mxu0 0.0
    %3472 = vmatprep.subr.mxu0 0.0
    %3473 = vmatpush1.msra.mxu0 0.0
    %3474 = vmatprep.subr.mxu0 0.0
    %3475 = vmatpush1.msra.mxu0 0.0
    %3476 = vmatprep.subr.mxu0 0.0
    %3477 = vmatpush1.msra.mxu0 0.0
    %3478 = vmatprep.subr.mxu0 0.0
    %3479 = vmatpush1.msra.mxu0 0.0
    %3480 = vmatprep.subr.mxu0 0.0
    %3481 = vmatpush1.msra.mxu0 0.0
    %3482 = vmatprep.subr.mxu0 0.0
    %3483 = vmatpush1.msra.mxu0 0.0
    %3484 = vmatprep.subr.mxu0 0.0
    %3485 = vmatpush1.msra.mxu0 0.0
    %3486 = vmatprep.subr.mxu0 0.0
    %3487 = vmatpush1.msra.mxu0 0.0
    %3488 = vmatprep.mubr.f32.mxu0 0.0
    %3489 = vmatmul.mubr.f32.gmra.mrb[0].mxu0 %v3419
    %v3490 = vpop.f32.mrb[0].mxu0
    %v3491 = vadd.f32 %v3415, %v3490
    %v3492 = vpop.f32.mrb[0].mxu0
    %3493 = vmatprep.mubr.f32.mxu0 0.0
    %3494 = vmatmul.mubr.f32.gmra.mrb[0].mxu0 %v3422
    %v3495 = vpop.f32.mrb[0].mxu0
    %v3496 = vadd.f32 %v3415, %v3495
    %v3497 = vpop.f32.mrb[0].mxu0
    %3498 = vdwg.mxu0
    %v3499 = vmul.f32 %v3491, %v822
    %v3500 = vmul.f32 %v3496, %v826
    %v3501 = vadd.f32 %v3202, %v3499
    %v3502 = vadd.f32 %v3203, %v3500
    %s3503 = scalar_lea.vmem %s3, 64
    %v3504 = vld [vmem:[%s3503] sm:$0xff]
    %v3505 = vld [vmem:[%s3503 + $0x8] sm:$0xff]
    %v3506 = vld [vmem:[%s3503 + $0x10] sm:$0xff]
    %v3507 = vld [vmem:[%s3503 + $0x18] sm:$0xff]
    %v3508 = vld [vmem:[%s3503 + $0x20] sm:$0xff]
    %v3509 = vld [vmem:[%s3503 + $0x28] sm:$0xff]
    %v3510 = vld [vmem:[%s3503 + $0x30] sm:$0xff]
    %v3511 = vld [vmem:[%s3503 + $0x38] sm:$0xff]
    %s3512 = scalar_lea.vmem %s4, 2
    %v3513 = vld [vmem:[%s3512] sm:$0x3]
    %v3515 = vlaneseq
    %v3516 = vshrl.u32 %v3515, 7
    %v3517 = vsub.s32 0, %v3516
    %v3518 = vrot.slane %v3513, %v3517
    %v3519 = vlaneseq
    %v3520 = vshrl.u32 %v3519, 7
    %v3521 = vsub.s32 1, %v3520
    %v3522 = vrot.slane %v3513, %v3521
    %3525 = vmatprep.subr.mxu0 %v3505
    %3526 = vmatpush1.msra.mxu0 %v3504
    %3527 = vmatprep.subr.mxu0 %v3507
    %3528 = vmatpush1.msra.mxu0 %v3506
    %3529 = vmatprep.subr.mxu0 %v3509
    %3530 = vmatpush1.msra.mxu0 %v3508
    %3531 = vmatprep.subr.mxu0 %v3511
    %3532 = vmatpush1.msra.mxu0 %v3510
    %3533 = vmatprep.subr.mxu0 0.0
    %3534 = vmatpush1.msra.mxu0 0.0
    %3535 = vmatprep.subr.mxu0 0.0
    %3536 = vmatpush1.msra.mxu0 0.0
    %3537 = vmatprep.subr.mxu0 0.0
    %3538 = vmatpush1.msra.mxu0 0.0
    %3539 = vmatprep.subr.mxu0 0.0
    %3540 = vmatpush1.msra.mxu0 0.0
    %3541 = vmatprep.subr.mxu0 0.0
    %3542 = vmatpush1.msra.mxu0 0.0
    %3543 = vmatprep.subr.mxu0 0.0
    %3544 = vmatpush1.msra.mxu0 0.0
    %3545 = vmatprep.subr.mxu0 0.0
    %3546 = vmatpush1.msra.mxu0 0.0
    %3547 = vmatprep.subr.mxu0 0.0
    %3548 = vmatpush1.msra.mxu0 0.0
    %3549 = vmatprep.subr.mxu0 0.0
    %3550 = vmatpush1.msra.mxu0 0.0
    %3551 = vmatprep.subr.mxu0 0.0
    %3552 = vmatpush1.msra.mxu0 0.0
    %3553 = vmatprep.subr.mxu0 0.0
    %3554 = vmatpush1.msra.mxu0 0.0
    %3555 = vmatprep.subr.mxu0 0.0
    %3556 = vmatpush1.msra.mxu0 0.0
    %3557 = vmatprep.subr.mxu0 0.0
    %3558 = vmatpush1.msra.mxu0 0.0
    %3559 = vmatprep.subr.mxu0 0.0
    %3560 = vmatpush1.msra.mxu0 0.0
    %3561 = vmatprep.subr.mxu0 0.0
    %3562 = vmatpush1.msra.mxu0 0.0
    %3563 = vmatprep.subr.mxu0 0.0
    %3564 = vmatpush1.msra.mxu0 0.0
    %3565 = vmatprep.subr.mxu0 0.0
    %3566 = vmatpush1.msra.mxu0 0.0
    %3567 = vmatprep.subr.mxu0 0.0
    %3568 = vmatpush1.msra.mxu0 0.0
    %3569 = vmatprep.subr.mxu0 0.0
    %3570 = vmatpush1.msra.mxu0 0.0
    %3571 = vmatprep.subr.mxu0 0.0
    %3572 = vmatpush1.msra.mxu0 0.0
    %3573 = vmatprep.subr.mxu0 0.0
    %3574 = vmatpush1.msra.mxu0 0.0
    %3575 = vmatprep.subr.mxu0 0.0
    %3576 = vmatpush1.msra.mxu0 0.0
    %3577 = vmatprep.subr.mxu0 0.0
    %3578 = vmatpush1.msra.mxu0 0.0
    %3579 = vmatprep.subr.mxu0 0.0
    %3580 = vmatpush1.msra.mxu0 0.0
    %3581 = vmatprep.subr.mxu0 0.0
    %3582 = vmatpush1.msra.mxu0 0.0
    %3583 = vmatprep.subr.mxu0 0.0
    %3584 = vmatpush1.msra.mxu0 0.0
    %3585 = vmatprep.subr.mxu0 0.0
    %3586 = vmatpush1.msra.mxu0 0.0
    %3587 = vmatprep.subr.mxu0 0.0
    %3588 = vmatpush1.msra.mxu0 0.0
    %3589 = vmatprep.mubr.f32.mxu0 0.0
    %3590 = vmatmul.mubr.f32.gmra.mrb[0].mxu0 %v102
    %v3591 = vpop.f32.mrb[0].mxu0
    %v3592 = vadd.f32 %v3518, %v3591
    %v3593 = vpop.f32.mrb[0].mxu0
    %v3594 = vadd.f32 %v3522, %v3593
    %3595 = vdwg.mxu0
    %v3596 = vmul.f32 %v3592, 0.5
    %v3597 = vmul.f32 %v3594, 0.5
    %v3598 = vmul.f32 %v3592, 0.70710677
    %v3599 = vmul.f32 %v3594, 0.70710677
    %vm3600 = vcmp.lt.f32.partialorder %v3598, 0.0
    %vm3601 = vcmp.lt.f32.partialorder %v3599, 0.0
    %v3602 = vsel %vm3600, -1.0, 1.0
    %v3603 = vsel %vm3601, -1.0, 1.0
    %v3604 = vmul.f32 %v3598, %v3602
    %v3605 = vmul.f32 %v3599, %v3603
    %v3606 = vmul.f32 %v3604, 0.3275911
    %v3607 = vmul.f32 %v3605, 0.3275911
    %v3608 = vadd.f32 %v3606, 1.0
    %v3609 = vadd.f32 %v3607, 1.0
    %v3610 = vrcp.pop %v3608
    %v3611 = vrcp.pop %v3609
    %v3612 = vmul.f32 %v3608, %v3610
    %v3613 = vmul.f32 %v3609, %v3611
    %v3614 = vsub.f32 2.0, %v3612
    %v3615 = vsub.f32 2.0, %v3613
    %v3616 = vmul.f32 %v3610, %v3614
    %v3617 = vmul.f32 %v3611, %v3615
    %v3618 = vmul.f32 %v3616, 1.0614054
    %v3619 = vmul.f32 %v3617, 1.0614054
    %v3620 = vadd.f32 %v3618, -1.4531521
    %v3621 = vadd.f32 %v3619, -1.4531521
    %v3622 = vmul.f32 %v3620, %v3616
    %v3623 = vmul.f32 %v3621, %v3617
    %v3624 = vadd.f32 %v3622, 1.4214138
    %v3625 = vadd.f32 %v3623, 1.4214138
    %v3626 = vmul.f32 %v3624, %v3616
    %v3627 = vmul.f32 %v3625, %v3617
    %v3628 = vadd.f32 %v3626, -0.28449672
    %v3629 = vadd.f32 %v3627, -0.28449672
    %v3630 = vmul.f32 %v3628, %v3616
    %v3631 = vmul.f32 %v3629, %v3617
    %v3632 = vadd.f32 %v3630, 0.2548296
    %v3633 = vadd.f32 %v3631, 0.2548296
    %v3634 = vmul.f32 %v3632, %v3616
    %v3635 = vmul.f32 %v3633, %v3617
    %v3636 = vsub.f32 0.0, %v3604
    %v3637 = vsub.f32 0.0, %v3605
    %v3638 = vmul.f32 %v3636, %v3604
    %v3639 = vmul.f32 %v3637, %v3605
    %v3640 = vmul.f32 %v3638, 1.442695
    %v3641 = vpow.pop %v3640
    %v3642 = vmul.f32 %v3639, 1.442695
    %v3643 = vpow.pop %v3642
    %v3644 = vmul.f32 %v3634, %v3641
    %v3645 = vmul.f32 %v3635, %v3643
    %v3646 = vsub.f32 1.0, %v3644
    %v3647 = vsub.f32 1.0, %v3645
    %v3648 = vmul.f32 %v3602, %v3646
    %v3649 = vmul.f32 %v3603, %v3647
    %v3650 = vadd.f32 %v3648, 1.0
    %v3651 = vadd.f32 %v3649, 1.0
    %v3652 = vmul.f32 %v3596, %v3650
    %v3653 = vmul.f32 %v3597, %v3651
    %s3654 = scalar_lea.vmem %s5, 192
    %v3655 = vld [vmem:[%s3654] sm:$0xff]
    %v3656 = vld [vmem:[%s3654 + $0x8] sm:$0xff]
    %v3657 = vld [vmem:[%s3654 + $0x10] sm:$0xff]
    %v3658 = vld [vmem:[%s3654 + $0x18] sm:$0xff]
    %s3659 = scalar_lea.vmem %s6, 6
    %v3660 = vld [vmem:[%s3659] sm:$0x1]
    %v3662 = vlaneseq
    %v3663 = vshrl.u32 %v3662, 7
    %v3664 = vsub.s32 0, %v3663
    %v3665 = vrot.slane %v3660, %v3664
    %v3668 = vsel %vm100, %v3652, 0
    %3670 = vmatprep.subr.mxu0 0.0
    %3671 = vmatpush1.msra.mxu0 %v3655
    %3672 = vmatprep.subr.mxu0 0.0
    %3673 = vmatpush1.msra.mxu0 %v3656
    %3674 = vmatprep.subr.mxu0 0.0
    %3675 = vmatpush1.msra.mxu0 %v3657
    %3676 = vmatprep.subr.mxu0 0.0
    %3677 = vmatpush1.msra.mxu0 %v3658
    %3678 = vmatprep.subr.mxu0 0.0
    %3679 = vmatpush1.msra.mxu0 0.0
    %3680 = vmatprep.subr.mxu0 0.0
    %3681 = vmatpush1.msra.mxu0 0.0
    %3682 = vmatprep.subr.mxu0 0.0
    %3683 = vmatpush1.msra.mxu0 0.0
    %3684 = vmatprep.subr.mxu0 0.0
    %3685 = vmatpush1.msra.mxu0 0.0
    %3686 = vmatprep.subr.mxu0 0.0
    %3687 = vmatpush1.msra.mxu0 0.0
    %3688 = vmatprep.subr.mxu0 0.0
    %3689 = vmatpush1.msra.mxu0 0.0
    %3690 = vmatprep.subr.mxu0 0.0
    %3691 = vmatpush1.msra.mxu0 0.0
    %3692 = vmatprep.subr.mxu0 0.0
    %3693 = vmatpush1.msra.mxu0 0.0
    %3694 = vmatprep.subr.mxu0 0.0
    %3695 = vmatpush1.msra.mxu0 0.0
    %3696 = vmatprep.subr.mxu0 0.0
    %3697 = vmatpush1.msra.mxu0 0.0
    %3698 = vmatprep.subr.mxu0 0.0
    %3699 = vmatpush1.msra.mxu0 0.0
    %3700 = vmatprep.subr.mxu0 0.0
    %3701 = vmatpush1.msra.mxu0 0.0
    %3702 = vmatprep.subr.mxu0 0.0
    %3703 = vmatpush1.msra.mxu0 0.0
    %3704 = vmatprep.subr.mxu0 0.0
    %3705 = vmatpush1.msra.mxu0 0.0
    %3706 = vmatprep.subr.mxu0 0.0
    %3707 = vmatpush1.msra.mxu0 0.0
    %3708 = vmatprep.subr.mxu0 0.0
    %3709 = vmatpush1.msra.mxu0 0.0
    %3710 = vmatprep.subr.mxu0 0.0
    %3711 = vmatpush1.msra.mxu0 0.0
    %3712 = vmatprep.subr.mxu0 0.0
    %3713 = vmatpush1.msra.mxu0 0.0
    %3714 = vmatprep.subr.mxu0 0.0
    %3715 = vmatpush1.msra.mxu0 0.0
    %3716 = vmatprep.subr.mxu0 0.0
    %3717 = vmatpush1.msra.mxu0 0.0
    %3718 = vmatprep.subr.mxu0 0.0
    %3719 = vmatpush1.msra.mxu0 0.0
    %3720 = vmatprep.subr.mxu0 0.0
    %3721 = vmatpush1.msra.mxu0 0.0
    %3722 = vmatprep.subr.mxu0 0.0
    %3723 = vmatpush1.msra.mxu0 0.0
    %3724 = vmatprep.subr.mxu0 0.0
    %3725 = vmatpush1.msra.mxu0 0.0
    %3726 = vmatprep.subr.mxu0 0.0
    %3727 = vmatpush1.msra.mxu0 0.0
    %3728 = vmatprep.subr.mxu0 0.0
    %3729 = vmatpush1.msra.mxu0 0.0
    %3730 = vmatprep.subr.mxu0 0.0
    %3731 = vmatpush1.msra.mxu0 0.0
    %3732 = vmatprep.subr.mxu0 0.0
    %3733 = vmatpush1.msra.mxu0 0.0
    %3734 = vmatprep.mubr.f32.mxu0 0.0
    %3735 = vmatmul.mubr.f32.gmra.mrb[0].mxu0 %v3668
    %v3736 = vpop.f32.mrb[0].mxu0
    %v3737 = vadd.f32 %v3665, %v3736
    %v3738 = vpop.f32.mrb[0].mxu0
    %3739 = vdwg.mxu0
    %v3742 = vunpack.c.l.s4 1966171168
    %v3743 = vunpack.c.0.s8 %v3742
    %v3744 = vlaneseq
    %v3745 = vshrl.u32 %v3744, 7
    %v3746 = vsub.s32 %v3743, %v3745
    %v3747 = vrot.slane %v3737, %v3746
    %v3748 = vcombine.high %v3747, %v3747
    %v3750 = vunpack.c.l.s4 1966171168
    %v3751 = vunpack.c.0.s8 %v3750
    %v3752 = vlaneseq
    %v3753 = vshrl.u32 %v3752, 7
    %v3754 = vsub.s32 %v3751, %v3753
    %v3755 = vrot.slane %v3747, %v3754
    %v3757 = vunpack.c.l.s4 1966171168
    %v3758 = vunpack.c.0.s8 %v3757
    %v3759 = vlaneseq
    %v3760 = vshrl.u32 %v3759, 7
    %v3761 = vsub.s32 %v3758, %v3760
    %v3762 = vrot.slane %v3748, %v3761
    %v3763 = vlaneseq
    %v3764 = vshrl.u32 %v3763, 7
    %v3765 = vsub.s32 0, %v3764
    %v3766 = vrot.slane %v3755, %v3765
    %v3767 = vlaneseq
    %v3768 = vshrl.u32 %v3767, 7
    %v3769 = vsub.s32 0, %v3768
    %v3770 = vrot.slane %v3762, %v3769
    %s3773 = scalar_lea.vmem %s5, 224
    %v3774 = vld [vmem:[%s3773] sm:$0xff]
    %v3775 = vld [vmem:[%s3773 + $0x8] sm:$0xff]
    %v3776 = vld [vmem:[%s3773 + $0x10] sm:$0xff]
    %v3777 = vld [vmem:[%s3773 + $0x18] sm:$0xff]
    %s3778 = scalar_lea.vmem %s6, 7
    %v3779 = vld [vmem:[%s3778] sm:$0x1]
    %v3781 = vlaneseq
    %v3782 = vshrl.u32 %v3781, 7
    %v3783 = vsub.s32 0, %v3782
    %v3784 = vrot.slane %v3779, %v3783
    %3786 = vrot.lane.b32.xlu0 %v3652, 96
    %v3787 = vpop.permute.xlu0 %3786
    %v3788 = vsel %vm100, %v3787, 0
    %3790 = vmatprep.subr.mxu0 0.0
    %3791 = vmatpush1.msra.mxu0 %v3774
    %3792 = vmatprep.subr.mxu0 0.0
    %3793 = vmatpush1.msra.mxu0 %v3775
    %3794 = vmatprep.subr.mxu0 0.0
    %3795 = vmatpush1.msra.mxu0 %v3776
    %3796 = vmatprep.subr.mxu0 0.0
    %3797 = vmatpush1.msra.mxu0 %v3777
    %3798 = vmatprep.subr.mxu0 0.0
    %3799 = vmatpush1.msra.mxu0 0.0
    %3800 = vmatprep.subr.mxu0 0.0
    %3801 = vmatpush1.msra.mxu0 0.0
    %3802 = vmatprep.subr.mxu0 0.0
    %3803 = vmatpush1.msra.mxu0 0.0
    %3804 = vmatprep.subr.mxu0 0.0
    %3805 = vmatpush1.msra.mxu0 0.0
    %3806 = vmatprep.subr.mxu0 0.0
    %3807 = vmatpush1.msra.mxu0 0.0
    %3808 = vmatprep.subr.mxu0 0.0
    %3809 = vmatpush1.msra.mxu0 0.0
    %3810 = vmatprep.subr.mxu0 0.0
    %3811 = vmatpush1.msra.mxu0 0.0
    %3812 = vmatprep.subr.mxu0 0.0
    %3813 = vmatpush1.msra.mxu0 0.0
    %3814 = vmatprep.subr.mxu0 0.0
    %3815 = vmatpush1.msra.mxu0 0.0
    %3816 = vmatprep.subr.mxu0 0.0
    %3817 = vmatpush1.msra.mxu0 0.0
    %3818 = vmatprep.subr.mxu0 0.0
    %3819 = vmatpush1.msra.mxu0 0.0
    %3820 = vmatprep.subr.mxu0 0.0
    %3821 = vmatpush1.msra.mxu0 0.0
    %3822 = vmatprep.subr.mxu0 0.0
    %3823 = vmatpush1.msra.mxu0 0.0
    %3824 = vmatprep.subr.mxu0 0.0
    %3825 = vmatpush1.msra.mxu0 0.0
    %3826 = vmatprep.subr.mxu0 0.0
    %3827 = vmatpush1.msra.mxu0 0.0
    %3828 = vmatprep.subr.mxu0 0.0
    %3829 = vmatpush1.msra.mxu0 0.0
    %3830 = vmatprep.subr.mxu0 0.0
    %3831 = vmatpush1.msra.mxu0 0.0
    %3832 = vmatprep.subr.mxu0 0.0
    %3833 = vmatpush1.msra.mxu0 0.0
    %3834 = vmatprep.subr.mxu0 0.0
    %3835 = vmatpush1.msra.mxu0 0.0
    %3836 = vmatprep.subr.mxu0 0.0
    %3837 = vmatpush1.msra.mxu0 0.0
    %3838 = vmatprep.subr.mxu0 0.0
    %3839 = vmatpush1.msra.mxu0 0.0
    %3840 = vmatprep.subr.mxu0 0.0
    %3841 = vmatpush1.msra.mxu0 0.0
    %3842 = vmatprep.subr.mxu0 0.0
    %3843 = vmatpush1.msra.mxu0 0.0
    %3844 = vmatprep.subr.mxu0 0.0
    %3845 = vmatpush1.msra.mxu0 0.0
    %3846 = vmatprep.subr.mxu0 0.0
    %3847 = vmatpush1.msra.mxu0 0.0
    %3848 = vmatprep.subr.mxu0 0.0
    %3849 = vmatpush1.msra.mxu0 0.0
    %3850 = vmatprep.subr.mxu0 0.0
    %3851 = vmatpush1.msra.mxu0 0.0
    %3852 = vmatprep.subr.mxu0 0.0
    %3853 = vmatpush1.msra.mxu0 0.0
    %3854 = vmatprep.mubr.f32.mxu0 0.0
    %3855 = vmatmul.mubr.f32.gmra.mrb[0].mxu0 %v3788
    %v3856 = vpop.f32.mrb[0].mxu0
    %v3857 = vadd.f32 %v3784, %v3856
    %v3858 = vpop.f32.mrb[0].mxu0
    %3859 = vdwg.mxu0
    %v3862 = vunpack.c.l.s4 1966171168
    %v3863 = vunpack.c.0.s8 %v3862
    %v3864 = vlaneseq
    %v3865 = vshrl.u32 %v3864, 7
    %v3866 = vsub.s32 %v3863, %v3865
    %v3867 = vrot.slane %v3857, %v3866
    %v3868 = vcombine.high %v3867, %v3867
    %v3870 = vunpack.c.l.s4 1966171168
    %v3871 = vunpack.c.0.s8 %v3870
    %v3872 = vlaneseq
    %v3873 = vshrl.u32 %v3872, 7
    %v3874 = vsub.s32 %v3871, %v3873
    %v3875 = vrot.slane %v3867, %v3874
    %v3877 = vunpack.c.l.s4 1966171168
    %v3878 = vunpack.c.0.s8 %v3877
    %v3879 = vlaneseq
    %v3880 = vshrl.u32 %v3879, 7
    %v3881 = vsub.s32 %v3878, %v3880
    %v3882 = vrot.slane %v3868, %v3881
    %v3883 = vlaneseq
    %v3884 = vshrl.u32 %v3883, 7
    %v3885 = vsub.s32 0, %v3884
    %v3886 = vrot.slane %v3875, %v3885
    %v3887 = vlaneseq
    %v3888 = vshrl.u32 %v3887, 7
    %v3889 = vsub.s32 0, %v3888
    %v3890 = vrot.slane %v3882, %v3889
    %s3893 = scalar_lea.vmem %s5, 256
    %v3894 = vld [vmem:[%s3893] sm:$0xff]
    %v3895 = vld [vmem:[%s3893 + $0x8] sm:$0xff]
    %v3896 = vld [vmem:[%s3893 + $0x10] sm:$0xff]
    %v3897 = vld [vmem:[%s3893 + $0x18] sm:$0xff]
    %s3898 = scalar_lea.vmem %s6, 8
    %v3899 = vld [vmem:[%s3898] sm:$0x1]
    %v3901 = vlaneseq
    %v3902 = vshrl.u32 %v3901, 7
    %v3903 = vsub.s32 0, %v3902
    %v3904 = vrot.slane %v3899, %v3903
    %3906 = vrot.lane.b32.xlu0 %v3652, 64
    %v3907 = vpop.permute.xlu0 %3906
    %v3908 = vsel %vm100, %v3907, 0
    %3910 = vmatprep.subr.mxu0 0.0
    %3911 = vmatpush1.msra.mxu0 %v3894
    %3912 = vmatprep.subr.mxu0 0.0
    %3913 = vmatpush1.msra.mxu0 %v3895
    %3914 = vmatprep.subr.mxu0 0.0
    %3915 = vmatpush1.msra.mxu0 %v3896
    %3916 = vmatprep.subr.mxu0 0.0
    %3917 = vmatpush1.msra.mxu0 %v3897
    %3918 = vmatprep.subr.mxu0 0.0
    %3919 = vmatpush1.msra.mxu0 0.0
    %3920 = vmatprep.subr.mxu0 0.0
    %3921 = vmatpush1.msra.mxu0 0.0
    %3922 = vmatprep.subr.mxu0 0.0
    %3923 = vmatpush1.msra.mxu0 0.0
    %3924 = vmatprep.subr.mxu0 0.0
    %3925 = vmatpush1.msra.mxu0 0.0
    %3926 = vmatprep.subr.mxu0 0.0
    %3927 = vmatpush1.msra.mxu0 0.0
    %3928 = vmatprep.subr.mxu0 0.0
    %3929 = vmatpush1.msra.mxu0 0.0
    %3930 = vmatprep.subr.mxu0 0.0
    %3931 = vmatpush1.msra.mxu0 0.0
    %3932 = vmatprep.subr.mxu0 0.0
    %3933 = vmatpush1.msra.mxu0 0.0
    %3934 = vmatprep.subr.mxu0 0.0
    %3935 = vmatpush1.msra.mxu0 0.0
    %3936 = vmatprep.subr.mxu0 0.0
    %3937 = vmatpush1.msra.mxu0 0.0
    %3938 = vmatprep.subr.mxu0 0.0
    %3939 = vmatpush1.msra.mxu0 0.0
    %3940 = vmatprep.subr.mxu0 0.0
    %3941 = vmatpush1.msra.mxu0 0.0
    %3942 = vmatprep.subr.mxu0 0.0
    %3943 = vmatpush1.msra.mxu0 0.0
    %3944 = vmatprep.subr.mxu0 0.0
    %3945 = vmatpush1.msra.mxu0 0.0
    %3946 = vmatprep.subr.mxu0 0.0
    %3947 = vmatpush1.msra.mxu0 0.0
    %3948 = vmatprep.subr.mxu0 0.0
    %3949 = vmatpush1.msra.mxu0 0.0
    %3950 = vmatprep.subr.mxu0 0.0
    %3951 = vmatpush1.msra.mxu0 0.0
    %3952 = vmatprep.subr.mxu0 0.0
    %3953 = vmatpush1.msra.mxu0 0.0
    %3954 = vmatprep.subr.mxu0 0.0
    %3955 = vmatpush1.msra.mxu0 0.0
    %3956 = vmatprep.subr.mxu0 0.0
    %3957 = vmatpush1.msra.mxu0 0.0
    %3958 = vmatprep.subr.mxu0 0.0
    %3959 = vmatpush1.msra.mxu0 0.0
    %3960 = vmatprep.subr.mxu0 0.0
    %3961 = vmatpush1.msra.mxu0 0.0
    %3962 = vmatprep.subr.mxu0 0.0
    %3963 = vmatpush1.msra.mxu0 0.0
    %3964 = vmatprep.subr.mxu0 0.0
    %3965 = vmatpush1.msra.mxu0 0.0
    %3966 = vmatprep.subr.mxu0 0.0
    %3967 = vmatpush1.msra.mxu0 0.0
    %3968 = vmatprep.subr.mxu0 0.0
    %3969 = vmatpush1.msra.mxu0 0.0
    %3970 = vmatprep.subr.mxu0 0.0
    %3971 = vmatpush1.msra.mxu0 0.0
    %3972 = vmatprep.subr.mxu0 0.0
    %3973 = vmatpush1.msra.mxu0 0.0
    %3974 = vmatprep.mubr.f32.mxu0 0.0
    %3975 = vmatmul.mubr.f32.gmra.mrb[0].mxu0 %v3908
    %v3976 = vpop.f32.mrb[0].mxu0
    %v3977 = vadd.f32 %v3904, %v3976
    %v3978 = vpop.f32.mrb[0].mxu0
    %3979 = vdwg.mxu0
    %v3982 = vunpack.c.l.s4 1966171168
    %v3983 = vunpack.c.0.s8 %v3982
    %v3984 = vlaneseq
    %v3985 = vshrl.u32 %v3984, 7
    %v3986 = vsub.s32 %v3983, %v3985
    %v3987 = vrot.slane %v3977, %v3986
    %v3988 = vcombine.high %v3987, %v3987
    %v3990 = vunpack.c.l.s4 1966171168
    %v3991 = vunpack.c.0.s8 %v3990
    %v3992 = vlaneseq
    %v3993 = vshrl.u32 %v3992, 7
    %v3994 = vsub.s32 %v3991, %v3993
    %v3995 = vrot.slane %v3987, %v3994
    %v3997 = vunpack.c.l.s4 1966171168
    %v3998 = vunpack.c.0.s8 %v3997
    %v3999 = vlaneseq
    %v4000 = vshrl.u32 %v3999, 7
    %v4001 = vsub.s32 %v3998, %v4000
    %v4002 = vrot.slane %v3988, %v4001
    %v4003 = vlaneseq
    %v4004 = vshrl.u32 %v4003, 7
    %v4005 = vsub.s32 0, %v4004
    %v4006 = vrot.slane %v3995, %v4005
    %v4007 = vlaneseq
    %v4008 = vshrl.u32 %v4007, 7
    %v4009 = vsub.s32 0, %v4008
    %v4010 = vrot.slane %v4002, %v4009
    %s4013 = scalar_lea.vmem %s5, 288
    %v4014 = vld [vmem:[%s4013] sm:$0xff]
    %v4015 = vld [vmem:[%s4013 + $0x8] sm:$0xff]
    %v4016 = vld [vmem:[%s4013 + $0x10] sm:$0xff]
    %v4017 = vld [vmem:[%s4013 + $0x18] sm:$0xff]
    %s4018 = scalar_lea.vmem %s6, 9
    %v4019 = vld [vmem:[%s4018] sm:$0x1]
    %v4021 = vlaneseq
    %v4022 = vshrl.u32 %v4021, 7
    %v4023 = vsub.s32 0, %v4022
    %v4024 = vrot.slane %v4019, %v4023
    %4026 = vrot.lane.b32.xlu0 %v3652, 32
    %v4027 = vpop.permute.xlu0 %4026
    %v4028 = vsel %vm100, %v4027, 0
    %4030 = vmatprep.subr.mxu0 0.0
    %4031 = vmatpush1.msra.mxu0 %v4014
    %4032 = vmatprep.subr.mxu0 0.0
    %4033 = vmatpush1.msra.mxu0 %v4015
    %4034 = vmatprep.subr.mxu0 0.0
    %4035 = vmatpush1.msra.mxu0 %v4016
    %4036 = vmatprep.subr.mxu0 0.0
    %4037 = vmatpush1.msra.mxu0 %v4017
    %4038 = vmatprep.subr.mxu0 0.0
    %4039 = vmatpush1.msra.mxu0 0.0
    %4040 = vmatprep.subr.mxu0 0.0
    %4041 = vmatpush1.msra.mxu0 0.0
    %4042 = vmatprep.subr.mxu0 0.0
    %4043 = vmatpush1.msra.mxu0 0.0
    %4044 = vmatprep.subr.mxu0 0.0
    %4045 = vmatpush1.msra.mxu0 0.0
    %4046 = vmatprep.subr.mxu0 0.0
    %4047 = vmatpush1.msra.mxu0 0.0
    %4048 = vmatprep.subr.mxu0 0.0
    %4049 = vmatpush1.msra.mxu0 0.0
    %4050 = vmatprep.subr.mxu0 0.0
    %4051 = vmatpush1.msra.mxu0 0.0
    %4052 = vmatprep.subr.mxu0 0.0
    %4053 = vmatpush1.msra.mxu0 0.0
    %4054 = vmatprep.subr.mxu0 0.0
    %4055 = vmatpush1.msra.mxu0 0.0
    %4056 = vmatprep.subr.mxu0 0.0
    %4057 = vmatpush1.msra.mxu0 0.0
    %4058 = vmatprep.subr.mxu0 0.0
    %4059 = vmatpush1.msra.mxu0 0.0
    %4060 = vmatprep.subr.mxu0 0.0
    %4061 = vmatpush1.msra.mxu0 0.0
    %4062 = vmatprep.subr.mxu0 0.0
    %4063 = vmatpush1.msra.mxu0 0.0
    %4064 = vmatprep.subr.mxu0 0.0
    %4065 = vmatpush1.msra.mxu0 0.0
    %4066 = vmatprep.subr.mxu0 0.0
    %4067 = vmatpush1.msra.mxu0 0.0
    %4068 = vmatprep.subr.mxu0 0.0
    %4069 = vmatpush1.msra.mxu0 0.0
    %4070 = vmatprep.subr.mxu0 0.0
    %4071 = vmatpush1.msra.mxu0 0.0
    %4072 = vmatprep.subr.mxu0 0.0
    %4073 = vmatpush1.msra.mxu0 0.0
    %4074 = vmatprep.subr.mxu0 0.0
    %4075 = vmatpush1.msra.mxu0 0.0
    %4076 = vmatprep.subr.mxu0 0.0
    %4077 = vmatpush1.msra.mxu0 0.0
    %4078 = vmatprep.subr.mxu0 0.0
    %4079 = vmatpush1.msra.mxu0 0.0
    %4080 = vmatprep.subr.mxu0 0.0
    %4081 = vmatpush1.msra.mxu0 0.0
    %4082 = vmatprep.subr.mxu0 0.0
    %4083 = vmatpush1.msra.mxu0 0.0
    %4084 = vmatprep.subr.mxu0 0.0
    %4085 = vmatpush1.msra.mxu0 0.0
    %4086 = vmatprep.subr.mxu0 0.0
    %4087 = vmatpush1.msra.mxu0 0.0
    %4088 = vmatprep.subr.mxu0 0.0
    %4089 = vmatpush1.msra.mxu0 0.0
    %4090 = vmatprep.subr.mxu0 0.0
    %4091 = vmatpush1.msra.mxu0 0.0
    %4092 = vmatprep.subr.mxu0 0.0
    %4093 = vmatpush1.msra.mxu0 0.0
    %4094 = vmatprep.mubr.f32.mxu0 0.0
    %4095 = vmatmul.mubr.f32.gmra.mrb[0].mxu0 %v4028
    %v4096 = vpop.f32.mrb[0].mxu0
    %v4097 = vadd.f32 %v4024, %v4096
    %v4098 = vpop.f32.mrb[0].mxu0
    %4099 = vdwg.mxu0
    %v4102 = vunpack.c.l.s4 1966171168
    %v4103 = vunpack.c.0.s8 %v4102
    %v4104 = vlaneseq
    %v4105 = vshrl.u32 %v4104, 7
    %v4106 = vsub.s32 %v4103, %v4105
    %v4107 = vrot.slane %v4097, %v4106
    %v4108 = vcombine.high %v4107, %v4107
    %v4110 = vunpack.c.l.s4 1966171168
    %v4111 = vunpack.c.0.s8 %v4110
    %v4112 = vlaneseq
    %v4113 = vshrl.u32 %v4112, 7
    %v4114 = vsub.s32 %v4111, %v4113
    %v4115 = vrot.slane %v4107, %v4114
    %v4117 = vunpack.c.l.s4 1966171168
    %v4118 = vunpack.c.0.s8 %v4117
    %v4119 = vlaneseq
    %v4120 = vshrl.u32 %v4119, 7
    %v4121 = vsub.s32 %v4118, %v4120
    %v4122 = vrot.slane %v4108, %v4121
    %v4123 = vlaneseq
    %v4124 = vshrl.u32 %v4123, 7
    %v4125 = vsub.s32 0, %v4124
    %v4126 = vrot.slane %v4115, %v4125
    %v4127 = vlaneseq
    %v4128 = vshrl.u32 %v4127, 7
    %v4129 = vsub.s32 0, %v4128
    %v4130 = vrot.slane %v4122, %v4129
    %s4133 = scalar_lea.vmem %s5, 320
    %v4134 = vld [vmem:[%s4133] sm:$0xff]
    %v4135 = vld [vmem:[%s4133 + $0x8] sm:$0xff]
    %v4136 = vld [vmem:[%s4133 + $0x10] sm:$0xff]
    %v4137 = vld [vmem:[%s4133 + $0x18] sm:$0xff]
    %s4138 = scalar_lea.vmem %s6, 10
    %v4139 = vld [vmem:[%s4138] sm:$0x1]
    %v4141 = vlaneseq
    %v4142 = vshrl.u32 %v4141, 7
    %v4143 = vsub.s32 0, %v4142
    %v4144 = vrot.slane %v4139, %v4143
    %v4147 = vsel %vm100, %v3653, 0
    %4149 = vmatprep.subr.mxu0 0.0
    %4150 = vmatpush1.msra.mxu0 %v4134
    %4151 = vmatprep.subr.mxu0 0.0
    %4152 = vmatpush1.msra.mxu0 %v4135
    %4153 = vmatprep.subr.mxu0 0.0
    %4154 = vmatpush1.msra.mxu0 %v4136
    %4155 = vmatprep.subr.mxu0 0.0
    %4156 = vmatpush1.msra.mxu0 %v4137
    %4157 = vmatprep.subr.mxu0 0.0
    %4158 = vmatpush1.msra.mxu0 0.0
    %4159 = vmatprep.subr.mxu0 0.0
    %4160 = vmatpush1.msra.mxu0 0.0
    %4161 = vmatprep.subr.mxu0 0.0
    %4162 = vmatpush1.msra.mxu0 0.0
    %4163 = vmatprep.subr.mxu0 0.0
    %4164 = vmatpush1.msra.mxu0 0.0
    %4165 = vmatprep.subr.mxu0 0.0
    %4166 = vmatpush1.msra.mxu0 0.0
    %4167 = vmatprep.subr.mxu0 0.0
    %4168 = vmatpush1.msra.mxu0 0.0
    %4169 = vmatprep.subr.mxu0 0.0
    %4170 = vmatpush1.msra.mxu0 0.0
    %4171 = vmatprep.subr.mxu0 0.0
    %4172 = vmatpush1.msra.mxu0 0.0
    %4173 = vmatprep.subr.mxu0 0.0
    %4174 = vmatpush1.msra.mxu0 0.0
    %4175 = vmatprep.subr.mxu0 0.0
    %4176 = vmatpush1.msra.mxu0 0.0
    %4177 = vmatprep.subr.mxu0 0.0
    %4178 = vmatpush1.msra.mxu0 0.0
    %4179 = vmatprep.subr.mxu0 0.0
    %4180 = vmatpush1.msra.mxu0 0.0
    %4181 = vmatprep.subr.mxu0 0.0
    %4182 = vmatpush1.msra.mxu0 0.0
    %4183 = vmatprep.subr.mxu0 0.0
    %4184 = vmatpush1.msra.mxu0 0.0
    %4185 = vmatprep.subr.mxu0 0.0
    %4186 = vmatpush1.msra.mxu0 0.0
    %4187 = vmatprep.subr.mxu0 0.0
    %4188 = vmatpush1.msra.mxu0 0.0
    %4189 = vmatprep.subr.mxu0 0.0
    %4190 = vmatpush1.msra.mxu0 0.0
    %4191 = vmatprep.subr.mxu0 0.0
    %4192 = vmatpush1.msra.mxu0 0.0
    %4193 = vmatprep.subr.mxu0 0.0
    %4194 = vmatpush1.msra.mxu0 0.0
    %4195 = vmatprep.subr.mxu0 0.0
    %4196 = vmatpush1.msra.mxu0 0.0
    %4197 = vmatprep.subr.mxu0 0.0
    %4198 = vmatpush1.msra.mxu0 0.0
    %4199 = vmatprep.subr.mxu0 0.0
    %4200 = vmatpush1.msra.mxu0 0.0
    %4201 = vmatprep.subr.mxu0 0.0
    %4202 = vmatpush1.msra.mxu0 0.0
    %4203 = vmatprep.subr.mxu0 0.0
    %4204 = vmatpush1.msra.mxu0 0.0
    %4205 = vmatprep.subr.mxu0 0.0
    %4206 = vmatpush1.msra.mxu0 0.0
    %4207 = vmatprep.subr.mxu0 0.0
    %4208 = vmatpush1.msra.mxu0 0.0
    %4209 = vmatprep.subr.mxu0 0.0
    %4210 = vmatpush1.msra.mxu0 0.0
    %4211 = vmatprep.subr.mxu0 0.0
    %4212 = vmatpush1.msra.mxu0 0.0
    %4213 = vmatprep.mubr.f32.mxu0 0.0
    %4214 = vmatmul.mubr.f32.gmra.mrb[0].mxu0 %v4147
    %v4215 = vpop.f32.mrb[0].mxu0
    %v4216 = vadd.f32 %v4144, %v4215
    %v4217 = vpop.f32.mrb[0].mxu0
    %4218 = vdwg.mxu0
    %v4221 = vunpack.c.l.s4 1966171168
    %v4222 = vunpack.c.0.s8 %v4221
    %v4223 = vlaneseq
    %v4224 = vshrl.u32 %v4223, 7
    %v4225 = vsub.s32 %v4222, %v4224
    %v4226 = vrot.slane %v4216, %v4225
    %v4227 = vcombine.high %v4226, %v4226
    %v4229 = vunpack.c.l.s4 1966171168
    %v4230 = vunpack.c.0.s8 %v4229
    %v4231 = vlaneseq
    %v4232 = vshrl.u32 %v4231, 7
    %v4233 = vsub.s32 %v4230, %v4232
    %v4234 = vrot.slane %v4226, %v4233
    %v4236 = vunpack.c.l.s4 1966171168
    %v4237 = vunpack.c.0.s8 %v4236
    %v4238 = vlaneseq
    %v4239 = vshrl.u32 %v4238, 7
    %v4240 = vsub.s32 %v4237, %v4239
    %v4241 = vrot.slane %v4227, %v4240
    %v4242 = vlaneseq
    %v4243 = vshrl.u32 %v4242, 7
    %v4244 = vsub.s32 0, %v4243
    %v4245 = vrot.slane %v4234, %v4244
    %v4246 = vlaneseq
    %v4247 = vshrl.u32 %v4246, 7
    %v4248 = vsub.s32 0, %v4247
    %v4249 = vrot.slane %v4241, %v4248
    %s4252 = scalar_lea.vmem %s5, 352
    %v4253 = vld [vmem:[%s4252] sm:$0xff]
    %v4254 = vld [vmem:[%s4252 + $0x8] sm:$0xff]
    %v4255 = vld [vmem:[%s4252 + $0x10] sm:$0xff]
    %v4256 = vld [vmem:[%s4252 + $0x18] sm:$0xff]
    %s4257 = scalar_lea.vmem %s6, 11
    %v4258 = vld [vmem:[%s4257] sm:$0x1]
    %v4260 = vlaneseq
    %v4261 = vshrl.u32 %v4260, 7
    %v4262 = vsub.s32 0, %v4261
    %v4263 = vrot.slane %v4258, %v4262
    %4265 = vrot.lane.b32.xlu0 %v3653, 96
    %v4266 = vpop.permute.xlu0 %4265
    %v4267 = vsel %vm100, %v4266, 0
    %4269 = vmatprep.subr.mxu0 0.0
    %4270 = vmatpush1.msra.mxu0 %v4253
    %4271 = vmatprep.subr.mxu0 0.0
    %4272 = vmatpush1.msra.mxu0 %v4254
    %4273 = vmatprep.subr.mxu0 0.0
    %4274 = vmatpush1.msra.mxu0 %v4255
    %4275 = vmatprep.subr.mxu0 0.0
    %4276 = vmatpush1.msra.mxu0 %v4256
    %4277 = vmatprep.subr.mxu0 0.0
    %4278 = vmatpush1.msra.mxu0 0.0
    %4279 = vmatprep.subr.mxu0 0.0
    %4280 = vmatpush1.msra.mxu0 0.0
    %4281 = vmatprep.subr.mxu0 0.0
    %4282 = vmatpush1.msra.mxu0 0.0
    %4283 = vmatprep.subr.mxu0 0.0
    %4284 = vmatpush1.msra.mxu0 0.0
    %4285 = vmatprep.subr.mxu0 0.0
    %4286 = vmatpush1.msra.mxu0 0.0
    %4287 = vmatprep.subr.mxu0 0.0
    %4288 = vmatpush1.msra.mxu0 0.0
    %4289 = vmatprep.subr.mxu0 0.0
    %4290 = vmatpush1.msra.mxu0 0.0
    %4291 = vmatprep.subr.mxu0 0.0
    %4292 = vmatpush1.msra.mxu0 0.0
    %4293 = vmatprep.subr.mxu0 0.0
    %4294 = vmatpush1.msra.mxu0 0.0
    %4295 = vmatprep.subr.mxu0 0.0
    %4296 = vmatpush1.msra.mxu0 0.0
    %4297 = vmatprep.subr.mxu0 0.0
    %4298 = vmatpush1.msra.mxu0 0.0
    %4299 = vmatprep.subr.mxu0 0.0
    %4300 = vmatpush1.msra.mxu0 0.0
    %4301 = vmatprep.subr.mxu0 0.0
    %4302 = vmatpush1.msra.mxu0 0.0
    %4303 = vmatprep.subr.mxu0 0.0
    %4304 = vmatpush1.msra.mxu0 0.0
    %4305 = vmatprep.subr.mxu0 0.0
    %4306 = vmatpush1.msra.mxu0 0.0
    %4307 = vmatprep.subr.mxu0 0.0
    %4308 = vmatpush1.msra.mxu0 0.0
    %4309 = vmatprep.subr.mxu0 0.0
    %4310 = vmatpush1.msra.mxu0 0.0
    %4311 = vmatprep.subr.mxu0 0.0
    %4312 = vmatpush1.msra.mxu0 0.0
    %4313 = vmatprep.subr.mxu0 0.0
    %4314 = vmatpush1.msra.mxu0 0.0
    %4315 = vmatprep.subr.mxu0 0.0
    %4316 = vmatpush1.msra.mxu0 0.0
    %4317 = vmatprep.subr.mxu0 0.0
    %4318 = vmatpush1.msra.mxu0 0.0
    %4319 = vmatprep.subr.mxu0 0.0
    %4320 = vmatpush1.msra.mxu0 0.0
    %4321 = vmatprep.subr.mxu0 0.0
    %4322 = vmatpush1.msra.mxu0 0.0
    %4323 = vmatprep.subr.mxu0 0.0
    %4324 = vmatpush1.msra.mxu0 0.0
    %4325 = vmatprep.subr.mxu0 0.0
    %4326 = vmatpush1.msra.mxu0 0.0
    %4327 = vmatprep.subr.mxu0 0.0
    %4328 = vmatpush1.msra.mxu0 0.0
    %4329 = vmatprep.subr.mxu0 0.0
    %4330 = vmatpush1.msra.mxu0 0.0
    %4331 = vmatprep.subr.mxu0 0.0
    %4332 = vmatpush1.msra.mxu0 0.0
    %4333 = vmatprep.mubr.f32.mxu0 0.0
    %4334 = vmatmul.mubr.f32.gmra.mrb[0].mxu0 %v4267
    %v4335 = vpop.f32.mrb[0].mxu0
    %v4336 = vadd.f32 %v4263, %v4335
    %v4337 = vpop.f32.mrb[0].mxu0
    %4338 = vdwg.mxu0
    %v4341 = vunpack.c.l.s4 1966171168
    %v4342 = vunpack.c.0.s8 %v4341
    %v4343 = vlaneseq
    %v4344 = vshrl.u32 %v4343, 7
    %v4345 = vsub.s32 %v4342, %v4344
    %v4346 = vrot.slane %v4336, %v4345
    %v4347 = vcombine.high %v4346, %v4346
    %v4349 = vunpack.c.l.s4 1966171168
    %v4350 = vunpack.c.0.s8 %v4349
    %v4351 = vlaneseq
    %v4352 = vshrl.u32 %v4351, 7
    %v4353 = vsub.s32 %v4350, %v4352
    %v4354 = vrot.slane %v4346, %v4353
    %v4356 = vunpack.c.l.s4 1966171168
    %v4357 = vunpack.c.0.s8 %v4356
    %v4358 = vlaneseq
    %v4359 = vshrl.u32 %v4358, 7
    %v4360 = vsub.s32 %v4357, %v4359
    %v4361 = vrot.slane %v4347, %v4360
    %v4362 = vlaneseq
    %v4363 = vshrl.u32 %v4362, 7
    %v4364 = vsub.s32 0, %v4363
    %v4365 = vrot.slane %v4354, %v4364
    %v4366 = vlaneseq
    %v4367 = vshrl.u32 %v4366, 7
    %v4368 = vsub.s32 0, %v4367
    %v4369 = vrot.slane %v4361, %v4368
    %s4372 = scalar_lea.vmem %s7, 1
    %v4373 = vld [vmem:[%s4372] sm:$0x1]
    %s4374 = scalar_lea.vmem %s8, 1
    %v4375 = vld [vmem:[%s4374] sm:$0x1]
    %v4376 = vsel %vm100, %v3501, 0.0
    %4377 = vadd.xlane.f32.xlu0 %v4376
    %v4378 = vpop.xlane.xlu0 %4377
    %v4379 = vsel %vm100, %v3502, 0.0
    %4380 = vadd.xlane.f32.xlu0 %v4379
    %v4381 = vpop.xlane.xlu0 %4380
    %v4382 = vmul.f32 %v4378, %v957
    %v4383 = vmul.f32 %v4381, %v957
    %v4384 = vsub.f32 %v3501, %v4382
    %v4385 = vsub.f32 %v3502, %v4383
    %v4386 = vmul.f32 %v4384, %v4384
    %v4387 = vmul.f32 %v4385, %v4385
    %v4388 = vsel %vm100, %v4386, 0.0
    %4389 = vadd.xlane.f32.xlu0 %v4388
    %v4390 = vpop.xlane.xlu0 %4389
    %v4391 = vsel %vm100, %v4387, 0.0
    %4392 = vadd.xlane.f32.xlu0 %v4391
    %v4393 = vpop.xlane.xlu0 %4392
    %v4394 = vmul.f32 %v4390, %v957
    %v4395 = vmul.f32 %v4393, %v957
    %v4396 = vadd.f32 %v4394, 1e-05
    %v4397 = vadd.f32 %v4395, 1e-05
    %v4398 = vrsqrt.pop %v4396
    %v4399 = vrsqrt.pop %v4397
    %v4400 = vmul.f32 %v4384, %v4398
    %v4401 = vmul.f32 %v4385, %v4399
    %v4403 = vlaneseq
    %v4404 = vshrl.u32 %v4403, 7
    %v4405 = vsub.s32 0, %v4404
    %v4406 = vrot.slane %v4373, %v4405
    %v4408 = vmul.f32 %v4400, %v4406
    %v4409 = vmul.f32 %v4401, %v4406
    %v4411 = vlaneseq
    %v4412 = vshrl.u32 %v4411, 7
    %v4413 = vsub.s32 0, %v4412
    %v4414 = vrot.slane %v4375, %v4413
    %v4416 = vadd.f32 %v4408, %v4414
    %v4417 = vadd.f32 %v4409, %v4414
    %v4418 = vmul.f32 %v4416, %v3766
    %v4419 = vmul.f32 %v4417, %v3770
    %v4420 = vadd.f32 %v4418, %v4006
    %v4421 = vadd.f32 %v4419, %v4010
    %s4422 = scalar_lea.vmem %s11, 128
    %v4423 = vld [vmem:[%s4422] sm:$0xff]
    %v4424 = vld [vmem:[%s4422 + $0x8] sm:$0xff]
    %v4425 = vld [vmem:[%s4422 + $0x10] sm:$0xff]
    %v4426 = vld [vmem:[%s4422 + $0x18] sm:$0xff]
    %s4427 = scalar_lea.vmem %s14, 4
    %v4428 = vld [vmem:[%s4427] sm:$0x1]
    %v4430 = vlaneseq
    %v4431 = vshrl.u32 %v4430, 7
    %v4432 = vsub.s32 0, %v4431
    %v4433 = vrot.slane %v4428, %v4432
    %v4436 = vsel %vm100, %v4420, 0
    %v4439 = vsel %vm100, %v4421, 0
    %4441 = vmatprep.subr.mxu0 0.0
    %4442 = vmatpush1.msra.mxu0 %v4423
    %4443 = vmatprep.subr.mxu0 0.0
    %4444 = vmatpush1.msra.mxu0 %v4424
    %4445 = vmatprep.subr.mxu0 0.0
    %4446 = vmatpush1.msra.mxu0 %v4425
    %4447 = vmatprep.subr.mxu0 0.0
    %4448 = vmatpush1.msra.mxu0 %v4426
    %4449 = vmatprep.subr.mxu0 0.0
    %4450 = vmatpush1.msra.mxu0 0.0
    %4451 = vmatprep.subr.mxu0 0.0
    %4452 = vmatpush1.msra.mxu0 0.0
    %4453 = vmatprep.subr.mxu0 0.0
    %4454 = vmatpush1.msra.mxu0 0.0
    %4455 = vmatprep.subr.mxu0 0.0
    %4456 = vmatpush1.msra.mxu0 0.0
    %4457 = vmatprep.subr.mxu0 0.0
    %4458 = vmatpush1.msra.mxu0 0.0
    %4459 = vmatprep.subr.mxu0 0.0
    %4460 = vmatpush1.msra.mxu0 0.0
    %4461 = vmatprep.subr.mxu0 0.0
    %4462 = vmatpush1.msra.mxu0 0.0
    %4463 = vmatprep.subr.mxu0 0.0
    %4464 = vmatpush1.msra.mxu0 0.0
    %4465 = vmatprep.subr.mxu0 0.0
    %4466 = vmatpush1.msra.mxu0 0.0
    %4467 = vmatprep.subr.mxu0 0.0
    %4468 = vmatpush1.msra.mxu0 0.0
    %4469 = vmatprep.subr.mxu0 0.0
    %4470 = vmatpush1.msra.mxu0 0.0
    %4471 = vmatprep.subr.mxu0 0.0
    %4472 = vmatpush1.msra.mxu0 0.0
    %4473 = vmatprep.subr.mxu0 0.0
    %4474 = vmatpush1.msra.mxu0 0.0
    %4475 = vmatprep.subr.mxu0 0.0
    %4476 = vmatpush1.msra.mxu0 0.0
    %4477 = vmatprep.subr.mxu0 0.0
    %4478 = vmatpush1.msra.mxu0 0.0
    %4479 = vmatprep.subr.mxu0 0.0
    %4480 = vmatpush1.msra.mxu0 0.0
    %4481 = vmatprep.subr.mxu0 0.0
    %4482 = vmatpush1.msra.mxu0 0.0
    %4483 = vmatprep.subr.mxu0 0.0
    %4484 = vmatpush1.msra.mxu0 0.0
    %4485 = vmatprep.subr.mxu0 0.0
    %4486 = vmatpush1.msra.mxu0 0.0
    %4487 = vmatprep.subr.mxu0 0.0
    %4488 = vmatpush1.msra.mxu0 0.0
    %4489 = vmatprep.subr.mxu0 0.0
    %4490 = vmatpush1.msra.mxu0 0.0
    %4491 = vmatprep.subr.mxu0 0.0
    %4492 = vmatpush1.msra.mxu0 0.0
    %4493 = vmatprep.subr.mxu0 0.0
    %4494 = vmatpush1.msra.mxu0 0.0
    %4495 = vmatprep.subr.mxu0 0.0
    %4496 = vmatpush1.msra.mxu0 0.0
    %4497 = vmatprep.subr.mxu0 0.0
    %4498 = vmatpush1.msra.mxu0 0.0
    %4499 = vmatprep.subr.mxu0 0.0
    %4500 = vmatpush1.msra.mxu0 0.0
    %4501 = vmatprep.subr.mxu0 0.0
    %4502 = vmatpush1.msra.mxu0 0.0
    %4503 = vmatprep.subr.mxu0 0.0
    %4504 = vmatpush1.msra.mxu0 0.0
    %4505 = vmatprep.mubr.f32.mxu0 0.0
    %4506 = vmatmul.mubr.f32.gmra.mrb[0].mxu0 %v4436
    %v4507 = vpop.f32.mrb[0].mxu0
    %v4508 = vadd.f32 %v4433, %v4507
    %v4509 = vpop.f32.mrb[0].mxu0
    %4510 = vmatprep.mubr.f32.mxu0 0.0
    %4511 = vmatmul.mubr.f32.gmra.mrb[0].mxu0 %v4439
    %v4512 = vpop.f32.mrb[0].mxu0
    %v4513 = vadd.f32 %v4433, %v4512
    %v4514 = vpop.f32.mrb[0].mxu0
    %4515 = vdwg.mxu0
    %s4516 = scalar_lea.vmem %s12, 128
    %v4517 = vld [vmem:[%s4516] sm:$0xff]
    %v4518 = vld [vmem:[%s4516 + $0x8] sm:$0xff]
    %v4519 = vld [vmem:[%s4516 + $0x10] sm:$0xff]
    %v4520 = vld [vmem:[%s4516 + $0x18] sm:$0xff]
    %s4521 = scalar_lea.vmem %s15, 4
    %v4522 = vld [vmem:[%s4521] sm:$0x1]
    %v4524 = vlaneseq
    %v4525 = vshrl.u32 %v4524, 7
    %v4526 = vsub.s32 0, %v4525
    %v4527 = vrot.slane %v4522, %v4526
    %4529 = vmatprep.subr.mxu0 0.0
    %4530 = vmatpush1.msra.mxu0 %v4517
    %4531 = vmatprep.subr.mxu0 0.0
    %4532 = vmatpush1.msra.mxu0 %v4518
    %4533 = vmatprep.subr.mxu0 0.0
    %4534 = vmatpush1.msra.mxu0 %v4519
    %4535 = vmatprep.subr.mxu0 0.0
    %4536 = vmatpush1.msra.mxu0 %v4520
    %4537 = vmatprep.subr.mxu0 0.0
    %4538 = vmatpush1.msra.mxu0 0.0
    %4539 = vmatprep.subr.mxu0 0.0
    %4540 = vmatpush1.msra.mxu0 0.0
    %4541 = vmatprep.subr.mxu0 0.0
    %4542 = vmatpush1.msra.mxu0 0.0
    %4543 = vmatprep.subr.mxu0 0.0
    %4544 = vmatpush1.msra.mxu0 0.0
    %4545 = vmatprep.subr.mxu0 0.0
    %4546 = vmatpush1.msra.mxu0 0.0
    %4547 = vmatprep.subr.mxu0 0.0
    %4548 = vmatpush1.msra.mxu0 0.0
    %4549 = vmatprep.subr.mxu0 0.0
    %4550 = vmatpush1.msra.mxu0 0.0
    %4551 = vmatprep.subr.mxu0 0.0
    %4552 = vmatpush1.msra.mxu0 0.0
    %4553 = vmatprep.subr.mxu0 0.0
    %4554 = vmatpush1.msra.mxu0 0.0
    %4555 = vmatprep.subr.mxu0 0.0
    %4556 = vmatpush1.msra.mxu0 0.0
    %4557 = vmatprep.subr.mxu0 0.0
    %4558 = vmatpush1.msra.mxu0 0.0
    %4559 = vmatprep.subr.mxu0 0.0
    %4560 = vmatpush1.msra.mxu0 0.0
    %4561 = vmatprep.subr.mxu0 0.0
    %4562 = vmatpush1.msra.mxu0 0.0
    %4563 = vmatprep.subr.mxu0 0.0
    %4564 = vmatpush1.msra.mxu0 0.0
    %4565 = vmatprep.subr.mxu0 0.0
    %4566 = vmatpush1.msra.mxu0 0.0
    %4567 = vmatprep.subr.mxu0 0.0
    %4568 = vmatpush1.msra.mxu0 0.0
    %4569 = vmatprep.subr.mxu0 0.0
    %4570 = vmatpush1.msra.mxu0 0.0
    %4571 = vmatprep.subr.mxu0 0.0
    %4572 = vmatpush1.msra.mxu0 0.0
    %4573 = vmatprep.subr.mxu0 0.0
    %4574 = vmatpush1.msra.mxu0 0.0
    %4575 = vmatprep.subr.mxu0 0.0
    %4576 = vmatpush1.msra.mxu0 0.0
    %4577 = vmatprep.subr.mxu0 0.0
    %4578 = vmatpush1.msra.mxu0 0.0
    %4579 = vmatprep.subr.mxu0 0.0
    %4580 = vmatpush1.msra.mxu0 0.0
    %4581 = vmatprep.subr.mxu0 0.0
    %4582 = vmatpush1.msra.mxu0 0.0
    %4583 = vmatprep.subr.mxu0 0.0
    %4584 = vmatpush1.msra.mxu0 0.0
    %4585 = vmatprep.subr.mxu0 0.0
    %4586 = vmatpush1.msra.mxu0 0.0
    %4587 = vmatprep.subr.mxu0 0.0
    %4588 = vmatpush1.msra.mxu0 0.0
    %4589 = vmatprep.subr.mxu0 0.0
    %4590 = vmatpush1.msra.mxu0 0.0
    %4591 = vmatprep.subr.mxu0 0.0
    %4592 = vmatpush1.msra.mxu0 0.0
    %4593 = vmatprep.mubr.f32.mxu0 0.0
    %4594 = vmatmul.mubr.f32.gmra.mrb[0].mxu0 %v4436
    %v4595 = vpop.f32.mrb[0].mxu0
    %v4596 = vadd.f32 %v4527, %v4595
    %v4597 = vpop.f32.mrb[0].mxu0
    %4598 = vmatprep.mubr.f32.mxu0 0.0
    %4599 = vmatmul.mubr.f32.gmra.mrb[0].mxu0 %v4439
    %v4600 = vpop.f32.mrb[0].mxu0
    %v4601 = vadd.f32 %v4527, %v4600
    %v4602 = vpop.f32.mrb[0].mxu0
    %4603 = vdwg.mxu0
    %s4604 = scalar_lea.vmem %s13, 128
    %v4605 = vld [vmem:[%s4604] sm:$0xff]
    %v4606 = vld [vmem:[%s4604 + $0x8] sm:$0xff]
    %v4607 = vld [vmem:[%s4604 + $0x10] sm:$0xff]
    %v4608 = vld [vmem:[%s4604 + $0x18] sm:$0xff]
    %s4609 = scalar_lea.vmem %s16, 4
    %v4610 = vld [vmem:[%s4609] sm:$0x1]
    %v4612 = vlaneseq
    %v4613 = vshrl.u32 %v4612, 7
    %v4614 = vsub.s32 0, %v4613
    %v4615 = vrot.slane %v4610, %v4614
    %4617 = vmatprep.subr.mxu0 0.0
    %4618 = vmatpush1.msra.mxu0 %v4605
    %4619 = vmatprep.subr.mxu0 0.0
    %4620 = vmatpush1.msra.mxu0 %v4606
    %4621 = vmatprep.subr.mxu0 0.0
    %4622 = vmatpush1.msra.mxu0 %v4607
    %4623 = vmatprep.subr.mxu0 0.0
    %4624 = vmatpush1.msra.mxu0 %v4608
    %4625 = vmatprep.subr.mxu0 0.0
    %4626 = vmatpush1.msra.mxu0 0.0
    %4627 = vmatprep.subr.mxu0 0.0
    %4628 = vmatpush1.msra.mxu0 0.0
    %4629 = vmatprep.subr.mxu0 0.0
    %4630 = vmatpush1.msra.mxu0 0.0
    %4631 = vmatprep.subr.mxu0 0.0
    %4632 = vmatpush1.msra.mxu0 0.0
    %4633 = vmatprep.subr.mxu0 0.0
    %4634 = vmatpush1.msra.mxu0 0.0
    %4635 = vmatprep.subr.mxu0 0.0
    %4636 = vmatpush1.msra.mxu0 0.0
    %4637 = vmatprep.subr.mxu0 0.0
    %4638 = vmatpush1.msra.mxu0 0.0
    %4639 = vmatprep.subr.mxu0 0.0
    %4640 = vmatpush1.msra.mxu0 0.0
    %4641 = vmatprep.subr.mxu0 0.0
    %4642 = vmatpush1.msra.mxu0 0.0
    %4643 = vmatprep.subr.mxu0 0.0
    %4644 = vmatpush1.msra.mxu0 0.0
    %4645 = vmatprep.subr.mxu0 0.0
    %4646 = vmatpush1.msra.mxu0 0.0
    %4647 = vmatprep.subr.mxu0 0.0
    %4648 = vmatpush1.msra.mxu0 0.0
    %4649 = vmatprep.subr.mxu0 0.0
    %4650 = vmatpush1.msra.mxu0 0.0
    %4651 = vmatprep.subr.mxu0 0.0
    %4652 = vmatpush1.msra.mxu0 0.0
    %4653 = vmatprep.subr.mxu0 0.0
    %4654 = vmatpush1.msra.mxu0 0.0
    %4655 = vmatprep.subr.mxu0 0.0
    %4656 = vmatpush1.msra.mxu0 0.0
    %4657 = vmatprep.subr.mxu0 0.0
    %4658 = vmatpush1.msra.mxu0 0.0
    %4659 = vmatprep.subr.mxu0 0.0
    %4660 = vmatpush1.msra.mxu0 0.0
    %4661 = vmatprep.subr.mxu0 0.0
    %4662 = vmatpush1.msra.mxu0 0.0
    %4663 = vmatprep.subr.mxu0 0.0
    %4664 = vmatpush1.msra.mxu0 0.0
    %4665 = vmatprep.subr.mxu0 0.0
    %4666 = vmatpush1.msra.mxu0 0.0
    %4667 = vmatprep.subr.mxu0 0.0
    %4668 = vmatpush1.msra.mxu0 0.0
    %4669 = vmatprep.subr.mxu0 0.0
    %4670 = vmatpush1.msra.mxu0 0.0
    %4671 = vmatprep.subr.mxu0 0.0
    %4672 = vmatpush1.msra.mxu0 0.0
    %4673 = vmatprep.subr.mxu0 0.0
    %4674 = vmatpush1.msra.mxu0 0.0
    %4675 = vmatprep.subr.mxu0 0.0
    %4676 = vmatpush1.msra.mxu0 0.0
    %4677 = vmatprep.subr.mxu0 0.0
    %4678 = vmatpush1.msra.mxu0 0.0
    %4679 = vmatprep.subr.mxu0 0.0
    %4680 = vmatpush1.msra.mxu0 0.0
    %4681 = vmatprep.mubr.f32.mxu0 0.0
    %4682 = vmatmul.mubr.f32.gmra.mrb[0].mxu0 %v4436
    %v4683 = vpop.f32.mrb[0].mxu0
    %v4684 = vadd.f32 %v4615, %v4683
    %v4685 = vpop.f32.mrb[0].mxu0
    %4686 = vmatprep.mubr.f32.mxu0 0.0
    %4687 = vmatmul.mubr.f32.gmra.mrb[0].mxu0 %v4439
    %v4688 = vpop.f32.mrb[0].mxu0
    %v4689 = vadd.f32 %v4615, %v4688
    %v4690 = vpop.f32.mrb[0].mxu0
    %4691 = vdwg.mxu0
    %v4693 = vsel %vm1262, %v4508, 0
    %v4696 = vsel %vm1262, %v4513, 0
    %v4699 = vsel %vm1262, %v4596, 0
    %v4702 = vsel %vm1262, %v4601, 0
    %4704 = vmatprep.subr.mxu0 0.0
    %4705 = vmatpush1.xpose.msra.mxu0 %v4699
    %4706 = vmatprep.subr.mxu0 0.0
    %4707 = vmatpush1.xpose.msra.mxu0 %v4702
    %4708 = vmatprep.subr.mxu0 0.0
    %4709 = vmatpush1.xpose.msra.mxu0 0.0
    %4710 = vmatprep.subr.mxu0 0.0
    %4711 = vmatpush1.xpose.msra.mxu0 0.0
    %4712 = vmatprep.subr.mxu0 0.0
    %4713 = vmatpush1.xpose.msra.mxu0 0.0
    %4714 = vmatprep.subr.mxu0 0.0
    %4715 = vmatpush1.xpose.msra.mxu0 0.0
    %4716 = vmatprep.subr.mxu0 0.0
    %4717 = vmatpush1.xpose.msra.mxu0 0.0
    %4718 = vmatprep.subr.mxu0 0.0
    %4719 = vmatpush1.xpose.msra.mxu0 0.0
    %4720 = vmatprep.subr.mxu0 0.0
    %4721 = vmatpush1.xpose.msra.mxu0 0.0
    %4722 = vmatprep.subr.mxu0 0.0
    %4723 = vmatpush1.xpose.msra.mxu0 0.0
    %4724 = vmatprep.subr.mxu0 0.0
    %4725 = vmatpush1.xpose.msra.mxu0 0.0
    %4726 = vmatprep.subr.mxu0 0.0
    %4727 = vmatpush1.xpose.msra.mxu0 0.0
    %4728 = vmatprep.subr.mxu0 0.0
    %4729 = vmatpush1.xpose.msra.mxu0 0.0
    %4730 = vmatprep.subr.mxu0 0.0
    %4731 = vmatpush1.xpose.msra.mxu0 0.0
    %4732 = vmatprep.subr.mxu0 0.0
    %4733 = vmatpush1.xpose.msra.mxu0 0.0
    %4734 = vmatprep.subr.mxu0 0.0
    %4735 = vmatpush1.xpose.msra.mxu0 0.0
    %4736 = vmatprep.subr.mxu0 0.0
    %4737 = vmatpush1.xpose.msra.mxu0 0.0
    %4738 = vmatprep.subr.mxu0 0.0
    %4739 = vmatpush1.xpose.msra.mxu0 0.0
    %4740 = vmatprep.subr.mxu0 0.0
    %4741 = vmatpush1.xpose.msra.mxu0 0.0
    %4742 = vmatprep.subr.mxu0 0.0
    %4743 = vmatpush1.xpose.msra.mxu0 0.0
    %4744 = vmatprep.subr.mxu0 0.0
    %4745 = vmatpush1.xpose.msra.mxu0 0.0
    %4746 = vmatprep.subr.mxu0 0.0
    %4747 = vmatpush1.xpose.msra.mxu0 0.0
    %4748 = vmatprep.subr.mxu0 0.0
    %4749 = vmatpush1.xpose.msra.mxu0 0.0
    %4750 = vmatprep.subr.mxu0 0.0
    %4751 = vmatpush1.xpose.msra.mxu0 0.0
    %4752 = vmatprep.subr.mxu0 0.0
    %4753 = vmatpush1.xpose.msra.mxu0 0.0
    %4754 = vmatprep.subr.mxu0 0.0
    %4755 = vmatpush1.xpose.msra.mxu0 0.0
    %4756 = vmatprep.subr.mxu0 0.0
    %4757 = vmatpush1.xpose.msra.mxu0 0.0
    %4758 = vmatprep.subr.mxu0 0.0
    %4759 = vmatpush1.xpose.msra.mxu0 0.0
    %4760 = vmatprep.subr.mxu0 0.0
    %4761 = vmatpush1.xpose.msra.mxu0 0.0
    %4762 = vmatprep.subr.mxu0 0.0
    %4763 = vmatpush1.xpose.msra.mxu0 0.0
    %4764 = vmatprep.subr.mxu0 0.0
    %4765 = vmatpush1.xpose.msra.mxu0 0.0
    %4766 = vmatprep.subr.mxu0 0.0
    %4767 = vmatpush1.xpose.msra.mxu0 0.0
    %4768 = vmatprep.mubr.f32.mxu0 0.0
    %4769 = vmatmul.mubr.f32.gmra.mrb[0].mxu0 %v4693
    %v4770 = vpop.f32.mrb[0].mxu0
    %v4771 = vadd.f32 0.0, %v4770
    %v4772 = vpop.f32.mrb[0].mxu0
    %4773 = vmatprep.mubr.f32.mxu0 0.0
    %4774 = vmatmul.mubr.f32.gmra.mrb[0].mxu0 %v4696
    %v4775 = vpop.f32.mrb[0].mxu0
    %v4776 = vadd.f32 0.0, %v4775
    %v4777 = vpop.f32.mrb[0].mxu0
    %4778 = vdwg.mxu0
    %v4779 = vmul.f32 %v4771, 0.35355338
    %v4780 = vmul.f32 %v4776, 0.35355338
    %v4781 = vadd.f32 %v4779, %v78
    %v4782 = vadd.f32 %v4780, %v79
    %v4783 = vsel %vm1354, %v4781, -inf
    %4784 = vmax.xlane.f32.xlu0 %v4783
    %v4785 = vpop.xlane.xlu0 %4784
    %v4786 = vsel %vm1354, %v4782, -inf
    %4787 = vmax.xlane.f32.xlu0 %v4786
    %v4788 = vpop.xlane.xlu0 %4787
    %v4789 = vsub.f32 %v4781, %v4785
    %v4790 = vsub.f32 %v4782, %v4788
    %v4791 = vmul.f32 %v4789, 1.442695
    %v4792 = vpow.pop %v4791
    %v4793 = vmul.f32 %v4790, 1.442695
    %v4794 = vpow.pop %v4793
    %v4795 = vsel %vm1354, %v4792, 0.0
    %4796 = vadd.xlane.f32.xlu0 %v4795
    %v4797 = vpop.xlane.xlu0 %4796
    %v4798 = vsel %vm1354, %v4794, 0.0
    %4799 = vadd.xlane.f32.xlu0 %v4798
    %v4800 = vpop.xlane.xlu0 %4799
    %v4801 = vrcp.pop %v4797
    %v4802 = vrcp.pop %v4800
    %v4803 = vmul.f32 %v4797, %v4801
    %v4804 = vmul.f32 %v4800, %v4802
    %v4805 = vsub.f32 2.0, %v4803
    %v4806 = vsub.f32 2.0, %v4804
    %v4807 = vmul.f32 %v4801, %v4805
    %v4808 = vmul.f32 %v4802, %v4806
    %v4809 = vmul.f32 %v4792, %v4807
    %v4810 = vmul.f32 %v4794, %v4808
    %v4812 = vsel %vm1354, %v4809, 0
    %v4815 = vsel %vm1354, %v4810, 0
    %4817 = vmatprep.subr.mxu0 0.0
    %4818 = vmatpush1.msra.mxu0 %v4684
    %4819 = vmatprep.subr.mxu0 0.0
    %4820 = vmatpush1.msra.mxu0 %v4689
    %4821 = vmatprep.subr.mxu0 0.0
    %4822 = vmatpush1.msra.mxu0 0.0
    %4823 = vmatprep.subr.mxu0 0.0
    %4824 = vmatpush1.msra.mxu0 0.0
    %4825 = vmatprep.subr.mxu0 0.0
    %4826 = vmatpush1.msra.mxu0 0.0
    %4827 = vmatprep.subr.mxu0 0.0
    %4828 = vmatpush1.msra.mxu0 0.0
    %4829 = vmatprep.subr.mxu0 0.0
    %4830 = vmatpush1.msra.mxu0 0.0
    %4831 = vmatprep.subr.mxu0 0.0
    %4832 = vmatpush1.msra.mxu0 0.0
    %4833 = vmatprep.subr.mxu0 0.0
    %4834 = vmatpush1.msra.mxu0 0.0
    %4835 = vmatprep.subr.mxu0 0.0
    %4836 = vmatpush1.msra.mxu0 0.0
    %4837 = vmatprep.subr.mxu0 0.0
    %4838 = vmatpush1.msra.mxu0 0.0
    %4839 = vmatprep.subr.mxu0 0.0
    %4840 = vmatpush1.msra.mxu0 0.0
    %4841 = vmatprep.subr.mxu0 0.0
    %4842 = vmatpush1.msra.mxu0 0.0
    %4843 = vmatprep.subr.mxu0 0.0
    %4844 = vmatpush1.msra.mxu0 0.0
    %4845 = vmatprep.subr.mxu0 0.0
    %4846 = vmatpush1.msra.mxu0 0.0
    %4847 = vmatprep.subr.mxu0 0.0
    %4848 = vmatpush1.msra.mxu0 0.0
    %4849 = vmatprep.subr.mxu0 0.0
    %4850 = vmatpush1.msra.mxu0 0.0
    %4851 = vmatprep.subr.mxu0 0.0
    %4852 = vmatpush1.msra.mxu0 0.0
    %4853 = vmatprep.subr.mxu0 0.0
    %4854 = vmatpush1.msra.mxu0 0.0
    %4855 = vmatprep.subr.mxu0 0.0
    %4856 = vmatpush1.msra.mxu0 0.0
    %4857 = vmatprep.subr.mxu0 0.0
    %4858 = vmatpush1.msra.mxu0 0.0
    %4859 = vmatprep.subr.mxu0 0.0
    %4860 = vmatpush1.msra.mxu0 0.0
    %4861 = vmatprep.subr.mxu0 0.0
    %4862 = vmatpush1.msra.mxu0 0.0
    %4863 = vmatprep.subr.mxu0 0.0
    %4864 = vmatpush1.msra.mxu0 0.0
    %4865 = vmatprep.subr.mxu0 0.0
    %4866 = vmatpush1.msra.mxu0 0.0
    %4867 = vmatprep.subr.mxu0 0.0
    %4868 = vmatpush1.msra.mxu0 0.0
    %4869 = vmatprep.subr.mxu0 0.0
    %4870 = vmatpush1.msra.mxu0 0.0
    %4871 = vmatprep.subr.mxu0 0.0
    %4872 = vmatpush1.msra.mxu0 0.0
    %4873 = vmatprep.subr.mxu0 0.0
    %4874 = vmatpush1.msra.mxu0 0.0
    %4875 = vmatprep.subr.mxu0 0.0
    %4876 = vmatpush1.msra.mxu0 0.0
    %4877 = vmatprep.subr.mxu0 0.0
    %4878 = vmatpush1.msra.mxu0 0.0
    %4879 = vmatprep.subr.mxu0 0.0
    %4880 = vmatpush1.msra.mxu0 0.0
    %4881 = vmatprep.mubr.f32.mxu0 0.0
    %4882 = vmatmul.mubr.f32.gmra.mrb[0].mxu0 %v4812
    %v4883 = vpop.f32.mrb[0].mxu0
    %v4884 = vadd.f32 0.0, %v4883
    %v4885 = vpop.f32.mrb[0].mxu0
    %4886 = vmatprep.mubr.f32.mxu0 0.0
    %4887 = vmatmul.mubr.f32.gmra.mrb[0].mxu0 %v4815
    %v4888 = vpop.f32.mrb[0].mxu0
    %v4889 = vadd.f32 0.0, %v4888
    %v4890 = vpop.f32.mrb[0].mxu0
    %4891 = vdwg.mxu0
    %s4892 = scalar_lea.vmem %s17, 32
    %v4893 = vld [vmem:[%s4892] sm:$0xff]
    %s4894 = scalar_lea.vmem %s11, 160
    %v4895 = vld [vmem:[%s4894] sm:$0xff]
    %v4896 = vld [vmem:[%s4894 + $0x8] sm:$0xff]
    %v4897 = vld [vmem:[%s4894 + $0x10] sm:$0xff]
    %v4898 = vld [vmem:[%s4894 + $0x18] sm:$0xff]
    %s4899 = scalar_lea.vmem %s14, 5
    %v4900 = vld [vmem:[%s4899] sm:$0x1]
    %v4902 = vlaneseq
    %v4903 = vshrl.u32 %v4902, 7
    %v4904 = vsub.s32 0, %v4903
    %v4905 = vrot.slane %v4900, %v4904
    %4907 = vmatprep.subr.mxu0 0.0
    %4908 = vmatpush1.msra.mxu0 %v4895
    %4909 = vmatprep.subr.mxu0 0.0
    %4910 = vmatpush1.msra.mxu0 %v4896
    %4911 = vmatprep.subr.mxu0 0.0
    %4912 = vmatpush1.msra.mxu0 %v4897
    %4913 = vmatprep.subr.mxu0 0.0
    %4914 = vmatpush1.msra.mxu0 %v4898
    %4915 = vmatprep.subr.mxu0 0.0
    %4916 = vmatpush1.msra.mxu0 0.0
    %4917 = vmatprep.subr.mxu0 0.0
    %4918 = vmatpush1.msra.mxu0 0.0
    %4919 = vmatprep.subr.mxu0 0.0
    %4920 = vmatpush1.msra.mxu0 0.0
    %4921 = vmatprep.subr.mxu0 0.0
    %4922 = vmatpush1.msra.mxu0 0.0
    %4923 = vmatprep.subr.mxu0 0.0
    %4924 = vmatpush1.msra.mxu0 0.0
    %4925 = vmatprep.subr.mxu0 0.0
    %4926 = vmatpush1.msra.mxu0 0.0
    %4927 = vmatprep.subr.mxu0 0.0
    %4928 = vmatpush1.msra.mxu0 0.0
    %4929 = vmatprep.subr.mxu0 0.0
    %4930 = vmatpush1.msra.mxu0 0.0
    %4931 = vmatprep.subr.mxu0 0.0
    %4932 = vmatpush1.msra.mxu0 0.0
    %4933 = vmatprep.subr.mxu0 0.0
    %4934 = vmatpush1.msra.mxu0 0.0
    %4935 = vmatprep.subr.mxu0 0.0
    %4936 = vmatpush1.msra.mxu0 0.0
    %4937 = vmatprep.subr.mxu0 0.0
    %4938 = vmatpush1.msra.mxu0 0.0
    %4939 = vmatprep.subr.mxu0 0.0
    %4940 = vmatpush1.msra.mxu0 0.0
    %4941 = vmatprep.subr.mxu0 0.0
    %4942 = vmatpush1.msra.mxu0 0.0
    %4943 = vmatprep.subr.mxu0 0.0
    %4944 = vmatpush1.msra.mxu0 0.0
    %4945 = vmatprep.subr.mxu0 0.0
    %4946 = vmatpush1.msra.mxu0 0.0
    %4947 = vmatprep.subr.mxu0 0.0
    %4948 = vmatpush1.msra.mxu0 0.0
    %4949 = vmatprep.subr.mxu0 0.0
    %4950 = vmatpush1.msra.mxu0 0.0
    %4951 = vmatprep.subr.mxu0 0.0
    %4952 = vmatpush1.msra.mxu0 0.0
    %4953 = vmatprep.subr.mxu0 0.0
    %4954 = vmatpush1.msra.mxu0 0.0
    %4955 = vmatprep.subr.mxu0 0.0
    %4956 = vmatpush1.msra.mxu0 0.0
    %4957 = vmatprep.subr.mxu0 0.0
    %4958 = vmatpush1.msra.mxu0 0.0
    %4959 = vmatprep.subr.mxu0 0.0
    %4960 = vmatpush1.msra.mxu0 0.0
    %4961 = vmatprep.subr.mxu0 0.0
    %4962 = vmatpush1.msra.mxu0 0.0
    %4963 = vmatprep.subr.mxu0 0.0
    %4964 = vmatpush1.msra.mxu0 0.0
    %4965 = vmatprep.subr.mxu0 0.0
    %4966 = vmatpush1.msra.mxu0 0.0
    %4967 = vmatprep.subr.mxu0 0.0
    %4968 = vmatpush1.msra.mxu0 0.0
    %4969 = vmatprep.subr.mxu0 0.0
    %4970 = vmatpush1.msra.mxu0 0.0
    %4971 = vmatprep.mubr.f32.mxu0 0.0
    %4972 = vmatmul.mubr.f32.gmra.mrb[0].mxu0 %v4436
    %v4973 = vpop.f32.mrb[0].mxu0
    %v4974 = vadd.f32 %v4905, %v4973
    %v4975 = vpop.f32.mrb[0].mxu0
    %4976 = vmatprep.mubr.f32.mxu0 0.0
    %4977 = vmatmul.mubr.f32.gmra.mrb[0].mxu0 %v4439
    %v4978 = vpop.f32.mrb[0].mxu0
    %v4979 = vadd.f32 %v4905, %v4978
    %v4980 = vpop.f32.mrb[0].mxu0
    %4981 = vdwg.mxu0
    %s4982 = scalar_lea.vmem %s12, 160
    %v4983 = vld [vmem:[%s4982] sm:$0xff]
    %v4984 = vld [vmem:[%s4982 + $0x8] sm:$0xff]
    %v4985 = vld [vmem:[%s4982 + $0x10] sm:$0xff]
    %v4986 = vld [vmem:[%s4982 + $0x18] sm:$0xff]
    %s4987 = scalar_lea.vmem %s15, 5
    %v4988 = vld [vmem:[%s4987] sm:$0x1]
    %v4990 = vlaneseq
    %v4991 = vshrl.u32 %v4990, 7
    %v4992 = vsub.s32 0, %v4991
    %v4993 = vrot.slane %v4988, %v4992
    %4995 = vmatprep.subr.mxu0 0.0
    %4996 = vmatpush1.msra.mxu0 %v4983
    %4997 = vmatprep.subr.mxu0 0.0
    %4998 = vmatpush1.msra.mxu0 %v4984
    %4999 = vmatprep.subr.mxu0 0.0
    %5000 = vmatpush1.msra.mxu0 %v4985
    %5001 = vmatprep.subr.mxu0 0.0
    %5002 = vmatpush1.msra.mxu0 %v4986
    %5003 = vmatprep.subr.mxu0 0.0
    %5004 = vmatpush1.msra.mxu0 0.0
    %5005 = vmatprep.subr.mxu0 0.0
    %5006 = vmatpush1.msra.mxu0 0.0
    %5007 = vmatprep.subr.mxu0 0.0
    %5008 = vmatpush1.msra.mxu0 0.0
    %5009 = vmatprep.subr.mxu0 0.0
    %5010 = vmatpush1.msra.mxu0 0.0
    %5011 = vmatprep.subr.mxu0 0.0
    %5012 = vmatpush1.msra.mxu0 0.0
    %5013 = vmatprep.subr.mxu0 0.0
    %5014 = vmatpush1.msra.mxu0 0.0
    %5015 = vmatprep.subr.mxu0 0.0
    %5016 = vmatpush1.msra.mxu0 0.0
    %5017 = vmatprep.subr.mxu0 0.0
    %5018 = vmatpush1.msra.mxu0 0.0
    %5019 = vmatprep.subr.mxu0 0.0
    %5020 = vmatpush1.msra.mxu0 0.0
    %5021 = vmatprep.subr.mxu0 0.0
    %5022 = vmatpush1.msra.mxu0 0.0
    %5023 = vmatprep.subr.mxu0 0.0
    %5024 = vmatpush1.msra.mxu0 0.0
    %5025 = vmatprep.subr.mxu0 0.0
    %5026 = vmatpush1.msra.mxu0 0.0
    %5027 = vmatprep.subr.mxu0 0.0
    %5028 = vmatpush1.msra.mxu0 0.0
    %5029 = vmatprep.subr.mxu0 0.0
    %5030 = vmatpush1.msra.mxu0 0.0
    %5031 = vmatprep.subr.mxu0 0.0
    %5032 = vmatpush1.msra.mxu0 0.0
    %5033 = vmatprep.subr.mxu0 0.0
    %5034 = vmatpush1.msra.mxu0 0.0
    %5035 = vmatprep.subr.mxu0 0.0
    %5036 = vmatpush1.msra.mxu0 0.0
    %5037 = vmatprep.subr.mxu0 0.0
    %5038 = vmatpush1.msra.mxu0 0.0
    %5039 = vmatprep.subr.mxu0 0.0
    %5040 = vmatpush1.msra.mxu0 0.0
    %5041 = vmatprep.subr.mxu0 0.0
    %5042 = vmatpush1.msra.mxu0 0.0
    %5043 = vmatprep.subr.mxu0 0.0
    %5044 = vmatpush1.msra.mxu0 0.0
    %5045 = vmatprep.subr.mxu0 0.0
    %5046 = vmatpush1.msra.mxu0 0.0
    %5047 = vmatprep.subr.mxu0 0.0
    %5048 = vmatpush1.msra.mxu0 0.0
    %5049 = vmatprep.subr.mxu0 0.0
    %5050 = vmatpush1.msra.mxu0 0.0
    %5051 = vmatprep.subr.mxu0 0.0
    %5052 = vmatpush1.msra.mxu0 0.0
    %5053 = vmatprep.subr.mxu0 0.0
    %5054 = vmatpush1.msra.mxu0 0.0
    %5055 = vmatprep.subr.mxu0 0.0
    %5056 = vmatpush1.msra.mxu0 0.0
    %5057 = vmatprep.subr.mxu0 0.0
    %5058 = vmatpush1.msra.mxu0 0.0
    %5059 = vmatprep.mubr.f32.mxu0 0.0
    %5060 = vmatmul.mubr.f32.gmra.mrb[0].mxu0 %v4436
    %v5061 = vpop.f32.mrb[0].mxu0
    %v5062 = vadd.f32 %v4993, %v5061
    %v5063 = vpop.f32.mrb[0].mxu0
    %5064 = vmatprep.mubr.f32.mxu0 0.0
    %5065 = vmatmul.mubr.f32.gmra.mrb[0].mxu0 %v4439
    %v5066 = vpop.f32.mrb[0].mxu0
    %v5067 = vadd.f32 %v4993, %v5066
    %v5068 = vpop.f32.mrb[0].mxu0
    %5069 = vdwg.mxu0
    %s5070 = scalar_lea.vmem %s13, 160
    %v5071 = vld [vmem:[%s5070] sm:$0xff]
    %v5072 = vld [vmem:[%s5070 + $0x8] sm:$0xff]
    %v5073 = vld [vmem:[%s5070 + $0x10] sm:$0xff]
    %v5074 = vld [vmem:[%s5070 + $0x18] sm:$0xff]
    %s5075 = scalar_lea.vmem %s16, 5
    %v5076 = vld [vmem:[%s5075] sm:$0x1]
    %v5078 = vlaneseq
    %v5079 = vshrl.u32 %v5078, 7
    %v5080 = vsub.s32 0, %v5079
    %v5081 = vrot.slane %v5076, %v5080
    %5083 = vmatprep.subr.mxu0 0.0
    %5084 = vmatpush1.msra.mxu0 %v5071
    %5085 = vmatprep.subr.mxu0 0.0
    %5086 = vmatpush1.msra.mxu0 %v5072
    %5087 = vmatprep.subr.mxu0 0.0
    %5088 = vmatpush1.msra.mxu0 %v5073
    %5089 = vmatprep.subr.mxu0 0.0
    %5090 = vmatpush1.msra.mxu0 %v5074
    %5091 = vmatprep.subr.mxu0 0.0
    %5092 = vmatpush1.msra.mxu0 0.0
    %5093 = vmatprep.subr.mxu0 0.0
    %5094 = vmatpush1.msra.mxu0 0.0
    %5095 = vmatprep.subr.mxu0 0.0
    %5096 = vmatpush1.msra.mxu0 0.0
    %5097 = vmatprep.subr.mxu0 0.0
    %5098 = vmatpush1.msra.mxu0 0.0
    %5099 = vmatprep.subr.mxu0 0.0
    %5100 = vmatpush1.msra.mxu0 0.0
    %5101 = vmatprep.subr.mxu0 0.0
    %5102 = vmatpush1.msra.mxu0 0.0
    %5103 = vmatprep.subr.mxu0 0.0
    %5104 = vmatpush1.msra.mxu0 0.0
    %5105 = vmatprep.subr.mxu0 0.0
    %5106 = vmatpush1.msra.mxu0 0.0
    %5107 = vmatprep.subr.mxu0 0.0
    %5108 = vmatpush1.msra.mxu0 0.0
    %5109 = vmatprep.subr.mxu0 0.0
    %5110 = vmatpush1.msra.mxu0 0.0
    %5111 = vmatprep.subr.mxu0 0.0
    %5112 = vmatpush1.msra.mxu0 0.0
    %5113 = vmatprep.subr.mxu0 0.0
    %5114 = vmatpush1.msra.mxu0 0.0
    %5115 = vmatprep.subr.mxu0 0.0
    %5116 = vmatpush1.msra.mxu0 0.0
    %5117 = vmatprep.subr.mxu0 0.0
    %5118 = vmatpush1.msra.mxu0 0.0
    %5119 = vmatprep.subr.mxu0 0.0
    %5120 = vmatpush1.msra.mxu0 0.0
    %5121 = vmatprep.subr.mxu0 0.0
    %5122 = vmatpush1.msra.mxu0 0.0
    %5123 = vmatprep.subr.mxu0 0.0
    %5124 = vmatpush1.msra.mxu0 0.0
    %5125 = vmatprep.subr.mxu0 0.0
    %5126 = vmatpush1.msra.mxu0 0.0
    %5127 = vmatprep.subr.mxu0 0.0
    %5128 = vmatpush1.msra.mxu0 0.0
    %5129 = vmatprep.subr.mxu0 0.0
    %5130 = vmatpush1.msra.mxu0 0.0
    %5131 = vmatprep.subr.mxu0 0.0
    %5132 = vmatpush1.msra.mxu0 0.0
    %5133 = vmatprep.subr.mxu0 0.0
    %5134 = vmatpush1.msra.mxu0 0.0
    %5135 = vmatprep.subr.mxu0 0.0
    %5136 = vmatpush1.msra.mxu0 0.0
    %5137 = vmatprep.subr.mxu0 0.0
    %5138 = vmatpush1.msra.mxu0 0.0
    %5139 = vmatprep.subr.mxu0 0.0
    %5140 = vmatpush1.msra.mxu0 0.0
    %5141 = vmatprep.subr.mxu0 0.0
    %5142 = vmatpush1.msra.mxu0 0.0
    %5143 = vmatprep.subr.mxu0 0.0
    %5144 = vmatpush1.msra.mxu0 0.0
    %5145 = vmatprep.subr.mxu0 0.0
    %5146 = vmatpush1.msra.mxu0 0.0
    %5147 = vmatprep.mubr.f32.mxu0 0.0
    %5148 = vmatmul.mubr.f32.gmra.mrb[0].mxu0 %v4436
    %v5149 = vpop.f32.mrb[0].mxu0
    %v5150 = vadd.f32 %v5081, %v5149
    %v5151 = vpop.f32.mrb[0].mxu0
    %5152 = vmatprep.mubr.f32.mxu0 0.0
    %5153 = vmatmul.mubr.f32.gmra.mrb[0].mxu0 %v4439
    %v5154 = vpop.f32.mrb[0].mxu0
    %v5155 = vadd.f32 %v5081, %v5154
    %v5156 = vpop.f32.mrb[0].mxu0
    %5157 = vdwg.mxu0
    %v5159 = vsel %vm1262, %v4974, 0
    %v5162 = vsel %vm1262, %v4979, 0
    %v5165 = vsel %vm1262, %v5062, 0
    %v5168 = vsel %vm1262, %v5067, 0
    %5170 = vmatprep.subr.mxu0 0.0
    %5171 = vmatpush1.xpose.msra.mxu0 %v5165
    %5172 = vmatprep.subr.mxu0 0.0
    %5173 = vmatpush1.xpose.msra.mxu0 %v5168
    %5174 = vmatprep.subr.mxu0 0.0
    %5175 = vmatpush1.xpose.msra.mxu0 0.0
    %5176 = vmatprep.subr.mxu0 0.0
    %5177 = vmatpush1.xpose.msra.mxu0 0.0
    %5178 = vmatprep.subr.mxu0 0.0
    %5179 = vmatpush1.xpose.msra.mxu0 0.0
    %5180 = vmatprep.subr.mxu0 0.0
    %5181 = vmatpush1.xpose.msra.mxu0 0.0
    %5182 = vmatprep.subr.mxu0 0.0
    %5183 = vmatpush1.xpose.msra.mxu0 0.0
    %5184 = vmatprep.subr.mxu0 0.0
    %5185 = vmatpush1.xpose.msra.mxu0 0.0
    %5186 = vmatprep.subr.mxu0 0.0
    %5187 = vmatpush1.xpose.msra.mxu0 0.0
    %5188 = vmatprep.subr.mxu0 0.0
    %5189 = vmatpush1.xpose.msra.mxu0 0.0
    %5190 = vmatprep.subr.mxu0 0.0
    %5191 = vmatpush1.xpose.msra.mxu0 0.0
    %5192 = vmatprep.subr.mxu0 0.0
    %5193 = vmatpush1.xpose.msra.mxu0 0.0
    %5194 = vmatprep.subr.mxu0 0.0
    %5195 = vmatpush1.xpose.msra.mxu0 0.0
    %5196 = vmatprep.subr.mxu0 0.0
    %5197 = vmatpush1.xpose.msra.mxu0 0.0
    %5198 = vmatprep.subr.mxu0 0.0
    %5199 = vmatpush1.xpose.msra.mxu0 0.0
    %5200 = vmatprep.subr.mxu0 0.0
    %5201 = vmatpush1.xpose.msra.mxu0 0.0
    %5202 = vmatprep.subr.mxu0 0.0
    %5203 = vmatpush1.xpose.msra.mxu0 0.0
    %5204 = vmatprep.subr.mxu0 0.0
    %5205 = vmatpush1.xpose.msra.mxu0 0.0
    %5206 = vmatprep.subr.mxu0 0.0
    %5207 = vmatpush1.xpose.msra.mxu0 0.0
    %5208 = vmatprep.subr.mxu0 0.0
    %5209 = vmatpush1.xpose.msra.mxu0 0.0
    %5210 = vmatprep.subr.mxu0 0.0
    %5211 = vmatpush1.xpose.msra.mxu0 0.0
    %5212 = vmatprep.subr.mxu0 0.0
    %5213 = vmatpush1.xpose.msra.mxu0 0.0
    %5214 = vmatprep.subr.mxu0 0.0
    %5215 = vmatpush1.xpose.msra.mxu0 0.0
    %5216 = vmatprep.subr.mxu0 0.0
    %5217 = vmatpush1.xpose.msra.mxu0 0.0
    %5218 = vmatprep.subr.mxu0 0.0
    %5219 = vmatpush1.xpose.msra.mxu0 0.0
    %5220 = vmatprep.subr.mxu0 0.0
    %5221 = vmatpush1.xpose.msra.mxu0 0.0
    %5222 = vmatprep.subr.mxu0 0.0
    %5223 = vmatpush1.xpose.msra.mxu0 0.0
    %5224 = vmatprep.subr.mxu0 0.0
    %5225 = vmatpush1.xpose.msra.mxu0 0.0
    %5226 = vmatprep.subr.mxu0 0.0
    %5227 = vmatpush1.xpose.msra.mxu0 0.0
    %5228 = vmatprep.subr.mxu0 0.0
    %5229 = vmatpush1.xpose.msra.mxu0 0.0
    %5230 = vmatprep.subr.mxu0 0.0
    %5231 = vmatpush1.xpose.msra.mxu0 0.0
    %5232 = vmatprep.subr.mxu0 0.0
    %5233 = vmatpush1.xpose.msra.mxu0 0.0
    %5234 = vmatprep.mubr.f32.mxu0 0.0
    %5235 = vmatmul.mubr.f32.gmra.mrb[0].mxu0 %v5159
    %v5236 = vpop.f32.mrb[0].mxu0
    %v5237 = vadd.f32 0.0, %v5236
    %v5238 = vpop.f32.mrb[0].mxu0
    %5239 = vmatprep.mubr.f32.mxu0 0.0
    %5240 = vmatmul.mubr.f32.gmra.mrb[0].mxu0 %v5162
    %v5241 = vpop.f32.mrb[0].mxu0
    %v5242 = vadd.f32 0.0, %v5241
    %v5243 = vpop.f32.mrb[0].mxu0
    %5244 = vdwg.mxu0
    %v5245 = vmul.f32 %v5237, 0.35355338
    %v5246 = vmul.f32 %v5242, 0.35355338
    %v5247 = vadd.f32 %v5245, %v78
    %v5248 = vadd.f32 %v5246, %v79
    %v5249 = vsel %vm1354, %v5247, -inf
    %5250 = vmax.xlane.f32.xlu0 %v5249
    %v5251 = vpop.xlane.xlu0 %5250
    %v5252 = vsel %vm1354, %v5248, -inf
    %5253 = vmax.xlane.f32.xlu0 %v5252
    %v5254 = vpop.xlane.xlu0 %5253
    %v5255 = vsub.f32 %v5247, %v5251
    %v5256 = vsub.f32 %v5248, %v5254
    %v5257 = vmul.f32 %v5255, 1.442695
    %v5258 = vpow.pop %v5257
    %v5259 = vmul.f32 %v5256, 1.442695
    %v5260 = vpow.pop %v5259
    %v5261 = vsel %vm1354, %v5258, 0.0
    %5262 = vadd.xlane.f32.xlu0 %v5261
    %v5263 = vpop.xlane.xlu0 %5262
    %v5264 = vsel %vm1354, %v5260, 0.0
    %5265 = vadd.xlane.f32.xlu0 %v5264
    %v5266 = vpop.xlane.xlu0 %5265
    %v5267 = vrcp.pop %v5263
    %v5268 = vrcp.pop %v5266
    %v5269 = vmul.f32 %v5263, %v5267
    %v5270 = vmul.f32 %v5266, %v5268
    %v5271 = vsub.f32 2.0, %v5269
    %v5272 = vsub.f32 2.0, %v5270
    %v5273 = vmul.f32 %v5267, %v5271
    %v5274 = vmul.f32 %v5268, %v5272
    %v5275 = vmul.f32 %v5258, %v5273
    %v5276 = vmul.f32 %v5260, %v5274
    %v5278 = vsel %vm1354, %v5275, 0
    %v5281 = vsel %vm1354, %v5276, 0
    %5283 = vmatprep.subr.mxu0 0.0
    %5284 = vmatpush1.msra.mxu0 %v5150
    %5285 = vmatprep.subr.mxu0 0.0
    %5286 = vmatpush1.msra.mxu0 %v5155
    %5287 = vmatprep.subr.mxu0 0.0
    %5288 = vmatpush1.msra.mxu0 0.0
    %5289 = vmatprep.subr.mxu0 0.0
    %5290 = vmatpush1.msra.mxu0 0.0
    %5291 = vmatprep.subr.mxu0 0.0
    %5292 = vmatpush1.msra.mxu0 0.0
    %5293 = vmatprep.subr.mxu0 0.0
    %5294 = vmatpush1.msra.mxu0 0.0
    %5295 = vmatprep.subr.mxu0 0.0
    %5296 = vmatpush1.msra.mxu0 0.0
    %5297 = vmatprep.subr.mxu0 0.0
    %5298 = vmatpush1.msra.mxu0 0.0
    %5299 = vmatprep.subr.mxu0 0.0
    %5300 = vmatpush1.msra.mxu0 0.0
    %5301 = vmatprep.subr.mxu0 0.0
    %5302 = vmatpush1.msra.mxu0 0.0
    %5303 = vmatprep.subr.mxu0 0.0
    %5304 = vmatpush1.msra.mxu0 0.0
    %5305 = vmatprep.subr.mxu0 0.0
    %5306 = vmatpush1.msra.mxu0 0.0
    %5307 = vmatprep.subr.mxu0 0.0
    %5308 = vmatpush1.msra.mxu0 0.0
    %5309 = vmatprep.subr.mxu0 0.0
    %5310 = vmatpush1.msra.mxu0 0.0
    %5311 = vmatprep.subr.mxu0 0.0
    %5312 = vmatpush1.msra.mxu0 0.0
    %5313 = vmatprep.subr.mxu0 0.0
    %5314 = vmatpush1.msra.mxu0 0.0
    %5315 = vmatprep.subr.mxu0 0.0
    %5316 = vmatpush1.msra.mxu0 0.0
    %5317 = vmatprep.subr.mxu0 0.0
    %5318 = vmatpush1.msra.mxu0 0.0
    %5319 = vmatprep.subr.mxu0 0.0
    %5320 = vmatpush1.msra.mxu0 0.0
    %5321 = vmatprep.subr.mxu0 0.0
    %5322 = vmatpush1.msra.mxu0 0.0
    %5323 = vmatprep.subr.mxu0 0.0
    %5324 = vmatpush1.msra.mxu0 0.0
    %5325 = vmatprep.subr.mxu0 0.0
    %5326 = vmatpush1.msra.mxu0 0.0
    %5327 = vmatprep.subr.mxu0 0.0
    %5328 = vmatpush1.msra.mxu0 0.0
    %5329 = vmatprep.subr.mxu0 0.0
    %5330 = vmatpush1.msra.mxu0 0.0
    %5331 = vmatprep.subr.mxu0 0.0
    %5332 = vmatpush1.msra.mxu0 0.0
    %5333 = vmatprep.subr.mxu0 0.0
    %5334 = vmatpush1.msra.mxu0 0.0
    %5335 = vmatprep.subr.mxu0 0.0
    %5336 = vmatpush1.msra.mxu0 0.0
    %5337 = vmatprep.subr.mxu0 0.0
    %5338 = vmatpush1.msra.mxu0 0.0
    %5339 = vmatprep.subr.mxu0 0.0
    %5340 = vmatpush1.msra.mxu0 0.0
    %5341 = vmatprep.subr.mxu0 0.0
    %5342 = vmatpush1.msra.mxu0 0.0
    %5343 = vmatprep.subr.mxu0 0.0
    %5344 = vmatpush1.msra.mxu0 0.0
    %5345 = vmatprep.subr.mxu0 0.0
    %5346 = vmatpush1.msra.mxu0 0.0
    %5347 = vmatprep.mubr.f32.mxu0 0.0
    %5348 = vmatmul.mubr.f32.gmra.mrb[0].mxu0 %v5278
    %v5349 = vpop.f32.mrb[0].mxu0
    %v5350 = vadd.f32 0.0, %v5349
    %v5351 = vpop.f32.mrb[0].mxu0
    %5352 = vmatprep.mubr.f32.mxu0 0.0
    %5353 = vmatmul.mubr.f32.gmra.mrb[0].mxu0 %v5281
    %v5354 = vpop.f32.mrb[0].mxu0
    %v5355 = vadd.f32 0.0, %v5354
    %v5356 = vpop.f32.mrb[0].mxu0
    %5357 = vdwg.mxu0
    %s5358 = scalar_lea.vmem %s17, 40
    %v5359 = vld [vmem:[%s5358] sm:$0xff]
    %v5361 = vsel %vm1262, %v5350, 0
    %v5364 = vsel %vm1262, %v5355, 0
    %5366 = vmatprep.subr.mxu0 0.0
    %5367 = vmatpush1.msra.mxu0 %v5359
    %5368 = vmatprep.subr.mxu0 0.0
    %5369 = vmatpush1.msra.mxu0 0.0
    %5370 = vmatprep.subr.mxu0 0.0
    %5371 = vmatpush1.msra.mxu0 0.0
    %5372 = vmatprep.subr.mxu0 0.0
    %5373 = vmatpush1.msra.mxu0 0.0
    %5374 = vmatprep.subr.mxu0 0.0
    %5375 = vmatpush1.msra.mxu0 0.0
    %5376 = vmatprep.subr.mxu0 0.0
    %5377 = vmatpush1.msra.mxu0 0.0
    %5378 = vmatprep.subr.mxu0 0.0
    %5379 = vmatpush1.msra.mxu0 0.0
    %5380 = vmatprep.subr.mxu0 0.0
    %5381 = vmatpush1.msra.mxu0 0.0
    %5382 = vmatprep.subr.mxu0 0.0
    %5383 = vmatpush1.msra.mxu0 0.0
    %5384 = vmatprep.subr.mxu0 0.0
    %5385 = vmatpush1.msra.mxu0 0.0
    %5386 = vmatprep.subr.mxu0 0.0
    %5387 = vmatpush1.msra.mxu0 0.0
    %5388 = vmatprep.subr.mxu0 0.0
    %5389 = vmatpush1.msra.mxu0 0.0
    %5390 = vmatprep.subr.mxu0 0.0
    %5391 = vmatpush1.msra.mxu0 0.0
    %5392 = vmatprep.subr.mxu0 0.0
    %5393 = vmatpush1.msra.mxu0 0.0
    %5394 = vmatprep.subr.mxu0 0.0
    %5395 = vmatpush1.msra.mxu0 0.0
    %5396 = vmatprep.subr.mxu0 0.0
    %5397 = vmatpush1.msra.mxu0 0.0
    %5398 = vmatprep.subr.mxu0 0.0
    %5399 = vmatpush1.msra.mxu0 0.0
    %5400 = vmatprep.subr.mxu0 0.0
    %5401 = vmatpush1.msra.mxu0 0.0
    %5402 = vmatprep.subr.mxu0 0.0
    %5403 = vmatpush1.msra.mxu0 0.0
    %5404 = vmatprep.subr.mxu0 0.0
    %5405 = vmatpush1.msra.mxu0 0.0
    %5406 = vmatprep.subr.mxu0 0.0
    %5407 = vmatpush1.msra.mxu0 0.0
    %5408 = vmatprep.subr.mxu0 0.0
    %5409 = vmatpush1.msra.mxu0 0.0
    %5410 = vmatprep.subr.mxu0 0.0
    %5411 = vmatpush1.msra.mxu0 0.0
    %5412 = vmatprep.subr.mxu0 0.0
    %5413 = vmatpush1.msra.mxu0 0.0
    %5414 = vmatprep.subr.mxu0 0.0
    %5415 = vmatpush1.msra.mxu0 0.0
    %5416 = vmatprep.subr.mxu0 0.0
    %5417 = vmatpush1.msra.mxu0 0.0
    %5418 = vmatprep.subr.mxu0 0.0
    %5419 = vmatpush1.msra.mxu0 0.0
    %5420 = vmatprep.subr.mxu0 0.0
    %5421 = vmatpush1.msra.mxu0 0.0
    %5422 = vmatprep.subr.mxu0 0.0
    %5423 = vmatpush1.msra.mxu0 0.0
    %5424 = vmatprep.subr.mxu0 0.0
    %5425 = vmatpush1.msra.mxu0 0.0
    %5426 = vmatprep.subr.mxu0 0.0
    %5427 = vmatpush1.msra.mxu0 0.0
    %5428 = vmatprep.subr.mxu0 0.0
    %5429 = vmatpush1.msra.mxu0 0.0
    %5430 = vmatprep.mubr.f32.mxu0 0.0
    %5431 = vmatmul.mubr.f32.gmra.mrb[0].mxu0 %v5361
    %v5432 = vpop.f32.mrb[0].mxu0
    %v5433 = vadd.f32 0.0, %v5432
    %v5434 = vpop.f32.mrb[0].mxu0
    %5435 = vmatprep.mubr.f32.mxu0 0.0
    %5436 = vmatmul.mubr.f32.gmra.mrb[0].mxu0 %v5364
    %v5437 = vpop.f32.mrb[0].mxu0
    %v5438 = vadd.f32 0.0, %v5437
    %v5439 = vpop.f32.mrb[0].mxu0
    %5440 = vdwg.mxu0
    %v5442 = vsel %vm1262, %v4884, 0
    %v5445 = vsel %vm1262, %v4889, 0
    %5447 = vmatprep.subr.mxu0 0.0
    %5448 = vmatpush1.msra.mxu0 %v4893
    %5449 = vmatprep.subr.mxu0 0.0
    %5450 = vmatpush1.msra.mxu0 0.0
    %5451 = vmatprep.subr.mxu0 0.0
    %5452 = vmatpush1.msra.mxu0 0.0
    %5453 = vmatprep.subr.mxu0 0.0
    %5454 = vmatpush1.msra.mxu0 0.0
    %5455 = vmatprep.subr.mxu0 0.0
    %5456 = vmatpush1.msra.mxu0 0.0
    %5457 = vmatprep.subr.mxu0 0.0
    %5458 = vmatpush1.msra.mxu0 0.0
    %5459 = vmatprep.subr.mxu0 0.0
    %5460 = vmatpush1.msra.mxu0 0.0
    %5461 = vmatprep.subr.mxu0 0.0
    %5462 = vmatpush1.msra.mxu0 0.0
    %5463 = vmatprep.subr.mxu0 0.0
    %5464 = vmatpush1.msra.mxu0 0.0
    %5465 = vmatprep.subr.mxu0 0.0
    %5466 = vmatpush1.msra.mxu0 0.0
    %5467 = vmatprep.subr.mxu0 0.0
    %5468 = vmatpush1.msra.mxu0 0.0
    %5469 = vmatprep.subr.mxu0 0.0
    %5470 = vmatpush1.msra.mxu0 0.0
    %5471 = vmatprep.subr.mxu0 0.0
    %5472 = vmatpush1.msra.mxu0 0.0
    %5473 = vmatprep.subr.mxu0 0.0
    %5474 = vmatpush1.msra.mxu0 0.0
    %5475 = vmatprep.subr.mxu0 0.0
    %5476 = vmatpush1.msra.mxu0 0.0
    %5477 = vmatprep.subr.mxu0 0.0
    %5478 = vmatpush1.msra.mxu0 0.0
    %5479 = vmatprep.subr.mxu0 0.0
    %5480 = vmatpush1.msra.mxu0 0.0
    %5481 = vmatprep.subr.mxu0 0.0
    %5482 = vmatpush1.msra.mxu0 0.0
    %5483 = vmatprep.subr.mxu0 0.0
    %5484 = vmatpush1.msra.mxu0 0.0
    %5485 = vmatprep.subr.mxu0 0.0
    %5486 = vmatpush1.msra.mxu0 0.0
    %5487 = vmatprep.subr.mxu0 0.0
    %5488 = vmatpush1.msra.mxu0 0.0
    %5489 = vmatprep.subr.mxu0 0.0
    %5490 = vmatpush1.msra.mxu0 0.0
    %5491 = vmatprep.subr.mxu0 0.0
    %5492 = vmatpush1.msra.mxu0 0.0
    %5493 = vmatprep.subr.mxu0 0.0
    %5494 = vmatpush1.msra.mxu0 0.0
    %5495 = vmatprep.subr.mxu0 0.0
    %5496 = vmatpush1.msra.mxu0 0.0
    %5497 = vmatprep.subr.mxu0 0.0
    %5498 = vmatpush1.msra.mxu0 0.0
    %5499 = vmatprep.subr.mxu0 0.0
    %5500 = vmatpush1.msra.mxu0 0.0
    %5501 = vmatprep.subr.mxu0 0.0
    %5502 = vmatpush1.msra.mxu0 0.0
    %5503 = vmatprep.subr.mxu0 0.0
    %5504 = vmatpush1.msra.mxu0 0.0
    %5505 = vmatprep.subr.mxu0 0.0
    %5506 = vmatpush1.msra.mxu0 0.0
    %5507 = vmatprep.subr.mxu0 0.0
    %5508 = vmatpush1.msra.mxu0 0.0
    %5509 = vmatprep.subr.mxu0 0.0
    %5510 = vmatpush1.msra.mxu0 0.0
    %5511 = vmatprep.mubr.f32.mxu0 0.0
    %5512 = vmatmul.mubr.f32.gmra.mrb[0].mxu0 %v5442
    %v5513 = vpop.f32.mrb[0].mxu0
    %v5514 = vadd.f32 %v5433, %v5513
    %v5515 = vpop.f32.mrb[0].mxu0
    %5516 = vmatprep.mubr.f32.mxu0 0.0
    %5517 = vmatmul.mubr.f32.gmra.mrb[0].mxu0 %v5445
    %v5518 = vpop.f32.mrb[0].mxu0
    %v5519 = vadd.f32 %v5438, %v5518
    %v5520 = vpop.f32.mrb[0].mxu0
    %5521 = vdwg.mxu0
    %s5522 = scalar_lea.vmem %s11, 192
    %v5523 = vld [vmem:[%s5522] sm:$0xff]
    %v5524 = vld [vmem:[%s5522 + $0x8] sm:$0xff]
    %v5525 = vld [vmem:[%s5522 + $0x10] sm:$0xff]
    %v5526 = vld [vmem:[%s5522 + $0x18] sm:$0xff]
    %s5527 = scalar_lea.vmem %s14, 6
    %v5528 = vld [vmem:[%s5527] sm:$0x1]
    %v5530 = vlaneseq
    %v5531 = vshrl.u32 %v5530, 7
    %v5532 = vsub.s32 0, %v5531
    %v5533 = vrot.slane %v5528, %v5532
    %5535 = vmatprep.subr.mxu0 0.0
    %5536 = vmatpush1.msra.mxu0 %v5523
    %5537 = vmatprep.subr.mxu0 0.0
    %5538 = vmatpush1.msra.mxu0 %v5524
    %5539 = vmatprep.subr.mxu0 0.0
    %5540 = vmatpush1.msra.mxu0 %v5525
    %5541 = vmatprep.subr.mxu0 0.0
    %5542 = vmatpush1.msra.mxu0 %v5526
    %5543 = vmatprep.subr.mxu0 0.0
    %5544 = vmatpush1.msra.mxu0 0.0
    %5545 = vmatprep.subr.mxu0 0.0
    %5546 = vmatpush1.msra.mxu0 0.0
    %5547 = vmatprep.subr.mxu0 0.0
    %5548 = vmatpush1.msra.mxu0 0.0
    %5549 = vmatprep.subr.mxu0 0.0
    %5550 = vmatpush1.msra.mxu0 0.0
    %5551 = vmatprep.subr.mxu0 0.0
    %5552 = vmatpush1.msra.mxu0 0.0
    %5553 = vmatprep.subr.mxu0 0.0
    %5554 = vmatpush1.msra.mxu0 0.0
    %5555 = vmatprep.subr.mxu0 0.0
    %5556 = vmatpush1.msra.mxu0 0.0
    %5557 = vmatprep.subr.mxu0 0.0
    %5558 = vmatpush1.msra.mxu0 0.0
    %5559 = vmatprep.subr.mxu0 0.0
    %5560 = vmatpush1.msra.mxu0 0.0
    %5561 = vmatprep.subr.mxu0 0.0
    %5562 = vmatpush1.msra.mxu0 0.0
    %5563 = vmatprep.subr.mxu0 0.0
    %5564 = vmatpush1.msra.mxu0 0.0
    %5565 = vmatprep.subr.mxu0 0.0
    %5566 = vmatpush1.msra.mxu0 0.0
    %5567 = vmatprep.subr.mxu0 0.0
    %5568 = vmatpush1.msra.mxu0 0.0
    %5569 = vmatprep.subr.mxu0 0.0
    %5570 = vmatpush1.msra.mxu0 0.0
    %5571 = vmatprep.subr.mxu0 0.0
    %5572 = vmatpush1.msra.mxu0 0.0
    %5573 = vmatprep.subr.mxu0 0.0
    %5574 = vmatpush1.msra.mxu0 0.0
    %5575 = vmatprep.subr.mxu0 0.0
    %5576 = vmatpush1.msra.mxu0 0.0
    %5577 = vmatprep.subr.mxu0 0.0
    %5578 = vmatpush1.msra.mxu0 0.0
    %5579 = vmatprep.subr.mxu0 0.0
    %5580 = vmatpush1.msra.mxu0 0.0
    %5581 = vmatprep.subr.mxu0 0.0
    %5582 = vmatpush1.msra.mxu0 0.0
    %5583 = vmatprep.subr.mxu0 0.0
    %5584 = vmatpush1.msra.mxu0 0.0
    %5585 = vmatprep.subr.mxu0 0.0
    %5586 = vmatpush1.msra.mxu0 0.0
    %5587 = vmatprep.subr.mxu0 0.0
    %5588 = vmatpush1.msra.mxu0 0.0
    %5589 = vmatprep.subr.mxu0 0.0
    %5590 = vmatpush1.msra.mxu0 0.0
    %5591 = vmatprep.subr.mxu0 0.0
    %5592 = vmatpush1.msra.mxu0 0.0
    %5593 = vmatprep.subr.mxu0 0.0
    %5594 = vmatpush1.msra.mxu0 0.0
    %5595 = vmatprep.subr.mxu0 0.0
    %5596 = vmatpush1.msra.mxu0 0.0
    %5597 = vmatprep.subr.mxu0 0.0
    %5598 = vmatpush1.msra.mxu0 0.0
    %5599 = vmatprep.mubr.f32.mxu0 0.0
    %5600 = vmatmul.mubr.f32.gmra.mrb[0].mxu0 %v4436
    %v5601 = vpop.f32.mrb[0].mxu0
    %v5602 = vadd.f32 %v5533, %v5601
    %v5603 = vpop.f32.mrb[0].mxu0
    %5604 = vmatprep.mubr.f32.mxu0 0.0
    %5605 = vmatmul.mubr.f32.gmra.mrb[0].mxu0 %v4439
    %v5606 = vpop.f32.mrb[0].mxu0
    %v5607 = vadd.f32 %v5533, %v5606
    %v5608 = vpop.f32.mrb[0].mxu0
    %5609 = vdwg.mxu0
    %s5610 = scalar_lea.vmem %s12, 192
    %v5611 = vld [vmem:[%s5610] sm:$0xff]
    %v5612 = vld [vmem:[%s5610 + $0x8] sm:$0xff]
    %v5613 = vld [vmem:[%s5610 + $0x10] sm:$0xff]
    %v5614 = vld [vmem:[%s5610 + $0x18] sm:$0xff]
    %s5615 = scalar_lea.vmem %s15, 6
    %v5616 = vld [vmem:[%s5615] sm:$0x1]
    %v5618 = vlaneseq
    %v5619 = vshrl.u32 %v5618, 7
    %v5620 = vsub.s32 0, %v5619
    %v5621 = vrot.slane %v5616, %v5620
    %5623 = vmatprep.subr.mxu0 0.0
    %5624 = vmatpush1.msra.mxu0 %v5611
    %5625 = vmatprep.subr.mxu0 0.0
    %5626 = vmatpush1.msra.mxu0 %v5612
    %5627 = vmatprep.subr.mxu0 0.0
    %5628 = vmatpush1.msra.mxu0 %v5613
    %5629 = vmatprep.subr.mxu0 0.0
    %5630 = vmatpush1.msra.mxu0 %v5614
    %5631 = vmatprep.subr.mxu0 0.0
    %5632 = vmatpush1.msra.mxu0 0.0
    %5633 = vmatprep.subr.mxu0 0.0
    %5634 = vmatpush1.msra.mxu0 0.0
    %5635 = vmatprep.subr.mxu0 0.0
    %5636 = vmatpush1.msra.mxu0 0.0
    %5637 = vmatprep.subr.mxu0 0.0
    %5638 = vmatpush1.msra.mxu0 0.0
    %5639 = vmatprep.subr.mxu0 0.0
    %5640 = vmatpush1.msra.mxu0 0.0
    %5641 = vmatprep.subr.mxu0 0.0
    %5642 = vmatpush1.msra.mxu0 0.0
    %5643 = vmatprep.subr.mxu0 0.0
    %5644 = vmatpush1.msra.mxu0 0.0
    %5645 = vmatprep.subr.mxu0 0.0
    %5646 = vmatpush1.msra.mxu0 0.0
    %5647 = vmatprep.subr.mxu0 0.0
    %5648 = vmatpush1.msra.mxu0 0.0
    %5649 = vmatprep.subr.mxu0 0.0
    %5650 = vmatpush1.msra.mxu0 0.0
    %5651 = vmatprep.subr.mxu0 0.0
    %5652 = vmatpush1.msra.mxu0 0.0
    %5653 = vmatprep.subr.mxu0 0.0
    %5654 = vmatpush1.msra.mxu0 0.0
    %5655 = vmatprep.subr.mxu0 0.0
    %5656 = vmatpush1.msra.mxu0 0.0
    %5657 = vmatprep.subr.mxu0 0.0
    %5658 = vmatpush1.msra.mxu0 0.0
    %5659 = vmatprep.subr.mxu0 0.0
    %5660 = vmatpush1.msra.mxu0 0.0
    %5661 = vmatprep.subr.mxu0 0.0
    %5662 = vmatpush1.msra.mxu0 0.0
    %5663 = vmatprep.subr.mxu0 0.0
    %5664 = vmatpush1.msra.mxu0 0.0
    %5665 = vmatprep.subr.mxu0 0.0
    %5666 = vmatpush1.msra.mxu0 0.0
    %5667 = vmatprep.subr.mxu0 0.0
    %5668 = vmatpush1.msra.mxu0 0.0
    %5669 = vmatprep.subr.mxu0 0.0
    %5670 = vmatpush1.msra.mxu0 0.0
    %5671 = vmatprep.subr.mxu0 0.0
    %5672 = vmatpush1.msra.mxu0 0.0
    %5673 = vmatprep.subr.mxu0 0.0
    %5674 = vmatpush1.msra.mxu0 0.0
    %5675 = vmatprep.subr.mxu0 0.0
    %5676 = vmatpush1.msra.mxu0 0.0
    %5677 = vmatprep.subr.mxu0 0.0
    %5678 = vmatpush1.msra.mxu0 0.0
    %5679 = vmatprep.subr.mxu0 0.0
    %5680 = vmatpush1.msra.mxu0 0.0
    %5681 = vmatprep.subr.mxu0 0.0
    %5682 = vmatpush1.msra.mxu0 0.0
    %5683 = vmatprep.subr.mxu0 0.0
    %5684 = vmatpush1.msra.mxu0 0.0
    %5685 = vmatprep.subr.mxu0 0.0
    %5686 = vmatpush1.msra.mxu0 0.0
    %5687 = vmatprep.mubr.f32.mxu0 0.0
    %5688 = vmatmul.mubr.f32.gmra.mrb[0].mxu0 %v4436
    %v5689 = vpop.f32.mrb[0].mxu0
    %v5690 = vadd.f32 %v5621, %v5689
    %v5691 = vpop.f32.mrb[0].mxu0
    %5692 = vmatprep.mubr.f32.mxu0 0.0
    %5693 = vmatmul.mubr.f32.gmra.mrb[0].mxu0 %v4439
    %v5694 = vpop.f32.mrb[0].mxu0
    %v5695 = vadd.f32 %v5621, %v5694
    %v5696 = vpop.f32.mrb[0].mxu0
    %5697 = vdwg.mxu0
    %s5698 = scalar_lea.vmem %s13, 192
    %v5699 = vld [vmem:[%s5698] sm:$0xff]
    %v5700 = vld [vmem:[%s5698 + $0x8] sm:$0xff]
    %v5701 = vld [vmem:[%s5698 + $0x10] sm:$0xff]
    %v5702 = vld [vmem:[%s5698 + $0x18] sm:$0xff]
    %s5703 = scalar_lea.vmem %s16, 6
    %v5704 = vld [vmem:[%s5703] sm:$0x1]
    %v5706 = vlaneseq
    %v5707 = vshrl.u32 %v5706, 7
    %v5708 = vsub.s32 0, %v5707
    %v5709 = vrot.slane %v5704, %v5708
    %5711 = vmatprep.subr.mxu0 0.0
    %5712 = vmatpush1.msra.mxu0 %v5699
    %5713 = vmatprep.subr.mxu0 0.0
    %5714 = vmatpush1.msra.mxu0 %v5700
    %5715 = vmatprep.subr.mxu0 0.0
    %5716 = vmatpush1.msra.mxu0 %v5701
    %5717 = vmatprep.subr.mxu0 0.0
    %5718 = vmatpush1.msra.mxu0 %v5702
    %5719 = vmatprep.subr.mxu0 0.0
    %5720 = vmatpush1.msra.mxu0 0.0
    %5721 = vmatprep.subr.mxu0 0.0
    %5722 = vmatpush1.msra.mxu0 0.0
    %5723 = vmatprep.subr.mxu0 0.0
    %5724 = vmatpush1.msra.mxu0 0.0
    %5725 = vmatprep.subr.mxu0 0.0
    %5726 = vmatpush1.msra.mxu0 0.0
    %5727 = vmatprep.subr.mxu0 0.0
    %5728 = vmatpush1.msra.mxu0 0.0
    %5729 = vmatprep.subr.mxu0 0.0
    %5730 = vmatpush1.msra.mxu0 0.0
    %5731 = vmatprep.subr.mxu0 0.0
    %5732 = vmatpush1.msra.mxu0 0.0
    %5733 = vmatprep.subr.mxu0 0.0
    %5734 = vmatpush1.msra.mxu0 0.0
    %5735 = vmatprep.subr.mxu0 0.0
    %5736 = vmatpush1.msra.mxu0 0.0
    %5737 = vmatprep.subr.mxu0 0.0
    %5738 = vmatpush1.msra.mxu0 0.0
    %5739 = vmatprep.subr.mxu0 0.0
    %5740 = vmatpush1.msra.mxu0 0.0
    %5741 = vmatprep.subr.mxu0 0.0
    %5742 = vmatpush1.msra.mxu0 0.0
    %5743 = vmatprep.subr.mxu0 0.0
    %5744 = vmatpush1.msra.mxu0 0.0
    %5745 = vmatprep.subr.mxu0 0.0
    %5746 = vmatpush1.msra.mxu0 0.0
    %5747 = vmatprep.subr.mxu0 0.0
    %5748 = vmatpush1.msra.mxu0 0.0
    %5749 = vmatprep.subr.mxu0 0.0
    %5750 = vmatpush1.msra.mxu0 0.0
    %5751 = vmatprep.subr.mxu0 0.0
    %5752 = vmatpush1.msra.mxu0 0.0
    %5753 = vmatprep.subr.mxu0 0.0
    %5754 = vmatpush1.msra.mxu0 0.0
    %5755 = vmatprep.subr.mxu0 0.0
    %5756 = vmatpush1.msra.mxu0 0.0
    %5757 = vmatprep.subr.mxu0 0.0
    %5758 = vmatpush1.msra.mxu0 0.0
    %5759 = vmatprep.subr.mxu0 0.0
    %5760 = vmatpush1.msra.mxu0 0.0
    %5761 = vmatprep.subr.mxu0 0.0
    %5762 = vmatpush1.msra.mxu0 0.0
    %5763 = vmatprep.subr.mxu0 0.0
    %5764 = vmatpush1.msra.mxu0 0.0
    %5765 = vmatprep.subr.mxu0 0.0
    %5766 = vmatpush1.msra.mxu0 0.0
    %5767 = vmatprep.subr.mxu0 0.0
    %5768 = vmatpush1.msra.mxu0 0.0
    %5769 = vmatprep.subr.mxu0 0.0
    %5770 = vmatpush1.msra.mxu0 0.0
    %5771 = vmatprep.subr.mxu0 0.0
    %5772 = vmatpush1.msra.mxu0 0.0
    %5773 = vmatprep.subr.mxu0 0.0
    %5774 = vmatpush1.msra.mxu0 0.0
    %5775 = vmatprep.mubr.f32.mxu0 0.0
    %5776 = vmatmul.mubr.f32.gmra.mrb[0].mxu0 %v4436
    %v5777 = vpop.f32.mrb[0].mxu0
    %v5778 = vadd.f32 %v5709, %v5777
    %v5779 = vpop.f32.mrb[0].mxu0
    %5780 = vmatprep.mubr.f32.mxu0 0.0
    %5781 = vmatmul.mubr.f32.gmra.mrb[0].mxu0 %v4439
    %v5782 = vpop.f32.mrb[0].mxu0
    %v5783 = vadd.f32 %v5709, %v5782
    %v5784 = vpop.f32.mrb[0].mxu0
    %5785 = vdwg.mxu0
    %v5787 = vsel %vm1262, %v5602, 0
    %v5790 = vsel %vm1262, %v5607, 0
    %v5793 = vsel %vm1262, %v5690, 0
    %v5796 = vsel %vm1262, %v5695, 0
    %5798 = vmatprep.subr.mxu0 0.0
    %5799 = vmatpush1.xpose.msra.mxu0 %v5793
    %5800 = vmatprep.subr.mxu0 0.0
    %5801 = vmatpush1.xpose.msra.mxu0 %v5796
    %5802 = vmatprep.subr.mxu0 0.0
    %5803 = vmatpush1.xpose.msra.mxu0 0.0
    %5804 = vmatprep.subr.mxu0 0.0
    %5805 = vmatpush1.xpose.msra.mxu0 0.0
    %5806 = vmatprep.subr.mxu0 0.0
    %5807 = vmatpush1.xpose.msra.mxu0 0.0
    %5808 = vmatprep.subr.mxu0 0.0
    %5809 = vmatpush1.xpose.msra.mxu0 0.0
    %5810 = vmatprep.subr.mxu0 0.0
    %5811 = vmatpush1.xpose.msra.mxu0 0.0
    %5812 = vmatprep.subr.mxu0 0.0
    %5813 = vmatpush1.xpose.msra.mxu0 0.0
    %5814 = vmatprep.subr.mxu0 0.0
    %5815 = vmatpush1.xpose.msra.mxu0 0.0
    %5816 = vmatprep.subr.mxu0 0.0
    %5817 = vmatpush1.xpose.msra.mxu0 0.0
    %5818 = vmatprep.subr.mxu0 0.0
    %5819 = vmatpush1.xpose.msra.mxu0 0.0
    %5820 = vmatprep.subr.mxu0 0.0
    %5821 = vmatpush1.xpose.msra.mxu0 0.0
    %5822 = vmatprep.subr.mxu0 0.0
    %5823 = vmatpush1.xpose.msra.mxu0 0.0
    %5824 = vmatprep.subr.mxu0 0.0
    %5825 = vmatpush1.xpose.msra.mxu0 0.0
    %5826 = vmatprep.subr.mxu0 0.0
    %5827 = vmatpush1.xpose.msra.mxu0 0.0
    %5828 = vmatprep.subr.mxu0 0.0
    %5829 = vmatpush1.xpose.msra.mxu0 0.0
    %5830 = vmatprep.subr.mxu0 0.0
    %5831 = vmatpush1.xpose.msra.mxu0 0.0
    %5832 = vmatprep.subr.mxu0 0.0
    %5833 = vmatpush1.xpose.msra.mxu0 0.0
    %5834 = vmatprep.subr.mxu0 0.0
    %5835 = vmatpush1.xpose.msra.mxu0 0.0
    %5836 = vmatprep.subr.mxu0 0.0
    %5837 = vmatpush1.xpose.msra.mxu0 0.0
    %5838 = vmatprep.subr.mxu0 0.0
    %5839 = vmatpush1.xpose.msra.mxu0 0.0
    %5840 = vmatprep.subr.mxu0 0.0
    %5841 = vmatpush1.xpose.msra.mxu0 0.0
    %5842 = vmatprep.subr.mxu0 0.0
    %5843 = vmatpush1.xpose.msra.mxu0 0.0
    %5844 = vmatprep.subr.mxu0 0.0
    %5845 = vmatpush1.xpose.msra.mxu0 0.0
    %5846 = vmatprep.subr.mxu0 0.0
    %5847 = vmatpush1.xpose.msra.mxu0 0.0
    %5848 = vmatprep.subr.mxu0 0.0
    %5849 = vmatpush1.xpose.msra.mxu0 0.0
    %5850 = vmatprep.subr.mxu0 0.0
    %5851 = vmatpush1.xpose.msra.mxu0 0.0
    %5852 = vmatprep.subr.mxu0 0.0
    %5853 = vmatpush1.xpose.msra.mxu0 0.0
    %5854 = vmatprep.subr.mxu0 0.0
    %5855 = vmatpush1.xpose.msra.mxu0 0.0
    %5856 = vmatprep.subr.mxu0 0.0
    %5857 = vmatpush1.xpose.msra.mxu0 0.0
    %5858 = vmatprep.subr.mxu0 0.0
    %5859 = vmatpush1.xpose.msra.mxu0 0.0
    %5860 = vmatprep.subr.mxu0 0.0
    %5861 = vmatpush1.xpose.msra.mxu0 0.0
    %5862 = vmatprep.mubr.f32.mxu0 0.0
    %5863 = vmatmul.mubr.f32.gmra.mrb[0].mxu0 %v5787
    %v5864 = vpop.f32.mrb[0].mxu0
    %v5865 = vadd.f32 0.0, %v5864
    %v5866 = vpop.f32.mrb[0].mxu0
    %5867 = vmatprep.mubr.f32.mxu0 0.0
    %5868 = vmatmul.mubr.f32.gmra.mrb[0].mxu0 %v5790
    %v5869 = vpop.f32.mrb[0].mxu0
    %v5870 = vadd.f32 0.0, %v5869
    %v5871 = vpop.f32.mrb[0].mxu0
    %5872 = vdwg.mxu0
    %v5873 = vmul.f32 %v5865, 0.35355338
    %v5874 = vmul.f32 %v5870, 0.35355338
    %v5875 = vadd.f32 %v5873, %v78
    %v5876 = vadd.f32 %v5874, %v79
    %v5877 = vsel %vm1354, %v5875, -inf
    %5878 = vmax.xlane.f32.xlu0 %v5877
    %v5879 = vpop.xlane.xlu0 %5878
    %v5880 = vsel %vm1354, %v5876, -inf
    %5881 = vmax.xlane.f32.xlu0 %v5880
    %v5882 = vpop.xlane.xlu0 %5881
    %v5883 = vsub.f32 %v5875, %v5879
    %v5884 = vsub.f32 %v5876, %v5882
    %v5885 = vmul.f32 %v5883, 1.442695
    %v5886 = vpow.pop %v5885
    %v5887 = vmul.f32 %v5884, 1.442695
    %v5888 = vpow.pop %v5887
    %v5889 = vsel %vm1354, %v5886, 0.0
    %5890 = vadd.xlane.f32.xlu0 %v5889
    %v5891 = vpop.xlane.xlu0 %5890
    %v5892 = vsel %vm1354, %v5888, 0.0
    %5893 = vadd.xlane.f32.xlu0 %v5892
    %v5894 = vpop.xlane.xlu0 %5893
    %v5895 = vrcp.pop %v5891
    %v5896 = vrcp.pop %v5894
    %v5897 = vmul.f32 %v5891, %v5895
    %v5898 = vmul.f32 %v5894, %v5896
    %v5899 = vsub.f32 2.0, %v5897
    %v5900 = vsub.f32 2.0, %v5898
    %v5901 = vmul.f32 %v5895, %v5899
    %v5902 = vmul.f32 %v5896, %v5900
    %v5903 = vmul.f32 %v5886, %v5901
    %v5904 = vmul.f32 %v5888, %v5902
    %v5906 = vsel %vm1354, %v5903, 0
    %v5909 = vsel %vm1354, %v5904, 0
    %5911 = vmatprep.subr.mxu0 0.0
    %5912 = vmatpush1.msra.mxu0 %v5778
    %5913 = vmatprep.subr.mxu0 0.0
    %5914 = vmatpush1.msra.mxu0 %v5783
    %5915 = vmatprep.subr.mxu0 0.0
    %5916 = vmatpush1.msra.mxu0 0.0
    %5917 = vmatprep.subr.mxu0 0.0
    %5918 = vmatpush1.msra.mxu0 0.0
    %5919 = vmatprep.subr.mxu0 0.0
    %5920 = vmatpush1.msra.mxu0 0.0
    %5921 = vmatprep.subr.mxu0 0.0
    %5922 = vmatpush1.msra.mxu0 0.0
    %5923 = vmatprep.subr.mxu0 0.0
    %5924 = vmatpush1.msra.mxu0 0.0
    %5925 = vmatprep.subr.mxu0 0.0
    %5926 = vmatpush1.msra.mxu0 0.0
    %5927 = vmatprep.subr.mxu0 0.0
    %5928 = vmatpush1.msra.mxu0 0.0
    %5929 = vmatprep.subr.mxu0 0.0
    %5930 = vmatpush1.msra.mxu0 0.0
    %5931 = vmatprep.subr.mxu0 0.0
    %5932 = vmatpush1.msra.mxu0 0.0
    %5933 = vmatprep.subr.mxu0 0.0
    %5934 = vmatpush1.msra.mxu0 0.0
    %5935 = vmatprep.subr.mxu0 0.0
    %5936 = vmatpush1.msra.mxu0 0.0
    %5937 = vmatprep.subr.mxu0 0.0
    %5938 = vmatpush1.msra.mxu0 0.0
    %5939 = vmatprep.subr.mxu0 0.0
    %5940 = vmatpush1.msra.mxu0 0.0
    %5941 = vmatprep.subr.mxu0 0.0
    %5942 = vmatpush1.msra.mxu0 0.0
    %5943 = vmatprep.subr.mxu0 0.0
    %5944 = vmatpush1.msra.mxu0 0.0
    %5945 = vmatprep.subr.mxu0 0.0
    %5946 = vmatpush1.msra.mxu0 0.0
    %5947 = vmatprep.subr.mxu0 0.0
    %5948 = vmatpush1.msra.mxu0 0.0
    %5949 = vmatprep.subr.mxu0 0.0
    %5950 = vmatpush1.msra.mxu0 0.0
    %5951 = vmatprep.subr.mxu0 0.0
    %5952 = vmatpush1.msra.mxu0 0.0
    %5953 = vmatprep.subr.mxu0 0.0
    %5954 = vmatpush1.msra.mxu0 0.0
    %5955 = vmatprep.subr.mxu0 0.0
    %5956 = vmatpush1.msra.mxu0 0.0
    %5957 = vmatprep.subr.mxu0 0.0
    %5958 = vmatpush1.msra.mxu0 0.0
    %5959 = vmatprep.subr.mxu0 0.0
    %5960 = vmatpush1.msra.mxu0 0.0
    %5961 = vmatprep.subr.mxu0 0.0
    %5962 = vmatpush1.msra.mxu0 0.0
    %5963 = vmatprep.subr.mxu0 0.0
    %5964 = vmatpush1.msra.mxu0 0.0
    %5965 = vmatprep.subr.mxu0 0.0
    %5966 = vmatpush1.msra.mxu0 0.0
    %5967 = vmatprep.subr.mxu0 0.0
    %5968 = vmatpush1.msra.mxu0 0.0
    %5969 = vmatprep.subr.mxu0 0.0
    %5970 = vmatpush1.msra.mxu0 0.0
    %5971 = vmatprep.subr.mxu0 0.0
    %5972 = vmatpush1.msra.mxu0 0.0
    %5973 = vmatprep.subr.mxu0 0.0
    %5974 = vmatpush1.msra.mxu0 0.0
    %5975 = vmatprep.mubr.f32.mxu0 0.0
    %5976 = vmatmul.mubr.f32.gmra.mrb[0].mxu0 %v5906
    %v5977 = vpop.f32.mrb[0].mxu0
    %v5978 = vadd.f32 0.0, %v5977
    %v5979 = vpop.f32.mrb[0].mxu0
    %5980 = vmatprep.mubr.f32.mxu0 0.0
    %5981 = vmatmul.mubr.f32.gmra.mrb[0].mxu0 %v5909
    %v5982 = vpop.f32.mrb[0].mxu0
    %v5983 = vadd.f32 0.0, %v5982
    %v5984 = vpop.f32.mrb[0].mxu0
    %5985 = vdwg.mxu0
    %s5986 = scalar_lea.vmem %s17, 48
    %v5987 = vld [vmem:[%s5986] sm:$0xff]
    %v5989 = vsel %vm1262, %v5978, 0
    %v5992 = vsel %vm1262, %v5983, 0
    %5994 = vmatprep.subr.mxu0 0.0
    %5995 = vmatpush1.msra.mxu0 %v5987
    %5996 = vmatprep.subr.mxu0 0.0
    %5997 = vmatpush1.msra.mxu0 0.0
    %5998 = vmatprep.subr.mxu0 0.0
    %5999 = vmatpush1.msra.mxu0 0.0
    %6000 = vmatprep.subr.mxu0 0.0
    %6001 = vmatpush1.msra.mxu0 0.0
    %6002 = vmatprep.subr.mxu0 0.0
    %6003 = vmatpush1.msra.mxu0 0.0
    %6004 = vmatprep.subr.mxu0 0.0
    %6005 = vmatpush1.msra.mxu0 0.0
    %6006 = vmatprep.subr.mxu0 0.0
    %6007 = vmatpush1.msra.mxu0 0.0
    %6008 = vmatprep.subr.mxu0 0.0
    %6009 = vmatpush1.msra.mxu0 0.0
    %6010 = vmatprep.subr.mxu0 0.0
    %6011 = vmatpush1.msra.mxu0 0.0
    %6012 = vmatprep.subr.mxu0 0.0
    %6013 = vmatpush1.msra.mxu0 0.0
    %6014 = vmatprep.subr.mxu0 0.0
    %6015 = vmatpush1.msra.mxu0 0.0
    %6016 = vmatprep.subr.mxu0 0.0
    %6017 = vmatpush1.msra.mxu0 0.0
    %6018 = vmatprep.subr.mxu0 0.0
    %6019 = vmatpush1.msra.mxu0 0.0
    %6020 = vmatprep.subr.mxu0 0.0
    %6021 = vmatpush1.msra.mxu0 0.0
    %6022 = vmatprep.subr.mxu0 0.0
    %6023 = vmatpush1.msra.mxu0 0.0
    %6024 = vmatprep.subr.mxu0 0.0
    %6025 = vmatpush1.msra.mxu0 0.0
    %6026 = vmatprep.subr.mxu0 0.0
    %6027 = vmatpush1.msra.mxu0 0.0
    %6028 = vmatprep.subr.mxu0 0.0
    %6029 = vmatpush1.msra.mxu0 0.0
    %6030 = vmatprep.subr.mxu0 0.0
    %6031 = vmatpush1.msra.mxu0 0.0
    %6032 = vmatprep.subr.mxu0 0.0
    %6033 = vmatpush1.msra.mxu0 0.0
    %6034 = vmatprep.subr.mxu0 0.0
    %6035 = vmatpush1.msra.mxu0 0.0
    %6036 = vmatprep.subr.mxu0 0.0
    %6037 = vmatpush1.msra.mxu0 0.0
    %6038 = vmatprep.subr.mxu0 0.0
    %6039 = vmatpush1.msra.mxu0 0.0
    %6040 = vmatprep.subr.mxu0 0.0
    %6041 = vmatpush1.msra.mxu0 0.0
    %6042 = vmatprep.subr.mxu0 0.0
    %6043 = vmatpush1.msra.mxu0 0.0
    %6044 = vmatprep.subr.mxu0 0.0
    %6045 = vmatpush1.msra.mxu0 0.0
    %6046 = vmatprep.subr.mxu0 0.0
    %6047 = vmatpush1.msra.mxu0 0.0
    %6048 = vmatprep.subr.mxu0 0.0
    %6049 = vmatpush1.msra.mxu0 0.0
    %6050 = vmatprep.subr.mxu0 0.0
    %6051 = vmatpush1.msra.mxu0 0.0
    %6052 = vmatprep.subr.mxu0 0.0
    %6053 = vmatpush1.msra.mxu0 0.0
    %6054 = vmatprep.subr.mxu0 0.0
    %6055 = vmatpush1.msra.mxu0 0.0
    %6056 = vmatprep.subr.mxu0 0.0
    %6057 = vmatpush1.msra.mxu0 0.0
    %6058 = vmatprep.mubr.f32.mxu0 0.0
    %6059 = vmatmul.mubr.f32.gmra.mrb[0].mxu0 %v5989
    %v6060 = vpop.f32.mrb[0].mxu0
    %v6061 = vadd.f32 0.0, %v6060
    %v6062 = vpop.f32.mrb[0].mxu0
    %6063 = vmatprep.mubr.f32.mxu0 0.0
    %6064 = vmatmul.mubr.f32.gmra.mrb[0].mxu0 %v5992
    %v6065 = vpop.f32.mrb[0].mxu0
    %v6066 = vadd.f32 0.0, %v6065
    %v6067 = vpop.f32.mrb[0].mxu0
    %6068 = vdwg.mxu0
    %v6069 = vadd.f32 %v5514, %v6061
    %v6070 = vadd.f32 %v5519, %v6066
    %s6071 = scalar_lea.vmem %s11, 224
    %v6072 = vld [vmem:[%s6071] sm:$0xff]
    %v6073 = vld [vmem:[%s6071 + $0x8] sm:$0xff]
    %v6074 = vld [vmem:[%s6071 + $0x10] sm:$0xff]
    %v6075 = vld [vmem:[%s6071 + $0x18] sm:$0xff]
    %s6076 = scalar_lea.vmem %s14, 7
    %v6077 = vld [vmem:[%s6076] sm:$0x1]
    %v6079 = vlaneseq
    %v6080 = vshrl.u32 %v6079, 7
    %v6081 = vsub.s32 0, %v6080
    %v6082 = vrot.slane %v6077, %v6081
    %6084 = vmatprep.subr.mxu0 0.0
    %6085 = vmatpush1.msra.mxu0 %v6072
    %6086 = vmatprep.subr.mxu0 0.0
    %6087 = vmatpush1.msra.mxu0 %v6073
    %6088 = vmatprep.subr.mxu0 0.0
    %6089 = vmatpush1.msra.mxu0 %v6074
    %6090 = vmatprep.subr.mxu0 0.0
    %6091 = vmatpush1.msra.mxu0 %v6075
    %6092 = vmatprep.subr.mxu0 0.0
    %6093 = vmatpush1.msra.mxu0 0.0
    %6094 = vmatprep.subr.mxu0 0.0
    %6095 = vmatpush1.msra.mxu0 0.0
    %6096 = vmatprep.subr.mxu0 0.0
    %6097 = vmatpush1.msra.mxu0 0.0
    %6098 = vmatprep.subr.mxu0 0.0
    %6099 = vmatpush1.msra.mxu0 0.0
    %6100 = vmatprep.subr.mxu0 0.0
    %6101 = vmatpush1.msra.mxu0 0.0
    %6102 = vmatprep.subr.mxu0 0.0
    %6103 = vmatpush1.msra.mxu0 0.0
    %6104 = vmatprep.subr.mxu0 0.0
    %6105 = vmatpush1.msra.mxu0 0.0
    %6106 = vmatprep.subr.mxu0 0.0
    %6107 = vmatpush1.msra.mxu0 0.0
    %6108 = vmatprep.subr.mxu0 0.0
    %6109 = vmatpush1.msra.mxu0 0.0
    %6110 = vmatprep.subr.mxu0 0.0
    %6111 = vmatpush1.msra.mxu0 0.0
    %6112 = vmatprep.subr.mxu0 0.0
    %6113 = vmatpush1.msra.mxu0 0.0
    %6114 = vmatprep.subr.mxu0 0.0
    %6115 = vmatpush1.msra.mxu0 0.0
    %6116 = vmatprep.subr.mxu0 0.0
    %6117 = vmatpush1.msra.mxu0 0.0
    %6118 = vmatprep.subr.mxu0 0.0
    %6119 = vmatpush1.msra.mxu0 0.0
    %6120 = vmatprep.subr.mxu0 0.0
    %6121 = vmatpush1.msra.mxu0 0.0
    %6122 = vmatprep.subr.mxu0 0.0
    %6123 = vmatpush1.msra.mxu0 0.0
    %6124 = vmatprep.subr.mxu0 0.0
    %6125 = vmatpush1.msra.mxu0 0.0
    %6126 = vmatprep.subr.mxu0 0.0
    %6127 = vmatpush1.msra.mxu0 0.0
    %6128 = vmatprep.subr.mxu0 0.0
    %6129 = vmatpush1.msra.mxu0 0.0
    %6130 = vmatprep.subr.mxu0 0.0
    %6131 = vmatpush1.msra.mxu0 0.0
    %6132 = vmatprep.subr.mxu0 0.0
    %6133 = vmatpush1.msra.mxu0 0.0
    %6134 = vmatprep.subr.mxu0 0.0
    %6135 = vmatpush1.msra.mxu0 0.0
    %6136 = vmatprep.subr.mxu0 0.0
    %6137 = vmatpush1.msra.mxu0 0.0
    %6138 = vmatprep.subr.mxu0 0.0
    %6139 = vmatpush1.msra.mxu0 0.0
    %6140 = vmatprep.subr.mxu0 0.0
    %6141 = vmatpush1.msra.mxu0 0.0
    %6142 = vmatprep.subr.mxu0 0.0
    %6143 = vmatpush1.msra.mxu0 0.0
    %6144 = vmatprep.subr.mxu0 0.0
    %6145 = vmatpush1.msra.mxu0 0.0
    %6146 = vmatprep.subr.mxu0 0.0
    %6147 = vmatpush1.msra.mxu0 0.0
    %6148 = vmatprep.mubr.f32.mxu0 0.0
    %6149 = vmatmul.mubr.f32.gmra.mrb[0].mxu0 %v4436
    %v6150 = vpop.f32.mrb[0].mxu0
    %v6151 = vadd.f32 %v6082, %v6150
    %v6152 = vpop.f32.mrb[0].mxu0
    %6153 = vmatprep.mubr.f32.mxu0 0.0
    %6154 = vmatmul.mubr.f32.gmra.mrb[0].mxu0 %v4439
    %v6155 = vpop.f32.mrb[0].mxu0
    %v6156 = vadd.f32 %v6082, %v6155
    %v6157 = vpop.f32.mrb[0].mxu0
    %6158 = vdwg.mxu0
    %s6159 = scalar_lea.vmem %s12, 224
    %v6160 = vld [vmem:[%s6159] sm:$0xff]
    %v6161 = vld [vmem:[%s6159 + $0x8] sm:$0xff]
    %v6162 = vld [vmem:[%s6159 + $0x10] sm:$0xff]
    %v6163 = vld [vmem:[%s6159 + $0x18] sm:$0xff]
    %s6164 = scalar_lea.vmem %s15, 7
    %v6165 = vld [vmem:[%s6164] sm:$0x1]
    %v6167 = vlaneseq
    %v6168 = vshrl.u32 %v6167, 7
    %v6169 = vsub.s32 0, %v6168
    %v6170 = vrot.slane %v6165, %v6169
    %6172 = vmatprep.subr.mxu0 0.0
    %6173 = vmatpush1.msra.mxu0 %v6160
    %6174 = vmatprep.subr.mxu0 0.0
    %6175 = vmatpush1.msra.mxu0 %v6161
    %6176 = vmatprep.subr.mxu0 0.0
    %6177 = vmatpush1.msra.mxu0 %v6162
    %6178 = vmatprep.subr.mxu0 0.0
    %6179 = vmatpush1.msra.mxu0 %v6163
    %6180 = vmatprep.subr.mxu0 0.0
    %6181 = vmatpush1.msra.mxu0 0.0
    %6182 = vmatprep.subr.mxu0 0.0
    %6183 = vmatpush1.msra.mxu0 0.0
    %6184 = vmatprep.subr.mxu0 0.0
    %6185 = vmatpush1.msra.mxu0 0.0
    %6186 = vmatprep.subr.mxu0 0.0
    %6187 = vmatpush1.msra.mxu0 0.0
    %6188 = vmatprep.subr.mxu0 0.0
    %6189 = vmatpush1.msra.mxu0 0.0
    %6190 = vmatprep.subr.mxu0 0.0
    %6191 = vmatpush1.msra.mxu0 0.0
    %6192 = vmatprep.subr.mxu0 0.0
    %6193 = vmatpush1.msra.mxu0 0.0
    %6194 = vmatprep.subr.mxu0 0.0
    %6195 = vmatpush1.msra.mxu0 0.0
    %6196 = vmatprep.subr.mxu0 0.0
    %6197 = vmatpush1.msra.mxu0 0.0
    %6198 = vmatprep.subr.mxu0 0.0
    %6199 = vmatpush1.msra.mxu0 0.0
    %6200 = vmatprep.subr.mxu0 0.0
    %6201 = vmatpush1.msra.mxu0 0.0
    %6202 = vmatprep.subr.mxu0 0.0
    %6203 = vmatpush1.msra.mxu0 0.0
    %6204 = vmatprep.subr.mxu0 0.0
    %6205 = vmatpush1.msra.mxu0 0.0
    %6206 = vmatprep.subr.mxu0 0.0
    %6207 = vmatpush1.msra.mxu0 0.0
    %6208 = vmatprep.subr.mxu0 0.0
    %6209 = vmatpush1.msra.mxu0 0.0
    %6210 = vmatprep.subr.mxu0 0.0
    %6211 = vmatpush1.msra.mxu0 0.0
    %6212 = vmatprep.subr.mxu0 0.0
    %6213 = vmatpush1.msra.mxu0 0.0
    %6214 = vmatprep.subr.mxu0 0.0
    %6215 = vmatpush1.msra.mxu0 0.0
    %6216 = vmatprep.subr.mxu0 0.0
    %6217 = vmatpush1.msra.mxu0 0.0
    %6218 = vmatprep.subr.mxu0 0.0
    %6219 = vmatpush1.msra.mxu0 0.0
    %6220 = vmatprep.subr.mxu0 0.0
    %6221 = vmatpush1.msra.mxu0 0.0
    %6222 = vmatprep.subr.mxu0 0.0
    %6223 = vmatpush1.msra.mxu0 0.0
    %6224 = vmatprep.subr.mxu0 0.0
    %6225 = vmatpush1.msra.mxu0 0.0
    %6226 = vmatprep.subr.mxu0 0.0
    %6227 = vmatpush1.msra.mxu0 0.0
    %6228 = vmatprep.subr.mxu0 0.0
    %6229 = vmatpush1.msra.mxu0 0.0
    %6230 = vmatprep.subr.mxu0 0.0
    %6231 = vmatpush1.msra.mxu0 0.0
    %6232 = vmatprep.subr.mxu0 0.0
    %6233 = vmatpush1.msra.mxu0 0.0
    %6234 = vmatprep.subr.mxu0 0.0
    %6235 = vmatpush1.msra.mxu0 0.0
    %6236 = vmatprep.mubr.f32.mxu0 0.0
    %6237 = vmatmul.mubr.f32.gmra.mrb[0].mxu0 %v4436
    %v6238 = vpop.f32.mrb[0].mxu0
    %v6239 = vadd.f32 %v6170, %v6238
    %v6240 = vpop.f32.mrb[0].mxu0
    %6241 = vmatprep.mubr.f32.mxu0 0.0
    %6242 = vmatmul.mubr.f32.gmra.mrb[0].mxu0 %v4439
    %v6243 = vpop.f32.mrb[0].mxu0
    %v6244 = vadd.f32 %v6170, %v6243
    %v6245 = vpop.f32.mrb[0].mxu0
    %6246 = vdwg.mxu0
    %s6247 = scalar_lea.vmem %s13, 224
    %v6248 = vld [vmem:[%s6247] sm:$0xff]
    %v6249 = vld [vmem:[%s6247 + $0x8] sm:$0xff]
    %v6250 = vld [vmem:[%s6247 + $0x10] sm:$0xff]
    %v6251 = vld [vmem:[%s6247 + $0x18] sm:$0xff]
    %s6252 = scalar_lea.vmem %s16, 7
    %v6253 = vld [vmem:[%s6252] sm:$0x1]
    %v6255 = vlaneseq
    %v6256 = vshrl.u32 %v6255, 7
    %v6257 = vsub.s32 0, %v6256
    %v6258 = vrot.slane %v6253, %v6257
    %6260 = vmatprep.subr.mxu0 0.0
    %6261 = vmatpush1.msra.mxu0 %v6248
    %6262 = vmatprep.subr.mxu0 0.0
    %6263 = vmatpush1.msra.mxu0 %v6249
    %6264 = vmatprep.subr.mxu0 0.0
    %6265 = vmatpush1.msra.mxu0 %v6250
    %6266 = vmatprep.subr.mxu0 0.0
    %6267 = vmatpush1.msra.mxu0 %v6251
    %6268 = vmatprep.subr.mxu0 0.0
    %6269 = vmatpush1.msra.mxu0 0.0
    %6270 = vmatprep.subr.mxu0 0.0
    %6271 = vmatpush1.msra.mxu0 0.0
    %6272 = vmatprep.subr.mxu0 0.0
    %6273 = vmatpush1.msra.mxu0 0.0
    %6274 = vmatprep.subr.mxu0 0.0
    %6275 = vmatpush1.msra.mxu0 0.0
    %6276 = vmatprep.subr.mxu0 0.0
    %6277 = vmatpush1.msra.mxu0 0.0
    %6278 = vmatprep.subr.mxu0 0.0
    %6279 = vmatpush1.msra.mxu0 0.0
    %6280 = vmatprep.subr.mxu0 0.0
    %6281 = vmatpush1.msra.mxu0 0.0
    %6282 = vmatprep.subr.mxu0 0.0
    %6283 = vmatpush1.msra.mxu0 0.0
    %6284 = vmatprep.subr.mxu0 0.0
    %6285 = vmatpush1.msra.mxu0 0.0
    %6286 = vmatprep.subr.mxu0 0.0
    %6287 = vmatpush1.msra.mxu0 0.0
    %6288 = vmatprep.subr.mxu0 0.0
    %6289 = vmatpush1.msra.mxu0 0.0
    %6290 = vmatprep.subr.mxu0 0.0
    %6291 = vmatpush1.msra.mxu0 0.0
    %6292 = vmatprep.subr.mxu0 0.0
    %6293 = vmatpush1.msra.mxu0 0.0
    %6294 = vmatprep.subr.mxu0 0.0
    %6295 = vmatpush1.msra.mxu0 0.0
    %6296 = vmatprep.subr.mxu0 0.0
    %6297 = vmatpush1.msra.mxu0 0.0
    %6298 = vmatprep.subr.mxu0 0.0
    %6299 = vmatpush1.msra.mxu0 0.0
    %6300 = vmatprep.subr.mxu0 0.0
    %6301 = vmatpush1.msra.mxu0 0.0
    %6302 = vmatprep.subr.mxu0 0.0
    %6303 = vmatpush1.msra.mxu0 0.0
    %6304 = vmatprep.subr.mxu0 0.0
    %6305 = vmatpush1.msra.mxu0 0.0
    %6306 = vmatprep.subr.mxu0 0.0
    %6307 = vmatpush1.msra.mxu0 0.0
    %6308 = vmatprep.subr.mxu0 0.0
    %6309 = vmatpush1.msra.mxu0 0.0
    %6310 = vmatprep.subr.mxu0 0.0
    %6311 = vmatpush1.msra.mxu0 0.0
    %6312 = vmatprep.subr.mxu0 0.0
    %6313 = vmatpush1.msra.mxu0 0.0
    %6314 = vmatprep.subr.mxu0 0.0
    %6315 = vmatpush1.msra.mxu0 0.0
    %6316 = vmatprep.subr.mxu0 0.0
    %6317 = vmatpush1.msra.mxu0 0.0
    %6318 = vmatprep.subr.mxu0 0.0
    %6319 = vmatpush1.msra.mxu0 0.0
    %6320 = vmatprep.subr.mxu0 0.0
    %6321 = vmatpush1.msra.mxu0 0.0
    %6322 = vmatprep.subr.mxu0 0.0
    %6323 = vmatpush1.msra.mxu0 0.0
    %6324 = vmatprep.mubr.f32.mxu0 0.0
    %6325 = vmatmul.mubr.f32.gmra.mrb[0].mxu0 %v4436
    %v6326 = vpop.f32.mrb[0].mxu0
    %v6327 = vadd.f32 %v6258, %v6326
    %v6328 = vpop.f32.mrb[0].mxu0
    %6329 = vmatprep.mubr.f32.mxu0 0.0
    %6330 = vmatmul.mubr.f32.gmra.mrb[0].mxu0 %v4439
    %v6331 = vpop.f32.mrb[0].mxu0
    %v6332 = vadd.f32 %v6258, %v6331
    %v6333 = vpop.f32.mrb[0].mxu0
    %6334 = vdwg.mxu0
    %v6336 = vsel %vm1262, %v6151, 0
    %v6339 = vsel %vm1262, %v6156, 0
    %v6342 = vsel %vm1262, %v6239, 0
    %v6345 = vsel %vm1262, %v6244, 0
    %6347 = vmatprep.subr.mxu0 0.0
    %6348 = vmatpush1.xpose.msra.mxu0 %v6342
    %6349 = vmatprep.subr.mxu0 0.0
    %6350 = vmatpush1.xpose.msra.mxu0 %v6345
    %6351 = vmatprep.subr.mxu0 0.0
    %6352 = vmatpush1.xpose.msra.mxu0 0.0
    %6353 = vmatprep.subr.mxu0 0.0
    %6354 = vmatpush1.xpose.msra.mxu0 0.0
    %6355 = vmatprep.subr.mxu0 0.0
    %6356 = vmatpush1.xpose.msra.mxu0 0.0
    %6357 = vmatprep.subr.mxu0 0.0
    %6358 = vmatpush1.xpose.msra.mxu0 0.0
    %6359 = vmatprep.subr.mxu0 0.0
    %6360 = vmatpush1.xpose.msra.mxu0 0.0
    %6361 = vmatprep.subr.mxu0 0.0
    %6362 = vmatpush1.xpose.msra.mxu0 0.0
    %6363 = vmatprep.subr.mxu0 0.0
    %6364 = vmatpush1.xpose.msra.mxu0 0.0
    %6365 = vmatprep.subr.mxu0 0.0
    %6366 = vmatpush1.xpose.msra.mxu0 0.0
    %6367 = vmatprep.subr.mxu0 0.0
    %6368 = vmatpush1.xpose.msra.mxu0 0.0
    %6369 = vmatprep.subr.mxu0 0.0
    %6370 = vmatpush1.xpose.msra.mxu0 0.0
    %6371 = vmatprep.subr.mxu0 0.0
    %6372 = vmatpush1.xpose.msra.mxu0 0.0
    %6373 = vmatprep.subr.mxu0 0.0
    %6374 = vmatpush1.xpose.msra.mxu0 0.0
    %6375 = vmatprep.subr.mxu0 0.0
    %6376 = vmatpush1.xpose.msra.mxu0 0.0
    %6377 = vmatprep.subr.mxu0 0.0
    %6378 = vmatpush1.xpose.msra.mxu0 0.0
    %6379 = vmatprep.subr.mxu0 0.0
    %6380 = vmatpush1.xpose.msra.mxu0 0.0
    %6381 = vmatprep.subr.mxu0 0.0
    %6382 = vmatpush1.xpose.msra.mxu0 0.0
    %6383 = vmatprep.subr.mxu0 0.0
    %6384 = vmatpush1.xpose.msra.mxu0 0.0
    %6385 = vmatprep.subr.mxu0 0.0
    %6386 = vmatpush1.xpose.msra.mxu0 0.0
    %6387 = vmatprep.subr.mxu0 0.0
    %6388 = vmatpush1.xpose.msra.mxu0 0.0
    %6389 = vmatprep.subr.mxu0 0.0
    %6390 = vmatpush1.xpose.msra.mxu0 0.0
    %6391 = vmatprep.subr.mxu0 0.0
    %6392 = vmatpush1.xpose.msra.mxu0 0.0
    %6393 = vmatprep.subr.mxu0 0.0
    %6394 = vmatpush1.xpose.msra.mxu0 0.0
    %6395 = vmatprep.subr.mxu0 0.0
    %6396 = vmatpush1.xpose.msra.mxu0 0.0
    %6397 = vmatprep.subr.mxu0 0.0
    %6398 = vmatpush1.xpose.msra.mxu0 0.0
    %6399 = vmatprep.subr.mxu0 0.0
    %6400 = vmatpush1.xpose.msra.mxu0 0.0
    %6401 = vmatprep.subr.mxu0 0.0
    %6402 = vmatpush1.xpose.msra.mxu0 0.0
    %6403 = vmatprep.subr.mxu0 0.0
    %6404 = vmatpush1.xpose.msra.mxu0 0.0
    %6405 = vmatprep.subr.mxu0 0.0
    %6406 = vmatpush1.xpose.msra.mxu0 0.0
    %6407 = vmatprep.subr.mxu0 0.0
    %6408 = vmatpush1.xpose.msra.mxu0 0.0
    %6409 = vmatprep.subr.mxu0 0.0
    %6410 = vmatpush1.xpose.msra.mxu0 0.0
    %6411 = vmatprep.mubr.f32.mxu0 0.0
    %6412 = vmatmul.mubr.f32.gmra.mrb[0].mxu0 %v6336
    %v6413 = vpop.f32.mrb[0].mxu0
    %v6414 = vadd.f32 0.0, %v6413
    %v6415 = vpop.f32.mrb[0].mxu0
    %6416 = vmatprep.mubr.f32.mxu0 0.0
    %6417 = vmatmul.mubr.f32.gmra.mrb[0].mxu0 %v6339
    %v6418 = vpop.f32.mrb[0].mxu0
    %v6419 = vadd.f32 0.0, %v6418
    %v6420 = vpop.f32.mrb[0].mxu0
    %6421 = vdwg.mxu0
    %v6422 = vmul.f32 %v6414, 0.35355338
    %v6423 = vmul.f32 %v6419, 0.35355338
    %v6424 = vadd.f32 %v6422, %v78
    %v6425 = vadd.f32 %v6423, %v79
    %v6426 = vsel %vm1354, %v6424, -inf
    %6427 = vmax.xlane.f32.xlu0 %v6426
    %v6428 = vpop.xlane.xlu0 %6427
    %v6429 = vsel %vm1354, %v6425, -inf
    %6430 = vmax.xlane.f32.xlu0 %v6429
    %v6431 = vpop.xlane.xlu0 %6430
    %v6432 = vsub.f32 %v6424, %v6428
    %v6433 = vsub.f32 %v6425, %v6431
    %v6434 = vmul.f32 %v6432, 1.442695
    %v6435 = vpow.pop %v6434
    %v6436 = vmul.f32 %v6433, 1.442695
    %v6437 = vpow.pop %v6436
    %v6438 = vsel %vm1354, %v6435, 0.0
    %6439 = vadd.xlane.f32.xlu0 %v6438
    %v6440 = vpop.xlane.xlu0 %6439
    %v6441 = vsel %vm1354, %v6437, 0.0
    %6442 = vadd.xlane.f32.xlu0 %v6441
    %v6443 = vpop.xlane.xlu0 %6442
    %v6444 = vrcp.pop %v6440
    %v6445 = vrcp.pop %v6443
    %v6446 = vmul.f32 %v6440, %v6444
    %v6447 = vmul.f32 %v6443, %v6445
    %v6448 = vsub.f32 2.0, %v6446
    %v6449 = vsub.f32 2.0, %v6447
    %v6450 = vmul.f32 %v6444, %v6448
    %v6451 = vmul.f32 %v6445, %v6449
    %v6452 = vmul.f32 %v6435, %v6450
    %v6453 = vmul.f32 %v6437, %v6451
    %v6455 = vsel %vm1354, %v6452, 0
    %v6458 = vsel %vm1354, %v6453, 0
    %6460 = vmatprep.subr.mxu0 0.0
    %6461 = vmatpush1.msra.mxu0 %v6327
    %6462 = vmatprep.subr.mxu0 0.0
    %6463 = vmatpush1.msra.mxu0 %v6332
    %6464 = vmatprep.subr.mxu0 0.0
    %6465 = vmatpush1.msra.mxu0 0.0
    %6466 = vmatprep.subr.mxu0 0.0
    %6467 = vmatpush1.msra.mxu0 0.0
    %6468 = vmatprep.subr.mxu0 0.0
    %6469 = vmatpush1.msra.mxu0 0.0
    %6470 = vmatprep.subr.mxu0 0.0
    %6471 = vmatpush1.msra.mxu0 0.0
    %6472 = vmatprep.subr.mxu0 0.0
    %6473 = vmatpush1.msra.mxu0 0.0
    %6474 = vmatprep.subr.mxu0 0.0
    %6475 = vmatpush1.msra.mxu0 0.0
    %6476 = vmatprep.subr.mxu0 0.0
    %6477 = vmatpush1.msra.mxu0 0.0
    %6478 = vmatprep.subr.mxu0 0.0
    %6479 = vmatpush1.msra.mxu0 0.0
    %6480 = vmatprep.subr.mxu0 0.0
    %6481 = vmatpush1.msra.mxu0 0.0
    %6482 = vmatprep.subr.mxu0 0.0
    %6483 = vmatpush1.msra.mxu0 0.0
    %6484 = vmatprep.subr.mxu0 0.0
    %6485 = vmatpush1.msra.mxu0 0.0
    %6486 = vmatprep.subr.mxu0 0.0
    %6487 = vmatpush1.msra.mxu0 0.0
    %6488 = vmatprep.subr.mxu0 0.0
    %6489 = vmatpush1.msra.mxu0 0.0
    %6490 = vmatprep.subr.mxu0 0.0
    %6491 = vmatpush1.msra.mxu0 0.0
    %6492 = vmatprep.subr.mxu0 0.0
    %6493 = vmatpush1.msra.mxu0 0.0
    %6494 = vmatprep.subr.mxu0 0.0
    %6495 = vmatpush1.msra.mxu0 0.0
    %6496 = vmatprep.subr.mxu0 0.0
    %6497 = vmatpush1.msra.mxu0 0.0
    %6498 = vmatprep.subr.mxu0 0.0
    %6499 = vmatpush1.msra.mxu0 0.0
    %6500 = vmatprep.subr.mxu0 0.0
    %6501 = vmatpush1.msra.mxu0 0.0
    %6502 = vmatprep.subr.mxu0 0.0
    %6503 = vmatpush1.msra.mxu0 0.0
    %6504 = vmatprep.subr.mxu0 0.0
    %6505 = vmatpush1.msra.mxu0 0.0
    %6506 = vmatprep.subr.mxu0 0.0
    %6507 = vmatpush1.msra.mxu0 0.0
    %6508 = vmatprep.subr.mxu0 0.0
    %6509 = vmatpush1.msra.mxu0 0.0
    %6510 = vmatprep.subr.mxu0 0.0
    %6511 = vmatpush1.msra.mxu0 0.0
    %6512 = vmatprep.subr.mxu0 0.0
    %6513 = vmatpush1.msra.mxu0 0.0
    %6514 = vmatprep.subr.mxu0 0.0
    %6515 = vmatpush1.msra.mxu0 0.0
    %6516 = vmatprep.subr.mxu0 0.0
    %6517 = vmatpush1.msra.mxu0 0.0
    %6518 = vmatprep.subr.mxu0 0.0
    %6519 = vmatpush1.msra.mxu0 0.0
    %6520 = vmatprep.subr.mxu0 0.0
    %6521 = vmatpush1.msra.mxu0 0.0
    %6522 = vmatprep.subr.mxu0 0.0
    %6523 = vmatpush1.msra.mxu0 0.0
    %6524 = vmatprep.mubr.f32.mxu0 0.0
    %6525 = vmatmul.mubr.f32.gmra.mrb[0].mxu0 %v6455
    %v6526 = vpop.f32.mrb[0].mxu0
    %v6527 = vadd.f32 0.0, %v6526
    %v6528 = vpop.f32.mrb[0].mxu0
    %6529 = vmatprep.mubr.f32.mxu0 0.0
    %6530 = vmatmul.mubr.f32.gmra.mrb[0].mxu0 %v6458
    %v6531 = vpop.f32.mrb[0].mxu0
    %v6532 = vadd.f32 0.0, %v6531
    %v6533 = vpop.f32.mrb[0].mxu0
    %6534 = vdwg.mxu0
    %s6535 = scalar_lea.vmem %s17, 56
    %v6536 = vld [vmem:[%s6535] sm:$0xff]
    %v6538 = vsel %vm1262, %v6527, 0
    %v6541 = vsel %vm1262, %v6532, 0
    %6543 = vmatprep.subr.mxu0 0.0
    %6544 = vmatpush1.msra.mxu0 %v6536
    %6545 = vmatprep.subr.mxu0 0.0
    %6546 = vmatpush1.msra.mxu0 0.0
    %6547 = vmatprep.subr.mxu0 0.0
    %6548 = vmatpush1.msra.mxu0 0.0
    %6549 = vmatprep.subr.mxu0 0.0
    %6550 = vmatpush1.msra.mxu0 0.0
    %6551 = vmatprep.subr.mxu0 0.0
    %6552 = vmatpush1.msra.mxu0 0.0
    %6553 = vmatprep.subr.mxu0 0.0
    %6554 = vmatpush1.msra.mxu0 0.0
    %6555 = vmatprep.subr.mxu0 0.0
    %6556 = vmatpush1.msra.mxu0 0.0
    %6557 = vmatprep.subr.mxu0 0.0
    %6558 = vmatpush1.msra.mxu0 0.0
    %6559 = vmatprep.subr.mxu0 0.0
    %6560 = vmatpush1.msra.mxu0 0.0
    %6561 = vmatprep.subr.mxu0 0.0
    %6562 = vmatpush1.msra.mxu0 0.0
    %6563 = vmatprep.subr.mxu0 0.0
    %6564 = vmatpush1.msra.mxu0 0.0
    %6565 = vmatprep.subr.mxu0 0.0
    %6566 = vmatpush1.msra.mxu0 0.0
    %6567 = vmatprep.subr.mxu0 0.0
    %6568 = vmatpush1.msra.mxu0 0.0
    %6569 = vmatprep.subr.mxu0 0.0
    %6570 = vmatpush1.msra.mxu0 0.0
    %6571 = vmatprep.subr.mxu0 0.0
    %6572 = vmatpush1.msra.mxu0 0.0
    %6573 = vmatprep.subr.mxu0 0.0
    %6574 = vmatpush1.msra.mxu0 0.0
    %6575 = vmatprep.subr.mxu0 0.0
    %6576 = vmatpush1.msra.mxu0 0.0
    %6577 = vmatprep.subr.mxu0 0.0
    %6578 = vmatpush1.msra.mxu0 0.0
    %6579 = vmatprep.subr.mxu0 0.0
    %6580 = vmatpush1.msra.mxu0 0.0
    %6581 = vmatprep.subr.mxu0 0.0
    %6582 = vmatpush1.msra.mxu0 0.0
    %6583 = vmatprep.subr.mxu0 0.0
    %6584 = vmatpush1.msra.mxu0 0.0
    %6585 = vmatprep.subr.mxu0 0.0
    %6586 = vmatpush1.msra.mxu0 0.0
    %6587 = vmatprep.subr.mxu0 0.0
    %6588 = vmatpush1.msra.mxu0 0.0
    %6589 = vmatprep.subr.mxu0 0.0
    %6590 = vmatpush1.msra.mxu0 0.0
    %6591 = vmatprep.subr.mxu0 0.0
    %6592 = vmatpush1.msra.mxu0 0.0
    %6593 = vmatprep.subr.mxu0 0.0
    %6594 = vmatpush1.msra.mxu0 0.0
    %6595 = vmatprep.subr.mxu0 0.0
    %6596 = vmatpush1.msra.mxu0 0.0
    %6597 = vmatprep.subr.mxu0 0.0
    %6598 = vmatpush1.msra.mxu0 0.0
    %6599 = vmatprep.subr.mxu0 0.0
    %6600 = vmatpush1.msra.mxu0 0.0
    %6601 = vmatprep.subr.mxu0 0.0
    %6602 = vmatpush1.msra.mxu0 0.0
    %6603 = vmatprep.subr.mxu0 0.0
    %6604 = vmatpush1.msra.mxu0 0.0
    %6605 = vmatprep.subr.mxu0 0.0
    %6606 = vmatpush1.msra.mxu0 0.0
    %6607 = vmatprep.mubr.f32.mxu0 0.0
    %6608 = vmatmul.mubr.f32.gmra.mrb[0].mxu0 %v6538
    %v6609 = vpop.f32.mrb[0].mxu0
    %v6610 = vadd.f32 0.0, %v6609
    %v6611 = vpop.f32.mrb[0].mxu0
    %6612 = vmatprep.mubr.f32.mxu0 0.0
    %6613 = vmatmul.mubr.f32.gmra.mrb[0].mxu0 %v6541
    %v6614 = vpop.f32.mrb[0].mxu0
    %v6615 = vadd.f32 0.0, %v6614
    %v6616 = vpop.f32.mrb[0].mxu0
    %6617 = vdwg.mxu0
    %v6618 = vadd.f32 %v6069, %v6610
    %v6619 = vadd.f32 %v6070, %v6615
    %s6620 = scalar_lea.vmem %s18, 1
    %v6621 = vld [vmem:[%s6620] sm:$0x1]
    %v6623 = vlaneseq
    %v6624 = vshrl.u32 %v6623, 7
    %v6625 = vsub.s32 0, %v6624
    %v6626 = vrot.slane %v6621, %v6625
    %v6628 = vadd.f32 %v6618, %v6626
    %v6629 = vadd.f32 %v6619, %v6626
    %v6630 = vmul.f32 %v6628, %v3886
    %v6631 = vmul.f32 %v6629, %v3890
    %v6632 = vadd.f32 %v3501, %v6630
    %v6633 = vadd.f32 %v3502, %v6631
    %s6634 = scalar_lea.vmem %s9, 1
    %v6635 = vld [vmem:[%s6634] sm:$0x1]
    %s6636 = scalar_lea.vmem %s10, 1
    %v6637 = vld [vmem:[%s6636] sm:$0x1]
    %v6638 = vsel %vm100, %v6632, 0.0
    %6639 = vadd.xlane.f32.xlu0 %v6638
    %v6640 = vpop.xlane.xlu0 %6639
    %v6641 = vsel %vm100, %v6633, 0.0
    %6642 = vadd.xlane.f32.xlu0 %v6641
    %v6643 = vpop.xlane.xlu0 %6642
    %v6644 = vmul.f32 %v6640, %v957
    %v6645 = vmul.f32 %v6643, %v957
    %v6646 = vsub.f32 %v6632, %v6644
    %v6647 = vsub.f32 %v6633, %v6645
    %v6648 = vmul.f32 %v6646, %v6646
    %v6649 = vmul.f32 %v6647, %v6647
    %v6650 = vsel %vm100, %v6648, 0.0
    %6651 = vadd.xlane.f32.xlu0 %v6650
    %v6652 = vpop.xlane.xlu0 %6651
    %v6653 = vsel %vm100, %v6649, 0.0
    %6654 = vadd.xlane.f32.xlu0 %v6653
    %v6655 = vpop.xlane.xlu0 %6654
    %v6656 = vmul.f32 %v6652, %v957
    %v6657 = vmul.f32 %v6655, %v957
    %v6658 = vadd.f32 %v6656, 1e-05
    %v6659 = vadd.f32 %v6657, 1e-05
    %v6660 = vrsqrt.pop %v6658
    %v6661 = vrsqrt.pop %v6659
    %v6662 = vmul.f32 %v6646, %v6660
    %v6663 = vmul.f32 %v6647, %v6661
    %v6665 = vlaneseq
    %v6666 = vshrl.u32 %v6665, 7
    %v6667 = vsub.s32 0, %v6666
    %v6668 = vrot.slane %v6635, %v6667
    %v6670 = vmul.f32 %v6662, %v6668
    %v6671 = vmul.f32 %v6663, %v6668
    %v6673 = vlaneseq
    %v6674 = vshrl.u32 %v6673, 7
    %v6675 = vsub.s32 0, %v6674
    %v6676 = vrot.slane %v6637, %v6675
    %v6678 = vadd.f32 %v6670, %v6676
    %v6679 = vadd.f32 %v6671, %v6676
    %v6680 = vmul.f32 %v6678, %v4126
    %v6681 = vmul.f32 %v6679, %v4130
    %v6682 = vadd.f32 %v6680, %v4365
    %v6683 = vadd.f32 %v6681, %v4369
    %s6684 = scalar_lea.vmem %s19, 32
    %v6685 = vld [vmem:[%s6684] sm:$0xff]
    %v6686 = vld [vmem:[%s6684 + $0x8] sm:$0xff]
    %v6687 = vld [vmem:[%s6684 + $0x10] sm:$0xff]
    %v6688 = vld [vmem:[%s6684 + $0x18] sm:$0xff]
    %s6689 = scalar_lea.vmem %s20, 1
    %v6690 = vld [vmem:[%s6689] sm:$0x1]
    %v6692 = vlaneseq
    %v6693 = vshrl.u32 %v6692, 7
    %v6694 = vsub.s32 0, %v6693
    %v6695 = vrot.slane %v6690, %v6694
    %v6698 = vsel %vm100, %v6682, 0
    %v6701 = vsel %vm100, %v6683, 0
    %6703 = vmatprep.subr.mxu0 0.0
    %6704 = vmatpush1.msra.mxu0 %v6685
    %6705 = vmatprep.subr.mxu0 0.0
    %6706 = vmatpush1.msra.mxu0 %v6686
    %6707 = vmatprep.subr.mxu0 0.0
    %6708 = vmatpush1.msra.mxu0 %v6687
    %6709 = vmatprep.subr.mxu0 0.0
    %6710 = vmatpush1.msra.mxu0 %v6688
    %6711 = vmatprep.subr.mxu0 0.0
    %6712 = vmatpush1.msra.mxu0 0.0
    %6713 = vmatprep.subr.mxu0 0.0
    %6714 = vmatpush1.msra.mxu0 0.0
    %6715 = vmatprep.subr.mxu0 0.0
    %6716 = vmatpush1.msra.mxu0 0.0
    %6717 = vmatprep.subr.mxu0 0.0
    %6718 = vmatpush1.msra.mxu0 0.0
    %6719 = vmatprep.subr.mxu0 0.0
    %6720 = vmatpush1.msra.mxu0 0.0
    %6721 = vmatprep.subr.mxu0 0.0
    %6722 = vmatpush1.msra.mxu0 0.0
    %6723 = vmatprep.subr.mxu0 0.0
    %6724 = vmatpush1.msra.mxu0 0.0
    %6725 = vmatprep.subr.mxu0 0.0
    %6726 = vmatpush1.msra.mxu0 0.0
    %6727 = vmatprep.subr.mxu0 0.0
    %6728 = vmatpush1.msra.mxu0 0.0
    %6729 = vmatprep.subr.mxu0 0.0
    %6730 = vmatpush1.msra.mxu0 0.0
    %6731 = vmatprep.subr.mxu0 0.0
    %6732 = vmatpush1.msra.mxu0 0.0
    %6733 = vmatprep.subr.mxu0 0.0
    %6734 = vmatpush1.msra.mxu0 0.0
    %6735 = vmatprep.subr.mxu0 0.0
    %6736 = vmatpush1.msra.mxu0 0.0
    %6737 = vmatprep.subr.mxu0 0.0
    %6738 = vmatpush1.msra.mxu0 0.0
    %6739 = vmatprep.subr.mxu0 0.0
    %6740 = vmatpush1.msra.mxu0 0.0
    %6741 = vmatprep.subr.mxu0 0.0
    %6742 = vmatpush1.msra.mxu0 0.0
    %6743 = vmatprep.subr.mxu0 0.0
    %6744 = vmatpush1.msra.mxu0 0.0
    %6745 = vmatprep.subr.mxu0 0.0
    %6746 = vmatpush1.msra.mxu0 0.0
    %6747 = vmatprep.subr.mxu0 0.0
    %6748 = vmatpush1.msra.mxu0 0.0
    %6749 = vmatprep.subr.mxu0 0.0
    %6750 = vmatpush1.msra.mxu0 0.0
    %6751 = vmatprep.subr.mxu0 0.0
    %6752 = vmatpush1.msra.mxu0 0.0
    %6753 = vmatprep.subr.mxu0 0.0
    %6754 = vmatpush1.msra.mxu0 0.0
    %6755 = vmatprep.subr.mxu0 0.0
    %6756 = vmatpush1.msra.mxu0 0.0
    %6757 = vmatprep.subr.mxu0 0.0
    %6758 = vmatpush1.msra.mxu0 0.0
    %6759 = vmatprep.subr.mxu0 0.0
    %6760 = vmatpush1.msra.mxu0 0.0
    %6761 = vmatprep.subr.mxu0 0.0
    %6762 = vmatpush1.msra.mxu0 0.0
    %6763 = vmatprep.subr.mxu0 0.0
    %6764 = vmatpush1.msra.mxu0 0.0
    %6765 = vmatprep.subr.mxu0 0.0
    %6766 = vmatpush1.msra.mxu0 0.0
    %6767 = vmatprep.mubr.f32.mxu0 0.0
    %6768 = vmatmul.mubr.f32.gmra.mrb[0].mxu0 %v6698
    %v6769 = vpop.f32.mrb[0].mxu0
    %v6770 = vadd.f32 %v6695, %v6769
    %v6771 = vpop.f32.mrb[0].mxu0
    %6772 = vmatprep.mubr.f32.mxu0 0.0
    %6773 = vmatmul.mubr.f32.gmra.mrb[0].mxu0 %v6701
    %v6774 = vpop.f32.mrb[0].mxu0
    %v6775 = vadd.f32 %v6695, %v6774
    %v6776 = vpop.f32.mrb[0].mxu0
    %6777 = vdwg.mxu0
    %v6778 = vmul.f32 %v6770, 0.5
    %v6779 = vmul.f32 %v6775, 0.5
    %v6780 = vmul.f32 %v6770, 0.70710677
    %v6781 = vmul.f32 %v6775, 0.70710677
    %vm6782 = vcmp.lt.f32.partialorder %v6780, 0.0
    %vm6783 = vcmp.lt.f32.partialorder %v6781, 0.0
    %v6784 = vsel %vm6782, -1.0, 1.0
    %v6785 = vsel %vm6783, -1.0, 1.0
    %v6786 = vmul.f32 %v6780, %v6784
    %v6787 = vmul.f32 %v6781, %v6785
    %v6788 = vmul.f32 %v6786, 0.3275911
    %v6789 = vmul.f32 %v6787, 0.3275911
    %v6790 = vadd.f32 %v6788, 1.0
    %v6791 = vadd.f32 %v6789, 1.0
    %v6792 = vrcp.pop %v6790
    %v6793 = vrcp.pop %v6791
    %v6794 = vmul.f32 %v6790, %v6792
    %v6795 = vmul.f32 %v6791, %v6793
    %v6796 = vsub.f32 2.0, %v6794
    %v6797 = vsub.f32 2.0, %v6795
    %v6798 = vmul.f32 %v6792, %v6796
    %v6799 = vmul.f32 %v6793, %v6797
    %v6800 = vmul.f32 %v6798, 1.0614054
    %v6801 = vmul.f32 %v6799, 1.0614054
    %v6802 = vadd.f32 %v6800, -1.4531521
    %v6803 = vadd.f32 %v6801, -1.4531521
    %v6804 = vmul.f32 %v6802, %v6798
    %v6805 = vmul.f32 %v6803, %v6799
    %v6806 = vadd.f32 %v6804, 1.4214138
    %v6807 = vadd.f32 %v6805, 1.4214138
    %v6808 = vmul.f32 %v6806, %v6798
    %v6809 = vmul.f32 %v6807, %v6799
    %v6810 = vadd.f32 %v6808, -0.28449672
    %v6811 = vadd.f32 %v6809, -0.28449672
    %v6812 = vmul.f32 %v6810, %v6798
    %v6813 = vmul.f32 %v6811, %v6799
    %v6814 = vadd.f32 %v6812, 0.2548296
    %v6815 = vadd.f32 %v6813, 0.2548296
    %v6816 = vmul.f32 %v6814, %v6798
    %v6817 = vmul.f32 %v6815, %v6799
    %v6818 = vsub.f32 0.0, %v6786
    %v6819 = vsub.f32 0.0, %v6787
    %v6820 = vmul.f32 %v6818, %v6786
    %v6821 = vmul.f32 %v6819, %v6787
    %v6822 = vmul.f32 %v6820, 1.442695
    %v6823 = vpow.pop %v6822
    %v6824 = vmul.f32 %v6821, 1.442695
    %v6825 = vpow.pop %v6824
    %v6826 = vmul.f32 %v6816, %v6823
    %v6827 = vmul.f32 %v6817, %v6825
    %v6828 = vsub.f32 1.0, %v6826
    %v6829 = vsub.f32 1.0, %v6827
    %v6830 = vmul.f32 %v6784, %v6828
    %v6831 = vmul.f32 %v6785, %v6829
    %v6832 = vadd.f32 %v6830, 1.0
    %v6833 = vadd.f32 %v6831, 1.0
    %v6834 = vmul.f32 %v6778, %v6832
    %v6835 = vmul.f32 %v6779, %v6833
    %s6836 = scalar_lea.vmem %s21, 64
    %v6837 = vld [vmem:[%s6836] sm:$0xff]
    %v6838 = vld [vmem:[%s6836 + $0x8] sm:$0xff]
    %v6839 = vld [vmem:[%s6836 + $0x10] sm:$0xff]
    %v6840 = vld [vmem:[%s6836 + $0x18] sm:$0xff]
    %v6841 = vld [vmem:[%s6836 + $0x20] sm:$0xff]
    %v6842 = vld [vmem:[%s6836 + $0x28] sm:$0xff]
    %v6843 = vld [vmem:[%s6836 + $0x30] sm:$0xff]
    %v6844 = vld [vmem:[%s6836 + $0x38] sm:$0xff]
    %s6845 = scalar_lea.vmem %s22, 1
    %v6846 = vld [vmem:[%s6845] sm:$0x1]
    %v6848 = vlaneseq
    %v6849 = vshrl.u32 %v6848, 7
    %v6850 = vsub.s32 0, %v6849
    %v6851 = vrot.slane %v6846, %v6850
    %v6854 = vsel %vm3417, %v6834, 0
    %v6857 = vsel %vm3417, %v6835, 0
    %6859 = vmatprep.subr.mxu0 0.0
    %6860 = vmatpush1.msra.mxu0 %v6837
    %6861 = vmatprep.subr.mxu0 0.0
    %6862 = vmatpush1.msra.mxu0 %v6838
    %6863 = vmatprep.subr.mxu0 0.0
    %6864 = vmatpush1.msra.mxu0 %v6839
    %6865 = vmatprep.subr.mxu0 0.0
    %6866 = vmatpush1.msra.mxu0 %v6840
    %6867 = vmatprep.subr.mxu0 0.0
    %6868 = vmatpush1.msra.mxu0 %v6841
    %6869 = vmatprep.subr.mxu0 0.0
    %6870 = vmatpush1.msra.mxu0 %v6842
    %6871 = vmatprep.subr.mxu0 0.0
    %6872 = vmatpush1.msra.mxu0 %v6843
    %6873 = vmatprep.subr.mxu0 0.0
    %6874 = vmatpush1.msra.mxu0 %v6844
    %6875 = vmatprep.subr.mxu0 0.0
    %6876 = vmatpush1.msra.mxu0 0.0
    %6877 = vmatprep.subr.mxu0 0.0
    %6878 = vmatpush1.msra.mxu0 0.0
    %6879 = vmatprep.subr.mxu0 0.0
    %6880 = vmatpush1.msra.mxu0 0.0
    %6881 = vmatprep.subr.mxu0 0.0
    %6882 = vmatpush1.msra.mxu0 0.0
    %6883 = vmatprep.subr.mxu0 0.0
    %6884 = vmatpush1.msra.mxu0 0.0
    %6885 = vmatprep.subr.mxu0 0.0
    %6886 = vmatpush1.msra.mxu0 0.0
    %6887 = vmatprep.subr.mxu0 0.0
    %6888 = vmatpush1.msra.mxu0 0.0
    %6889 = vmatprep.subr.mxu0 0.0
    %6890 = vmatpush1.msra.mxu0 0.0
    %6891 = vmatprep.subr.mxu0 0.0
    %6892 = vmatpush1.msra.mxu0 0.0
    %6893 = vmatprep.subr.mxu0 0.0
    %6894 = vmatpush1.msra.mxu0 0.0
    %6895 = vmatprep.subr.mxu0 0.0
    %6896 = vmatpush1.msra.mxu0 0.0
    %6897 = vmatprep.subr.mxu0 0.0
    %6898 = vmatpush1.msra.mxu0 0.0
    %6899 = vmatprep.subr.mxu0 0.0
    %6900 = vmatpush1.msra.mxu0 0.0
    %6901 = vmatprep.subr.mxu0 0.0
    %6902 = vmatpush1.msra.mxu0 0.0
    %6903 = vmatprep.subr.mxu0 0.0
    %6904 = vmatpush1.msra.mxu0 0.0
    %6905 = vmatprep.subr.mxu0 0.0
    %6906 = vmatpush1.msra.mxu0 0.0
    %6907 = vmatprep.subr.mxu0 0.0
    %6908 = vmatpush1.msra.mxu0 0.0
    %6909 = vmatprep.subr.mxu0 0.0
    %6910 = vmatpush1.msra.mxu0 0.0
    %6911 = vmatprep.subr.mxu0 0.0
    %6912 = vmatpush1.msra.mxu0 0.0
    %6913 = vmatprep.subr.mxu0 0.0
    %6914 = vmatpush1.msra.mxu0 0.0
    %6915 = vmatprep.subr.mxu0 0.0
    %6916 = vmatpush1.msra.mxu0 0.0
    %6917 = vmatprep.subr.mxu0 0.0
    %6918 = vmatpush1.msra.mxu0 0.0
    %6919 = vmatprep.subr.mxu0 0.0
    %6920 = vmatpush1.msra.mxu0 0.0
    %6921 = vmatprep.subr.mxu0 0.0
    %6922 = vmatpush1.msra.mxu0 0.0
    %6923 = vmatprep.mubr.f32.mxu0 0.0
    %6924 = vmatmul.mubr.f32.gmra.mrb[0].mxu0 %v6854
    %v6925 = vpop.f32.mrb[0].mxu0
    %v6926 = vadd.f32 %v6851, %v6925
    %v6927 = vpop.f32.mrb[0].mxu0
    %6928 = vmatprep.mubr.f32.mxu0 0.0
    %6929 = vmatmul.mubr.f32.gmra.mrb[0].mxu0 %v6857
    %v6930 = vpop.f32.mrb[0].mxu0
    %v6931 = vadd.f32 %v6851, %v6930
    %v6932 = vpop.f32.mrb[0].mxu0
    %6933 = vdwg.mxu0
    %v6934 = vmul.f32 %v6926, %v4245
    %v6935 = vmul.f32 %v6931, %v4249
    %v6936 = vadd.f32 %v6632, %v6934
    %v6937 = vadd.f32 %v6633, %v6935
    %6938 = vst.msk [vmem:[#allocation2] sm:$0xff] %vm100, %v6936
    %6939 = vst.msk [vmem:[#allocation2 + $0x8] sm:$0xff] %vm100, %v6937
    // Predicated region
    $region94: #{tpu_custom_call.1} parent=1 // pred_check
      _
    $region95: #{tpu_custom_call.1} parent=1 // pred_check_branch
      %6941 = sbr.rel (0) target = $region97
    $region96: #{tpu_custom_call.1} parent=1 // pred_region
      %s6943 = ssub.s32 256, 256
      %6944 = vsyncadd [#allocation3], %s6943
      %s6945 = sshll.u32 [#allocation2], 4
      %s6946 = int_to_ptr.vmem [resolvable:$true] %s6945
      %6951 = dma.vmem_to_hbm [thread:$0]  %s6946, 256, %s23, [#allocation3], 128, 128, 8
    $region97: #{tpu_custom_call.1} parent=1 // pred_fallthru
      _
    // Predicated region
    $region98: #{tpu_custom_call.1} parent=1 // pred_check
      _
    $region99: #{tpu_custom_call.1} parent=1 // pred_check_branch
      %6953 = sbr.rel (0) target = $region101
    $region100: #{tpu_custom_call.1} parent=1 // pred_region
      %6954 = dma.done [#allocation3], 256
    $region101: #{tpu_custom_call.1} parent=1 // pred_fallthru
      _
    %6955 = vsyncpa [#allocation3], 1

</llo_original>
